<compile_context>
chip_gen: v7x
topology: tpu7x:2x2x1
jax: 0.10.0
libtpu: 0.0.40
codegen_flags: <defaults>
</compile_context>

<pallas_src>
import jax
import jax.numpy as jnp
from jax.experimental import pallas as pl
from jax.experimental.pallas import tpu as pltpu

_VMEM_LIMIT = 32 * 1024 * 1024  # <= physical VMEM on all generations (v7x: 64 MiB)


# ---------------------------------------------------------------------------
# Fused kernel: all four layers in one pass
# ---------------------------------------------------------------------------
def _age_net_kernel(x_ref, w1_ref, s1_ref, w2_ref, s2_ref,
                    w3_ref, s3_ref, w4_ref, b4_ref, o_ref, h2_acc):
    j = pl.program_id(0)

    @pl.when(j == 0)
    def _():
        h2_acc[...] = jnp.zeros_like(h2_acc)

    # layer 1 (tile of 960 -> 2048): Linear + folded BN + ReLU
    xb = x_ref[...].astype(jnp.bfloat16)
    h1 = jnp.dot(xb, w1_ref[...], preferred_element_type=jnp.float32)
    h1 = jnp.maximum(h1 + s1_ref[...], 0.0)

    # layer 2 (2048 -> 1024) partial accumulation over the layer-1 tile
    h2_acc[...] += jnp.dot(h1.astype(jnp.bfloat16), w2_ref[...],
                           preferred_element_type=jnp.float32)

    @pl.when(j == pl.num_programs(0) - 1)
    def _():
        # finish layer 2: folded BN shift + ReLU
        h2 = jnp.maximum(h2_acc[...] + s2_ref[...], 0.0)
        # layer 3 (1024 -> 512): Linear + folded BN + ReLU
        h3 = jnp.dot(h2.astype(jnp.bfloat16), w3_ref[...],
                     preferred_element_type=jnp.float32)
        h3 = jnp.maximum(h3 + s3_ref[...], 0.0)
        # layer 4 (512 -> 1): VPU multiply + lane reduction (skip degenerate MXU matmul)
        w4 = w4_ref[...].astype(jnp.float32)                     # (1, 512)
        out = jnp.sum(h3 * w4, axis=-1, keepdims=True) + b4_ref[...]
        o_ref[...] = out.astype(o_ref.dtype)


def age_net_pallas(x, params, *, tn=1024):
    B, K = x.shape                      # (8, 960)
    N1 = params["w1"].shape[1]          # 2048
    N2 = params["w2"].shape[1]          # 1024
    N3 = params["w3"].shape[1]          # 512
    if N1 % tn != 0 or tn % 128 != 0:
        tn = N1                         # fallback: single full-width step
    grid = (N1 // tn,)

    flops = 2 * B * (K * N1 + N1 * N2 + N2 * N3 + N3 * 1)
    bytes_accessed = (
        2 * (K * N1 + N1 * N2 + N2 * N3 + N3)          # bf16 weights
        + 4 * (N1 + N2 + N3 + 1)                        # f32 shifts / bias
        + 4 * B * K + 4 * B                             # activations in, out
    )

    return pl.pallas_call(
        _age_net_kernel,
        out_shape=jax.ShapeDtypeStruct((B, 1), jnp.float32),
        grid_spec=pltpu.PrefetchScalarGridSpec(
            num_scalar_prefetch=0,
            grid=grid,
            in_specs=[
                pl.BlockSpec((B, K), lambda j: (0, 0)),     # x (f32, full)
                pl.BlockSpec((K, tn), lambda j: (0, j)),    # w1 column tile (bf16)
                pl.BlockSpec((1, tn), lambda j: (0, j)),    # s1 tile
                pl.BlockSpec((tn, N2), lambda j: (j, 0)),   # w2 K-tile (bf16)
                pl.BlockSpec((1, N2), lambda j: (0, 0)),    # s2
                pl.BlockSpec((N2, N3), lambda j: (0, 0)),   # w3 (bf16)
                pl.BlockSpec((1, N3), lambda j: (0, 0)),    # s3
                pl.BlockSpec((1, N3), lambda j: (0, 0)),    # w4 row vector (bf16)
                pl.BlockSpec((1, 1), lambda j: (0, 0)),     # b4
            ],
            out_specs=pl.BlockSpec((B, 1), lambda j: (0, 0)),
            scratch_shapes=[pltpu.VMEM((B, N2), jnp.float32)],   # h2 accumulator
        ),
        compiler_params=pltpu.CompilerParams(
            dimension_semantics=("arbitrary",),   # reduction axis over layer-1 tiles
            vmem_limit_bytes=_VMEM_LIMIT,
        ),
        cost_estimate=pl.CostEstimate(
            flops=flops, transcendentals=0, bytes_accessed=bytes_accessed),
    )(x, params["w1"], params["s1"], params["w2"], params["s2"],
      params["w3"], params["s3"], params["w4"], params["b4"])


# ---------------------------------------------------------------------------
# Parameters (deterministic synthetic weights, BN folded, bf16 weight storage)
# ---------------------------------------------------------------------------
def init_params(key, input_dim=960, output_dim=1):
    assert output_dim == 1
    dims = [input_dim, 2048, 1024, 512, output_dim]
    eps = 1e-5
    layers = []
    for li in range(4):
        k_in, k_out = dims[li], dims[li + 1]
        key, kw, kb, kg, kbeta, km, kv = jax.random.split(key, 7)
        bound = 1.0 / jnp.sqrt(k_in)
        w = jax.random.uniform(kw, (k_in, k_out), jnp.float32, -bound, bound)
        b = jax.random.uniform(kb, (k_out,), jnp.float32, -bound, bound)
        if li < 3:  # layers with BatchNorm1d
            gamma = jax.random.uniform(kg, (k_out,), jnp.float32, 0.5, 1.5)
            beta = jax.random.uniform(kbeta, (k_out,), jnp.float32, -0.1, 0.1)
            r_mean = jax.random.uniform(km, (k_out,), jnp.float32, -0.1, 0.1)
            r_var = jax.random.uniform(kv, (k_out,), jnp.float32, 0.5, 1.5)
            scale = gamma / jnp.sqrt(r_var + eps)
            w_folded = w * scale[None, :]          # fold BN scale into weight columns
            shift = (b - r_mean) * scale + beta
        else:
            w_folded = w
            shift = b
        layers.append((w_folded, shift))

    (w1, s1), (w2, s2), (w3, s3), (w4, s4) = layers
    return dict(
        w1=w1.astype(jnp.bfloat16), s1=s1.reshape(1, -1),
        w2=w2.astype(jnp.bfloat16), s2=s2.reshape(1, -1),
        w3=w3.astype(jnp.bfloat16), s3=s3.reshape(1, -1),
        # final 512 -> 1 weight kept as a (1, 512) row vector for the VPU reduction
        w4=w4.T.astype(jnp.bfloat16), b4=s4.reshape(1, 1),
    )


@jax.jit
def age_net_forward(x, params):
    return age_net_pallas(x, params, tn=1024)   # (B, 1) f32


# Plain-JAX reference of the same (eval-mode, bf16-weight) math.
def reference_forward(x, params):
    def mm(h, w_bf16):
        return jnp.dot(h.astype(jnp.bfloat16).astype(jnp.float32),
                       w_bf16.astype(jnp.float32))
    h = jnp.maximum(mm(x, params["w1"]) + params["s1"], 0.0)
    h = jnp.maximum(mm(h, params["w2"]) + params["s2"], 0.0)
    h = jnp.maximum(mm(h, params["w3"]) + params["s3"], 0.0)
    w4 = params["w4"].astype(jnp.float32)
    return jnp.sum(h * w4, axis=-1, keepdims=True) + params["b4"]


if __name__ == "__main__":
    key = jax.random.PRNGKey(0)
    kx, kp = jax.random.split(key)
    batch, input_dim = 8, 960
    x = jax.random.normal(kx, (batch, input_dim), jnp.float32)
    params = init_params(kp, input_dim=input_dim, output_dim=1)

    out = age_net_forward(x, params)
    jax.block_until_ready(out)
    assert out.shape == (batch, 1) and out.dtype == jnp.float32

    ref = reference_forward(x, params)
    max_diff = float(jnp.max(jnp.abs(out - ref)))
    assert jnp.allclose(out, ref, atol=1e-2, rtol=1e-2), f"max abs diff {max_diff}"

    print("KERNEL_OK")
</pallas_src>

<mosaic_0001>
module attributes {stable_mosaic.version = 11 : i64} {
  func.func @_age_net_kernel(%arg0: i32, %arg1: memref<8x960xf32, #tpu.memory_space<vmem>>, %arg2: memref<960x1024xbf16, #tpu.memory_space<vmem>>, %arg3: memref<1x1024xf32, #tpu.memory_space<vmem>>, %arg4: memref<1024x1024xbf16, #tpu.memory_space<vmem>>, %arg5: memref<1x1024xf32, #tpu.memory_space<vmem>>, %arg6: memref<1024x512xbf16, #tpu.memory_space<vmem>>, %arg7: memref<1x512xf32, #tpu.memory_space<vmem>>, %arg8: memref<1x512xbf16, #tpu.memory_space<vmem>>, %arg9: memref<1x1xf32, #tpu.memory_space<vmem>>, %arg10: memref<8x1xf32, #tpu.memory_space<vmem>>, %arg11: memref<8x1024xf32, #tpu.memory_space<vmem>>) attributes {dimension_semantics = [#tpu.dimension_semantics<arbitrary>], iteration_bounds = array<i64: 2>, scalar_prefetch = 0 : i64, scratch_operands = 1 : i64, tpu.core_type = #tpu.core_type<tc>, window_params = [{pipeline_mode = #tpu.pipeline_mode<synchronous>, transform_indices = @transform_0, window_bounds = array<i64: 8, 960>}, {transform_indices = @transform_1, window_bounds = array<i64: 960, 1024>}, {transform_indices = @transform_2, window_bounds = array<i64: 1, 1024>}, {transform_indices = @transform_3, window_bounds = array<i64: 1024, 1024>}, {pipeline_mode = #tpu.pipeline_mode<synchronous>, transform_indices = @transform_4, window_bounds = array<i64: 1, 1024>}, {pipeline_mode = #tpu.pipeline_mode<synchronous>, transform_indices = @transform_5, window_bounds = array<i64: 1024, 512>}, {pipeline_mode = #tpu.pipeline_mode<synchronous>, transform_indices = @transform_6, window_bounds = array<i64: 1, 512>}, {pipeline_mode = #tpu.pipeline_mode<synchronous>, transform_indices = @transform_7, window_bounds = array<i64: 1, 512>}, {pipeline_mode = #tpu.pipeline_mode<synchronous>, transform_indices = @transform_8, window_bounds = array<i64: 1, 1>}, {pipeline_mode = #tpu.pipeline_mode<synchronous>, transform_indices = @transform_9, window_bounds = array<i64: 8, 1>}]} {
    %c0_i32 = arith.constant 0 : i32
    %0 = arith.cmpi eq, %arg0, %c0_i32 : i32
    %1 = arith.extui %0 : i1 to i32
    %c0_i32_0 = arith.constant 0 : i32
    %2 = arith.cmpi ne, %1, %c0_i32_0 : i32
    scf.if %2 {
      %cst_15 = arith.constant 0.000000e+00 : f32
      %21 = vector.broadcast %cst_15 : f32 to vector<8x1024xf32>
      %c0_16 = arith.constant 0 : index
      %c0_17 = arith.constant 0 : index
      %22 = vector.load %arg11[%c0_16, %c0_17] : memref<8x1024xf32, #tpu.memory_space<vmem>>, vector<8x1024xf32>
      tpu.vector_store %arg11[%c0_16, %c0_17], %21 {strides = array<i32>} : memref<8x1024xf32, #tpu.memory_space<vmem>>, vector<8x1024xf32>,
    } else {
    }
    %c0 = arith.constant 0 : index
    %c0_1 = arith.constant 0 : index
    %3 = vector.load %arg1[%c0, %c0_1] : memref<8x960xf32, #tpu.memory_space<vmem>>, vector<8x960xf32>
    %4 = arith.truncf %3 : vector<8x960xf32> to vector<8x960xbf16>
    %c0_2 = arith.constant 0 : index
    %c0_3 = arith.constant 0 : index
    %5 = vector.load %arg2[%c0_2, %c0_3] : memref<960x1024xbf16, #tpu.memory_space<vmem>>, vector<960x1024xbf16>
    %cst = arith.constant dense<0.000000e+00> : vector<8x1024xf32>
    %6 = tpu.matmul %4, %5, %cst {dimension_numbers = #tpu.dot_dimension_numbers<[1], [0], [0], [1], [0, 0, 1, 1], [], []>} : vector<8x960xbf16>, vector<960x1024xbf16>, vector<8x1024xf32> -> vector<8x1024xf32>
    %c0_4 = arith.constant 0 : index
    %c0_5 = arith.constant 0 : index
    %7 = vector.load %arg3[%c0_4, %c0_5] : memref<1x1024xf32, #tpu.memory_space<vmem>>, vector<1x1024xf32>
    %8 = vector.broadcast %7 : vector<1x1024xf32> to vector<8x1024xf32>
    %9 = arith.addf %6, %8 : vector<8x1024xf32>
    %cst_6 = arith.constant 0.000000e+00 : f32
    %10 = vector.broadcast %cst_6 : f32 to vector<8x1024xf32>
    %11 = arith.maximumf %9, %10 : vector<8x1024xf32>
    %c0_7 = arith.constant 0 : index
    %c0_8 = arith.constant 0 : index
    %12 = vector.load %arg11[%c0_7, %c0_8] : memref<8x1024xf32, #tpu.memory_space<vmem>>, vector<8x1024xf32>
    %13 = arith.truncf %11 : vector<8x1024xf32> to vector<8x1024xbf16>
    %c0_9 = arith.constant 0 : index
    %c0_10 = arith.constant 0 : index
    %14 = vector.load %arg4[%c0_9, %c0_10] : memref<1024x1024xbf16, #tpu.memory_space<vmem>>, vector<1024x1024xbf16>
    %cst_11 = arith.constant dense<0.000000e+00> : vector<8x1024xf32>
    %15 = tpu.matmul %13, %14, %cst_11 {dimension_numbers = #tpu.dot_dimension_numbers<[1], [0], [0], [1], [0, 0, 1, 1], [], []>} : vector<8x1024xbf16>, vector<1024x1024xbf16>, vector<8x1024xf32> -> vector<8x1024xf32>
    %16 = arith.addf %12, %15 : vector<8x1024xf32>
    %c0_12 = arith.constant 0 : index
    %c0_13 = arith.constant 0 : index
    %17 = vector.load %arg11[%c0_12, %c0_13] : memref<8x1024xf32, #tpu.memory_space<vmem>>, vector<8x1024xf32>
    tpu.vector_store %arg11[%c0_12, %c0_13], %16 {strides = array<i32>} : memref<8x1024xf32, #tpu.memory_space<vmem>>, vector<8x1024xf32>,
    %c1_i32 = arith.constant 1 : i32
    %18 = arith.cmpi eq, %arg0, %c1_i32 : i32
    %19 = arith.extui %18 : i1 to i32
    %c0_i32_14 = arith.constant 0 : i32
    %20 = arith.cmpi ne, %19, %c0_i32_14 : i32
    scf.if %20 {
      %c0_15 = arith.constant 0 : index
      %c0_16 = arith.constant 0 : index
      %21 = vector.load %arg11[%c0_15, %c0_16] : memref<8x1024xf32, #tpu.memory_space<vmem>>, vector<8x1024xf32>
      %c0_17 = arith.constant 0 : index
      %c0_18 = arith.constant 0 : index
      %22 = vector.load %arg5[%c0_17, %c0_18] : memref<1x1024xf32, #tpu.memory_space<vmem>>, vector<1x1024xf32>
      %23 = vector.broadcast %22 : vector<1x1024xf32> to vector<8x1024xf32>
      %24 = arith.addf %21, %23 : vector<8x1024xf32>
      %cst_19 = arith.constant 0.000000e+00 : f32
      %25 = vector.broadcast %cst_19 : f32 to vector<8x1024xf32>
      %26 = arith.maximumf %24, %25 : vector<8x1024xf32>
      %27 = arith.truncf %26 : vector<8x1024xf32> to vector<8x1024xbf16>
      %c0_20 = arith.constant 0 : index
      %c0_21 = arith.constant 0 : index
      %28 = vector.load %arg6[%c0_20, %c0_21] : memref<1024x512xbf16, #tpu.memory_space<vmem>>, vector<1024x512xbf16>
      %cst_22 = arith.constant dense<0.000000e+00> : vector<8x512xf32>
      %29 = tpu.matmul %27, %28, %cst_22 {dimension_numbers = #tpu.dot_dimension_numbers<[1], [0], [0], [1], [0, 0, 1, 1], [], []>} : vector<8x1024xbf16>, vector<1024x512xbf16>, vector<8x512xf32> -> vector<8x512xf32>
      %c0_23 = arith.constant 0 : index
      %c0_24 = arith.constant 0 : index
      %30 = vector.load %arg7[%c0_23, %c0_24] : memref<1x512xf32, #tpu.memory_space<vmem>>, vector<1x512xf32>
      %31 = vector.broadcast %30 : vector<1x512xf32> to vector<8x512xf32>
      %32 = arith.addf %29, %31 : vector<8x512xf32>
      %cst_25 = arith.constant 0.000000e+00 : f32
      %33 = vector.broadcast %cst_25 : f32 to vector<8x512xf32>
      %34 = arith.maximumf %32, %33 : vector<8x512xf32>
      %c0_26 = arith.constant 0 : index
      %c0_27 = arith.constant 0 : index
      %35 = vector.load %arg8[%c0_26, %c0_27] : memref<1x512xbf16, #tpu.memory_space<vmem>>, vector<1x512xbf16>
      %36 = arith.extf %35 : vector<1x512xbf16> to vector<1x512xf32>
      %37 = vector.broadcast %36 : vector<1x512xf32> to vector<8x512xf32>
      %38 = arith.mulf %34, %37 : vector<8x512xf32>
      %cst_28 = arith.constant dense<0.000000e+00> : vector<8xf32>
      %39 = vector.multi_reduction <add>, %38, %cst_28 [1] : vector<8x512xf32> to vector<8xf32>
      %40 = vector.shape_cast %39 : vector<8xf32> to vector<8x1xf32>
      %c0_29 = arith.constant 0 : index
      %c0_30 = arith.constant 0 : index
      %41 = vector.load %arg9[%c0_29, %c0_30] : memref<1x1xf32, #tpu.memory_space<vmem>>, vector<1x1xf32>
      %42 = vector.broadcast %41 : vector<1x1xf32> to vector<8x1xf32>
      %43 = arith.addf %40, %42 : vector<8x1xf32>
      %c0_31 = arith.constant 0 : index
      %c0_32 = arith.constant 0 : index
      %44 = vector.load %arg10[%c0_31, %c0_32] : memref<8x1xf32, #tpu.memory_space<vmem>>, vector<8x1xf32>
      tpu.vector_store %arg10[%c0_31, %c0_32], %43 {strides = array<i32>} : memref<8x1xf32, #tpu.memory_space<vmem>>, vector<8x1xf32>,
    } else {
    }
    return
  }
  func.func @transform_0(%arg0: i32) -> (i32, i32) {
    %c0_i32 = arith.constant 0 : i32
    %c0_i32_0 = arith.constant 0 : i32
    %c0_i32_1 = arith.constant 0 : i32
    return %c0_i32, %c0_i32_0 : i32, i32
  }
  func.func @transform_1(%arg0: i32) -> (i32, i32) {
    %c0_i32 = arith.constant 0 : i32
    %c0_i32_0 = arith.constant 0 : i32
    return %c0_i32, %arg0 : i32, i32
  }
  func.func @transform_2(%arg0: i32) -> (i32, i32) {
    %c0_i32 = arith.constant 0 : i32
    %c0_i32_0 = arith.constant 0 : i32
    return %c0_i32, %arg0 : i32, i32
  }
  func.func @transform_3(%arg0: i32) -> (i32, i32) {
    %c0_i32 = arith.constant 0 : i32
    %c0_i32_0 = arith.constant 0 : i32
    return %arg0, %c0_i32 : i32, i32
  }
  func.func @transform_4(%arg0: i32) -> (i32, i32) {
    %c0_i32 = arith.constant 0 : i32
    %c0_i32_0 = arith.constant 0 : i32
    %c0_i32_1 = arith.constant 0 : i32
    return %c0_i32, %c0_i32_0 : i32, i32
  }
  func.func @transform_5(%arg0: i32) -> (i32, i32) {
    %c0_i32 = arith.constant 0 : i32
    %c0_i32_0 = arith.constant 0 : i32
    %c0_i32_1 = arith.constant 0 : i32
    return %c0_i32, %c0_i32_0 : i32, i32
  }
  func.func @transform_6(%arg0: i32) -> (i32, i32) {
    %c0_i32 = arith.constant 0 : i32
    %c0_i32_0 = arith.constant 0 : i32
    %c0_i32_1 = arith.constant 0 : i32
    return %c0_i32, %c0_i32_0 : i32, i32
  }
  func.func @transform_7(%arg0: i32) -> (i32, i32) {
    %c0_i32 = arith.constant 0 : i32
    %c0_i32_0 = arith.constant 0 : i32
    %c0_i32_1 = arith.constant 0 : i32
    return %c0_i32, %c0_i32_0 : i32, i32
  }
  func.func @transform_8(%arg0: i32) -> (i32, i32) {
    %c0_i32 = arith.constant 0 : i32
    %c0_i32_0 = arith.constant 0 : i32
    %c0_i32_1 = arith.constant 0 : i32
    return %c0_i32, %c0_i32_0 : i32, i32
  }
  func.func @transform_9(%arg0: i32) -> (i32, i32) {
    %c0_i32 = arith.constant 0 : i32
    %c0_i32_0 = arith.constant 0 : i32
    %c0_i32_1 = arith.constant 0 : i32
    return %c0_i32, %c0_i32_0 : i32, i32
  }
}

</mosaic_0001>

<llo_original>
// kernel: age_net_forward.1
$region0: #{age_net_forward.1}
  #allocation0 [shape = 'u32[]', space=smem, size = 0x4, offset = 0x4, fixed_abs, tag = 'smem constant byte address 0x4 - core index']
  #allocation1 [shape = 'u32[144,128]{1,0:T(1,128)}', space=vmem, size = 0x12000, scoped, tag = 'internal scratch']
  #allocation2 [shape = 'f32[8,1024]{1,0:T(8,128)}', space=vmem, size = 0x8000, scoped, tag = 'scratch operand']
  #allocation3 [shape = 'f32[1,1]{1,0:T(1,128)S(1)}', space=vmem, size = 0x200, scoped, tag = 'scoped memory for age_net_forward.1']
  %s0 = inlined_call_operand.hbm [shape: f32[8,960], index: 0, kind: input, shape index: {}]
  %s1 = inlined_call_operand.hbm [shape: bf16[960,2048], index: 1, kind: input, shape index: {}]
  %s2 = inlined_call_operand.hbm [shape: f32[1,2048], index: 2, kind: input, shape index: {}]
  %s3 = inlined_call_operand.hbm [shape: bf16[2048,1024], index: 3, kind: input, shape index: {}]
  %s4 = inlined_call_operand.hbm [shape: f32[1,1024], index: 4, kind: input, shape index: {}]
  %s5 = inlined_call_operand.hbm [shape: bf16[1024,512], index: 5, kind: input, shape index: {}]
  %s6 = inlined_call_operand.hbm [shape: f32[1,512], index: 6, kind: input, shape index: {}]
  %s7 = inlined_call_operand.hbm [shape: bf16[1,512], index: 7, kind: input, shape index: {}]
  %s8 = inlined_call_operand.<no memory space> [shape: f32[1,1], index: 8, kind: input, shape index: {}]
  %s9 = inlined_call_operand.vmem [shape: f32[8,1], index: 9, kind: output, shape index: {}]
  %s10 = sld [smem:[#allocation0]]
  $region109: #{age_net_forward.1} parent=0
    _
  %s12 = ssub.s32 1, %s10
  %s13 = scalar_select 0, %s12, %s10
  %v14 = vstv %s8
  %15 = vst [vmem:[#allocation3] sm:$0x1] %v14
  $region1: #{age_net_forward.1} parent=0
    #allocation4 [shape = 'u8[32768]{0}', space=vmem, size = 0x8000, scoped, tag = 'input window, operand 0, single buffered']
    #allocation5 [shape = 's32[2]{0}', space=sflag, size = 0x8, scoped, tag = 'scoped memory for age_net_forward.1']
    #allocation6 [shape = 'u8[3932160]{0}', space=vmem, size = 0x3c0000, scoped, tag = 'input window, operand 1']
    #allocation7 [shape = 's32[2]{0}', space=sflag, size = 0x8, scoped, tag = 'scoped memory for age_net_forward.1']
    #allocation8 [shape = 'u8[8192]{0}', space=vmem, size = 0x2000, scoped, tag = 'input window, operand 2']
    #allocation9 [shape = 'u8[4194304]{0}', space=vmem, size = 0x400000, scoped, tag = 'input window, operand 3']
    #allocation10 [shape = 's32[2]{0}', space=sflag, size = 0x8, scoped, tag = 'scoped memory for age_net_forward.1']
    #allocation11 [shape = 'u8[4096]{0}', space=vmem, size = 0x1000, scoped, tag = 'input window, operand 4, single buffered']
    #allocation12 [shape = 'u8[1048576]{0}', space=vmem, size = 0x100000, scoped, tag = 'input window, operand 5, single buffered']
    #allocation13 [shape = 's32[1]{0}', space=sflag, size = 0x4, scoped, tag = 'scoped memory for age_net_forward.1']
    #allocation14 [shape = 'u8[2048]{0}', space=vmem, size = 0x800, scoped, tag = 'input window, operand 6, single buffered']
    #allocation15 [shape = 'u8[2048]{0}', space=vmem, size = 0x800, scoped, tag = 'input window, operand 7, single buffered']
    #allocation16 [shape = 's32[1]{0}', space=sflag, size = 0x4, scoped, tag = 'scoped memory for age_net_forward.1']
    %16 = vsyncpa [#allocation5], 0
    %17 = vsyncpa [#allocation7], 0
    %s18 = scalar_lea.sflag [#allocation7], 1
    %19 = vsyncpa %s18, 0
    %20 = vsyncpa [#allocation10], 0
    %s21 = scalar_lea.sflag [#allocation10], 1
    %22 = vsyncpa %s21, 0
    %23 = vsyncpa [#allocation13], 0
    %24 = vsyncpa [#allocation16], 0
    loop: start=0, step=1, limit=4
    $region2: #{age_net_forward.1} parent=1 // loop_pre_header
      _
    $region3: #{age_net_forward.1} parent=1 // loop_header
      %s26 = sphi 0, %s30
      %p27 = scmp.ge.s32.totalorder %s26, 4
      %s34 = sphi 0, %s34
      %s36 = sphi 0, %s34
      %s37 = sphi 0, %s36
      %s51 = sphi 0, %s37
      %s57 = sphi 0, %s59
      %s60 = sphi 0, %s57
      %s61 = sphi 0, %s60
      %s77 = sphi 0, %s61
      %s83 = sphi 0, %s85
      %s86 = sphi 0, %s83
      %s87 = sphi 0, %s86
      %s103 = sphi 0, %s87
      %s109 = sphi 0, %s111
      %s112 = sphi 0, %s109
      %s113 = sphi 0, %s112
      %s129 = sphi 0, %s113
      %s133 = sphi 0, %s133
      %s135 = sphi 0, %s133
      %s136 = sphi 0, %s135
      %s150 = sphi 0, %s136
      %s154 = sphi 0, %s154
      %s156 = sphi 0, %s154
      %s157 = sphi 0, %s156
      %s171 = sphi 0, %s157
      %s175 = sphi 0, %s175
      %s177 = sphi 0, %s175
      %s178 = sphi 0, %s177
      %s192 = sphi 0, %s178
      %s196 = sphi 0, %s196
      %s198 = sphi 0, %s196
      %s199 = sphi 0, %s198
      %s213 = sphi 0, %s199
      %s217 = sphi 0, %s217
      %s219 = sphi 0, %s217
      %s220 = sphi 0, %s219
      %s234 = sphi 0, %s220
      %s238 = sphi 0, %s238
      %s240 = sphi 0, %s238
      %s241 = sphi 0, %s240
      %s255 = sphi 0, %s241
    $region4: #{age_net_forward.1} parent=1 // loop_header_branch
      %29 = sbr.rel (%p27) target = $region8
    $region5: #{age_net_forward.1} parent=1 // loop_body
      %s31 = ssub.s32 %s26, 1
      %s32 = ssub.s32 %s26, 2
      %s33 = sadd.s32 %s26, 1
      %s35 = sadd.s32 %s34, 1
      %p38 = scmp.eq.s32.totalorder %s26, 1
      %p39 = scmp.ne.s32.totalorder %s34, %s36
      %p40 = scmp.eq.s32.totalorder %s26, 0
      %p41 = por %p39, %p40
      %p42 = scmp.ne.s32.totalorder %s34, %s36
      %p43 = scmp.eq.s32.totalorder %s31, 1
      %p44 = por %p42, %p43
      %p45 = scmp.ne.s32.totalorder %s36, %s37
      %p46 = scmp.eq.s32.totalorder %s31, 0
      %p47 = por %p45, %p46
      %p48 = scmp.ne.s32.totalorder %s36, %s37
      %p49 = scmp.eq.s32.totalorder %s32, 1
      %p50 = por %p48, %p49
      %p52 = scmp.ne.s32.totalorder %s37, %s51
      %p53 = scmp.eq.s32.totalorder %s32, 0
      %p54 = por %p52, %p53
      %s55 = ssub.s32 %s26, %s33
      %p56 = scmp.eq.s32.totalorder %s55, 0
      %s58 = sadd.s32 %s57, 1
      %s59 = scalar_select %p56, %s57, %s58
      %p62 = pneg %p56
      %p63 = scmp.eq.s32.totalorder %s26, 1
      %p64 = por %p62, %p63
      %p65 = scmp.ne.s32.totalorder %s57, %s60
      %p66 = scmp.eq.s32.totalorder %s26, 0
      %p67 = por %p65, %p66
      %p68 = scmp.ne.s32.totalorder %s57, %s60
      %p69 = scmp.eq.s32.totalorder %s31, 1
      %p70 = por %p68, %p69
      %p71 = scmp.ne.s32.totalorder %s60, %s61
      %p72 = scmp.eq.s32.totalorder %s31, 0
      %p73 = por %p71, %p72
      %p74 = scmp.ne.s32.totalorder %s60, %s61
      %p75 = scmp.eq.s32.totalorder %s32, 1
      %p76 = por %p74, %p75
      %p78 = scmp.ne.s32.totalorder %s61, %s77
      %p79 = scmp.eq.s32.totalorder %s32, 0
      %p80 = por %p78, %p79
      %s81 = ssub.s32 %s26, %s33
      %p82 = scmp.eq.s32.totalorder %s81, 0
      %s84 = sadd.s32 %s83, 1
      %s85 = scalar_select %p82, %s83, %s84
      %p88 = pneg %p82
      %p89 = scmp.eq.s32.totalorder %s26, 1
      %p90 = por %p88, %p89
      %p91 = scmp.ne.s32.totalorder %s83, %s86
      %p92 = scmp.eq.s32.totalorder %s26, 0
      %p93 = por %p91, %p92
      %p94 = scmp.ne.s32.totalorder %s83, %s86
      %p95 = scmp.eq.s32.totalorder %s31, 1
      %p96 = por %p94, %p95
      %p97 = scmp.ne.s32.totalorder %s86, %s87
      %p98 = scmp.eq.s32.totalorder %s31, 0
      %p99 = por %p97, %p98
      %p100 = scmp.ne.s32.totalorder %s86, %s87
      %p101 = scmp.eq.s32.totalorder %s32, 1
      %p102 = por %p100, %p101
      %p104 = scmp.ne.s32.totalorder %s87, %s103
      %p105 = scmp.eq.s32.totalorder %s32, 0
      %p106 = por %p104, %p105
      %s107 = ssub.s32 %s26, %s33
      %p108 = scmp.eq.s32.totalorder %s107, 0
      %s110 = sadd.s32 %s109, 1
      %s111 = scalar_select %p108, %s109, %s110
      %p114 = pneg %p108
      %p115 = scmp.eq.s32.totalorder %s26, 1
      %p116 = por %p114, %p115
      %p117 = scmp.ne.s32.totalorder %s109, %s112
      %p118 = scmp.eq.s32.totalorder %s26, 0
      %p119 = por %p117, %p118
      %p120 = scmp.ne.s32.totalorder %s109, %s112
      %p121 = scmp.eq.s32.totalorder %s31, 1
      %p122 = por %p120, %p121
      %p123 = scmp.ne.s32.totalorder %s112, %s113
      %p124 = scmp.eq.s32.totalorder %s31, 0
      %p125 = por %p123, %p124
      %p126 = scmp.ne.s32.totalorder %s112, %s113
      %p127 = scmp.eq.s32.totalorder %s32, 1
      %p128 = por %p126, %p127
      %p130 = scmp.ne.s32.totalorder %s113, %s129
      %p131 = scmp.eq.s32.totalorder %s32, 0
      %p132 = por %p130, %p131
      %s134 = sadd.s32 %s133, 1
      %p137 = scmp.eq.s32.totalorder %s26, 1
      %p138 = scmp.ne.s32.totalorder %s133, %s135
      %p139 = scmp.eq.s32.totalorder %s26, 0
      %p140 = por %p138, %p139
      %p141 = scmp.ne.s32.totalorder %s133, %s135
      %p142 = scmp.eq.s32.totalorder %s31, 1
      %p143 = por %p141, %p142
      %p144 = scmp.ne.s32.totalorder %s135, %s136
      %p145 = scmp.eq.s32.totalorder %s31, 0
      %p146 = por %p144, %p145
      %p147 = scmp.ne.s32.totalorder %s135, %s136
      %p148 = scmp.eq.s32.totalorder %s32, 1
      %p149 = por %p147, %p148
      %p151 = scmp.ne.s32.totalorder %s136, %s150
      %p152 = scmp.eq.s32.totalorder %s32, 0
      %p153 = por %p151, %p152
      %s155 = sadd.s32 %s154, 1
      %p158 = scmp.eq.s32.totalorder %s26, 1
      %p159 = scmp.ne.s32.totalorder %s154, %s156
      %p160 = scmp.eq.s32.totalorder %s26, 0
      %p161 = por %p159, %p160
      %p162 = scmp.ne.s32.totalorder %s154, %s156
      %p163 = scmp.eq.s32.totalorder %s31, 1
      %p164 = por %p162, %p163
      %p165 = scmp.ne.s32.totalorder %s156, %s157
      %p166 = scmp.eq.s32.totalorder %s31, 0
      %p167 = por %p165, %p166
      %p168 = scmp.ne.s32.totalorder %s156, %s157
      %p169 = scmp.eq.s32.totalorder %s32, 1
      %p170 = por %p168, %p169
      %p172 = scmp.ne.s32.totalorder %s157, %s171
      %p173 = scmp.eq.s32.totalorder %s32, 0
      %p174 = por %p172, %p173
      %s176 = sadd.s32 %s175, 1
      %p179 = scmp.eq.s32.totalorder %s26, 1
      %p180 = scmp.ne.s32.totalorder %s175, %s177
      %p181 = scmp.eq.s32.totalorder %s26, 0
      %p182 = por %p180, %p181
      %p183 = scmp.ne.s32.totalorder %s175, %s177
      %p184 = scmp.eq.s32.totalorder %s31, 1
      %p185 = por %p183, %p184
      %p186 = scmp.ne.s32.totalorder %s177, %s178
      %p187 = scmp.eq.s32.totalorder %s31, 0
      %p188 = por %p186, %p187
      %p189 = scmp.ne.s32.totalorder %s177, %s178
      %p190 = scmp.eq.s32.totalorder %s32, 1
      %p191 = por %p189, %p190
      %p193 = scmp.ne.s32.totalorder %s178, %s192
      %p194 = scmp.eq.s32.totalorder %s32, 0
      %p195 = por %p193, %p194
      %s197 = sadd.s32 %s196, 1
      %p200 = scmp.eq.s32.totalorder %s26, 1
      %p201 = scmp.ne.s32.totalorder %s196, %s198
      %p202 = scmp.eq.s32.totalorder %s26, 0
      %p203 = por %p201, %p202
      %p204 = scmp.ne.s32.totalorder %s196, %s198
      %p205 = scmp.eq.s32.totalorder %s31, 1
      %p206 = por %p204, %p205
      %p207 = scmp.ne.s32.totalorder %s198, %s199
      %p208 = scmp.eq.s32.totalorder %s31, 0
      %p209 = por %p207, %p208
      %p210 = scmp.ne.s32.totalorder %s198, %s199
      %p211 = scmp.eq.s32.totalorder %s32, 1
      %p212 = por %p210, %p211
      %p214 = scmp.ne.s32.totalorder %s199, %s213
      %p215 = scmp.eq.s32.totalorder %s32, 0
      %p216 = por %p214, %p215
      %s218 = sadd.s32 %s217, 1
      %p221 = scmp.eq.s32.totalorder %s26, 1
      %p222 = scmp.ne.s32.totalorder %s217, %s219
      %p223 = scmp.eq.s32.totalorder %s26, 0
      %p224 = por %p222, %p223
      %p225 = scmp.ne.s32.totalorder %s217, %s219
      %p226 = scmp.eq.s32.totalorder %s31, 1
      %p227 = por %p225, %p226
      %p228 = scmp.ne.s32.totalorder %s219, %s220
      %p229 = scmp.eq.s32.totalorder %s31, 0
      %p230 = por %p228, %p229
      %p231 = scmp.ne.s32.totalorder %s219, %s220
      %p232 = scmp.eq.s32.totalorder %s32, 1
      %p233 = por %p231, %p232
      %p235 = scmp.ne.s32.totalorder %s220, %s234
      %p236 = scmp.eq.s32.totalorder %s32, 0
      %p237 = por %p235, %p236
      %s239 = sadd.s32 %s238, 1
      %p242 = scmp.eq.s32.totalorder %s26, 1
      %p243 = scmp.ne.s32.totalorder %s238, %s240
      %p244 = scmp.eq.s32.totalorder %s26, 0
      %p245 = por %p243, %p244
      %p246 = scmp.ne.s32.totalorder %s238, %s240
      %p247 = scmp.eq.s32.totalorder %s31, 1
      %p248 = por %p246, %p247
      %p249 = scmp.ne.s32.totalorder %s240, %s241
      %p250 = scmp.eq.s32.totalorder %s31, 0
      %p251 = por %p249, %p250
      %p252 = scmp.ne.s32.totalorder %s240, %s241
      %p253 = scmp.eq.s32.totalorder %s32, 1
      %p254 = por %p252, %p253
      %p256 = scmp.ne.s32.totalorder %s241, %s255
      %p257 = scmp.eq.s32.totalorder %s32, 0
      %p258 = por %p256, %p257
      %p259 = scmp.le.s32.totalorder 1, %s26
      %p260 = scmp.lt.s32.totalorder %s26, 3
      %p261 = pnand %p259, %p260
      %p262 = pneg %p261
      // Predicated region
      $region9: #{age_net_forward.1} parent=5 // pred_check
        _
      $region10: #{age_net_forward.1} parent=5 // pred_check_branch
        %264 = sbr.rel (%p261) target = $region12
      $region11: #{age_net_forward.1} parent=5 // pred_region
        %s265 = ssub.s32 %s26, 1
        // Predicated region
        $region13: #{age_net_forward.1} parent=11 // pred_check
          %p266 = pneg %p47
        $region14: #{age_net_forward.1} parent=11 // pred_check_branch
          %268 = sbr.rel (%p266) target = $region16
        $region15: #{age_net_forward.1} parent=11 // pred_region
          %s270 = ssub.s32 1024, 1024
          %271 = vsyncadd [#allocation5], %s270
          %s273 = sshll.u32 [#allocation4], 4
          %s274 = int_to_ptr.vmem [resolvable:$true] %s273
          %276 = dma.hbm_to_vmem [thread:$0]  %s0, 1024, %s274, [#allocation5]
        $region16: #{age_net_forward.1} parent=11 // pred_fallthru
          _
        // Predicated region
        $region17: #{age_net_forward.1} parent=11 // pred_check
          %p277 = pneg %p146
        $region18: #{age_net_forward.1} parent=11 // pred_check_branch
          %279 = sbr.rel (%p277) target = $region20
        $region19: #{age_net_forward.1} parent=11 // pred_region
          %s281 = ssub.s32 128, 128
          %282 = vsyncadd [#allocation10], %s281
          %s284 = sshll.u32 [#allocation11], 4
          %s285 = int_to_ptr.vmem [resolvable:$true] %s284
          %287 = dma.hbm_to_vmem [thread:$0]  %s4, 128, %s285, [#allocation10]
        $region20: #{age_net_forward.1} parent=11 // pred_fallthru
          _
        // Predicated region
        $region21: #{age_net_forward.1} parent=11 // pred_check
          %p288 = pneg %p167
        $region22: #{age_net_forward.1} parent=11 // pred_check_branch
          %290 = sbr.rel (%p288) target = $region24
        $region23: #{age_net_forward.1} parent=11 // pred_region
          %s292 = ssub.s32 32768, 32768
          %293 = vsyncadd [#allocation13], %s292
          %s294 = sshll.u32 [#allocation12], 4
          %s295 = int_to_ptr.vmem [resolvable:$true] %s294
          %300 = dma.hbm_to_vmem [thread:$0]  %s5, 32768, %s295, [#allocation13], 256, 256, 16
        $region24: #{age_net_forward.1} parent=11 // pred_fallthru
          _
        // Predicated region
        $region25: #{age_net_forward.1} parent=11 // pred_check
          %p301 = pneg %p188
        $region26: #{age_net_forward.1} parent=11 // pred_check_branch
          %303 = sbr.rel (%p301) target = $region28
        $region27: #{age_net_forward.1} parent=11 // pred_region
          %s305 = ssub.s32 64, 64
          %306 = vsyncadd [#allocation13], %s305
          %s308 = sshll.u32 [#allocation14], 4
          %s309 = int_to_ptr.vmem [resolvable:$true] %s308
          %311 = dma.hbm_to_vmem [thread:$0]  %s6, 64, %s309, [#allocation13]
        $region28: #{age_net_forward.1} parent=11 // pred_fallthru
          _
        // Predicated region
        $region29: #{age_net_forward.1} parent=11 // pred_check
          %p312 = pneg %p209
        $region30: #{age_net_forward.1} parent=11 // pred_check_branch
          %314 = sbr.rel (%p312) target = $region32
        $region31: #{age_net_forward.1} parent=11 // pred_region
          %s316 = ssub.s32 64, 64
          %317 = vsyncadd [#allocation16], %s316
          %s319 = sshll.u32 [#allocation15], 4
          %s320 = int_to_ptr.vmem [resolvable:$true] %s319
          %322 = dma.hbm_to_vmem [thread:$0]  %s7, 64, %s320, [#allocation16]
        $region32: #{age_net_forward.1} parent=11 // pred_fallthru
          _
        // Predicated region
        $region33: #{age_net_forward.1} parent=11 // pred_check
          %p323 = pneg %p230
        $region34: #{age_net_forward.1} parent=11 // pred_check_branch
          %325 = sbr.rel (%p323) target = $region36
        $region35: #{age_net_forward.1} parent=11 // pred_region
          _
        $region36: #{age_net_forward.1} parent=11 // pred_fallthru
          _
      $region12: #{age_net_forward.1} parent=5 // pred_fallthru
        _
      %p326 = scmp.lt.s32.totalorder %s26, 2
      // Predicated region
      $region37: #{age_net_forward.1} parent=5 // pred_check
        %p327 = pneg %p326
      $region38: #{age_net_forward.1} parent=5 // pred_check_branch
        %329 = sbr.rel (%p327) target = $region40
      $region39: #{age_net_forward.1} parent=5 // pred_region
        // Predicated region
        $region41: #{age_net_forward.1} parent=39 // pred_check
          %p330 = pneg %p67
        $region42: #{age_net_forward.1} parent=39 // pred_check_branch
          %332 = sbr.rel (%p330) target = $region44
        $region43: #{age_net_forward.1} parent=39 // pred_region
          %s333 = sand.u32 %s26, 1
          %s334 = scalar_lea.sflag [#allocation7], %s333
          %s335 = sand.u32 %s57, 1
          %s336 = smul.addr %s335, 3840
          %s337 = scalar_lea.vmem [#allocation6], %s336
          %s338 = smul.u32 8, %s26
          %s340 = ssub.s32 61440, 61440
          %341 = vsyncadd %s334, %s340
          %s342 = smul.addr %s338, 64
          %s343 = scalar_lea.hbm %s1, %s342
          %s344 = sshll.u32 %s337, 4
          %s345 = int_to_ptr.vmem [resolvable:$true] %s344
          %350 = dma.hbm_to_vmem [thread:$0]  %s343, 61440, %s345, %s334, 1024, 512, 32
        $region44: #{age_net_forward.1} parent=39 // pred_fallthru
          _
        // Predicated region
        $region45: #{age_net_forward.1} parent=39 // pred_check
          %p351 = pneg %p93
        $region46: #{age_net_forward.1} parent=39 // pred_check_branch
          %353 = sbr.rel (%p351) target = $region48
        $region47: #{age_net_forward.1} parent=39 // pred_region
          %s354 = sand.u32 %s26, 1
          %s355 = scalar_lea.sflag [#allocation7], %s354
          %s356 = sand.u32 %s83, 1
          %s357 = smul.addr %s356, 8
          %s358 = scalar_lea.vmem [#allocation8], %s357
          %s359 = smul.u32 8, %s26
          %s361 = ssub.s32 128, 128
          %362 = vsyncadd %s355, %s361
          %s363 = smul.addr %s359, 16
          %s364 = scalar_lea.hbm %s2, %s363
          %s366 = sshll.u32 %s358, 4
          %s367 = int_to_ptr.vmem [resolvable:$true] %s366
          %369 = dma.hbm_to_vmem [thread:$0]  %s364, 128, %s367, %s355
        $region48: #{age_net_forward.1} parent=39 // pred_fallthru
          _
        // Predicated region
        $region49: #{age_net_forward.1} parent=39 // pred_check
          %p370 = pneg %p119
        $region50: #{age_net_forward.1} parent=39 // pred_check_branch
          %372 = sbr.rel (%p370) target = $region52
        $region51: #{age_net_forward.1} parent=39 // pred_region
          %s373 = sand.u32 %s26, 1
          %s374 = scalar_lea.sflag [#allocation10], %s373
          %s375 = sand.u32 %s109, 1
          %s376 = smul.addr %s375, 4096
          %s377 = scalar_lea.vmem [#allocation9], %s376
          %s378 = smul.u32 128, %s26
          %s380 = ssub.s32 65536, 65536
          %381 = vsyncadd %s374, %s380
          %s382 = smul.addr %s378, 8
          %s383 = smul.addr %s382, 64
          %s384 = scalar_lea.hbm %s3, %s383
          %s385 = sshll.u32 %s377, 4
          %s386 = int_to_ptr.vmem [resolvable:$true] %s385
          %391 = dma.hbm_to_vmem [thread:$0]  %s384, 65536, %s386, %s374, 512, 512, 32
        $region52: #{age_net_forward.1} parent=39 // pred_fallthru
          _
      $region40: #{age_net_forward.1} parent=5 // pred_fallthru
        _
      %p392 = scmp.le.s32.totalorder 1, %s26
      %p393 = scmp.lt.s32.totalorder %s26, 3
      %p394 = pnand %p392, %p393
      %p395 = pneg %p394
      // Predicated region
      $region53: #{age_net_forward.1} parent=5 // pred_check
        _
      $region54: #{age_net_forward.1} parent=5 // pred_check_branch
        %397 = sbr.rel (%p394) target = $region56
      $region55: #{age_net_forward.1} parent=5 // pred_region
        %s398 = ssub.s32 %s26, 1
        // Predicated region
        $region57: #{age_net_forward.1} parent=55 // pred_check
          %p399 = pneg %p47
        $region58: #{age_net_forward.1} parent=55 // pred_check_branch
          %401 = sbr.rel (%p399) target = $region60
        $region59: #{age_net_forward.1} parent=55 // pred_region
          %402 = dma.done [#allocation5], 1024
        $region60: #{age_net_forward.1} parent=55 // pred_fallthru
          _
        %s403 = sand.u32 %s31, 1
        %s404 = scalar_lea.sflag [#allocation7], %s403
        %s405 = sand.u32 %s60, 1
        %s406 = smul.addr %s405, 3840
        %s407 = scalar_lea.vmem [#allocation6], %s406
        // Predicated region
        $region61: #{age_net_forward.1} parent=55 // pred_check
          %p408 = pneg %p73
        $region62: #{age_net_forward.1} parent=55 // pred_check_branch
          %410 = sbr.rel (%p408) target = $region64
        $region63: #{age_net_forward.1} parent=55 // pred_region
          %411 = dma.done %s404, 61440
        $region64: #{age_net_forward.1} parent=55 // pred_fallthru
          _
        %s412 = sand.u32 %s31, 1
        %s413 = scalar_lea.sflag [#allocation7], %s412
        %s414 = sand.u32 %s86, 1
        %s415 = smul.addr %s414, 8
        %s416 = scalar_lea.vmem [#allocation8], %s415
        // Predicated region
        $region65: #{age_net_forward.1} parent=55 // pred_check
          %p417 = pneg %p99
        $region66: #{age_net_forward.1} parent=55 // pred_check_branch
          %419 = sbr.rel (%p417) target = $region68
        $region67: #{age_net_forward.1} parent=55 // pred_region
          %420 = dma.done %s413, 128
        $region68: #{age_net_forward.1} parent=55 // pred_fallthru
          _
        %s421 = sand.u32 %s31, 1
        %s422 = scalar_lea.sflag [#allocation10], %s421
        %s423 = sand.u32 %s112, 1
        %s424 = smul.addr %s423, 4096
        %s425 = scalar_lea.vmem [#allocation9], %s424
        // Predicated region
        $region69: #{age_net_forward.1} parent=55 // pred_check
          %p426 = pneg %p125
        $region70: #{age_net_forward.1} parent=55 // pred_check_branch
          %428 = sbr.rel (%p426) target = $region72
        $region71: #{age_net_forward.1} parent=55 // pred_region
          %429 = dma.done %s422, 65536
        $region72: #{age_net_forward.1} parent=55 // pred_fallthru
          _
        // Predicated region
        $region73: #{age_net_forward.1} parent=55 // pred_check
          %p430 = pneg %p146
        $region74: #{age_net_forward.1} parent=55 // pred_check_branch
          %432 = sbr.rel (%p430) target = $region76
        $region75: #{age_net_forward.1} parent=55 // pred_region
          %433 = dma.done [#allocation10], 128
        $region76: #{age_net_forward.1} parent=55 // pred_fallthru
          _
        // Predicated region
        $region77: #{age_net_forward.1} parent=55 // pred_check
          %p434 = pneg %p167
        $region78: #{age_net_forward.1} parent=55 // pred_check_branch
          %436 = sbr.rel (%p434) target = $region80
        $region79: #{age_net_forward.1} parent=55 // pred_region
          %437 = dma.done [#allocation13], 32768
        $region80: #{age_net_forward.1} parent=55 // pred_fallthru
          _
        // Predicated region
        $region81: #{age_net_forward.1} parent=55 // pred_check
          %p438 = pneg %p188
        $region82: #{age_net_forward.1} parent=55 // pred_check_branch
          %440 = sbr.rel (%p438) target = $region84
        $region83: #{age_net_forward.1} parent=55 // pred_region
          %441 = dma.done [#allocation13], 64
        $region84: #{age_net_forward.1} parent=55 // pred_fallthru
          _
        // Predicated region
        $region85: #{age_net_forward.1} parent=55 // pred_check
          %p442 = pneg %p209
        $region86: #{age_net_forward.1} parent=55 // pred_check_branch
          %444 = sbr.rel (%p442) target = $region88
        $region87: #{age_net_forward.1} parent=55 // pred_region
          %445 = dma.done [#allocation16], 64
        $region88: #{age_net_forward.1} parent=55 // pred_fallthru
          _
        %p446 = pneg %p47
        %p447 = pneg %p44
        %s448 = sand.u32 %s31, 1
        %s449 = scalar_lea.sflag [#allocation7], %s448
        %s450 = sand.u32 %s60, 1
        %s451 = smul.addr %s450, 3840
        %s452 = scalar_lea.vmem [#allocation6], %s451
        %p453 = pneg %p73
        %p454 = pneg %p70
        %s455 = sand.u32 %s31, 1
        %s456 = scalar_lea.sflag [#allocation7], %s455
        %s457 = sand.u32 %s86, 1
        %s458 = smul.addr %s457, 8
        %s459 = scalar_lea.vmem [#allocation8], %s458
        %p460 = pneg %p99
        %p461 = pneg %p96
        %s462 = sand.u32 %s31, 1
        %s463 = scalar_lea.sflag [#allocation10], %s462
        %s464 = sand.u32 %s112, 1
        %s465 = smul.addr %s464, 4096
        %s466 = scalar_lea.vmem [#allocation9], %s465
        %p467 = pneg %p125
        %p468 = pneg %p122
        %p469 = pneg %p146
        %p470 = pneg %p143
        %p471 = pneg %p167
        %p472 = pneg %p164
        %p473 = pneg %p188
        %p474 = pneg %p185
        %p475 = pneg %p209
        %p476 = pneg %p206
        %p477 = pneg %p230
        %p478 = pneg %p227
        %p479 = pneg %p251
        %p480 = pneg %p248
        %s481 = smul.u32 8, %s31
        %s482 = smul.u32 8, %s31
        %s483 = smul.u32 128, %s31
        %p485 = scmp.eq.s32.totalorder %s31, 0
        // Predicated region
        $region89: #{age_net_forward.1} parent=55 // pred_check
          %p486 = pneg %p485
        $region90: #{age_net_forward.1} parent=55 // pred_check_branch
          %488 = sbr.rel (%p486) target = $region92
        $region91: #{age_net_forward.1} parent=55 // pred_region
          %489 = vst [vmem:[#allocation2] sm:$0xff] 0.0
          %490 = vst [vmem:[#allocation2 + $0x8] sm:$0xff] 0.0
          %491 = vst [vmem:[#allocation2 + $0x10] sm:$0xff] 0.0
          %492 = vst [vmem:[#allocation2 + $0x18] sm:$0xff] 0.0
          %493 = vst [vmem:[#allocation2 + $0x20] sm:$0xff] 0.0
          %494 = vst [vmem:[#allocation2 + $0x28] sm:$0xff] 0.0
          %495 = vst [vmem:[#allocation2 + $0x30] sm:$0xff] 0.0
          %496 = vst [vmem:[#allocation2 + $0x38] sm:$0xff] 0.0
        $region92: #{age_net_forward.1} parent=55 // pred_fallthru
          _
        %v497 = vld [vmem:[#allocation4] sm:$0xff]
        %v498 = vld [vmem:[#allocation4 + $0x8] sm:$0xff]
        %v499 = vld [vmem:[#allocation4 + $0x10] sm:$0xff]
        %v500 = vld [vmem:[#allocation4 + $0x18] sm:$0xff]
        %v501 = vld [vmem:[#allocation4 + $0x20] sm:$0xff]
        %v502 = vld [vmem:[#allocation4 + $0x28] sm:$0xff]
        %v503 = vld [vmem:[#allocation4 + $0x30] sm:$0xff]
        %v504 = vld [vmem:[#allocation4 + $0x38] sm:$0xff]
        %v505 = vpack.c.bf16 %v497, %v497
        %v506 = vpack.c.bf16 %v498, %v498
        %v507 = vpack.c.bf16 %v499, %v499
        %v508 = vpack.c.bf16 %v500, %v500
        %v509 = vpack.c.bf16 %v501, %v501
        %v510 = vpack.c.bf16 %v502, %v502
        %v511 = vpack.c.bf16 %v503, %v503
        %v512 = vpack.c.bf16 %v504, %v504
        %v513 = vld [vmem:[%s407] sm:$0xff]
        %v514 = vld [vmem:[%s407 + $0x8] sm:$0xff]
        %v515 = vld [vmem:[%s407 + $0x10] sm:$0xff]
        %v516 = vld [vmem:[%s407 + $0x18] sm:$0xff]
        %v517 = vld [vmem:[%s407 + $0x20] sm:$0xff]
        %v518 = vld [vmem:[%s407 + $0x28] sm:$0xff]
        %v519 = vld [vmem:[%s407 + $0x30] sm:$0xff]
        %v520 = vld [vmem:[%s407 + $0x38] sm:$0xff]
        %v521 = vld [vmem:[%s407 + $0x40] sm:$0xff]
        %v522 = vld [vmem:[%s407 + $0x48] sm:$0xff]
        %v523 = vld [vmem:[%s407 + $0x50] sm:$0xff]
        %v524 = vld [vmem:[%s407 + $0x58] sm:$0xff]
        %v525 = vld [vmem:[%s407 + $0x60] sm:$0xff]
        %v526 = vld [vmem:[%s407 + $0x68] sm:$0xff]
        %v527 = vld [vmem:[%s407 + $0x70] sm:$0xff]
        %v528 = vld [vmem:[%s407 + $0x78] sm:$0xff]
        %v529 = vld [vmem:[%s407 + $0x80] sm:$0xff]
        %v530 = vld [vmem:[%s407 + $0x88] sm:$0xff]
        %v531 = vld [vmem:[%s407 + $0x90] sm:$0xff]
        %v532 = vld [vmem:[%s407 + $0x98] sm:$0xff]
        %v533 = vld [vmem:[%s407 + $0xa0] sm:$0xff]
        %v534 = vld [vmem:[%s407 + $0xa8] sm:$0xff]
        %v535 = vld [vmem:[%s407 + $0xb0] sm:$0xff]
        %v536 = vld [vmem:[%s407 + $0xb8] sm:$0xff]
        %v537 = vld [vmem:[%s407 + $0xc0] sm:$0xff]
        %v538 = vld [vmem:[%s407 + $0xc8] sm:$0xff]
        %v539 = vld [vmem:[%s407 + $0xd0] sm:$0xff]
        %v540 = vld [vmem:[%s407 + $0xd8] sm:$0xff]
        %v541 = vld [vmem:[%s407 + $0xe0] sm:$0xff]
        %v542 = vld [vmem:[%s407 + $0xe8] sm:$0xff]
        %v543 = vld [vmem:[%s407 + $0xf0] sm:$0xff]
        %v544 = vld [vmem:[%s407 + $0xf8] sm:$0xff]
        %v545 = vld [vmem:[%s407 + $0x100] sm:$0xff]
        %v546 = vld [vmem:[%s407 + $0x108] sm:$0xff]
        %v547 = vld [vmem:[%s407 + $0x110] sm:$0xff]
        %v548 = vld [vmem:[%s407 + $0x118] sm:$0xff]
        %v549 = vld [vmem:[%s407 + $0x120] sm:$0xff]
        %v550 = vld [vmem:[%s407 + $0x128] sm:$0xff]
        %v551 = vld [vmem:[%s407 + $0x130] sm:$0xff]
        %v552 = vld [vmem:[%s407 + $0x138] sm:$0xff]
        %v553 = vld [vmem:[%s407 + $0x140] sm:$0xff]
        %v554 = vld [vmem:[%s407 + $0x148] sm:$0xff]
        %v555 = vld [vmem:[%s407 + $0x150] sm:$0xff]
        %v556 = vld [vmem:[%s407 + $0x158] sm:$0xff]
        %v557 = vld [vmem:[%s407 + $0x160] sm:$0xff]
        %v558 = vld [vmem:[%s407 + $0x168] sm:$0xff]
        %v559 = vld [vmem:[%s407 + $0x170] sm:$0xff]
        %v560 = vld [vmem:[%s407 + $0x178] sm:$0xff]
        %v561 = vld [vmem:[%s407 + $0x180] sm:$0xff]
        %v562 = vld [vmem:[%s407 + $0x188] sm:$0xff]
        %v563 = vld [vmem:[%s407 + $0x190] sm:$0xff]
        %v564 = vld [vmem:[%s407 + $0x198] sm:$0xff]
        %v565 = vld [vmem:[%s407 + $0x1a0] sm:$0xff]
        %v566 = vld [vmem:[%s407 + $0x1a8] sm:$0xff]
        %v567 = vld [vmem:[%s407 + $0x1b0] sm:$0xff]
        %v568 = vld [vmem:[%s407 + $0x1b8] sm:$0xff]
        %v569 = vld [vmem:[%s407 + $0x1c0] sm:$0xff]
        %v570 = vld [vmem:[%s407 + $0x1c8] sm:$0xff]
        %v571 = vld [vmem:[%s407 + $0x1d0] sm:$0xff]
        %v572 = vld [vmem:[%s407 + $0x1d8] sm:$0xff]
        %v573 = vld [vmem:[%s407 + $0x1e0] sm:$0xff]
        %v574 = vld [vmem:[%s407 + $0x1e8] sm:$0xff]
        %v575 = vld [vmem:[%s407 + $0x1f0] sm:$0xff]
        %v576 = vld [vmem:[%s407 + $0x1f8] sm:$0xff]
        %v577 = vld [vmem:[%s407 + $0x200] sm:$0xff]
        %v578 = vld [vmem:[%s407 + $0x208] sm:$0xff]
        %v579 = vld [vmem:[%s407 + $0x210] sm:$0xff]
        %v580 = vld [vmem:[%s407 + $0x218] sm:$0xff]
        %v581 = vld [vmem:[%s407 + $0x220] sm:$0xff]
        %v582 = vld [vmem:[%s407 + $0x228] sm:$0xff]
        %v583 = vld [vmem:[%s407 + $0x230] sm:$0xff]
        %v584 = vld [vmem:[%s407 + $0x238] sm:$0xff]
        %v585 = vld [vmem:[%s407 + $0x240] sm:$0xff]
        %v586 = vld [vmem:[%s407 + $0x248] sm:$0xff]
        %v587 = vld [vmem:[%s407 + $0x250] sm:$0xff]
        %v588 = vld [vmem:[%s407 + $0x258] sm:$0xff]
        %v589 = vld [vmem:[%s407 + $0x260] sm:$0xff]
        %v590 = vld [vmem:[%s407 + $0x268] sm:$0xff]
        %v591 = vld [vmem:[%s407 + $0x270] sm:$0xff]
        %v592 = vld [vmem:[%s407 + $0x278] sm:$0xff]
        %v593 = vld [vmem:[%s407 + $0x280] sm:$0xff]
        %v594 = vld [vmem:[%s407 + $0x288] sm:$0xff]
        %v595 = vld [vmem:[%s407 + $0x290] sm:$0xff]
        %v596 = vld [vmem:[%s407 + $0x298] sm:$0xff]
        %v597 = vld [vmem:[%s407 + $0x2a0] sm:$0xff]
        %v598 = vld [vmem:[%s407 + $0x2a8] sm:$0xff]
        %v599 = vld [vmem:[%s407 + $0x2b0] sm:$0xff]
        %v600 = vld [vmem:[%s407 + $0x2b8] sm:$0xff]
        %v601 = vld [vmem:[%s407 + $0x2c0] sm:$0xff]
        %v602 = vld [vmem:[%s407 + $0x2c8] sm:$0xff]
        %v603 = vld [vmem:[%s407 + $0x2d0] sm:$0xff]
        %v604 = vld [vmem:[%s407 + $0x2d8] sm:$0xff]
        %v605 = vld [vmem:[%s407 + $0x2e0] sm:$0xff]
        %v606 = vld [vmem:[%s407 + $0x2e8] sm:$0xff]
        %v607 = vld [vmem:[%s407 + $0x2f0] sm:$0xff]
        %v608 = vld [vmem:[%s407 + $0x2f8] sm:$0xff]
        %v609 = vld [vmem:[%s407 + $0x300] sm:$0xff]
        %v610 = vld [vmem:[%s407 + $0x308] sm:$0xff]
        %v611 = vld [vmem:[%s407 + $0x310] sm:$0xff]
        %v612 = vld [vmem:[%s407 + $0x318] sm:$0xff]
        %v613 = vld [vmem:[%s407 + $0x320] sm:$0xff]
        %v614 = vld [vmem:[%s407 + $0x328] sm:$0xff]
        %v615 = vld [vmem:[%s407 + $0x330] sm:$0xff]
        %v616 = vld [vmem:[%s407 + $0x338] sm:$0xff]
        %v617 = vld [vmem:[%s407 + $0x340] sm:$0xff]
        %v618 = vld [vmem:[%s407 + $0x348] sm:$0xff]
        %v619 = vld [vmem:[%s407 + $0x350] sm:$0xff]
        %v620 = vld [vmem:[%s407 + $0x358] sm:$0xff]
        %v621 = vld [vmem:[%s407 + $0x360] sm:$0xff]
        %v622 = vld [vmem:[%s407 + $0x368] sm:$0xff]
        %v623 = vld [vmem:[%s407 + $0x370] sm:$0xff]
        %v624 = vld [vmem:[%s407 + $0x378] sm:$0xff]
        %v625 = vld [vmem:[%s407 + $0x380] sm:$0xff]
        %v626 = vld [vmem:[%s407 + $0x388] sm:$0xff]
        %v627 = vld [vmem:[%s407 + $0x390] sm:$0xff]
        %v628 = vld [vmem:[%s407 + $0x398] sm:$0xff]
        %v629 = vld [vmem:[%s407 + $0x3a0] sm:$0xff]
        %v630 = vld [vmem:[%s407 + $0x3a8] sm:$0xff]
        %v631 = vld [vmem:[%s407 + $0x3b0] sm:$0xff]
        %v632 = vld [vmem:[%s407 + $0x3b8] sm:$0xff]
        %v633 = vld [vmem:[%s407 + $0x3c0] sm:$0xff]
        %v634 = vld [vmem:[%s407 + $0x3c8] sm:$0xff]
        %v635 = vld [vmem:[%s407 + $0x3d0] sm:$0xff]
        %v636 = vld [vmem:[%s407 + $0x3d8] sm:$0xff]
        %v637 = vld [vmem:[%s407 + $0x3e0] sm:$0xff]
        %v638 = vld [vmem:[%s407 + $0x3e8] sm:$0xff]
        %v639 = vld [vmem:[%s407 + $0x3f0] sm:$0xff]
        %v640 = vld [vmem:[%s407 + $0x3f8] sm:$0xff]
        %v641 = vld [vmem:[%s407 + $0x400] sm:$0xff]
        %v642 = vld [vmem:[%s407 + $0x408] sm:$0xff]
        %v643 = vld [vmem:[%s407 + $0x410] sm:$0xff]
        %v644 = vld [vmem:[%s407 + $0x418] sm:$0xff]
        %v645 = vld [vmem:[%s407 + $0x420] sm:$0xff]
        %v646 = vld [vmem:[%s407 + $0x428] sm:$0xff]
        %v647 = vld [vmem:[%s407 + $0x430] sm:$0xff]
        %v648 = vld [vmem:[%s407 + $0x438] sm:$0xff]
        %v649 = vld [vmem:[%s407 + $0x440] sm:$0xff]
        %v650 = vld [vmem:[%s407 + $0x448] sm:$0xff]
        %v651 = vld [vmem:[%s407 + $0x450] sm:$0xff]
        %v652 = vld [vmem:[%s407 + $0x458] sm:$0xff]
        %v653 = vld [vmem:[%s407 + $0x460] sm:$0xff]
        %v654 = vld [vmem:[%s407 + $0x468] sm:$0xff]
        %v655 = vld [vmem:[%s407 + $0x470] sm:$0xff]
        %v656 = vld [vmem:[%s407 + $0x478] sm:$0xff]
        %v657 = vld [vmem:[%s407 + $0x480] sm:$0xff]
        %v658 = vld [vmem:[%s407 + $0x488] sm:$0xff]
        %v659 = vld [vmem:[%s407 + $0x490] sm:$0xff]
        %v660 = vld [vmem:[%s407 + $0x498] sm:$0xff]
        %v661 = vld [vmem:[%s407 + $0x4a0] sm:$0xff]
        %v662 = vld [vmem:[%s407 + $0x4a8] sm:$0xff]
        %v663 = vld [vmem:[%s407 + $0x4b0] sm:$0xff]
        %v664 = vld [vmem:[%s407 + $0x4b8] sm:$0xff]
        %v665 = vld [vmem:[%s407 + $0x4c0] sm:$0xff]
        %v666 = vld [vmem:[%s407 + $0x4c8] sm:$0xff]
        %v667 = vld [vmem:[%s407 + $0x4d0] sm:$0xff]
        %v668 = vld [vmem:[%s407 + $0x4d8] sm:$0xff]
        %v669 = vld [vmem:[%s407 + $0x4e0] sm:$0xff]
        %v670 = vld [vmem:[%s407 + $0x4e8] sm:$0xff]
        %v671 = vld [vmem:[%s407 + $0x4f0] sm:$0xff]
        %v672 = vld [vmem:[%s407 + $0x4f8] sm:$0xff]
        %v673 = vld [vmem:[%s407 + $0x500] sm:$0xff]
        %v674 = vld [vmem:[%s407 + $0x508] sm:$0xff]
        %v675 = vld [vmem:[%s407 + $0x510] sm:$0xff]
        %v676 = vld [vmem:[%s407 + $0x518] sm:$0xff]
        %v677 = vld [vmem:[%s407 + $0x520] sm:$0xff]
        %v678 = vld [vmem:[%s407 + $0x528] sm:$0xff]
        %v679 = vld [vmem:[%s407 + $0x530] sm:$0xff]
        %v680 = vld [vmem:[%s407 + $0x538] sm:$0xff]
        %v681 = vld [vmem:[%s407 + $0x540] sm:$0xff]
        %v682 = vld [vmem:[%s407 + $0x548] sm:$0xff]
        %v683 = vld [vmem:[%s407 + $0x550] sm:$0xff]
        %v684 = vld [vmem:[%s407 + $0x558] sm:$0xff]
        %v685 = vld [vmem:[%s407 + $0x560] sm:$0xff]
        %v686 = vld [vmem:[%s407 + $0x568] sm:$0xff]
        %v687 = vld [vmem:[%s407 + $0x570] sm:$0xff]
        %v688 = vld [vmem:[%s407 + $0x578] sm:$0xff]
        %v689 = vld [vmem:[%s407 + $0x580] sm:$0xff]
        %v690 = vld [vmem:[%s407 + $0x588] sm:$0xff]
        %v691 = vld [vmem:[%s407 + $0x590] sm:$0xff]
        %v692 = vld [vmem:[%s407 + $0x598] sm:$0xff]
        %v693 = vld [vmem:[%s407 + $0x5a0] sm:$0xff]
        %v694 = vld [vmem:[%s407 + $0x5a8] sm:$0xff]
        %v695 = vld [vmem:[%s407 + $0x5b0] sm:$0xff]
        %v696 = vld [vmem:[%s407 + $0x5b8] sm:$0xff]
        %v697 = vld [vmem:[%s407 + $0x5c0] sm:$0xff]
        %v698 = vld [vmem:[%s407 + $0x5c8] sm:$0xff]
        %v699 = vld [vmem:[%s407 + $0x5d0] sm:$0xff]
        %v700 = vld [vmem:[%s407 + $0x5d8] sm:$0xff]
        %v701 = vld [vmem:[%s407 + $0x5e0] sm:$0xff]
        %v702 = vld [vmem:[%s407 + $0x5e8] sm:$0xff]
        %v703 = vld [vmem:[%s407 + $0x5f0] sm:$0xff]
        %v704 = vld [vmem:[%s407 + $0x5f8] sm:$0xff]
        %v705 = vld [vmem:[%s407 + $0x600] sm:$0xff]
        %v706 = vld [vmem:[%s407 + $0x608] sm:$0xff]
        %v707 = vld [vmem:[%s407 + $0x610] sm:$0xff]
        %v708 = vld [vmem:[%s407 + $0x618] sm:$0xff]
        %v709 = vld [vmem:[%s407 + $0x620] sm:$0xff]
        %v710 = vld [vmem:[%s407 + $0x628] sm:$0xff]
        %v711 = vld [vmem:[%s407 + $0x630] sm:$0xff]
        %v712 = vld [vmem:[%s407 + $0x638] sm:$0xff]
        %v713 = vld [vmem:[%s407 + $0x640] sm:$0xff]
        %v714 = vld [vmem:[%s407 + $0x648] sm:$0xff]
        %v715 = vld [vmem:[%s407 + $0x650] sm:$0xff]
        %v716 = vld [vmem:[%s407 + $0x658] sm:$0xff]
        %v717 = vld [vmem:[%s407 + $0x660] sm:$0xff]
        %v718 = vld [vmem:[%s407 + $0x668] sm:$0xff]
        %v719 = vld [vmem:[%s407 + $0x670] sm:$0xff]
        %v720 = vld [vmem:[%s407 + $0x678] sm:$0xff]
        %v721 = vld [vmem:[%s407 + $0x680] sm:$0xff]
        %v722 = vld [vmem:[%s407 + $0x688] sm:$0xff]
        %v723 = vld [vmem:[%s407 + $0x690] sm:$0xff]
        %v724 = vld [vmem:[%s407 + $0x698] sm:$0xff]
        %v725 = vld [vmem:[%s407 + $0x6a0] sm:$0xff]
        %v726 = vld [vmem:[%s407 + $0x6a8] sm:$0xff]
        %v727 = vld [vmem:[%s407 + $0x6b0] sm:$0xff]
        %v728 = vld [vmem:[%s407 + $0x6b8] sm:$0xff]
        %v729 = vld [vmem:[%s407 + $0x6c0] sm:$0xff]
        %v730 = vld [vmem:[%s407 + $0x6c8] sm:$0xff]
        %v731 = vld [vmem:[%s407 + $0x6d0] sm:$0xff]
        %v732 = vld [vmem:[%s407 + $0x6d8] sm:$0xff]
        %v733 = vld [vmem:[%s407 + $0x6e0] sm:$0xff]
        %v734 = vld [vmem:[%s407 + $0x6e8] sm:$0xff]
        %v735 = vld [vmem:[%s407 + $0x6f0] sm:$0xff]
        %v736 = vld [vmem:[%s407 + $0x6f8] sm:$0xff]
        %v737 = vld [vmem:[%s407 + $0x700] sm:$0xff]
        %v738 = vld [vmem:[%s407 + $0x708] sm:$0xff]
        %v739 = vld [vmem:[%s407 + $0x710] sm:$0xff]
        %v740 = vld [vmem:[%s407 + $0x718] sm:$0xff]
        %v741 = vld [vmem:[%s407 + $0x720] sm:$0xff]
        %v742 = vld [vmem:[%s407 + $0x728] sm:$0xff]
        %v743 = vld [vmem:[%s407 + $0x730] sm:$0xff]
        %v744 = vld [vmem:[%s407 + $0x738] sm:$0xff]
        %v745 = vld [vmem:[%s407 + $0x740] sm:$0xff]
        %v746 = vld [vmem:[%s407 + $0x748] sm:$0xff]
        %v747 = vld [vmem:[%s407 + $0x750] sm:$0xff]
        %v748 = vld [vmem:[%s407 + $0x758] sm:$0xff]
        %v749 = vld [vmem:[%s407 + $0x760] sm:$0xff]
        %v750 = vld [vmem:[%s407 + $0x768] sm:$0xff]
        %v751 = vld [vmem:[%s407 + $0x770] sm:$0xff]
        %v752 = vld [vmem:[%s407 + $0x778] sm:$0xff]
        %v753 = vld [vmem:[%s407 + $0x780] sm:$0xff]
        %v754 = vld [vmem:[%s407 + $0x788] sm:$0xff]
        %v755 = vld [vmem:[%s407 + $0x790] sm:$0xff]
        %v756 = vld [vmem:[%s407 + $0x798] sm:$0xff]
        %v757 = vld [vmem:[%s407 + $0x7a0] sm:$0xff]
        %v758 = vld [vmem:[%s407 + $0x7a8] sm:$0xff]
        %v759 = vld [vmem:[%s407 + $0x7b0] sm:$0xff]
        %v760 = vld [vmem:[%s407 + $0x7b8] sm:$0xff]
        %v761 = vld [vmem:[%s407 + $0x7c0] sm:$0xff]
        %v762 = vld [vmem:[%s407 + $0x7c8] sm:$0xff]
        %v763 = vld [vmem:[%s407 + $0x7d0] sm:$0xff]
        %v764 = vld [vmem:[%s407 + $0x7d8] sm:$0xff]
        %v765 = vld [vmem:[%s407 + $0x7e0] sm:$0xff]
        %v766 = vld [vmem:[%s407 + $0x7e8] sm:$0xff]
        %v767 = vld [vmem:[%s407 + $0x7f0] sm:$0xff]
        %v768 = vld [vmem:[%s407 + $0x7f8] sm:$0xff]
        %v769 = vld [vmem:[%s407 + $0x800] sm:$0xff]
        %v770 = vld [vmem:[%s407 + $0x808] sm:$0xff]
        %v771 = vld [vmem:[%s407 + $0x810] sm:$0xff]
        %v772 = vld [vmem:[%s407 + $0x818] sm:$0xff]
        %v773 = vld [vmem:[%s407 + $0x820] sm:$0xff]
        %v774 = vld [vmem:[%s407 + $0x828] sm:$0xff]
        %v775 = vld [vmem:[%s407 + $0x830] sm:$0xff]
        %v776 = vld [vmem:[%s407 + $0x838] sm:$0xff]
        %v777 = vld [vmem:[%s407 + $0x840] sm:$0xff]
        %v778 = vld [vmem:[%s407 + $0x848] sm:$0xff]
        %v779 = vld [vmem:[%s407 + $0x850] sm:$0xff]
        %v780 = vld [vmem:[%s407 + $0x858] sm:$0xff]
        %v781 = vld [vmem:[%s407 + $0x860] sm:$0xff]
        %v782 = vld [vmem:[%s407 + $0x868] sm:$0xff]
        %v783 = vld [vmem:[%s407 + $0x870] sm:$0xff]
        %v784 = vld [vmem:[%s407 + $0x878] sm:$0xff]
        %v785 = vld [vmem:[%s407 + $0x880] sm:$0xff]
        %v786 = vld [vmem:[%s407 + $0x888] sm:$0xff]
        %v787 = vld [vmem:[%s407 + $0x890] sm:$0xff]
        %v788 = vld [vmem:[%s407 + $0x898] sm:$0xff]
        %v789 = vld [vmem:[%s407 + $0x8a0] sm:$0xff]
        %v790 = vld [vmem:[%s407 + $0x8a8] sm:$0xff]
        %v791 = vld [vmem:[%s407 + $0x8b0] sm:$0xff]
        %v792 = vld [vmem:[%s407 + $0x8b8] sm:$0xff]
        %v793 = vld [vmem:[%s407 + $0x8c0] sm:$0xff]
        %v794 = vld [vmem:[%s407 + $0x8c8] sm:$0xff]
        %v795 = vld [vmem:[%s407 + $0x8d0] sm:$0xff]
        %v796 = vld [vmem:[%s407 + $0x8d8] sm:$0xff]
        %v797 = vld [vmem:[%s407 + $0x8e0] sm:$0xff]
        %v798 = vld [vmem:[%s407 + $0x8e8] sm:$0xff]
        %v799 = vld [vmem:[%s407 + $0x8f0] sm:$0xff]
        %v800 = vld [vmem:[%s407 + $0x8f8] sm:$0xff]
        %v801 = vld [vmem:[%s407 + $0x900] sm:$0xff]
        %v802 = vld [vmem:[%s407 + $0x908] sm:$0xff]
        %v803 = vld [vmem:[%s407 + $0x910] sm:$0xff]
        %v804 = vld [vmem:[%s407 + $0x918] sm:$0xff]
        %v805 = vld [vmem:[%s407 + $0x920] sm:$0xff]
        %v806 = vld [vmem:[%s407 + $0x928] sm:$0xff]
        %v807 = vld [vmem:[%s407 + $0x930] sm:$0xff]
        %v808 = vld [vmem:[%s407 + $0x938] sm:$0xff]
        %v809 = vld [vmem:[%s407 + $0x940] sm:$0xff]
        %v810 = vld [vmem:[%s407 + $0x948] sm:$0xff]
        %v811 = vld [vmem:[%s407 + $0x950] sm:$0xff]
        %v812 = vld [vmem:[%s407 + $0x958] sm:$0xff]
        %v813 = vld [vmem:[%s407 + $0x960] sm:$0xff]
        %v814 = vld [vmem:[%s407 + $0x968] sm:$0xff]
        %v815 = vld [vmem:[%s407 + $0x970] sm:$0xff]
        %v816 = vld [vmem:[%s407 + $0x978] sm:$0xff]
        %v817 = vld [vmem:[%s407 + $0x980] sm:$0xff]
        %v818 = vld [vmem:[%s407 + $0x988] sm:$0xff]
        %v819 = vld [vmem:[%s407 + $0x990] sm:$0xff]
        %v820 = vld [vmem:[%s407 + $0x998] sm:$0xff]
        %v821 = vld [vmem:[%s407 + $0x9a0] sm:$0xff]
        %v822 = vld [vmem:[%s407 + $0x9a8] sm:$0xff]
        %v823 = vld [vmem:[%s407 + $0x9b0] sm:$0xff]
        %v824 = vld [vmem:[%s407 + $0x9b8] sm:$0xff]
        %v825 = vld [vmem:[%s407 + $0x9c0] sm:$0xff]
        %v826 = vld [vmem:[%s407 + $0x9c8] sm:$0xff]
        %v827 = vld [vmem:[%s407 + $0x9d0] sm:$0xff]
        %v828 = vld [vmem:[%s407 + $0x9d8] sm:$0xff]
        %v829 = vld [vmem:[%s407 + $0x9e0] sm:$0xff]
        %v830 = vld [vmem:[%s407 + $0x9e8] sm:$0xff]
        %v831 = vld [vmem:[%s407 + $0x9f0] sm:$0xff]
        %v832 = vld [vmem:[%s407 + $0x9f8] sm:$0xff]
        %v833 = vld [vmem:[%s407 + $0xa00] sm:$0xff]
        %v834 = vld [vmem:[%s407 + $0xa08] sm:$0xff]
        %v835 = vld [vmem:[%s407 + $0xa10] sm:$0xff]
        %v836 = vld [vmem:[%s407 + $0xa18] sm:$0xff]
        %v837 = vld [vmem:[%s407 + $0xa20] sm:$0xff]
        %v838 = vld [vmem:[%s407 + $0xa28] sm:$0xff]
        %v839 = vld [vmem:[%s407 + $0xa30] sm:$0xff]
        %v840 = vld [vmem:[%s407 + $0xa38] sm:$0xff]
        %v841 = vld [vmem:[%s407 + $0xa40] sm:$0xff]
        %v842 = vld [vmem:[%s407 + $0xa48] sm:$0xff]
        %v843 = vld [vmem:[%s407 + $0xa50] sm:$0xff]
        %v844 = vld [vmem:[%s407 + $0xa58] sm:$0xff]
        %v845 = vld [vmem:[%s407 + $0xa60] sm:$0xff]
        %v846 = vld [vmem:[%s407 + $0xa68] sm:$0xff]
        %v847 = vld [vmem:[%s407 + $0xa70] sm:$0xff]
        %v848 = vld [vmem:[%s407 + $0xa78] sm:$0xff]
        %v849 = vld [vmem:[%s407 + $0xa80] sm:$0xff]
        %v850 = vld [vmem:[%s407 + $0xa88] sm:$0xff]
        %v851 = vld [vmem:[%s407 + $0xa90] sm:$0xff]
        %v852 = vld [vmem:[%s407 + $0xa98] sm:$0xff]
        %v853 = vld [vmem:[%s407 + $0xaa0] sm:$0xff]
        %v854 = vld [vmem:[%s407 + $0xaa8] sm:$0xff]
        %v855 = vld [vmem:[%s407 + $0xab0] sm:$0xff]
        %v856 = vld [vmem:[%s407 + $0xab8] sm:$0xff]
        %v857 = vld [vmem:[%s407 + $0xac0] sm:$0xff]
        %v858 = vld [vmem:[%s407 + $0xac8] sm:$0xff]
        %v859 = vld [vmem:[%s407 + $0xad0] sm:$0xff]
        %v860 = vld [vmem:[%s407 + $0xad8] sm:$0xff]
        %v861 = vld [vmem:[%s407 + $0xae0] sm:$0xff]
        %v862 = vld [vmem:[%s407 + $0xae8] sm:$0xff]
        %v863 = vld [vmem:[%s407 + $0xaf0] sm:$0xff]
        %v864 = vld [vmem:[%s407 + $0xaf8] sm:$0xff]
        %v865 = vld [vmem:[%s407 + $0xb00] sm:$0xff]
        %v866 = vld [vmem:[%s407 + $0xb08] sm:$0xff]
        %v867 = vld [vmem:[%s407 + $0xb10] sm:$0xff]
        %v868 = vld [vmem:[%s407 + $0xb18] sm:$0xff]
        %v869 = vld [vmem:[%s407 + $0xb20] sm:$0xff]
        %v870 = vld [vmem:[%s407 + $0xb28] sm:$0xff]
        %v871 = vld [vmem:[%s407 + $0xb30] sm:$0xff]
        %v872 = vld [vmem:[%s407 + $0xb38] sm:$0xff]
        %v873 = vld [vmem:[%s407 + $0xb40] sm:$0xff]
        %v874 = vld [vmem:[%s407 + $0xb48] sm:$0xff]
        %v875 = vld [vmem:[%s407 + $0xb50] sm:$0xff]
        %v876 = vld [vmem:[%s407 + $0xb58] sm:$0xff]
        %v877 = vld [vmem:[%s407 + $0xb60] sm:$0xff]
        %v878 = vld [vmem:[%s407 + $0xb68] sm:$0xff]
        %v879 = vld [vmem:[%s407 + $0xb70] sm:$0xff]
        %v880 = vld [vmem:[%s407 + $0xb78] sm:$0xff]
        %v881 = vld [vmem:[%s407 + $0xb80] sm:$0xff]
        %v882 = vld [vmem:[%s407 + $0xb88] sm:$0xff]
        %v883 = vld [vmem:[%s407 + $0xb90] sm:$0xff]
        %v884 = vld [vmem:[%s407 + $0xb98] sm:$0xff]
        %v885 = vld [vmem:[%s407 + $0xba0] sm:$0xff]
        %v886 = vld [vmem:[%s407 + $0xba8] sm:$0xff]
        %v887 = vld [vmem:[%s407 + $0xbb0] sm:$0xff]
        %v888 = vld [vmem:[%s407 + $0xbb8] sm:$0xff]
        %v889 = vld [vmem:[%s407 + $0xbc0] sm:$0xff]
        %v890 = vld [vmem:[%s407 + $0xbc8] sm:$0xff]
        %v891 = vld [vmem:[%s407 + $0xbd0] sm:$0xff]
        %v892 = vld [vmem:[%s407 + $0xbd8] sm:$0xff]
        %v893 = vld [vmem:[%s407 + $0xbe0] sm:$0xff]
        %v894 = vld [vmem:[%s407 + $0xbe8] sm:$0xff]
        %v895 = vld [vmem:[%s407 + $0xbf0] sm:$0xff]
        %v896 = vld [vmem:[%s407 + $0xbf8] sm:$0xff]
        %v897 = vld [vmem:[%s407 + $0xc00] sm:$0xff]
        %v898 = vld [vmem:[%s407 + $0xc08] sm:$0xff]
        %v899 = vld [vmem:[%s407 + $0xc10] sm:$0xff]
        %v900 = vld [vmem:[%s407 + $0xc18] sm:$0xff]
        %v901 = vld [vmem:[%s407 + $0xc20] sm:$0xff]
        %v902 = vld [vmem:[%s407 + $0xc28] sm:$0xff]
        %v903 = vld [vmem:[%s407 + $0xc30] sm:$0xff]
        %v904 = vld [vmem:[%s407 + $0xc38] sm:$0xff]
        %v905 = vld [vmem:[%s407 + $0xc40] sm:$0xff]
        %v906 = vld [vmem:[%s407 + $0xc48] sm:$0xff]
        %v907 = vld [vmem:[%s407 + $0xc50] sm:$0xff]
        %v908 = vld [vmem:[%s407 + $0xc58] sm:$0xff]
        %v909 = vld [vmem:[%s407 + $0xc60] sm:$0xff]
        %v910 = vld [vmem:[%s407 + $0xc68] sm:$0xff]
        %v911 = vld [vmem:[%s407 + $0xc70] sm:$0xff]
        %v912 = vld [vmem:[%s407 + $0xc78] sm:$0xff]
        %v913 = vld [vmem:[%s407 + $0xc80] sm:$0xff]
        %v914 = vld [vmem:[%s407 + $0xc88] sm:$0xff]
        %v915 = vld [vmem:[%s407 + $0xc90] sm:$0xff]
        %v916 = vld [vmem:[%s407 + $0xc98] sm:$0xff]
        %v917 = vld [vmem:[%s407 + $0xca0] sm:$0xff]
        %v918 = vld [vmem:[%s407 + $0xca8] sm:$0xff]
        %v919 = vld [vmem:[%s407 + $0xcb0] sm:$0xff]
        %v920 = vld [vmem:[%s407 + $0xcb8] sm:$0xff]
        %v921 = vld [vmem:[%s407 + $0xcc0] sm:$0xff]
        %v922 = vld [vmem:[%s407 + $0xcc8] sm:$0xff]
        %v923 = vld [vmem:[%s407 + $0xcd0] sm:$0xff]
        %v924 = vld [vmem:[%s407 + $0xcd8] sm:$0xff]
        %v925 = vld [vmem:[%s407 + $0xce0] sm:$0xff]
        %v926 = vld [vmem:[%s407 + $0xce8] sm:$0xff]
        %v927 = vld [vmem:[%s407 + $0xcf0] sm:$0xff]
        %v928 = vld [vmem:[%s407 + $0xcf8] sm:$0xff]
        %v929 = vld [vmem:[%s407 + $0xd00] sm:$0xff]
        %v930 = vld [vmem:[%s407 + $0xd08] sm:$0xff]
        %v931 = vld [vmem:[%s407 + $0xd10] sm:$0xff]
        %v932 = vld [vmem:[%s407 + $0xd18] sm:$0xff]
        %v933 = vld [vmem:[%s407 + $0xd20] sm:$0xff]
        %v934 = vld [vmem:[%s407 + $0xd28] sm:$0xff]
        %v935 = vld [vmem:[%s407 + $0xd30] sm:$0xff]
        %v936 = vld [vmem:[%s407 + $0xd38] sm:$0xff]
        %v937 = vld [vmem:[%s407 + $0xd40] sm:$0xff]
        %v938 = vld [vmem:[%s407 + $0xd48] sm:$0xff]
        %v939 = vld [vmem:[%s407 + $0xd50] sm:$0xff]
        %v940 = vld [vmem:[%s407 + $0xd58] sm:$0xff]
        %v941 = vld [vmem:[%s407 + $0xd60] sm:$0xff]
        %v942 = vld [vmem:[%s407 + $0xd68] sm:$0xff]
        %v943 = vld [vmem:[%s407 + $0xd70] sm:$0xff]
        %v944 = vld [vmem:[%s407 + $0xd78] sm:$0xff]
        %v945 = vld [vmem:[%s407 + $0xd80] sm:$0xff]
        %v946 = vld [vmem:[%s407 + $0xd88] sm:$0xff]
        %v947 = vld [vmem:[%s407 + $0xd90] sm:$0xff]
        %v948 = vld [vmem:[%s407 + $0xd98] sm:$0xff]
        %v949 = vld [vmem:[%s407 + $0xda0] sm:$0xff]
        %v950 = vld [vmem:[%s407 + $0xda8] sm:$0xff]
        %v951 = vld [vmem:[%s407 + $0xdb0] sm:$0xff]
        %v952 = vld [vmem:[%s407 + $0xdb8] sm:$0xff]
        %v953 = vld [vmem:[%s407 + $0xdc0] sm:$0xff]
        %v954 = vld [vmem:[%s407 + $0xdc8] sm:$0xff]
        %v955 = vld [vmem:[%s407 + $0xdd0] sm:$0xff]
        %v956 = vld [vmem:[%s407 + $0xdd8] sm:$0xff]
        %v957 = vld [vmem:[%s407 + $0xde0] sm:$0xff]
        %v958 = vld [vmem:[%s407 + $0xde8] sm:$0xff]
        %v959 = vld [vmem:[%s407 + $0xdf0] sm:$0xff]
        %v960 = vld [vmem:[%s407 + $0xdf8] sm:$0xff]
        %v961 = vld [vmem:[%s407 + $0xe00] sm:$0xff]
        %v962 = vld [vmem:[%s407 + $0xe08] sm:$0xff]
        %v963 = vld [vmem:[%s407 + $0xe10] sm:$0xff]
        %v964 = vld [vmem:[%s407 + $0xe18] sm:$0xff]
        %v965 = vld [vmem:[%s407 + $0xe20] sm:$0xff]
        %v966 = vld [vmem:[%s407 + $0xe28] sm:$0xff]
        %v967 = vld [vmem:[%s407 + $0xe30] sm:$0xff]
        %v968 = vld [vmem:[%s407 + $0xe38] sm:$0xff]
        %v969 = vld [vmem:[%s407 + $0xe40] sm:$0xff]
        %v970 = vld [vmem:[%s407 + $0xe48] sm:$0xff]
        %v971 = vld [vmem:[%s407 + $0xe50] sm:$0xff]
        %v972 = vld [vmem:[%s407 + $0xe58] sm:$0xff]
        %v973 = vld [vmem:[%s407 + $0xe60] sm:$0xff]
        %v974 = vld [vmem:[%s407 + $0xe68] sm:$0xff]
        %v975 = vld [vmem:[%s407 + $0xe70] sm:$0xff]
        %v976 = vld [vmem:[%s407 + $0xe78] sm:$0xff]
        %v977 = vld [vmem:[%s407 + $0xe80] sm:$0xff]
        %v978 = vld [vmem:[%s407 + $0xe88] sm:$0xff]
        %v979 = vld [vmem:[%s407 + $0xe90] sm:$0xff]
        %v980 = vld [vmem:[%s407 + $0xe98] sm:$0xff]
        %v981 = vld [vmem:[%s407 + $0xea0] sm:$0xff]
        %v982 = vld [vmem:[%s407 + $0xea8] sm:$0xff]
        %v983 = vld [vmem:[%s407 + $0xeb0] sm:$0xff]
        %v984 = vld [vmem:[%s407 + $0xeb8] sm:$0xff]
        %v985 = vld [vmem:[%s407 + $0xec0] sm:$0xff]
        %v986 = vld [vmem:[%s407 + $0xec8] sm:$0xff]
        %v987 = vld [vmem:[%s407 + $0xed0] sm:$0xff]
        %v988 = vld [vmem:[%s407 + $0xed8] sm:$0xff]
        %v989 = vld [vmem:[%s407 + $0xee0] sm:$0xff]
        %v990 = vld [vmem:[%s407 + $0xee8] sm:$0xff]
        %v991 = vld [vmem:[%s407 + $0xef0] sm:$0xff]
        %v992 = vld [vmem:[%s407 + $0xef8] sm:$0xff]
        %v993 = vld [vmem:[%s416] sm:$0xff]
        %v995 = vlaneseq
        %v996 = vshrl.u32 %v995, 7
        %v997 = vsub.s32 0, %v996
        %v998 = vrot.slane %v993, %v997
        %v999 = vlaneseq
        %v1000 = vshrl.u32 %v999, 7
        %v1001 = vsub.s32 1, %v1000
        %v1002 = vrot.slane %v993, %v1001
        %v1003 = vlaneseq
        %v1004 = vshrl.u32 %v1003, 7
        %v1005 = vsub.s32 2, %v1004
        %v1006 = vrot.slane %v993, %v1005
        %v1007 = vlaneseq
        %v1008 = vshrl.u32 %v1007, 7
        %v1009 = vsub.s32 3, %v1008
        %v1010 = vrot.slane %v993, %v1009
        %v1011 = vlaneseq
        %v1012 = vshrl.u32 %v1011, 7
        %v1013 = vsub.s32 4, %v1012
        %v1014 = vrot.slane %v993, %v1013
        %v1015 = vlaneseq
        %v1016 = vshrl.u32 %v1015, 7
        %v1017 = vsub.s32 5, %v1016
        %v1018 = vrot.slane %v993, %v1017
        %v1019 = vlaneseq
        %v1020 = vshrl.u32 %v1019, 7
        %v1021 = vsub.s32 6, %v1020
        %v1022 = vrot.slane %v993, %v1021
        %v1023 = vlaneseq
        %v1024 = vshrl.u32 %v1023, 7
        %v1025 = vsub.s32 7, %v1024
        %v1026 = vrot.slane %v993, %v1025
        %v1515 = vunpack.c.l.b16 %v513
        %v1516 = vunpack.c.h.b16 %v513
        %v1517 = vunpack.c.l.b16 %v514
        %v1518 = vunpack.c.h.b16 %v514
        %v1519 = vunpack.c.l.b16 %v515
        %v1520 = vunpack.c.h.b16 %v515
        %v1521 = vunpack.c.l.b16 %v516
        %v1522 = vunpack.c.h.b16 %v516
        %v1523 = vunpack.c.l.b16 %v517
        %v1524 = vunpack.c.h.b16 %v517
        %v1525 = vunpack.c.l.b16 %v518
        %v1526 = vunpack.c.h.b16 %v518
        %v1527 = vunpack.c.l.b16 %v519
        %v1528 = vunpack.c.h.b16 %v519
        %v1529 = vunpack.c.l.b16 %v520
        %v1530 = vunpack.c.h.b16 %v520
        %v1531 = vunpack.c.l.b16 %v521
        %v1532 = vunpack.c.h.b16 %v521
        %v1533 = vunpack.c.l.b16 %v522
        %v1534 = vunpack.c.h.b16 %v522
        %v1535 = vunpack.c.l.b16 %v523
        %v1536 = vunpack.c.h.b16 %v523
        %v1537 = vunpack.c.l.b16 %v524
        %v1538 = vunpack.c.h.b16 %v524
        %v1539 = vunpack.c.l.b16 %v525
        %v1540 = vunpack.c.h.b16 %v525
        %v1541 = vunpack.c.l.b16 %v526
        %v1542 = vunpack.c.h.b16 %v526
        %v1543 = vunpack.c.l.b16 %v527
        %v1544 = vunpack.c.h.b16 %v527
        %v1545 = vunpack.c.l.b16 %v528
        %v1546 = vunpack.c.h.b16 %v528
        %v1547 = vunpack.c.l.b16 %v529
        %v1548 = vunpack.c.h.b16 %v529
        %v1549 = vunpack.c.l.b16 %v530
        %v1550 = vunpack.c.h.b16 %v530
        %v1551 = vunpack.c.l.b16 %v531
        %v1552 = vunpack.c.h.b16 %v531
        %v1553 = vunpack.c.l.b16 %v532
        %v1554 = vunpack.c.h.b16 %v532
        %v1555 = vunpack.c.l.b16 %v533
        %v1556 = vunpack.c.h.b16 %v533
        %v1557 = vunpack.c.l.b16 %v534
        %v1558 = vunpack.c.h.b16 %v534
        %v1559 = vunpack.c.l.b16 %v535
        %v1560 = vunpack.c.h.b16 %v535
        %v1561 = vunpack.c.l.b16 %v536
        %v1562 = vunpack.c.h.b16 %v536
        %v1563 = vunpack.c.l.b16 %v537
        %v1564 = vunpack.c.h.b16 %v537
        %v1565 = vunpack.c.l.b16 %v538
        %v1566 = vunpack.c.h.b16 %v538
        %v1567 = vunpack.c.l.b16 %v539
        %v1568 = vunpack.c.h.b16 %v539
        %v1569 = vunpack.c.l.b16 %v540
        %v1570 = vunpack.c.h.b16 %v540
        %v1571 = vunpack.c.l.b16 %v541
        %v1572 = vunpack.c.h.b16 %v541
        %v1573 = vunpack.c.l.b16 %v542
        %v1574 = vunpack.c.h.b16 %v542
        %v1575 = vunpack.c.l.b16 %v543
        %v1576 = vunpack.c.h.b16 %v543
        %v1577 = vunpack.c.l.b16 %v544
        %v1578 = vunpack.c.h.b16 %v544
        %v1579 = vunpack.c.l.b16 %v545
        %v1580 = vunpack.c.h.b16 %v545
        %v1581 = vunpack.c.l.b16 %v546
        %v1582 = vunpack.c.h.b16 %v546
        %v1583 = vunpack.c.l.b16 %v547
        %v1584 = vunpack.c.h.b16 %v547
        %v1585 = vunpack.c.l.b16 %v548
        %v1586 = vunpack.c.h.b16 %v548
        %v1587 = vunpack.c.l.b16 %v549
        %v1588 = vunpack.c.h.b16 %v549
        %v1589 = vunpack.c.l.b16 %v550
        %v1590 = vunpack.c.h.b16 %v550
        %v1591 = vunpack.c.l.b16 %v551
        %v1592 = vunpack.c.h.b16 %v551
        %v1593 = vunpack.c.l.b16 %v552
        %v1594 = vunpack.c.h.b16 %v552
        %v1595 = vunpack.c.l.b16 %v553
        %v1596 = vunpack.c.h.b16 %v553
        %v1597 = vunpack.c.l.b16 %v554
        %v1598 = vunpack.c.h.b16 %v554
        %v1599 = vunpack.c.l.b16 %v555
        %v1600 = vunpack.c.h.b16 %v555
        %v1601 = vunpack.c.l.b16 %v556
        %v1602 = vunpack.c.h.b16 %v556
        %v1603 = vunpack.c.l.b16 %v557
        %v1604 = vunpack.c.h.b16 %v557
        %v1605 = vunpack.c.l.b16 %v558
        %v1606 = vunpack.c.h.b16 %v558
        %v1607 = vunpack.c.l.b16 %v559
        %v1608 = vunpack.c.h.b16 %v559
        %v1609 = vunpack.c.l.b16 %v560
        %v1610 = vunpack.c.h.b16 %v560
        %v1611 = vunpack.c.l.b16 %v561
        %v1612 = vunpack.c.h.b16 %v561
        %v1613 = vunpack.c.l.b16 %v562
        %v1614 = vunpack.c.h.b16 %v562
        %v1615 = vunpack.c.l.b16 %v563
        %v1616 = vunpack.c.h.b16 %v563
        %v1617 = vunpack.c.l.b16 %v564
        %v1618 = vunpack.c.h.b16 %v564
        %v1619 = vunpack.c.l.b16 %v565
        %v1620 = vunpack.c.h.b16 %v565
        %v1621 = vunpack.c.l.b16 %v566
        %v1622 = vunpack.c.h.b16 %v566
        %v1623 = vunpack.c.l.b16 %v567
        %v1624 = vunpack.c.h.b16 %v567
        %v1625 = vunpack.c.l.b16 %v568
        %v1626 = vunpack.c.h.b16 %v568
        %v1627 = vunpack.c.l.b16 %v569
        %v1628 = vunpack.c.h.b16 %v569
        %v1629 = vunpack.c.l.b16 %v570
        %v1630 = vunpack.c.h.b16 %v570
        %v1631 = vunpack.c.l.b16 %v571
        %v1632 = vunpack.c.h.b16 %v571
        %v1633 = vunpack.c.l.b16 %v572
        %v1634 = vunpack.c.h.b16 %v572
        %v1635 = vunpack.c.l.b16 %v573
        %v1636 = vunpack.c.h.b16 %v573
        %v1637 = vunpack.c.l.b16 %v574
        %v1638 = vunpack.c.h.b16 %v574
        %v1639 = vunpack.c.l.b16 %v575
        %v1640 = vunpack.c.h.b16 %v575
        %v1641 = vunpack.c.l.b16 %v576
        %v1642 = vunpack.c.h.b16 %v576
        %v1643 = vunpack.c.l.b16 %v577
        %v1644 = vunpack.c.h.b16 %v577
        %v1645 = vunpack.c.l.b16 %v578
        %v1646 = vunpack.c.h.b16 %v578
        %v1647 = vunpack.c.l.b16 %v579
        %v1648 = vunpack.c.h.b16 %v579
        %v1649 = vunpack.c.l.b16 %v580
        %v1650 = vunpack.c.h.b16 %v580
        %v1651 = vunpack.c.l.b16 %v581
        %v1652 = vunpack.c.h.b16 %v581
        %v1653 = vunpack.c.l.b16 %v582
        %v1654 = vunpack.c.h.b16 %v582
        %v1655 = vunpack.c.l.b16 %v583
        %v1656 = vunpack.c.h.b16 %v583
        %v1657 = vunpack.c.l.b16 %v584
        %v1658 = vunpack.c.h.b16 %v584
        %v1659 = vunpack.c.l.b16 %v585
        %v1660 = vunpack.c.h.b16 %v585
        %v1661 = vunpack.c.l.b16 %v586
        %v1662 = vunpack.c.h.b16 %v586
        %v1663 = vunpack.c.l.b16 %v587
        %v1664 = vunpack.c.h.b16 %v587
        %v1665 = vunpack.c.l.b16 %v588
        %v1666 = vunpack.c.h.b16 %v588
        %v1667 = vunpack.c.l.b16 %v589
        %v1668 = vunpack.c.h.b16 %v589
        %v1669 = vunpack.c.l.b16 %v590
        %v1670 = vunpack.c.h.b16 %v590
        %v1671 = vunpack.c.l.b16 %v591
        %v1672 = vunpack.c.h.b16 %v591
        %v1673 = vunpack.c.l.b16 %v592
        %v1674 = vunpack.c.h.b16 %v592
        %v1675 = vunpack.c.l.b16 %v593
        %v1676 = vunpack.c.h.b16 %v593
        %v1677 = vunpack.c.l.b16 %v594
        %v1678 = vunpack.c.h.b16 %v594
        %v1679 = vunpack.c.l.b16 %v595
        %v1680 = vunpack.c.h.b16 %v595
        %v1681 = vunpack.c.l.b16 %v596
        %v1682 = vunpack.c.h.b16 %v596
        %v1683 = vunpack.c.l.b16 %v597
        %v1684 = vunpack.c.h.b16 %v597
        %v1685 = vunpack.c.l.b16 %v598
        %v1686 = vunpack.c.h.b16 %v598
        %v1687 = vunpack.c.l.b16 %v599
        %v1688 = vunpack.c.h.b16 %v599
        %v1689 = vunpack.c.l.b16 %v600
        %v1690 = vunpack.c.h.b16 %v600
        %v1691 = vunpack.c.l.b16 %v601
        %v1692 = vunpack.c.h.b16 %v601
        %v1693 = vunpack.c.l.b16 %v602
        %v1694 = vunpack.c.h.b16 %v602
        %v1695 = vunpack.c.l.b16 %v603
        %v1696 = vunpack.c.h.b16 %v603
        %v1697 = vunpack.c.l.b16 %v604
        %v1698 = vunpack.c.h.b16 %v604
        %v1699 = vunpack.c.l.b16 %v605
        %v1700 = vunpack.c.h.b16 %v605
        %v1701 = vunpack.c.l.b16 %v606
        %v1702 = vunpack.c.h.b16 %v606
        %v1703 = vunpack.c.l.b16 %v607
        %v1704 = vunpack.c.h.b16 %v607
        %v1705 = vunpack.c.l.b16 %v608
        %v1706 = vunpack.c.h.b16 %v608
        %v1707 = vunpack.c.l.b16 %v609
        %v1708 = vunpack.c.h.b16 %v609
        %v1709 = vunpack.c.l.b16 %v610
        %v1710 = vunpack.c.h.b16 %v610
        %v1711 = vunpack.c.l.b16 %v611
        %v1712 = vunpack.c.h.b16 %v611
        %v1713 = vunpack.c.l.b16 %v612
        %v1714 = vunpack.c.h.b16 %v612
        %v1715 = vunpack.c.l.b16 %v613
        %v1716 = vunpack.c.h.b16 %v613
        %v1717 = vunpack.c.l.b16 %v614
        %v1718 = vunpack.c.h.b16 %v614
        %v1719 = vunpack.c.l.b16 %v615
        %v1720 = vunpack.c.h.b16 %v615
        %v1721 = vunpack.c.l.b16 %v616
        %v1722 = vunpack.c.h.b16 %v616
        %v1723 = vunpack.c.l.b16 %v617
        %v1724 = vunpack.c.h.b16 %v617
        %v1725 = vunpack.c.l.b16 %v618
        %v1726 = vunpack.c.h.b16 %v618
        %v1727 = vunpack.c.l.b16 %v619
        %v1728 = vunpack.c.h.b16 %v619
        %v1729 = vunpack.c.l.b16 %v620
        %v1730 = vunpack.c.h.b16 %v620
        %v1731 = vunpack.c.l.b16 %v621
        %v1732 = vunpack.c.h.b16 %v621
        %v1733 = vunpack.c.l.b16 %v622
        %v1734 = vunpack.c.h.b16 %v622
        %v1735 = vunpack.c.l.b16 %v623
        %v1736 = vunpack.c.h.b16 %v623
        %v1737 = vunpack.c.l.b16 %v624
        %v1738 = vunpack.c.h.b16 %v624
        %v1739 = vunpack.c.l.b16 %v625
        %v1740 = vunpack.c.h.b16 %v625
        %v1741 = vunpack.c.l.b16 %v626
        %v1742 = vunpack.c.h.b16 %v626
        %v1743 = vunpack.c.l.b16 %v627
        %v1744 = vunpack.c.h.b16 %v627
        %v1745 = vunpack.c.l.b16 %v628
        %v1746 = vunpack.c.h.b16 %v628
        %v1747 = vunpack.c.l.b16 %v629
        %v1748 = vunpack.c.h.b16 %v629
        %v1749 = vunpack.c.l.b16 %v630
        %v1750 = vunpack.c.h.b16 %v630
        %v1751 = vunpack.c.l.b16 %v631
        %v1752 = vunpack.c.h.b16 %v631
        %v1753 = vunpack.c.l.b16 %v632
        %v1754 = vunpack.c.h.b16 %v632
        %v1755 = vunpack.c.l.b16 %v633
        %v1756 = vunpack.c.h.b16 %v633
        %v1757 = vunpack.c.l.b16 %v634
        %v1758 = vunpack.c.h.b16 %v634
        %v1759 = vunpack.c.l.b16 %v635
        %v1760 = vunpack.c.h.b16 %v635
        %v1761 = vunpack.c.l.b16 %v636
        %v1762 = vunpack.c.h.b16 %v636
        %v1763 = vunpack.c.l.b16 %v637
        %v1764 = vunpack.c.h.b16 %v637
        %v1765 = vunpack.c.l.b16 %v638
        %v1766 = vunpack.c.h.b16 %v638
        %v1767 = vunpack.c.l.b16 %v639
        %v1768 = vunpack.c.h.b16 %v639
        %v1769 = vunpack.c.l.b16 %v640
        %v1770 = vunpack.c.h.b16 %v640
        %v1771 = vunpack.c.l.b16 %v641
        %v1772 = vunpack.c.h.b16 %v641
        %v1773 = vunpack.c.l.b16 %v642
        %v1774 = vunpack.c.h.b16 %v642
        %v1775 = vunpack.c.l.b16 %v643
        %v1776 = vunpack.c.h.b16 %v643
        %v1777 = vunpack.c.l.b16 %v644
        %v1778 = vunpack.c.h.b16 %v644
        %v1779 = vunpack.c.l.b16 %v645
        %v1780 = vunpack.c.h.b16 %v645
        %v1781 = vunpack.c.l.b16 %v646
        %v1782 = vunpack.c.h.b16 %v646
        %v1783 = vunpack.c.l.b16 %v647
        %v1784 = vunpack.c.h.b16 %v647
        %v1785 = vunpack.c.l.b16 %v648
        %v1786 = vunpack.c.h.b16 %v648
        %v1787 = vunpack.c.l.b16 %v649
        %v1788 = vunpack.c.h.b16 %v649
        %v1789 = vunpack.c.l.b16 %v650
        %v1790 = vunpack.c.h.b16 %v650
        %v1791 = vunpack.c.l.b16 %v651
        %v1792 = vunpack.c.h.b16 %v651
        %v1793 = vunpack.c.l.b16 %v652
        %v1794 = vunpack.c.h.b16 %v652
        %v1795 = vunpack.c.l.b16 %v653
        %v1796 = vunpack.c.h.b16 %v653
        %v1797 = vunpack.c.l.b16 %v654
        %v1798 = vunpack.c.h.b16 %v654
        %v1799 = vunpack.c.l.b16 %v655
        %v1800 = vunpack.c.h.b16 %v655
        %v1801 = vunpack.c.l.b16 %v656
        %v1802 = vunpack.c.h.b16 %v656
        %v1803 = vunpack.c.l.b16 %v657
        %v1804 = vunpack.c.h.b16 %v657
        %v1805 = vunpack.c.l.b16 %v658
        %v1806 = vunpack.c.h.b16 %v658
        %v1807 = vunpack.c.l.b16 %v659
        %v1808 = vunpack.c.h.b16 %v659
        %v1809 = vunpack.c.l.b16 %v660
        %v1810 = vunpack.c.h.b16 %v660
        %v1811 = vunpack.c.l.b16 %v661
        %v1812 = vunpack.c.h.b16 %v661
        %v1813 = vunpack.c.l.b16 %v662
        %v1814 = vunpack.c.h.b16 %v662
        %v1815 = vunpack.c.l.b16 %v663
        %v1816 = vunpack.c.h.b16 %v663
        %v1817 = vunpack.c.l.b16 %v664
        %v1818 = vunpack.c.h.b16 %v664
        %v1819 = vunpack.c.l.b16 %v665
        %v1820 = vunpack.c.h.b16 %v665
        %v1821 = vunpack.c.l.b16 %v666
        %v1822 = vunpack.c.h.b16 %v666
        %v1823 = vunpack.c.l.b16 %v667
        %v1824 = vunpack.c.h.b16 %v667
        %v1825 = vunpack.c.l.b16 %v668
        %v1826 = vunpack.c.h.b16 %v668
        %v1827 = vunpack.c.l.b16 %v669
        %v1828 = vunpack.c.h.b16 %v669
        %v1829 = vunpack.c.l.b16 %v670
        %v1830 = vunpack.c.h.b16 %v670
        %v1831 = vunpack.c.l.b16 %v671
        %v1832 = vunpack.c.h.b16 %v671
        %v1833 = vunpack.c.l.b16 %v672
        %v1834 = vunpack.c.h.b16 %v672
        %v1835 = vunpack.c.l.b16 %v673
        %v1836 = vunpack.c.h.b16 %v673
        %v1837 = vunpack.c.l.b16 %v674
        %v1838 = vunpack.c.h.b16 %v674
        %v1839 = vunpack.c.l.b16 %v675
        %v1840 = vunpack.c.h.b16 %v675
        %v1841 = vunpack.c.l.b16 %v676
        %v1842 = vunpack.c.h.b16 %v676
        %v1843 = vunpack.c.l.b16 %v677
        %v1844 = vunpack.c.h.b16 %v677
        %v1845 = vunpack.c.l.b16 %v678
        %v1846 = vunpack.c.h.b16 %v678
        %v1847 = vunpack.c.l.b16 %v679
        %v1848 = vunpack.c.h.b16 %v679
        %v1849 = vunpack.c.l.b16 %v680
        %v1850 = vunpack.c.h.b16 %v680
        %v1851 = vunpack.c.l.b16 %v681
        %v1852 = vunpack.c.h.b16 %v681
        %v1853 = vunpack.c.l.b16 %v682
        %v1854 = vunpack.c.h.b16 %v682
        %v1855 = vunpack.c.l.b16 %v683
        %v1856 = vunpack.c.h.b16 %v683
        %v1857 = vunpack.c.l.b16 %v684
        %v1858 = vunpack.c.h.b16 %v684
        %v1859 = vunpack.c.l.b16 %v685
        %v1860 = vunpack.c.h.b16 %v685
        %v1861 = vunpack.c.l.b16 %v686
        %v1862 = vunpack.c.h.b16 %v686
        %v1863 = vunpack.c.l.b16 %v687
        %v1864 = vunpack.c.h.b16 %v687
        %v1865 = vunpack.c.l.b16 %v688
        %v1866 = vunpack.c.h.b16 %v688
        %v1867 = vunpack.c.l.b16 %v689
        %v1868 = vunpack.c.h.b16 %v689
        %v1869 = vunpack.c.l.b16 %v690
        %v1870 = vunpack.c.h.b16 %v690
        %v1871 = vunpack.c.l.b16 %v691
        %v1872 = vunpack.c.h.b16 %v691
        %v1873 = vunpack.c.l.b16 %v692
        %v1874 = vunpack.c.h.b16 %v692
        %v1875 = vunpack.c.l.b16 %v693
        %v1876 = vunpack.c.h.b16 %v693
        %v1877 = vunpack.c.l.b16 %v694
        %v1878 = vunpack.c.h.b16 %v694
        %v1879 = vunpack.c.l.b16 %v695
        %v1880 = vunpack.c.h.b16 %v695
        %v1881 = vunpack.c.l.b16 %v696
        %v1882 = vunpack.c.h.b16 %v696
        %v1883 = vunpack.c.l.b16 %v697
        %v1884 = vunpack.c.h.b16 %v697
        %v1885 = vunpack.c.l.b16 %v698
        %v1886 = vunpack.c.h.b16 %v698
        %v1887 = vunpack.c.l.b16 %v699
        %v1888 = vunpack.c.h.b16 %v699
        %v1889 = vunpack.c.l.b16 %v700
        %v1890 = vunpack.c.h.b16 %v700
        %v1891 = vunpack.c.l.b16 %v701
        %v1892 = vunpack.c.h.b16 %v701
        %v1893 = vunpack.c.l.b16 %v702
        %v1894 = vunpack.c.h.b16 %v702
        %v1895 = vunpack.c.l.b16 %v703
        %v1896 = vunpack.c.h.b16 %v703
        %v1897 = vunpack.c.l.b16 %v704
        %v1898 = vunpack.c.h.b16 %v704
        %v1899 = vunpack.c.l.b16 %v705
        %v1900 = vunpack.c.h.b16 %v705
        %v1901 = vunpack.c.l.b16 %v706
        %v1902 = vunpack.c.h.b16 %v706
        %v1903 = vunpack.c.l.b16 %v707
        %v1904 = vunpack.c.h.b16 %v707
        %v1905 = vunpack.c.l.b16 %v708
        %v1906 = vunpack.c.h.b16 %v708
        %v1907 = vunpack.c.l.b16 %v709
        %v1908 = vunpack.c.h.b16 %v709
        %v1909 = vunpack.c.l.b16 %v710
        %v1910 = vunpack.c.h.b16 %v710
        %v1911 = vunpack.c.l.b16 %v711
        %v1912 = vunpack.c.h.b16 %v711
        %v1913 = vunpack.c.l.b16 %v712
        %v1914 = vunpack.c.h.b16 %v712
        %v1915 = vunpack.c.l.b16 %v713
        %v1916 = vunpack.c.h.b16 %v713
        %v1917 = vunpack.c.l.b16 %v714
        %v1918 = vunpack.c.h.b16 %v714
        %v1919 = vunpack.c.l.b16 %v715
        %v1920 = vunpack.c.h.b16 %v715
        %v1921 = vunpack.c.l.b16 %v716
        %v1922 = vunpack.c.h.b16 %v716
        %v1923 = vunpack.c.l.b16 %v717
        %v1924 = vunpack.c.h.b16 %v717
        %v1925 = vunpack.c.l.b16 %v718
        %v1926 = vunpack.c.h.b16 %v718
        %v1927 = vunpack.c.l.b16 %v719
        %v1928 = vunpack.c.h.b16 %v719
        %v1929 = vunpack.c.l.b16 %v720
        %v1930 = vunpack.c.h.b16 %v720
        %v1931 = vunpack.c.l.b16 %v721
        %v1932 = vunpack.c.h.b16 %v721
        %v1933 = vunpack.c.l.b16 %v722
        %v1934 = vunpack.c.h.b16 %v722
        %v1935 = vunpack.c.l.b16 %v723
        %v1936 = vunpack.c.h.b16 %v723
        %v1937 = vunpack.c.l.b16 %v724
        %v1938 = vunpack.c.h.b16 %v724
        %v1939 = vunpack.c.l.b16 %v725
        %v1940 = vunpack.c.h.b16 %v725
        %v1941 = vunpack.c.l.b16 %v726
        %v1942 = vunpack.c.h.b16 %v726
        %v1943 = vunpack.c.l.b16 %v727
        %v1944 = vunpack.c.h.b16 %v727
        %v1945 = vunpack.c.l.b16 %v728
        %v1946 = vunpack.c.h.b16 %v728
        %v1947 = vunpack.c.l.b16 %v729
        %v1948 = vunpack.c.h.b16 %v729
        %v1949 = vunpack.c.l.b16 %v730
        %v1950 = vunpack.c.h.b16 %v730
        %v1951 = vunpack.c.l.b16 %v731
        %v1952 = vunpack.c.h.b16 %v731
        %v1953 = vunpack.c.l.b16 %v732
        %v1954 = vunpack.c.h.b16 %v732
        %v1955 = vunpack.c.l.b16 %v733
        %v1956 = vunpack.c.h.b16 %v733
        %v1957 = vunpack.c.l.b16 %v734
        %v1958 = vunpack.c.h.b16 %v734
        %v1959 = vunpack.c.l.b16 %v735
        %v1960 = vunpack.c.h.b16 %v735
        %v1961 = vunpack.c.l.b16 %v736
        %v1962 = vunpack.c.h.b16 %v736
        %v1963 = vunpack.c.l.b16 %v737
        %v1964 = vunpack.c.h.b16 %v737
        %v1965 = vunpack.c.l.b16 %v738
        %v1966 = vunpack.c.h.b16 %v738
        %v1967 = vunpack.c.l.b16 %v739
        %v1968 = vunpack.c.h.b16 %v739
        %v1969 = vunpack.c.l.b16 %v740
        %v1970 = vunpack.c.h.b16 %v740
        %v1971 = vunpack.c.l.b16 %v741
        %v1972 = vunpack.c.h.b16 %v741
        %v1973 = vunpack.c.l.b16 %v742
        %v1974 = vunpack.c.h.b16 %v742
        %v1975 = vunpack.c.l.b16 %v743
        %v1976 = vunpack.c.h.b16 %v743
        %v1977 = vunpack.c.l.b16 %v744
        %v1978 = vunpack.c.h.b16 %v744
        %v1979 = vunpack.c.l.b16 %v745
        %v1980 = vunpack.c.h.b16 %v745
        %v1981 = vunpack.c.l.b16 %v746
        %v1982 = vunpack.c.h.b16 %v746
        %v1983 = vunpack.c.l.b16 %v747
        %v1984 = vunpack.c.h.b16 %v747
        %v1985 = vunpack.c.l.b16 %v748
        %v1986 = vunpack.c.h.b16 %v748
        %v1987 = vunpack.c.l.b16 %v749
        %v1988 = vunpack.c.h.b16 %v749
        %v1989 = vunpack.c.l.b16 %v750
        %v1990 = vunpack.c.h.b16 %v750
        %v1991 = vunpack.c.l.b16 %v751
        %v1992 = vunpack.c.h.b16 %v751
        %v1993 = vunpack.c.l.b16 %v752
        %v1994 = vunpack.c.h.b16 %v752
        %v1995 = vunpack.c.l.b16 %v753
        %v1996 = vunpack.c.h.b16 %v753
        %v1997 = vunpack.c.l.b16 %v754
        %v1998 = vunpack.c.h.b16 %v754
        %v1999 = vunpack.c.l.b16 %v755
        %v2000 = vunpack.c.h.b16 %v755
        %v2001 = vunpack.c.l.b16 %v756
        %v2002 = vunpack.c.h.b16 %v756
        %v2003 = vunpack.c.l.b16 %v757
        %v2004 = vunpack.c.h.b16 %v757
        %v2005 = vunpack.c.l.b16 %v758
        %v2006 = vunpack.c.h.b16 %v758
        %v2007 = vunpack.c.l.b16 %v759
        %v2008 = vunpack.c.h.b16 %v759
        %v2009 = vunpack.c.l.b16 %v760
        %v2010 = vunpack.c.h.b16 %v760
        %v2011 = vunpack.c.l.b16 %v761
        %v2012 = vunpack.c.h.b16 %v761
        %v2013 = vunpack.c.l.b16 %v762
        %v2014 = vunpack.c.h.b16 %v762
        %v2015 = vunpack.c.l.b16 %v763
        %v2016 = vunpack.c.h.b16 %v763
        %v2017 = vunpack.c.l.b16 %v764
        %v2018 = vunpack.c.h.b16 %v764
        %v2019 = vunpack.c.l.b16 %v765
        %v2020 = vunpack.c.h.b16 %v765
        %v2021 = vunpack.c.l.b16 %v766
        %v2022 = vunpack.c.h.b16 %v766
        %v2023 = vunpack.c.l.b16 %v767
        %v2024 = vunpack.c.h.b16 %v767
        %v2025 = vunpack.c.l.b16 %v768
        %v2026 = vunpack.c.h.b16 %v768
        %v2027 = vunpack.c.l.b16 %v769
        %v2028 = vunpack.c.h.b16 %v769
        %v2029 = vunpack.c.l.b16 %v770
        %v2030 = vunpack.c.h.b16 %v770
        %v2031 = vunpack.c.l.b16 %v771
        %v2032 = vunpack.c.h.b16 %v771
        %v2033 = vunpack.c.l.b16 %v772
        %v2034 = vunpack.c.h.b16 %v772
        %v2035 = vunpack.c.l.b16 %v773
        %v2036 = vunpack.c.h.b16 %v773
        %v2037 = vunpack.c.l.b16 %v774
        %v2038 = vunpack.c.h.b16 %v774
        %v2039 = vunpack.c.l.b16 %v775
        %v2040 = vunpack.c.h.b16 %v775
        %v2041 = vunpack.c.l.b16 %v776
        %v2042 = vunpack.c.h.b16 %v776
        %v2043 = vunpack.c.l.b16 %v777
        %v2044 = vunpack.c.h.b16 %v777
        %v2045 = vunpack.c.l.b16 %v778
        %v2046 = vunpack.c.h.b16 %v778
        %v2047 = vunpack.c.l.b16 %v779
        %v2048 = vunpack.c.h.b16 %v779
        %v2049 = vunpack.c.l.b16 %v780
        %v2050 = vunpack.c.h.b16 %v780
        %v2051 = vunpack.c.l.b16 %v781
        %v2052 = vunpack.c.h.b16 %v781
        %v2053 = vunpack.c.l.b16 %v782
        %v2054 = vunpack.c.h.b16 %v782
        %v2055 = vunpack.c.l.b16 %v783
        %v2056 = vunpack.c.h.b16 %v783
        %v2057 = vunpack.c.l.b16 %v784
        %v2058 = vunpack.c.h.b16 %v784
        %v2059 = vunpack.c.l.b16 %v785
        %v2060 = vunpack.c.h.b16 %v785
        %v2061 = vunpack.c.l.b16 %v786
        %v2062 = vunpack.c.h.b16 %v786
        %v2063 = vunpack.c.l.b16 %v787
        %v2064 = vunpack.c.h.b16 %v787
        %v2065 = vunpack.c.l.b16 %v788
        %v2066 = vunpack.c.h.b16 %v788
        %v2067 = vunpack.c.l.b16 %v789
        %v2068 = vunpack.c.h.b16 %v789
        %v2069 = vunpack.c.l.b16 %v790
        %v2070 = vunpack.c.h.b16 %v790
        %v2071 = vunpack.c.l.b16 %v791
        %v2072 = vunpack.c.h.b16 %v791
        %v2073 = vunpack.c.l.b16 %v792
        %v2074 = vunpack.c.h.b16 %v792
        %v2075 = vunpack.c.l.b16 %v793
        %v2076 = vunpack.c.h.b16 %v793
        %v2077 = vunpack.c.l.b16 %v794
        %v2078 = vunpack.c.h.b16 %v794
        %v2079 = vunpack.c.l.b16 %v795
        %v2080 = vunpack.c.h.b16 %v795
        %v2081 = vunpack.c.l.b16 %v796
        %v2082 = vunpack.c.h.b16 %v796
        %v2083 = vunpack.c.l.b16 %v797
        %v2084 = vunpack.c.h.b16 %v797
        %v2085 = vunpack.c.l.b16 %v798
        %v2086 = vunpack.c.h.b16 %v798
        %v2087 = vunpack.c.l.b16 %v799
        %v2088 = vunpack.c.h.b16 %v799
        %v2089 = vunpack.c.l.b16 %v800
        %v2090 = vunpack.c.h.b16 %v800
        %v2091 = vunpack.c.l.b16 %v801
        %v2092 = vunpack.c.h.b16 %v801
        %v2093 = vunpack.c.l.b16 %v802
        %v2094 = vunpack.c.h.b16 %v802
        %v2095 = vunpack.c.l.b16 %v803
        %v2096 = vunpack.c.h.b16 %v803
        %v2097 = vunpack.c.l.b16 %v804
        %v2098 = vunpack.c.h.b16 %v804
        %v2099 = vunpack.c.l.b16 %v805
        %v2100 = vunpack.c.h.b16 %v805
        %v2101 = vunpack.c.l.b16 %v806
        %v2102 = vunpack.c.h.b16 %v806
        %v2103 = vunpack.c.l.b16 %v807
        %v2104 = vunpack.c.h.b16 %v807
        %v2105 = vunpack.c.l.b16 %v808
        %v2106 = vunpack.c.h.b16 %v808
        %v2107 = vunpack.c.l.b16 %v809
        %v2108 = vunpack.c.h.b16 %v809
        %v2109 = vunpack.c.l.b16 %v810
        %v2110 = vunpack.c.h.b16 %v810
        %v2111 = vunpack.c.l.b16 %v811
        %v2112 = vunpack.c.h.b16 %v811
        %v2113 = vunpack.c.l.b16 %v812
        %v2114 = vunpack.c.h.b16 %v812
        %v2115 = vunpack.c.l.b16 %v813
        %v2116 = vunpack.c.h.b16 %v813
        %v2117 = vunpack.c.l.b16 %v814
        %v2118 = vunpack.c.h.b16 %v814
        %v2119 = vunpack.c.l.b16 %v815
        %v2120 = vunpack.c.h.b16 %v815
        %v2121 = vunpack.c.l.b16 %v816
        %v2122 = vunpack.c.h.b16 %v816
        %v2123 = vunpack.c.l.b16 %v817
        %v2124 = vunpack.c.h.b16 %v817
        %v2125 = vunpack.c.l.b16 %v818
        %v2126 = vunpack.c.h.b16 %v818
        %v2127 = vunpack.c.l.b16 %v819
        %v2128 = vunpack.c.h.b16 %v819
        %v2129 = vunpack.c.l.b16 %v820
        %v2130 = vunpack.c.h.b16 %v820
        %v2131 = vunpack.c.l.b16 %v821
        %v2132 = vunpack.c.h.b16 %v821
        %v2133 = vunpack.c.l.b16 %v822
        %v2134 = vunpack.c.h.b16 %v822
        %v2135 = vunpack.c.l.b16 %v823
        %v2136 = vunpack.c.h.b16 %v823
        %v2137 = vunpack.c.l.b16 %v824
        %v2138 = vunpack.c.h.b16 %v824
        %v2139 = vunpack.c.l.b16 %v825
        %v2140 = vunpack.c.h.b16 %v825
        %v2141 = vunpack.c.l.b16 %v826
        %v2142 = vunpack.c.h.b16 %v826
        %v2143 = vunpack.c.l.b16 %v827
        %v2144 = vunpack.c.h.b16 %v827
        %v2145 = vunpack.c.l.b16 %v828
        %v2146 = vunpack.c.h.b16 %v828
        %v2147 = vunpack.c.l.b16 %v829
        %v2148 = vunpack.c.h.b16 %v829
        %v2149 = vunpack.c.l.b16 %v830
        %v2150 = vunpack.c.h.b16 %v830
        %v2151 = vunpack.c.l.b16 %v831
        %v2152 = vunpack.c.h.b16 %v831
        %v2153 = vunpack.c.l.b16 %v832
        %v2154 = vunpack.c.h.b16 %v832
        %v2155 = vunpack.c.l.b16 %v833
        %v2156 = vunpack.c.h.b16 %v833
        %v2157 = vunpack.c.l.b16 %v834
        %v2158 = vunpack.c.h.b16 %v834
        %v2159 = vunpack.c.l.b16 %v835
        %v2160 = vunpack.c.h.b16 %v835
        %v2161 = vunpack.c.l.b16 %v836
        %v2162 = vunpack.c.h.b16 %v836
        %v2163 = vunpack.c.l.b16 %v837
        %v2164 = vunpack.c.h.b16 %v837
        %v2165 = vunpack.c.l.b16 %v838
        %v2166 = vunpack.c.h.b16 %v838
        %v2167 = vunpack.c.l.b16 %v839
        %v2168 = vunpack.c.h.b16 %v839
        %v2169 = vunpack.c.l.b16 %v840
        %v2170 = vunpack.c.h.b16 %v840
        %v2171 = vunpack.c.l.b16 %v841
        %v2172 = vunpack.c.h.b16 %v841
        %v2173 = vunpack.c.l.b16 %v842
        %v2174 = vunpack.c.h.b16 %v842
        %v2175 = vunpack.c.l.b16 %v843
        %v2176 = vunpack.c.h.b16 %v843
        %v2177 = vunpack.c.l.b16 %v844
        %v2178 = vunpack.c.h.b16 %v844
        %v2179 = vunpack.c.l.b16 %v845
        %v2180 = vunpack.c.h.b16 %v845
        %v2181 = vunpack.c.l.b16 %v846
        %v2182 = vunpack.c.h.b16 %v846
        %v2183 = vunpack.c.l.b16 %v847
        %v2184 = vunpack.c.h.b16 %v847
        %v2185 = vunpack.c.l.b16 %v848
        %v2186 = vunpack.c.h.b16 %v848
        %v2187 = vunpack.c.l.b16 %v849
        %v2188 = vunpack.c.h.b16 %v849
        %v2189 = vunpack.c.l.b16 %v850
        %v2190 = vunpack.c.h.b16 %v850
        %v2191 = vunpack.c.l.b16 %v851
        %v2192 = vunpack.c.h.b16 %v851
        %v2193 = vunpack.c.l.b16 %v852
        %v2194 = vunpack.c.h.b16 %v852
        %v2195 = vunpack.c.l.b16 %v853
        %v2196 = vunpack.c.h.b16 %v853
        %v2197 = vunpack.c.l.b16 %v854
        %v2198 = vunpack.c.h.b16 %v854
        %v2199 = vunpack.c.l.b16 %v855
        %v2200 = vunpack.c.h.b16 %v855
        %v2201 = vunpack.c.l.b16 %v856
        %v2202 = vunpack.c.h.b16 %v856
        %v2203 = vunpack.c.l.b16 %v857
        %v2204 = vunpack.c.h.b16 %v857
        %v2205 = vunpack.c.l.b16 %v858
        %v2206 = vunpack.c.h.b16 %v858
        %v2207 = vunpack.c.l.b16 %v859
        %v2208 = vunpack.c.h.b16 %v859
        %v2209 = vunpack.c.l.b16 %v860
        %v2210 = vunpack.c.h.b16 %v860
        %v2211 = vunpack.c.l.b16 %v861
        %v2212 = vunpack.c.h.b16 %v861
        %v2213 = vunpack.c.l.b16 %v862
        %v2214 = vunpack.c.h.b16 %v862
        %v2215 = vunpack.c.l.b16 %v863
        %v2216 = vunpack.c.h.b16 %v863
        %v2217 = vunpack.c.l.b16 %v864
        %v2218 = vunpack.c.h.b16 %v864
        %v2219 = vunpack.c.l.b16 %v865
        %v2220 = vunpack.c.h.b16 %v865
        %v2221 = vunpack.c.l.b16 %v866
        %v2222 = vunpack.c.h.b16 %v866
        %v2223 = vunpack.c.l.b16 %v867
        %v2224 = vunpack.c.h.b16 %v867
        %v2225 = vunpack.c.l.b16 %v868
        %v2226 = vunpack.c.h.b16 %v868
        %v2227 = vunpack.c.l.b16 %v869
        %v2228 = vunpack.c.h.b16 %v869
        %v2229 = vunpack.c.l.b16 %v870
        %v2230 = vunpack.c.h.b16 %v870
        %v2231 = vunpack.c.l.b16 %v871
        %v2232 = vunpack.c.h.b16 %v871
        %v2233 = vunpack.c.l.b16 %v872
        %v2234 = vunpack.c.h.b16 %v872
        %v2235 = vunpack.c.l.b16 %v873
        %v2236 = vunpack.c.h.b16 %v873
        %v2237 = vunpack.c.l.b16 %v874
        %v2238 = vunpack.c.h.b16 %v874
        %v2239 = vunpack.c.l.b16 %v875
        %v2240 = vunpack.c.h.b16 %v875
        %v2241 = vunpack.c.l.b16 %v876
        %v2242 = vunpack.c.h.b16 %v876
        %v2243 = vunpack.c.l.b16 %v877
        %v2244 = vunpack.c.h.b16 %v877
        %v2245 = vunpack.c.l.b16 %v878
        %v2246 = vunpack.c.h.b16 %v878
        %v2247 = vunpack.c.l.b16 %v879
        %v2248 = vunpack.c.h.b16 %v879
        %v2249 = vunpack.c.l.b16 %v880
        %v2250 = vunpack.c.h.b16 %v880
        %v2251 = vunpack.c.l.b16 %v881
        %v2252 = vunpack.c.h.b16 %v881
        %v2253 = vunpack.c.l.b16 %v882
        %v2254 = vunpack.c.h.b16 %v882
        %v2255 = vunpack.c.l.b16 %v883
        %v2256 = vunpack.c.h.b16 %v883
        %v2257 = vunpack.c.l.b16 %v884
        %v2258 = vunpack.c.h.b16 %v884
        %v2259 = vunpack.c.l.b16 %v885
        %v2260 = vunpack.c.h.b16 %v885
        %v2261 = vunpack.c.l.b16 %v886
        %v2262 = vunpack.c.h.b16 %v886
        %v2263 = vunpack.c.l.b16 %v887
        %v2264 = vunpack.c.h.b16 %v887
        %v2265 = vunpack.c.l.b16 %v888
        %v2266 = vunpack.c.h.b16 %v888
        %v2267 = vunpack.c.l.b16 %v889
        %v2268 = vunpack.c.h.b16 %v889
        %v2269 = vunpack.c.l.b16 %v890
        %v2270 = vunpack.c.h.b16 %v890
        %v2271 = vunpack.c.l.b16 %v891
        %v2272 = vunpack.c.h.b16 %v891
        %v2273 = vunpack.c.l.b16 %v892
        %v2274 = vunpack.c.h.b16 %v892
        %v2275 = vunpack.c.l.b16 %v893
        %v2276 = vunpack.c.h.b16 %v893
        %v2277 = vunpack.c.l.b16 %v894
        %v2278 = vunpack.c.h.b16 %v894
        %v2279 = vunpack.c.l.b16 %v895
        %v2280 = vunpack.c.h.b16 %v895
        %v2281 = vunpack.c.l.b16 %v896
        %v2282 = vunpack.c.h.b16 %v896
        %v2283 = vunpack.c.l.b16 %v897
        %v2284 = vunpack.c.h.b16 %v897
        %v2285 = vunpack.c.l.b16 %v898
        %v2286 = vunpack.c.h.b16 %v898
        %v2287 = vunpack.c.l.b16 %v899
        %v2288 = vunpack.c.h.b16 %v899
        %v2289 = vunpack.c.l.b16 %v900
        %v2290 = vunpack.c.h.b16 %v900
        %v2291 = vunpack.c.l.b16 %v901
        %v2292 = vunpack.c.h.b16 %v901
        %v2293 = vunpack.c.l.b16 %v902
        %v2294 = vunpack.c.h.b16 %v902
        %v2295 = vunpack.c.l.b16 %v903
        %v2296 = vunpack.c.h.b16 %v903
        %v2297 = vunpack.c.l.b16 %v904
        %v2298 = vunpack.c.h.b16 %v904
        %v2299 = vunpack.c.l.b16 %v905
        %v2300 = vunpack.c.h.b16 %v905
        %v2301 = vunpack.c.l.b16 %v906
        %v2302 = vunpack.c.h.b16 %v906
        %v2303 = vunpack.c.l.b16 %v907
        %v2304 = vunpack.c.h.b16 %v907
        %v2305 = vunpack.c.l.b16 %v908
        %v2306 = vunpack.c.h.b16 %v908
        %v2307 = vunpack.c.l.b16 %v909
        %v2308 = vunpack.c.h.b16 %v909
        %v2309 = vunpack.c.l.b16 %v910
        %v2310 = vunpack.c.h.b16 %v910
        %v2311 = vunpack.c.l.b16 %v911
        %v2312 = vunpack.c.h.b16 %v911
        %v2313 = vunpack.c.l.b16 %v912
        %v2314 = vunpack.c.h.b16 %v912
        %v2315 = vunpack.c.l.b16 %v913
        %v2316 = vunpack.c.h.b16 %v913
        %v2317 = vunpack.c.l.b16 %v914
        %v2318 = vunpack.c.h.b16 %v914
        %v2319 = vunpack.c.l.b16 %v915
        %v2320 = vunpack.c.h.b16 %v915
        %v2321 = vunpack.c.l.b16 %v916
        %v2322 = vunpack.c.h.b16 %v916
        %v2323 = vunpack.c.l.b16 %v917
        %v2324 = vunpack.c.h.b16 %v917
        %v2325 = vunpack.c.l.b16 %v918
        %v2326 = vunpack.c.h.b16 %v918
        %v2327 = vunpack.c.l.b16 %v919
        %v2328 = vunpack.c.h.b16 %v919
        %v2329 = vunpack.c.l.b16 %v920
        %v2330 = vunpack.c.h.b16 %v920
        %v2331 = vunpack.c.l.b16 %v921
        %v2332 = vunpack.c.h.b16 %v921
        %v2333 = vunpack.c.l.b16 %v922
        %v2334 = vunpack.c.h.b16 %v922
        %v2335 = vunpack.c.l.b16 %v923
        %v2336 = vunpack.c.h.b16 %v923
        %v2337 = vunpack.c.l.b16 %v924
        %v2338 = vunpack.c.h.b16 %v924
        %v2339 = vunpack.c.l.b16 %v925
        %v2340 = vunpack.c.h.b16 %v925
        %v2341 = vunpack.c.l.b16 %v926
        %v2342 = vunpack.c.h.b16 %v926
        %v2343 = vunpack.c.l.b16 %v927
        %v2344 = vunpack.c.h.b16 %v927
        %v2345 = vunpack.c.l.b16 %v928
        %v2346 = vunpack.c.h.b16 %v928
        %v2347 = vunpack.c.l.b16 %v929
        %v2348 = vunpack.c.h.b16 %v929
        %v2349 = vunpack.c.l.b16 %v930
        %v2350 = vunpack.c.h.b16 %v930
        %v2351 = vunpack.c.l.b16 %v931
        %v2352 = vunpack.c.h.b16 %v931
        %v2353 = vunpack.c.l.b16 %v932
        %v2354 = vunpack.c.h.b16 %v932
        %v2355 = vunpack.c.l.b16 %v933
        %v2356 = vunpack.c.h.b16 %v933
        %v2357 = vunpack.c.l.b16 %v934
        %v2358 = vunpack.c.h.b16 %v934
        %v2359 = vunpack.c.l.b16 %v935
        %v2360 = vunpack.c.h.b16 %v935
        %v2361 = vunpack.c.l.b16 %v936
        %v2362 = vunpack.c.h.b16 %v936
        %v2363 = vunpack.c.l.b16 %v937
        %v2364 = vunpack.c.h.b16 %v937
        %v2365 = vunpack.c.l.b16 %v938
        %v2366 = vunpack.c.h.b16 %v938
        %v2367 = vunpack.c.l.b16 %v939
        %v2368 = vunpack.c.h.b16 %v939
        %v2369 = vunpack.c.l.b16 %v940
        %v2370 = vunpack.c.h.b16 %v940
        %v2371 = vunpack.c.l.b16 %v941
        %v2372 = vunpack.c.h.b16 %v941
        %v2373 = vunpack.c.l.b16 %v942
        %v2374 = vunpack.c.h.b16 %v942
        %v2375 = vunpack.c.l.b16 %v943
        %v2376 = vunpack.c.h.b16 %v943
        %v2377 = vunpack.c.l.b16 %v944
        %v2378 = vunpack.c.h.b16 %v944
        %v2379 = vunpack.c.l.b16 %v945
        %v2380 = vunpack.c.h.b16 %v945
        %v2381 = vunpack.c.l.b16 %v946
        %v2382 = vunpack.c.h.b16 %v946
        %v2383 = vunpack.c.l.b16 %v947
        %v2384 = vunpack.c.h.b16 %v947
        %v2385 = vunpack.c.l.b16 %v948
        %v2386 = vunpack.c.h.b16 %v948
        %v2387 = vunpack.c.l.b16 %v949
        %v2388 = vunpack.c.h.b16 %v949
        %v2389 = vunpack.c.l.b16 %v950
        %v2390 = vunpack.c.h.b16 %v950
        %v2391 = vunpack.c.l.b16 %v951
        %v2392 = vunpack.c.h.b16 %v951
        %v2393 = vunpack.c.l.b16 %v952
        %v2394 = vunpack.c.h.b16 %v952
        %v2395 = vunpack.c.l.b16 %v953
        %v2396 = vunpack.c.h.b16 %v953
        %v2397 = vunpack.c.l.b16 %v954
        %v2398 = vunpack.c.h.b16 %v954
        %v2399 = vunpack.c.l.b16 %v955
        %v2400 = vunpack.c.h.b16 %v955
        %v2401 = vunpack.c.l.b16 %v956
        %v2402 = vunpack.c.h.b16 %v956
        %v2403 = vunpack.c.l.b16 %v957
        %v2404 = vunpack.c.h.b16 %v957
        %v2405 = vunpack.c.l.b16 %v958
        %v2406 = vunpack.c.h.b16 %v958
        %v2407 = vunpack.c.l.b16 %v959
        %v2408 = vunpack.c.h.b16 %v959
        %v2409 = vunpack.c.l.b16 %v960
        %v2410 = vunpack.c.h.b16 %v960
        %v2411 = vunpack.c.l.b16 %v961
        %v2412 = vunpack.c.h.b16 %v961
        %v2413 = vunpack.c.l.b16 %v962
        %v2414 = vunpack.c.h.b16 %v962
        %v2415 = vunpack.c.l.b16 %v963
        %v2416 = vunpack.c.h.b16 %v963
        %v2417 = vunpack.c.l.b16 %v964
        %v2418 = vunpack.c.h.b16 %v964
        %v2419 = vunpack.c.l.b16 %v965
        %v2420 = vunpack.c.h.b16 %v965
        %v2421 = vunpack.c.l.b16 %v966
        %v2422 = vunpack.c.h.b16 %v966
        %v2423 = vunpack.c.l.b16 %v967
        %v2424 = vunpack.c.h.b16 %v967
        %v2425 = vunpack.c.l.b16 %v968
        %v2426 = vunpack.c.h.b16 %v968
        %v2427 = vunpack.c.l.b16 %v969
        %v2428 = vunpack.c.h.b16 %v969
        %v2429 = vunpack.c.l.b16 %v970
        %v2430 = vunpack.c.h.b16 %v970
        %v2431 = vunpack.c.l.b16 %v971
        %v2432 = vunpack.c.h.b16 %v971
        %v2433 = vunpack.c.l.b16 %v972
        %v2434 = vunpack.c.h.b16 %v972
        %v2435 = vunpack.c.l.b16 %v973
        %v2436 = vunpack.c.h.b16 %v973
        %v2437 = vunpack.c.l.b16 %v974
        %v2438 = vunpack.c.h.b16 %v974
        %v2439 = vunpack.c.l.b16 %v975
        %v2440 = vunpack.c.h.b16 %v975
        %v2441 = vunpack.c.l.b16 %v976
        %v2442 = vunpack.c.h.b16 %v976
        %v2443 = vunpack.c.l.b16 %v977
        %v2444 = vunpack.c.h.b16 %v977
        %v2445 = vunpack.c.l.b16 %v978
        %v2446 = vunpack.c.h.b16 %v978
        %v2447 = vunpack.c.l.b16 %v979
        %v2448 = vunpack.c.h.b16 %v979
        %v2449 = vunpack.c.l.b16 %v980
        %v2450 = vunpack.c.h.b16 %v980
        %v2451 = vunpack.c.l.b16 %v981
        %v2452 = vunpack.c.h.b16 %v981
        %v2453 = vunpack.c.l.b16 %v982
        %v2454 = vunpack.c.h.b16 %v982
        %v2455 = vunpack.c.l.b16 %v983
        %v2456 = vunpack.c.h.b16 %v983
        %v2457 = vunpack.c.l.b16 %v984
        %v2458 = vunpack.c.h.b16 %v984
        %v2459 = vunpack.c.l.b16 %v985
        %v2460 = vunpack.c.h.b16 %v985
        %v2461 = vunpack.c.l.b16 %v986
        %v2462 = vunpack.c.h.b16 %v986
        %v2463 = vunpack.c.l.b16 %v987
        %v2464 = vunpack.c.h.b16 %v987
        %v2465 = vunpack.c.l.b16 %v988
        %v2466 = vunpack.c.h.b16 %v988
        %v2467 = vunpack.c.l.b16 %v989
        %v2468 = vunpack.c.h.b16 %v989
        %v2469 = vunpack.c.l.b16 %v990
        %v2470 = vunpack.c.h.b16 %v990
        %v2471 = vunpack.c.l.b16 %v991
        %v2472 = vunpack.c.h.b16 %v991
        %v2473 = vunpack.c.l.b16 %v992
        %v2474 = vunpack.c.h.b16 %v992
        %v2475 = vpack.c.b16 %v1523, %v1515
        %v2476 = vpack.c.b16 %v1524, %v1516
        %v2477 = vpack.c.b16 %v1525, %v1517
        %v2478 = vpack.c.b16 %v1526, %v1518
        %v2479 = vpack.c.b16 %v1527, %v1519
        %v2480 = vpack.c.b16 %v1528, %v1520
        %v2481 = vpack.c.b16 %v1529, %v1521
        %v2482 = vpack.c.b16 %v1530, %v1522
        %v2483 = vpack.c.b16 %v1539, %v1531
        %v2484 = vpack.c.b16 %v1540, %v1532
        %v2485 = vpack.c.b16 %v1541, %v1533
        %v2486 = vpack.c.b16 %v1542, %v1534
        %v2487 = vpack.c.b16 %v1543, %v1535
        %v2488 = vpack.c.b16 %v1544, %v1536
        %v2489 = vpack.c.b16 %v1545, %v1537
        %v2490 = vpack.c.b16 %v1546, %v1538
        %v2491 = vpack.c.b16 %v1555, %v1547
        %v2492 = vpack.c.b16 %v1556, %v1548
        %v2493 = vpack.c.b16 %v1557, %v1549
        %v2494 = vpack.c.b16 %v1558, %v1550
        %v2495 = vpack.c.b16 %v1559, %v1551
        %v2496 = vpack.c.b16 %v1560, %v1552
        %v2497 = vpack.c.b16 %v1561, %v1553
        %v2498 = vpack.c.b16 %v1562, %v1554
        %v2499 = vpack.c.b16 %v1571, %v1563
        %v2500 = vpack.c.b16 %v1572, %v1564
        %v2501 = vpack.c.b16 %v1573, %v1565
        %v2502 = vpack.c.b16 %v1574, %v1566
        %v2503 = vpack.c.b16 %v1575, %v1567
        %v2504 = vpack.c.b16 %v1576, %v1568
        %v2505 = vpack.c.b16 %v1577, %v1569
        %v2506 = vpack.c.b16 %v1578, %v1570
        %v2507 = vpack.c.b16 %v1587, %v1579
        %v2508 = vpack.c.b16 %v1588, %v1580
        %v2509 = vpack.c.b16 %v1589, %v1581
        %v2510 = vpack.c.b16 %v1590, %v1582
        %v2511 = vpack.c.b16 %v1591, %v1583
        %v2512 = vpack.c.b16 %v1592, %v1584
        %v2513 = vpack.c.b16 %v1593, %v1585
        %v2514 = vpack.c.b16 %v1594, %v1586
        %v2515 = vpack.c.b16 %v1603, %v1595
        %v2516 = vpack.c.b16 %v1604, %v1596
        %v2517 = vpack.c.b16 %v1605, %v1597
        %v2518 = vpack.c.b16 %v1606, %v1598
        %v2519 = vpack.c.b16 %v1607, %v1599
        %v2520 = vpack.c.b16 %v1608, %v1600
        %v2521 = vpack.c.b16 %v1609, %v1601
        %v2522 = vpack.c.b16 %v1610, %v1602
        %v2523 = vpack.c.b16 %v1619, %v1611
        %v2524 = vpack.c.b16 %v1620, %v1612
        %v2525 = vpack.c.b16 %v1621, %v1613
        %v2526 = vpack.c.b16 %v1622, %v1614
        %v2527 = vpack.c.b16 %v1623, %v1615
        %v2528 = vpack.c.b16 %v1624, %v1616
        %v2529 = vpack.c.b16 %v1625, %v1617
        %v2530 = vpack.c.b16 %v1626, %v1618
        %v2531 = vpack.c.b16 %v1635, %v1627
        %v2532 = vpack.c.b16 %v1636, %v1628
        %v2533 = vpack.c.b16 %v1637, %v1629
        %v2534 = vpack.c.b16 %v1638, %v1630
        %v2535 = vpack.c.b16 %v1639, %v1631
        %v2536 = vpack.c.b16 %v1640, %v1632
        %v2537 = vpack.c.b16 %v1641, %v1633
        %v2538 = vpack.c.b16 %v1642, %v1634
        %v2539 = vpack.c.b16 %v1651, %v1643
        %v2540 = vpack.c.b16 %v1652, %v1644
        %v2541 = vpack.c.b16 %v1653, %v1645
        %v2542 = vpack.c.b16 %v1654, %v1646
        %v2543 = vpack.c.b16 %v1655, %v1647
        %v2544 = vpack.c.b16 %v1656, %v1648
        %v2545 = vpack.c.b16 %v1657, %v1649
        %v2546 = vpack.c.b16 %v1658, %v1650
        %v2547 = vpack.c.b16 %v1667, %v1659
        %v2548 = vpack.c.b16 %v1668, %v1660
        %v2549 = vpack.c.b16 %v1669, %v1661
        %v2550 = vpack.c.b16 %v1670, %v1662
        %v2551 = vpack.c.b16 %v1671, %v1663
        %v2552 = vpack.c.b16 %v1672, %v1664
        %v2553 = vpack.c.b16 %v1673, %v1665
        %v2554 = vpack.c.b16 %v1674, %v1666
        %v2555 = vpack.c.b16 %v1683, %v1675
        %v2556 = vpack.c.b16 %v1684, %v1676
        %v2557 = vpack.c.b16 %v1685, %v1677
        %v2558 = vpack.c.b16 %v1686, %v1678
        %v2559 = vpack.c.b16 %v1687, %v1679
        %v2560 = vpack.c.b16 %v1688, %v1680
        %v2561 = vpack.c.b16 %v1689, %v1681
        %v2562 = vpack.c.b16 %v1690, %v1682
        %v2563 = vpack.c.b16 %v1699, %v1691
        %v2564 = vpack.c.b16 %v1700, %v1692
        %v2565 = vpack.c.b16 %v1701, %v1693
        %v2566 = vpack.c.b16 %v1702, %v1694
        %v2567 = vpack.c.b16 %v1703, %v1695
        %v2568 = vpack.c.b16 %v1704, %v1696
        %v2569 = vpack.c.b16 %v1705, %v1697
        %v2570 = vpack.c.b16 %v1706, %v1698
        %v2571 = vpack.c.b16 %v1715, %v1707
        %v2572 = vpack.c.b16 %v1716, %v1708
        %v2573 = vpack.c.b16 %v1717, %v1709
        %v2574 = vpack.c.b16 %v1718, %v1710
        %v2575 = vpack.c.b16 %v1719, %v1711
        %v2576 = vpack.c.b16 %v1720, %v1712
        %v2577 = vpack.c.b16 %v1721, %v1713
        %v2578 = vpack.c.b16 %v1722, %v1714
        %v2579 = vpack.c.b16 %v1731, %v1723
        %v2580 = vpack.c.b16 %v1732, %v1724
        %v2581 = vpack.c.b16 %v1733, %v1725
        %v2582 = vpack.c.b16 %v1734, %v1726
        %v2583 = vpack.c.b16 %v1735, %v1727
        %v2584 = vpack.c.b16 %v1736, %v1728
        %v2585 = vpack.c.b16 %v1737, %v1729
        %v2586 = vpack.c.b16 %v1738, %v1730
        %v2587 = vpack.c.b16 %v1747, %v1739
        %v2588 = vpack.c.b16 %v1748, %v1740
        %v2589 = vpack.c.b16 %v1749, %v1741
        %v2590 = vpack.c.b16 %v1750, %v1742
        %v2591 = vpack.c.b16 %v1751, %v1743
        %v2592 = vpack.c.b16 %v1752, %v1744
        %v2593 = vpack.c.b16 %v1753, %v1745
        %v2594 = vpack.c.b16 %v1754, %v1746
        %v2595 = vpack.c.b16 %v1763, %v1755
        %v2596 = vpack.c.b16 %v1764, %v1756
        %v2597 = vpack.c.b16 %v1765, %v1757
        %v2598 = vpack.c.b16 %v1766, %v1758
        %v2599 = vpack.c.b16 %v1767, %v1759
        %v2600 = vpack.c.b16 %v1768, %v1760
        %v2601 = vpack.c.b16 %v1769, %v1761
        %v2602 = vpack.c.b16 %v1770, %v1762
        %v2603 = vpack.c.b16 %v1779, %v1771
        %v2604 = vpack.c.b16 %v1780, %v1772
        %v2605 = vpack.c.b16 %v1781, %v1773
        %v2606 = vpack.c.b16 %v1782, %v1774
        %v2607 = vpack.c.b16 %v1783, %v1775
        %v2608 = vpack.c.b16 %v1784, %v1776
        %v2609 = vpack.c.b16 %v1785, %v1777
        %v2610 = vpack.c.b16 %v1786, %v1778
        %v2611 = vpack.c.b16 %v1795, %v1787
        %v2612 = vpack.c.b16 %v1796, %v1788
        %v2613 = vpack.c.b16 %v1797, %v1789
        %v2614 = vpack.c.b16 %v1798, %v1790
        %v2615 = vpack.c.b16 %v1799, %v1791
        %v2616 = vpack.c.b16 %v1800, %v1792
        %v2617 = vpack.c.b16 %v1801, %v1793
        %v2618 = vpack.c.b16 %v1802, %v1794
        %v2619 = vpack.c.b16 %v1811, %v1803
        %v2620 = vpack.c.b16 %v1812, %v1804
        %v2621 = vpack.c.b16 %v1813, %v1805
        %v2622 = vpack.c.b16 %v1814, %v1806
        %v2623 = vpack.c.b16 %v1815, %v1807
        %v2624 = vpack.c.b16 %v1816, %v1808
        %v2625 = vpack.c.b16 %v1817, %v1809
        %v2626 = vpack.c.b16 %v1818, %v1810
        %v2627 = vpack.c.b16 %v1827, %v1819
        %v2628 = vpack.c.b16 %v1828, %v1820
        %v2629 = vpack.c.b16 %v1829, %v1821
        %v2630 = vpack.c.b16 %v1830, %v1822
        %v2631 = vpack.c.b16 %v1831, %v1823
        %v2632 = vpack.c.b16 %v1832, %v1824
        %v2633 = vpack.c.b16 %v1833, %v1825
        %v2634 = vpack.c.b16 %v1834, %v1826
        %v2635 = vpack.c.b16 %v1843, %v1835
        %v2636 = vpack.c.b16 %v1844, %v1836
        %v2637 = vpack.c.b16 %v1845, %v1837
        %v2638 = vpack.c.b16 %v1846, %v1838
        %v2639 = vpack.c.b16 %v1847, %v1839
        %v2640 = vpack.c.b16 %v1848, %v1840
        %v2641 = vpack.c.b16 %v1849, %v1841
        %v2642 = vpack.c.b16 %v1850, %v1842
        %v2643 = vpack.c.b16 %v1859, %v1851
        %v2644 = vpack.c.b16 %v1860, %v1852
        %v2645 = vpack.c.b16 %v1861, %v1853
        %v2646 = vpack.c.b16 %v1862, %v1854
        %v2647 = vpack.c.b16 %v1863, %v1855
        %v2648 = vpack.c.b16 %v1864, %v1856
        %v2649 = vpack.c.b16 %v1865, %v1857
        %v2650 = vpack.c.b16 %v1866, %v1858
        %v2651 = vpack.c.b16 %v1875, %v1867
        %v2652 = vpack.c.b16 %v1876, %v1868
        %v2653 = vpack.c.b16 %v1877, %v1869
        %v2654 = vpack.c.b16 %v1878, %v1870
        %v2655 = vpack.c.b16 %v1879, %v1871
        %v2656 = vpack.c.b16 %v1880, %v1872
        %v2657 = vpack.c.b16 %v1881, %v1873
        %v2658 = vpack.c.b16 %v1882, %v1874
        %v2659 = vpack.c.b16 %v1891, %v1883
        %v2660 = vpack.c.b16 %v1892, %v1884
        %v2661 = vpack.c.b16 %v1893, %v1885
        %v2662 = vpack.c.b16 %v1894, %v1886
        %v2663 = vpack.c.b16 %v1895, %v1887
        %v2664 = vpack.c.b16 %v1896, %v1888
        %v2665 = vpack.c.b16 %v1897, %v1889
        %v2666 = vpack.c.b16 %v1898, %v1890
        %v2667 = vpack.c.b16 %v1907, %v1899
        %v2668 = vpack.c.b16 %v1908, %v1900
        %v2669 = vpack.c.b16 %v1909, %v1901
        %v2670 = vpack.c.b16 %v1910, %v1902
        %v2671 = vpack.c.b16 %v1911, %v1903
        %v2672 = vpack.c.b16 %v1912, %v1904
        %v2673 = vpack.c.b16 %v1913, %v1905
        %v2674 = vpack.c.b16 %v1914, %v1906
        %v2675 = vpack.c.b16 %v1923, %v1915
        %v2676 = vpack.c.b16 %v1924, %v1916
        %v2677 = vpack.c.b16 %v1925, %v1917
        %v2678 = vpack.c.b16 %v1926, %v1918
        %v2679 = vpack.c.b16 %v1927, %v1919
        %v2680 = vpack.c.b16 %v1928, %v1920
        %v2681 = vpack.c.b16 %v1929, %v1921
        %v2682 = vpack.c.b16 %v1930, %v1922
        %v2683 = vpack.c.b16 %v1939, %v1931
        %v2684 = vpack.c.b16 %v1940, %v1932
        %v2685 = vpack.c.b16 %v1941, %v1933
        %v2686 = vpack.c.b16 %v1942, %v1934
        %v2687 = vpack.c.b16 %v1943, %v1935
        %v2688 = vpack.c.b16 %v1944, %v1936
        %v2689 = vpack.c.b16 %v1945, %v1937
        %v2690 = vpack.c.b16 %v1946, %v1938
        %v2691 = vpack.c.b16 %v1955, %v1947
        %v2692 = vpack.c.b16 %v1956, %v1948
        %v2693 = vpack.c.b16 %v1957, %v1949
        %v2694 = vpack.c.b16 %v1958, %v1950
        %v2695 = vpack.c.b16 %v1959, %v1951
        %v2696 = vpack.c.b16 %v1960, %v1952
        %v2697 = vpack.c.b16 %v1961, %v1953
        %v2698 = vpack.c.b16 %v1962, %v1954
        %v2699 = vpack.c.b16 %v1971, %v1963
        %v2700 = vpack.c.b16 %v1972, %v1964
        %v2701 = vpack.c.b16 %v1973, %v1965
        %v2702 = vpack.c.b16 %v1974, %v1966
        %v2703 = vpack.c.b16 %v1975, %v1967
        %v2704 = vpack.c.b16 %v1976, %v1968
        %v2705 = vpack.c.b16 %v1977, %v1969
        %v2706 = vpack.c.b16 %v1978, %v1970
        %v2707 = vpack.c.b16 %v1987, %v1979
        %v2708 = vpack.c.b16 %v1988, %v1980
        %v2709 = vpack.c.b16 %v1989, %v1981
        %v2710 = vpack.c.b16 %v1990, %v1982
        %v2711 = vpack.c.b16 %v1991, %v1983
        %v2712 = vpack.c.b16 %v1992, %v1984
        %v2713 = vpack.c.b16 %v1993, %v1985
        %v2714 = vpack.c.b16 %v1994, %v1986
        %v2715 = vpack.c.b16 %v2003, %v1995
        %v2716 = vpack.c.b16 %v2004, %v1996
        %v2717 = vpack.c.b16 %v2005, %v1997
        %v2718 = vpack.c.b16 %v2006, %v1998
        %v2719 = vpack.c.b16 %v2007, %v1999
        %v2720 = vpack.c.b16 %v2008, %v2000
        %v2721 = vpack.c.b16 %v2009, %v2001
        %v2722 = vpack.c.b16 %v2010, %v2002
        %v2723 = vpack.c.b16 %v2019, %v2011
        %v2724 = vpack.c.b16 %v2020, %v2012
        %v2725 = vpack.c.b16 %v2021, %v2013
        %v2726 = vpack.c.b16 %v2022, %v2014
        %v2727 = vpack.c.b16 %v2023, %v2015
        %v2728 = vpack.c.b16 %v2024, %v2016
        %v2729 = vpack.c.b16 %v2025, %v2017
        %v2730 = vpack.c.b16 %v2026, %v2018
        %v2731 = vpack.c.b16 %v2035, %v2027
        %v2732 = vpack.c.b16 %v2036, %v2028
        %v2733 = vpack.c.b16 %v2037, %v2029
        %v2734 = vpack.c.b16 %v2038, %v2030
        %v2735 = vpack.c.b16 %v2039, %v2031
        %v2736 = vpack.c.b16 %v2040, %v2032
        %v2737 = vpack.c.b16 %v2041, %v2033
        %v2738 = vpack.c.b16 %v2042, %v2034
        %v2739 = vpack.c.b16 %v2051, %v2043
        %v2740 = vpack.c.b16 %v2052, %v2044
        %v2741 = vpack.c.b16 %v2053, %v2045
        %v2742 = vpack.c.b16 %v2054, %v2046
        %v2743 = vpack.c.b16 %v2055, %v2047
        %v2744 = vpack.c.b16 %v2056, %v2048
        %v2745 = vpack.c.b16 %v2057, %v2049
        %v2746 = vpack.c.b16 %v2058, %v2050
        %v2747 = vpack.c.b16 %v2067, %v2059
        %v2748 = vpack.c.b16 %v2068, %v2060
        %v2749 = vpack.c.b16 %v2069, %v2061
        %v2750 = vpack.c.b16 %v2070, %v2062
        %v2751 = vpack.c.b16 %v2071, %v2063
        %v2752 = vpack.c.b16 %v2072, %v2064
        %v2753 = vpack.c.b16 %v2073, %v2065
        %v2754 = vpack.c.b16 %v2074, %v2066
        %v2755 = vpack.c.b16 %v2083, %v2075
        %v2756 = vpack.c.b16 %v2084, %v2076
        %v2757 = vpack.c.b16 %v2085, %v2077
        %v2758 = vpack.c.b16 %v2086, %v2078
        %v2759 = vpack.c.b16 %v2087, %v2079
        %v2760 = vpack.c.b16 %v2088, %v2080
        %v2761 = vpack.c.b16 %v2089, %v2081
        %v2762 = vpack.c.b16 %v2090, %v2082
        %v2763 = vpack.c.b16 %v2099, %v2091
        %v2764 = vpack.c.b16 %v2100, %v2092
        %v2765 = vpack.c.b16 %v2101, %v2093
        %v2766 = vpack.c.b16 %v2102, %v2094
        %v2767 = vpack.c.b16 %v2103, %v2095
        %v2768 = vpack.c.b16 %v2104, %v2096
        %v2769 = vpack.c.b16 %v2105, %v2097
        %v2770 = vpack.c.b16 %v2106, %v2098
        %v2771 = vpack.c.b16 %v2115, %v2107
        %v2772 = vpack.c.b16 %v2116, %v2108
        %v2773 = vpack.c.b16 %v2117, %v2109
        %v2774 = vpack.c.b16 %v2118, %v2110
        %v2775 = vpack.c.b16 %v2119, %v2111
        %v2776 = vpack.c.b16 %v2120, %v2112
        %v2777 = vpack.c.b16 %v2121, %v2113
        %v2778 = vpack.c.b16 %v2122, %v2114
        %v2779 = vpack.c.b16 %v2131, %v2123
        %v2780 = vpack.c.b16 %v2132, %v2124
        %v2781 = vpack.c.b16 %v2133, %v2125
        %v2782 = vpack.c.b16 %v2134, %v2126
        %v2783 = vpack.c.b16 %v2135, %v2127
        %v2784 = vpack.c.b16 %v2136, %v2128
        %v2785 = vpack.c.b16 %v2137, %v2129
        %v2786 = vpack.c.b16 %v2138, %v2130
        %v2787 = vpack.c.b16 %v2147, %v2139
        %v2788 = vpack.c.b16 %v2148, %v2140
        %v2789 = vpack.c.b16 %v2149, %v2141
        %v2790 = vpack.c.b16 %v2150, %v2142
        %v2791 = vpack.c.b16 %v2151, %v2143
        %v2792 = vpack.c.b16 %v2152, %v2144
        %v2793 = vpack.c.b16 %v2153, %v2145
        %v2794 = vpack.c.b16 %v2154, %v2146
        %v2795 = vpack.c.b16 %v2163, %v2155
        %v2796 = vpack.c.b16 %v2164, %v2156
        %v2797 = vpack.c.b16 %v2165, %v2157
        %v2798 = vpack.c.b16 %v2166, %v2158
        %v2799 = vpack.c.b16 %v2167, %v2159
        %v2800 = vpack.c.b16 %v2168, %v2160
        %v2801 = vpack.c.b16 %v2169, %v2161
        %v2802 = vpack.c.b16 %v2170, %v2162
        %v2803 = vpack.c.b16 %v2179, %v2171
        %v2804 = vpack.c.b16 %v2180, %v2172
        %v2805 = vpack.c.b16 %v2181, %v2173
        %v2806 = vpack.c.b16 %v2182, %v2174
        %v2807 = vpack.c.b16 %v2183, %v2175
        %v2808 = vpack.c.b16 %v2184, %v2176
        %v2809 = vpack.c.b16 %v2185, %v2177
        %v2810 = vpack.c.b16 %v2186, %v2178
        %v2811 = vpack.c.b16 %v2195, %v2187
        %v2812 = vpack.c.b16 %v2196, %v2188
        %v2813 = vpack.c.b16 %v2197, %v2189
        %v2814 = vpack.c.b16 %v2198, %v2190
        %v2815 = vpack.c.b16 %v2199, %v2191
        %v2816 = vpack.c.b16 %v2200, %v2192
        %v2817 = vpack.c.b16 %v2201, %v2193
        %v2818 = vpack.c.b16 %v2202, %v2194
        %v2819 = vpack.c.b16 %v2211, %v2203
        %v2820 = vpack.c.b16 %v2212, %v2204
        %v2821 = vpack.c.b16 %v2213, %v2205
        %v2822 = vpack.c.b16 %v2214, %v2206
        %v2823 = vpack.c.b16 %v2215, %v2207
        %v2824 = vpack.c.b16 %v2216, %v2208
        %v2825 = vpack.c.b16 %v2217, %v2209
        %v2826 = vpack.c.b16 %v2218, %v2210
        %v2827 = vpack.c.b16 %v2227, %v2219
        %v2828 = vpack.c.b16 %v2228, %v2220
        %v2829 = vpack.c.b16 %v2229, %v2221
        %v2830 = vpack.c.b16 %v2230, %v2222
        %v2831 = vpack.c.b16 %v2231, %v2223
        %v2832 = vpack.c.b16 %v2232, %v2224
        %v2833 = vpack.c.b16 %v2233, %v2225
        %v2834 = vpack.c.b16 %v2234, %v2226
        %v2835 = vpack.c.b16 %v2243, %v2235
        %v2836 = vpack.c.b16 %v2244, %v2236
        %v2837 = vpack.c.b16 %v2245, %v2237
        %v2838 = vpack.c.b16 %v2246, %v2238
        %v2839 = vpack.c.b16 %v2247, %v2239
        %v2840 = vpack.c.b16 %v2248, %v2240
        %v2841 = vpack.c.b16 %v2249, %v2241
        %v2842 = vpack.c.b16 %v2250, %v2242
        %v2843 = vpack.c.b16 %v2259, %v2251
        %v2844 = vpack.c.b16 %v2260, %v2252
        %v2845 = vpack.c.b16 %v2261, %v2253
        %v2846 = vpack.c.b16 %v2262, %v2254
        %v2847 = vpack.c.b16 %v2263, %v2255
        %v2848 = vpack.c.b16 %v2264, %v2256
        %v2849 = vpack.c.b16 %v2265, %v2257
        %v2850 = vpack.c.b16 %v2266, %v2258
        %v2851 = vpack.c.b16 %v2275, %v2267
        %v2852 = vpack.c.b16 %v2276, %v2268
        %v2853 = vpack.c.b16 %v2277, %v2269
        %v2854 = vpack.c.b16 %v2278, %v2270
        %v2855 = vpack.c.b16 %v2279, %v2271
        %v2856 = vpack.c.b16 %v2280, %v2272
        %v2857 = vpack.c.b16 %v2281, %v2273
        %v2858 = vpack.c.b16 %v2282, %v2274
        %v2859 = vpack.c.b16 %v2291, %v2283
        %v2860 = vpack.c.b16 %v2292, %v2284
        %v2861 = vpack.c.b16 %v2293, %v2285
        %v2862 = vpack.c.b16 %v2294, %v2286
        %v2863 = vpack.c.b16 %v2295, %v2287
        %v2864 = vpack.c.b16 %v2296, %v2288
        %v2865 = vpack.c.b16 %v2297, %v2289
        %v2866 = vpack.c.b16 %v2298, %v2290
        %v2867 = vpack.c.b16 %v2307, %v2299
        %v2868 = vpack.c.b16 %v2308, %v2300
        %v2869 = vpack.c.b16 %v2309, %v2301
        %v2870 = vpack.c.b16 %v2310, %v2302
        %v2871 = vpack.c.b16 %v2311, %v2303
        %v2872 = vpack.c.b16 %v2312, %v2304
        %v2873 = vpack.c.b16 %v2313, %v2305
        %v2874 = vpack.c.b16 %v2314, %v2306
        %v2875 = vpack.c.b16 %v2323, %v2315
        %v2876 = vpack.c.b16 %v2324, %v2316
        %v2877 = vpack.c.b16 %v2325, %v2317
        %v2878 = vpack.c.b16 %v2326, %v2318
        %v2879 = vpack.c.b16 %v2327, %v2319
        %v2880 = vpack.c.b16 %v2328, %v2320
        %v2881 = vpack.c.b16 %v2329, %v2321
        %v2882 = vpack.c.b16 %v2330, %v2322
        %v2883 = vpack.c.b16 %v2339, %v2331
        %v2884 = vpack.c.b16 %v2340, %v2332
        %v2885 = vpack.c.b16 %v2341, %v2333
        %v2886 = vpack.c.b16 %v2342, %v2334
        %v2887 = vpack.c.b16 %v2343, %v2335
        %v2888 = vpack.c.b16 %v2344, %v2336
        %v2889 = vpack.c.b16 %v2345, %v2337
        %v2890 = vpack.c.b16 %v2346, %v2338
        %v2891 = vpack.c.b16 %v2355, %v2347
        %v2892 = vpack.c.b16 %v2356, %v2348
        %v2893 = vpack.c.b16 %v2357, %v2349
        %v2894 = vpack.c.b16 %v2358, %v2350
        %v2895 = vpack.c.b16 %v2359, %v2351
        %v2896 = vpack.c.b16 %v2360, %v2352
        %v2897 = vpack.c.b16 %v2361, %v2353
        %v2898 = vpack.c.b16 %v2362, %v2354
        %v2899 = vpack.c.b16 %v2371, %v2363
        %v2900 = vpack.c.b16 %v2372, %v2364
        %v2901 = vpack.c.b16 %v2373, %v2365
        %v2902 = vpack.c.b16 %v2374, %v2366
        %v2903 = vpack.c.b16 %v2375, %v2367
        %v2904 = vpack.c.b16 %v2376, %v2368
        %v2905 = vpack.c.b16 %v2377, %v2369
        %v2906 = vpack.c.b16 %v2378, %v2370
        %v2907 = vpack.c.b16 %v2387, %v2379
        %v2908 = vpack.c.b16 %v2388, %v2380
        %v2909 = vpack.c.b16 %v2389, %v2381
        %v2910 = vpack.c.b16 %v2390, %v2382
        %v2911 = vpack.c.b16 %v2391, %v2383
        %v2912 = vpack.c.b16 %v2392, %v2384
        %v2913 = vpack.c.b16 %v2393, %v2385
        %v2914 = vpack.c.b16 %v2394, %v2386
        %v2915 = vpack.c.b16 %v2403, %v2395
        %v2916 = vpack.c.b16 %v2404, %v2396
        %v2917 = vpack.c.b16 %v2405, %v2397
        %v2918 = vpack.c.b16 %v2406, %v2398
        %v2919 = vpack.c.b16 %v2407, %v2399
        %v2920 = vpack.c.b16 %v2408, %v2400
        %v2921 = vpack.c.b16 %v2409, %v2401
        %v2922 = vpack.c.b16 %v2410, %v2402
        %v2923 = vpack.c.b16 %v2419, %v2411
        %v2924 = vpack.c.b16 %v2420, %v2412
        %v2925 = vpack.c.b16 %v2421, %v2413
        %v2926 = vpack.c.b16 %v2422, %v2414
        %v2927 = vpack.c.b16 %v2423, %v2415
        %v2928 = vpack.c.b16 %v2424, %v2416
        %v2929 = vpack.c.b16 %v2425, %v2417
        %v2930 = vpack.c.b16 %v2426, %v2418
        %v2931 = vpack.c.b16 %v2435, %v2427
        %v2932 = vpack.c.b16 %v2436, %v2428
        %v2933 = vpack.c.b16 %v2437, %v2429
        %v2934 = vpack.c.b16 %v2438, %v2430
        %v2935 = vpack.c.b16 %v2439, %v2431
        %v2936 = vpack.c.b16 %v2440, %v2432
        %v2937 = vpack.c.b16 %v2441, %v2433
        %v2938 = vpack.c.b16 %v2442, %v2434
        %v2939 = vpack.c.b16 %v2451, %v2443
        %v2940 = vpack.c.b16 %v2452, %v2444
        %v2941 = vpack.c.b16 %v2453, %v2445
        %v2942 = vpack.c.b16 %v2454, %v2446
        %v2943 = vpack.c.b16 %v2455, %v2447
        %v2944 = vpack.c.b16 %v2456, %v2448
        %v2945 = vpack.c.b16 %v2457, %v2449
        %v2946 = vpack.c.b16 %v2458, %v2450
        %v2947 = vpack.c.b16 %v2467, %v2459
        %v2948 = vpack.c.b16 %v2468, %v2460
        %v2949 = vpack.c.b16 %v2469, %v2461
        %v2950 = vpack.c.b16 %v2470, %v2462
        %v2951 = vpack.c.b16 %v2471, %v2463
        %v2952 = vpack.c.b16 %v2472, %v2464
        %v2953 = vpack.c.b16 %v2473, %v2465
        %v2954 = vpack.c.b16 %v2474, %v2466
        %vm3435 = vcmask 523264
        %v3437 = vsel %vm3435, %v512, 0
        %3439 = vmatprep.subr.bf16.mxu0 %v2476
        %3440 = vmatpush1.bf16.msra.mxu0 %v2475
        %3441 = vmatprep.subr.bf16.mxu0 %v2484
        %3442 = vmatpush1.bf16.msra.mxu0 %v2483
        %3443 = vmatprep.subr.bf16.mxu0 %v2492
        %3444 = vmatpush1.bf16.msra.mxu0 %v2491
        %3445 = vmatprep.subr.bf16.mxu0 %v2500
        %3446 = vmatpush1.bf16.msra.mxu0 %v2499
        %3447 = vmatprep.subr.bf16.mxu0 %v2508
        %3448 = vmatpush1.bf16.msra.mxu0 %v2507
        %3449 = vmatprep.subr.bf16.mxu0 %v2516
        %3450 = vmatpush1.bf16.msra.mxu0 %v2515
        %3451 = vmatprep.subr.bf16.mxu0 %v2524
        %3452 = vmatpush1.bf16.msra.mxu0 %v2523
        %3453 = vmatprep.subr.bf16.mxu0 %v2532
        %3454 = vmatpush1.bf16.msra.mxu0 %v2531
        %3455 = vmatprep.subr.bf16.mxu0 %v2540
        %3456 = vmatpush1.bf16.msra.mxu0 %v2539
        %3457 = vmatprep.subr.bf16.mxu0 %v2548
        %3458 = vmatpush1.bf16.msra.mxu0 %v2547
        %3459 = vmatprep.subr.bf16.mxu0 %v2556
        %3460 = vmatpush1.bf16.msra.mxu0 %v2555
        %3461 = vmatprep.subr.bf16.mxu0 %v2564
        %3462 = vmatpush1.bf16.msra.mxu0 %v2563
        %3463 = vmatprep.subr.bf16.mxu0 %v2572
        %3464 = vmatpush1.bf16.msra.mxu0 %v2571
        %3465 = vmatprep.subr.bf16.mxu0 %v2580
        %3466 = vmatpush1.bf16.msra.mxu0 %v2579
        %3467 = vmatprep.subr.bf16.mxu0 %v2588
        %3468 = vmatpush1.bf16.msra.mxu0 %v2587
        %3469 = vmatprep.subr.bf16.mxu0 %v2596
        %3470 = vmatpush1.bf16.msra.mxu0 %v2595
        %3471 = vmatprep.mubr.bf16.mxu0 %v506
        %3472 = vmatmul.mubr.bf16.gmra.mrb[0].mxu0 %v505
        %v3473 = vpop.f32.mrb[0].mxu0
        %v3474 = vadd.f32 %v998, %v3473
        %v3475 = vpop.f32.mrb[0].mxu0
        %v3476 = vadd.f32 %v1002, %v3475
        %v3477 = vpop.f32.mrb[0].mxu0
        %v3478 = vpop.f32.mrb[0].mxu0
        %3479 = vdwg.mxu0
        %3480 = vmatprep.subr.bf16.mxu0 %v2604
        %3481 = vmatpush1.bf16.msra.mxu0 %v2603
        %3482 = vmatprep.subr.bf16.mxu0 %v2612
        %3483 = vmatpush1.bf16.msra.mxu0 %v2611
        %3484 = vmatprep.subr.bf16.mxu0 %v2620
        %3485 = vmatpush1.bf16.msra.mxu0 %v2619
        %3486 = vmatprep.subr.bf16.mxu0 %v2628
        %3487 = vmatpush1.bf16.msra.mxu0 %v2627
        %3488 = vmatprep.subr.bf16.mxu0 %v2636
        %3489 = vmatpush1.bf16.msra.mxu0 %v2635
        %3490 = vmatprep.subr.bf16.mxu0 %v2644
        %3491 = vmatpush1.bf16.msra.mxu0 %v2643
        %3492 = vmatprep.subr.bf16.mxu0 %v2652
        %3493 = vmatpush1.bf16.msra.mxu0 %v2651
        %3494 = vmatprep.subr.bf16.mxu0 %v2660
        %3495 = vmatpush1.bf16.msra.mxu0 %v2659
        %3496 = vmatprep.subr.bf16.mxu0 %v2668
        %3497 = vmatpush1.bf16.msra.mxu0 %v2667
        %3498 = vmatprep.subr.bf16.mxu0 %v2676
        %3499 = vmatpush1.bf16.msra.mxu0 %v2675
        %3500 = vmatprep.subr.bf16.mxu0 %v2684
        %3501 = vmatpush1.bf16.msra.mxu0 %v2683
        %3502 = vmatprep.subr.bf16.mxu0 %v2692
        %3503 = vmatpush1.bf16.msra.mxu0 %v2691
        %3504 = vmatprep.subr.bf16.mxu0 %v2700
        %3505 = vmatpush1.bf16.msra.mxu0 %v2699
        %3506 = vmatprep.subr.bf16.mxu0 %v2708
        %3507 = vmatpush1.bf16.msra.mxu0 %v2707
        %3508 = vmatprep.subr.bf16.mxu0 %v2716
        %3509 = vmatpush1.bf16.msra.mxu0 %v2715
        %3510 = vmatprep.subr.bf16.mxu0 %v2724
        %3511 = vmatpush1.bf16.msra.mxu0 %v2723
        %3512 = vmatprep.mubr.bf16.mxu0 %v508
        %3513 = vmatmul.mubr.bf16.gmra.mrb[0].mxu0 %v507
        %v3514 = vpop.f32.mrb[0].mxu0
        %v3515 = vadd.f32 %v3474, %v3514
        %v3516 = vpop.f32.mrb[0].mxu0
        %v3517 = vadd.f32 %v3476, %v3516
        %v3518 = vpop.f32.mrb[0].mxu0
        %v3519 = vpop.f32.mrb[0].mxu0
        %3520 = vdwg.mxu0
        %3521 = vmatprep.subr.bf16.mxu0 %v2732
        %3522 = vmatpush1.bf16.msra.mxu0 %v2731
        %3523 = vmatprep.subr.bf16.mxu0 %v2740
        %3524 = vmatpush1.bf16.msra.mxu0 %v2739
        %3525 = vmatprep.subr.bf16.mxu0 %v2748
        %3526 = vmatpush1.bf16.msra.mxu0 %v2747
        %3527 = vmatprep.subr.bf16.mxu0 %v2756
        %3528 = vmatpush1.bf16.msra.mxu0 %v2755
        %3529 = vmatprep.subr.bf16.mxu0 %v2764
        %3530 = vmatpush1.bf16.msra.mxu0 %v2763
        %3531 = vmatprep.subr.bf16.mxu0 %v2772
        %3532 = vmatpush1.bf16.msra.mxu0 %v2771
        %3533 = vmatprep.subr.bf16.mxu0 %v2780
        %3534 = vmatpush1.bf16.msra.mxu0 %v2779
        %3535 = vmatprep.subr.bf16.mxu0 %v2788
        %3536 = vmatpush1.bf16.msra.mxu0 %v2787
        %3537 = vmatprep.subr.bf16.mxu0 %v2796
        %3538 = vmatpush1.bf16.msra.mxu0 %v2795
        %3539 = vmatprep.subr.bf16.mxu0 %v2804
        %3540 = vmatpush1.bf16.msra.mxu0 %v2803
        %3541 = vmatprep.subr.bf16.mxu0 %v2812
        %3542 = vmatpush1.bf16.msra.mxu0 %v2811
        %3543 = vmatprep.subr.bf16.mxu0 %v2820
        %3544 = vmatpush1.bf16.msra.mxu0 %v2819
        %3545 = vmatprep.subr.bf16.mxu0 %v2828
        %3546 = vmatpush1.bf16.msra.mxu0 %v2827
        %3547 = vmatprep.subr.bf16.mxu0 %v2836
        %3548 = vmatpush1.bf16.msra.mxu0 %v2835
        %3549 = vmatprep.subr.bf16.mxu0 %v2844
        %3550 = vmatpush1.bf16.msra.mxu0 %v2843
        %3551 = vmatprep.subr.bf16.mxu0 %v2852
        %3552 = vmatpush1.bf16.msra.mxu0 %v2851
        %3553 = vmatprep.mubr.bf16.mxu0 %v510
        %3554 = vmatmul.mubr.bf16.gmra.mrb[0].mxu0 %v509
        %v3555 = vpop.f32.mrb[0].mxu0
        %v3556 = vadd.f32 %v3515, %v3555
        %v3557 = vpop.f32.mrb[0].mxu0
        %v3558 = vadd.f32 %v3517, %v3557
        %v3559 = vpop.f32.mrb[0].mxu0
        %v3560 = vpop.f32.mrb[0].mxu0
        %3561 = vdwg.mxu0
        %3562 = vmatprep.subr.bf16.mxu0 %v2860
        %3563 = vmatpush1.bf16.msra.mxu0 %v2859
        %3564 = vmatprep.subr.bf16.mxu0 %v2868
        %3565 = vmatpush1.bf16.msra.mxu0 %v2867
        %3566 = vmatprep.subr.bf16.mxu0 %v2876
        %3567 = vmatpush1.bf16.msra.mxu0 %v2875
        %3568 = vmatprep.subr.bf16.mxu0 %v2884
        %3569 = vmatpush1.bf16.msra.mxu0 %v2883
        %3570 = vmatprep.subr.bf16.mxu0 %v2892
        %3571 = vmatpush1.bf16.msra.mxu0 %v2891
        %3572 = vmatprep.subr.bf16.mxu0 %v2900
        %3573 = vmatpush1.bf16.msra.mxu0 %v2899
        %3574 = vmatprep.subr.bf16.mxu0 %v2908
        %3575 = vmatpush1.bf16.msra.mxu0 %v2907
        %3576 = vmatprep.subr.bf16.mxu0 %v2916
        %3577 = vmatpush1.bf16.msra.mxu0 %v2915
        %3578 = vmatprep.subr.bf16.mxu0 %v2924
        %3579 = vmatpush1.bf16.msra.mxu0 %v2923
        %3580 = vmatprep.subr.bf16.mxu0 %v2932
        %3581 = vmatpush1.bf16.msra.mxu0 %v2931
        %3582 = vmatprep.subr.bf16.mxu0 %v2940
        %3583 = vmatpush1.bf16.msra.mxu0 %v2939
        %3584 = vmatprep.subr.bf16.mxu0 %v2948
        %3585 = vmatpush1.bf16.msra.mxu0 %v2947
        %3586 = vmatprep.subr.bf16.mxu0 0
        %3587 = vmatpush1.bf16.msra.mxu0 0
        %3588 = vmatprep.subr.bf16.mxu0 0
        %3589 = vmatpush1.bf16.msra.mxu0 0
        %3590 = vmatprep.subr.bf16.mxu0 0
        %3591 = vmatpush1.bf16.msra.mxu0 0
        %3592 = vmatprep.subr.bf16.mxu0 0
        %3593 = vmatpush1.bf16.msra.mxu0 0
        %3594 = vmatprep.mubr.bf16.mxu0 %v3437
        %3595 = vmatmul.mubr.bf16.gmra.mrb[0].mxu0 %v511
        %v3596 = vpop.f32.mrb[0].mxu0
        %v3597 = vadd.f32 %v3556, %v3596
        %v3598 = vpop.f32.mrb[0].mxu0
        %v3599 = vadd.f32 %v3558, %v3598
        %v3600 = vpop.f32.mrb[0].mxu0
        %v3601 = vpop.f32.mrb[0].mxu0
        %3602 = vdwg.mxu0
        %3603 = vmatprep.subr.bf16.mxu0 %v2478
        %3604 = vmatpush1.bf16.msra.mxu0 %v2477
        %3605 = vmatprep.subr.bf16.mxu0 %v2486
        %3606 = vmatpush1.bf16.msra.mxu0 %v2485
        %3607 = vmatprep.subr.bf16.mxu0 %v2494
        %3608 = vmatpush1.bf16.msra.mxu0 %v2493
        %3609 = vmatprep.subr.bf16.mxu0 %v2502
        %3610 = vmatpush1.bf16.msra.mxu0 %v2501
        %3611 = vmatprep.subr.bf16.mxu0 %v2510
        %3612 = vmatpush1.bf16.msra.mxu0 %v2509
        %3613 = vmatprep.subr.bf16.mxu0 %v2518
        %3614 = vmatpush1.bf16.msra.mxu0 %v2517
        %3615 = vmatprep.subr.bf16.mxu0 %v2526
        %3616 = vmatpush1.bf16.msra.mxu0 %v2525
        %3617 = vmatprep.subr.bf16.mxu0 %v2534
        %3618 = vmatpush1.bf16.msra.mxu0 %v2533
        %3619 = vmatprep.subr.bf16.mxu0 %v2542
        %3620 = vmatpush1.bf16.msra.mxu0 %v2541
        %3621 = vmatprep.subr.bf16.mxu0 %v2550
        %3622 = vmatpush1.bf16.msra.mxu0 %v2549
        %3623 = vmatprep.subr.bf16.mxu0 %v2558
        %3624 = vmatpush1.bf16.msra.mxu0 %v2557
        %3625 = vmatprep.subr.bf16.mxu0 %v2566
        %3626 = vmatpush1.bf16.msra.mxu0 %v2565
        %3627 = vmatprep.subr.bf16.mxu0 %v2574
        %3628 = vmatpush1.bf16.msra.mxu0 %v2573
        %3629 = vmatprep.subr.bf16.mxu0 %v2582
        %3630 = vmatpush1.bf16.msra.mxu0 %v2581
        %3631 = vmatprep.subr.bf16.mxu0 %v2590
        %3632 = vmatpush1.bf16.msra.mxu0 %v2589
        %3633 = vmatprep.subr.bf16.mxu0 %v2598
        %3634 = vmatpush1.bf16.msra.mxu0 %v2597
        %3635 = vmatprep.mubr.bf16.mxu0 %v506
        %3636 = vmatmul.mubr.bf16.gmra.mrb[0].mxu0 %v505
        %v3637 = vpop.f32.mrb[0].mxu0
        %v3638 = vadd.f32 %v1006, %v3637
        %v3639 = vpop.f32.mrb[0].mxu0
        %v3640 = vadd.f32 %v1010, %v3639
        %v3641 = vpop.f32.mrb[0].mxu0
        %v3642 = vpop.f32.mrb[0].mxu0
        %3643 = vdwg.mxu0
        %3644 = vmatprep.subr.bf16.mxu0 %v2606
        %3645 = vmatpush1.bf16.msra.mxu0 %v2605
        %3646 = vmatprep.subr.bf16.mxu0 %v2614
        %3647 = vmatpush1.bf16.msra.mxu0 %v2613
        %3648 = vmatprep.subr.bf16.mxu0 %v2622
        %3649 = vmatpush1.bf16.msra.mxu0 %v2621
        %3650 = vmatprep.subr.bf16.mxu0 %v2630
        %3651 = vmatpush1.bf16.msra.mxu0 %v2629
        %3652 = vmatprep.subr.bf16.mxu0 %v2638
        %3653 = vmatpush1.bf16.msra.mxu0 %v2637
        %3654 = vmatprep.subr.bf16.mxu0 %v2646
        %3655 = vmatpush1.bf16.msra.mxu0 %v2645
        %3656 = vmatprep.subr.bf16.mxu0 %v2654
        %3657 = vmatpush1.bf16.msra.mxu0 %v2653
        %3658 = vmatprep.subr.bf16.mxu0 %v2662
        %3659 = vmatpush1.bf16.msra.mxu0 %v2661
        %3660 = vmatprep.subr.bf16.mxu0 %v2670
        %3661 = vmatpush1.bf16.msra.mxu0 %v2669
        %3662 = vmatprep.subr.bf16.mxu0 %v2678
        %3663 = vmatpush1.bf16.msra.mxu0 %v2677
        %3664 = vmatprep.subr.bf16.mxu0 %v2686
        %3665 = vmatpush1.bf16.msra.mxu0 %v2685
        %3666 = vmatprep.subr.bf16.mxu0 %v2694
        %3667 = vmatpush1.bf16.msra.mxu0 %v2693
        %3668 = vmatprep.subr.bf16.mxu0 %v2702
        %3669 = vmatpush1.bf16.msra.mxu0 %v2701
        %3670 = vmatprep.subr.bf16.mxu0 %v2710
        %3671 = vmatpush1.bf16.msra.mxu0 %v2709
        %3672 = vmatprep.subr.bf16.mxu0 %v2718
        %3673 = vmatpush1.bf16.msra.mxu0 %v2717
        %3674 = vmatprep.subr.bf16.mxu0 %v2726
        %3675 = vmatpush1.bf16.msra.mxu0 %v2725
        %3676 = vmatprep.mubr.bf16.mxu0 %v508
        %3677 = vmatmul.mubr.bf16.gmra.mrb[0].mxu0 %v507
        %v3678 = vpop.f32.mrb[0].mxu0
        %v3679 = vadd.f32 %v3638, %v3678
        %v3680 = vpop.f32.mrb[0].mxu0
        %v3681 = vadd.f32 %v3640, %v3680
        %v3682 = vpop.f32.mrb[0].mxu0
        %v3683 = vpop.f32.mrb[0].mxu0
        %3684 = vdwg.mxu0
        %3685 = vmatprep.subr.bf16.mxu0 %v2734
        %3686 = vmatpush1.bf16.msra.mxu0 %v2733
        %3687 = vmatprep.subr.bf16.mxu0 %v2742
        %3688 = vmatpush1.bf16.msra.mxu0 %v2741
        %3689 = vmatprep.subr.bf16.mxu0 %v2750
        %3690 = vmatpush1.bf16.msra.mxu0 %v2749
        %3691 = vmatprep.subr.bf16.mxu0 %v2758
        %3692 = vmatpush1.bf16.msra.mxu0 %v2757
        %3693 = vmatprep.subr.bf16.mxu0 %v2766
        %3694 = vmatpush1.bf16.msra.mxu0 %v2765
        %3695 = vmatprep.subr.bf16.mxu0 %v2774
        %3696 = vmatpush1.bf16.msra.mxu0 %v2773
        %3697 = vmatprep.subr.bf16.mxu0 %v2782
        %3698 = vmatpush1.bf16.msra.mxu0 %v2781
        %3699 = vmatprep.subr.bf16.mxu0 %v2790
        %3700 = vmatpush1.bf16.msra.mxu0 %v2789
        %3701 = vmatprep.subr.bf16.mxu0 %v2798
        %3702 = vmatpush1.bf16.msra.mxu0 %v2797
        %3703 = vmatprep.subr.bf16.mxu0 %v2806
        %3704 = vmatpush1.bf16.msra.mxu0 %v2805
        %3705 = vmatprep.subr.bf16.mxu0 %v2814
        %3706 = vmatpush1.bf16.msra.mxu0 %v2813
        %3707 = vmatprep.subr.bf16.mxu0 %v2822
        %3708 = vmatpush1.bf16.msra.mxu0 %v2821
        %3709 = vmatprep.subr.bf16.mxu0 %v2830
        %3710 = vmatpush1.bf16.msra.mxu0 %v2829
        %3711 = vmatprep.subr.bf16.mxu0 %v2838
        %3712 = vmatpush1.bf16.msra.mxu0 %v2837
        %3713 = vmatprep.subr.bf16.mxu0 %v2846
        %3714 = vmatpush1.bf16.msra.mxu0 %v2845
        %3715 = vmatprep.subr.bf16.mxu0 %v2854
        %3716 = vmatpush1.bf16.msra.mxu0 %v2853
        %3717 = vmatprep.mubr.bf16.mxu0 %v510
        %3718 = vmatmul.mubr.bf16.gmra.mrb[0].mxu0 %v509
        %v3719 = vpop.f32.mrb[0].mxu0
        %v3720 = vadd.f32 %v3679, %v3719
        %v3721 = vpop.f32.mrb[0].mxu0
        %v3722 = vadd.f32 %v3681, %v3721
        %v3723 = vpop.f32.mrb[0].mxu0
        %v3724 = vpop.f32.mrb[0].mxu0
        %3725 = vdwg.mxu0
        %3726 = vmatprep.subr.bf16.mxu0 %v2862
        %3727 = vmatpush1.bf16.msra.mxu0 %v2861
        %3728 = vmatprep.subr.bf16.mxu0 %v2870
        %3729 = vmatpush1.bf16.msra.mxu0 %v2869
        %3730 = vmatprep.subr.bf16.mxu0 %v2878
        %3731 = vmatpush1.bf16.msra.mxu0 %v2877
        %3732 = vmatprep.subr.bf16.mxu0 %v2886
        %3733 = vmatpush1.bf16.msra.mxu0 %v2885
        %3734 = vmatprep.subr.bf16.mxu0 %v2894
        %3735 = vmatpush1.bf16.msra.mxu0 %v2893
        %3736 = vmatprep.subr.bf16.mxu0 %v2902
        %3737 = vmatpush1.bf16.msra.mxu0 %v2901
        %3738 = vmatprep.subr.bf16.mxu0 %v2910
        %3739 = vmatpush1.bf16.msra.mxu0 %v2909
        %3740 = vmatprep.subr.bf16.mxu0 %v2918
        %3741 = vmatpush1.bf16.msra.mxu0 %v2917
        %3742 = vmatprep.subr.bf16.mxu0 %v2926
        %3743 = vmatpush1.bf16.msra.mxu0 %v2925
        %3744 = vmatprep.subr.bf16.mxu0 %v2934
        %3745 = vmatpush1.bf16.msra.mxu0 %v2933
        %3746 = vmatprep.subr.bf16.mxu0 %v2942
        %3747 = vmatpush1.bf16.msra.mxu0 %v2941
        %3748 = vmatprep.subr.bf16.mxu0 %v2950
        %3749 = vmatpush1.bf16.msra.mxu0 %v2949
        %3750 = vmatprep.subr.bf16.mxu0 0
        %3751 = vmatpush1.bf16.msra.mxu0 0
        %3752 = vmatprep.subr.bf16.mxu0 0
        %3753 = vmatpush1.bf16.msra.mxu0 0
        %3754 = vmatprep.subr.bf16.mxu0 0
        %3755 = vmatpush1.bf16.msra.mxu0 0
        %3756 = vmatprep.subr.bf16.mxu0 0
        %3757 = vmatpush1.bf16.msra.mxu0 0
        %3758 = vmatprep.mubr.bf16.mxu0 %v3437
        %3759 = vmatmul.mubr.bf16.gmra.mrb[0].mxu0 %v511
        %v3760 = vpop.f32.mrb[0].mxu0
        %v3761 = vadd.f32 %v3720, %v3760
        %v3762 = vpop.f32.mrb[0].mxu0
        %v3763 = vadd.f32 %v3722, %v3762
        %v3764 = vpop.f32.mrb[0].mxu0
        %v3765 = vpop.f32.mrb[0].mxu0
        %3766 = vdwg.mxu0
        %3767 = vmatprep.subr.bf16.mxu0 %v2480
        %3768 = vmatpush1.bf16.msra.mxu0 %v2479
        %3769 = vmatprep.subr.bf16.mxu0 %v2488
        %3770 = vmatpush1.bf16.msra.mxu0 %v2487
        %3771 = vmatprep.subr.bf16.mxu0 %v2496
        %3772 = vmatpush1.bf16.msra.mxu0 %v2495
        %3773 = vmatprep.subr.bf16.mxu0 %v2504
        %3774 = vmatpush1.bf16.msra.mxu0 %v2503
        %3775 = vmatprep.subr.bf16.mxu0 %v2512
        %3776 = vmatpush1.bf16.msra.mxu0 %v2511
        %3777 = vmatprep.subr.bf16.mxu0 %v2520
        %3778 = vmatpush1.bf16.msra.mxu0 %v2519
        %3779 = vmatprep.subr.bf16.mxu0 %v2528
        %3780 = vmatpush1.bf16.msra.mxu0 %v2527
        %3781 = vmatprep.subr.bf16.mxu0 %v2536
        %3782 = vmatpush1.bf16.msra.mxu0 %v2535
        %3783 = vmatprep.subr.bf16.mxu0 %v2544
        %3784 = vmatpush1.bf16.msra.mxu0 %v2543
        %3785 = vmatprep.subr.bf16.mxu0 %v2552
        %3786 = vmatpush1.bf16.msra.mxu0 %v2551
        %3787 = vmatprep.subr.bf16.mxu0 %v2560
        %3788 = vmatpush1.bf16.msra.mxu0 %v2559
        %3789 = vmatprep.subr.bf16.mxu0 %v2568
        %3790 = vmatpush1.bf16.msra.mxu0 %v2567
        %3791 = vmatprep.subr.bf16.mxu0 %v2576
        %3792 = vmatpush1.bf16.msra.mxu0 %v2575
        %3793 = vmatprep.subr.bf16.mxu0 %v2584
        %3794 = vmatpush1.bf16.msra.mxu0 %v2583
        %3795 = vmatprep.subr.bf16.mxu0 %v2592
        %3796 = vmatpush1.bf16.msra.mxu0 %v2591
        %3797 = vmatprep.subr.bf16.mxu0 %v2600
        %3798 = vmatpush1.bf16.msra.mxu0 %v2599
        %3799 = vmatprep.mubr.bf16.mxu0 %v506
        %3800 = vmatmul.mubr.bf16.gmra.mrb[0].mxu0 %v505
        %v3801 = vpop.f32.mrb[0].mxu0
        %v3802 = vadd.f32 %v1014, %v3801
        %v3803 = vpop.f32.mrb[0].mxu0
        %v3804 = vadd.f32 %v1018, %v3803
        %v3805 = vpop.f32.mrb[0].mxu0
        %v3806 = vpop.f32.mrb[0].mxu0
        %3807 = vdwg.mxu0
        %3808 = vmatprep.subr.bf16.mxu0 %v2608
        %3809 = vmatpush1.bf16.msra.mxu0 %v2607
        %3810 = vmatprep.subr.bf16.mxu0 %v2616
        %3811 = vmatpush1.bf16.msra.mxu0 %v2615
        %3812 = vmatprep.subr.bf16.mxu0 %v2624
        %3813 = vmatpush1.bf16.msra.mxu0 %v2623
        %3814 = vmatprep.subr.bf16.mxu0 %v2632
        %3815 = vmatpush1.bf16.msra.mxu0 %v2631
        %3816 = vmatprep.subr.bf16.mxu0 %v2640
        %3817 = vmatpush1.bf16.msra.mxu0 %v2639
        %3818 = vmatprep.subr.bf16.mxu0 %v2648
        %3819 = vmatpush1.bf16.msra.mxu0 %v2647
        %3820 = vmatprep.subr.bf16.mxu0 %v2656
        %3821 = vmatpush1.bf16.msra.mxu0 %v2655
        %3822 = vmatprep.subr.bf16.mxu0 %v2664
        %3823 = vmatpush1.bf16.msra.mxu0 %v2663
        %3824 = vmatprep.subr.bf16.mxu0 %v2672
        %3825 = vmatpush1.bf16.msra.mxu0 %v2671
        %3826 = vmatprep.subr.bf16.mxu0 %v2680
        %3827 = vmatpush1.bf16.msra.mxu0 %v2679
        %3828 = vmatprep.subr.bf16.mxu0 %v2688
        %3829 = vmatpush1.bf16.msra.mxu0 %v2687
        %3830 = vmatprep.subr.bf16.mxu0 %v2696
        %3831 = vmatpush1.bf16.msra.mxu0 %v2695
        %3832 = vmatprep.subr.bf16.mxu0 %v2704
        %3833 = vmatpush1.bf16.msra.mxu0 %v2703
        %3834 = vmatprep.subr.bf16.mxu0 %v2712
        %3835 = vmatpush1.bf16.msra.mxu0 %v2711
        %3836 = vmatprep.subr.bf16.mxu0 %v2720
        %3837 = vmatpush1.bf16.msra.mxu0 %v2719
        %3838 = vmatprep.subr.bf16.mxu0 %v2728
        %3839 = vmatpush1.bf16.msra.mxu0 %v2727
        %3840 = vmatprep.mubr.bf16.mxu0 %v508
        %3841 = vmatmul.mubr.bf16.gmra.mrb[0].mxu0 %v507
        %v3842 = vpop.f32.mrb[0].mxu0
        %v3843 = vadd.f32 %v3802, %v3842
        %v3844 = vpop.f32.mrb[0].mxu0
        %v3845 = vadd.f32 %v3804, %v3844
        %v3846 = vpop.f32.mrb[0].mxu0
        %v3847 = vpop.f32.mrb[0].mxu0
        %3848 = vdwg.mxu0
        %3849 = vmatprep.subr.bf16.mxu0 %v2736
        %3850 = vmatpush1.bf16.msra.mxu0 %v2735
        %3851 = vmatprep.subr.bf16.mxu0 %v2744
        %3852 = vmatpush1.bf16.msra.mxu0 %v2743
        %3853 = vmatprep.subr.bf16.mxu0 %v2752
        %3854 = vmatpush1.bf16.msra.mxu0 %v2751
        %3855 = vmatprep.subr.bf16.mxu0 %v2760
        %3856 = vmatpush1.bf16.msra.mxu0 %v2759
        %3857 = vmatprep.subr.bf16.mxu0 %v2768
        %3858 = vmatpush1.bf16.msra.mxu0 %v2767
        %3859 = vmatprep.subr.bf16.mxu0 %v2776
        %3860 = vmatpush1.bf16.msra.mxu0 %v2775
        %3861 = vmatprep.subr.bf16.mxu0 %v2784
        %3862 = vmatpush1.bf16.msra.mxu0 %v2783
        %3863 = vmatprep.subr.bf16.mxu0 %v2792
        %3864 = vmatpush1.bf16.msra.mxu0 %v2791
        %3865 = vmatprep.subr.bf16.mxu0 %v2800
        %3866 = vmatpush1.bf16.msra.mxu0 %v2799
        %3867 = vmatprep.subr.bf16.mxu0 %v2808
        %3868 = vmatpush1.bf16.msra.mxu0 %v2807
        %3869 = vmatprep.subr.bf16.mxu0 %v2816
        %3870 = vmatpush1.bf16.msra.mxu0 %v2815
        %3871 = vmatprep.subr.bf16.mxu0 %v2824
        %3872 = vmatpush1.bf16.msra.mxu0 %v2823
        %3873 = vmatprep.subr.bf16.mxu0 %v2832
        %3874 = vmatpush1.bf16.msra.mxu0 %v2831
        %3875 = vmatprep.subr.bf16.mxu0 %v2840
        %3876 = vmatpush1.bf16.msra.mxu0 %v2839
        %3877 = vmatprep.subr.bf16.mxu0 %v2848
        %3878 = vmatpush1.bf16.msra.mxu0 %v2847
        %3879 = vmatprep.subr.bf16.mxu0 %v2856
        %3880 = vmatpush1.bf16.msra.mxu0 %v2855
        %3881 = vmatprep.mubr.bf16.mxu0 %v510
        %3882 = vmatmul.mubr.bf16.gmra.mrb[0].mxu0 %v509
        %v3883 = vpop.f32.mrb[0].mxu0
        %v3884 = vadd.f32 %v3843, %v3883
        %v3885 = vpop.f32.mrb[0].mxu0
        %v3886 = vadd.f32 %v3845, %v3885
        %v3887 = vpop.f32.mrb[0].mxu0
        %v3888 = vpop.f32.mrb[0].mxu0
        %3889 = vdwg.mxu0
        %3890 = vmatprep.subr.bf16.mxu0 %v2864
        %3891 = vmatpush1.bf16.msra.mxu0 %v2863
        %3892 = vmatprep.subr.bf16.mxu0 %v2872
        %3893 = vmatpush1.bf16.msra.mxu0 %v2871
        %3894 = vmatprep.subr.bf16.mxu0 %v2880
        %3895 = vmatpush1.bf16.msra.mxu0 %v2879
        %3896 = vmatprep.subr.bf16.mxu0 %v2888
        %3897 = vmatpush1.bf16.msra.mxu0 %v2887
        %3898 = vmatprep.subr.bf16.mxu0 %v2896
        %3899 = vmatpush1.bf16.msra.mxu0 %v2895
        %3900 = vmatprep.subr.bf16.mxu0 %v2904
        %3901 = vmatpush1.bf16.msra.mxu0 %v2903
        %3902 = vmatprep.subr.bf16.mxu0 %v2912
        %3903 = vmatpush1.bf16.msra.mxu0 %v2911
        %3904 = vmatprep.subr.bf16.mxu0 %v2920
        %3905 = vmatpush1.bf16.msra.mxu0 %v2919
        %3906 = vmatprep.subr.bf16.mxu0 %v2928
        %3907 = vmatpush1.bf16.msra.mxu0 %v2927
        %3908 = vmatprep.subr.bf16.mxu0 %v2936
        %3909 = vmatpush1.bf16.msra.mxu0 %v2935
        %3910 = vmatprep.subr.bf16.mxu0 %v2944
        %3911 = vmatpush1.bf16.msra.mxu0 %v2943
        %3912 = vmatprep.subr.bf16.mxu0 %v2952
        %3913 = vmatpush1.bf16.msra.mxu0 %v2951
        %3914 = vmatprep.subr.bf16.mxu0 0
        %3915 = vmatpush1.bf16.msra.mxu0 0
        %3916 = vmatprep.subr.bf16.mxu0 0
        %3917 = vmatpush1.bf16.msra.mxu0 0
        %3918 = vmatprep.subr.bf16.mxu0 0
        %3919 = vmatpush1.bf16.msra.mxu0 0
        %3920 = vmatprep.subr.bf16.mxu0 0
        %3921 = vmatpush1.bf16.msra.mxu0 0
        %3922 = vmatprep.mubr.bf16.mxu0 %v3437
        %3923 = vmatmul.mubr.bf16.gmra.mrb[0].mxu0 %v511
        %v3924 = vpop.f32.mrb[0].mxu0
        %v3925 = vadd.f32 %v3884, %v3924
        %v3926 = vpop.f32.mrb[0].mxu0
        %v3927 = vadd.f32 %v3886, %v3926
        %v3928 = vpop.f32.mrb[0].mxu0
        %v3929 = vpop.f32.mrb[0].mxu0
        %3930 = vdwg.mxu0
        %3931 = vmatprep.subr.bf16.mxu0 %v2482
        %3932 = vmatpush1.bf16.msra.mxu0 %v2481
        %3933 = vmatprep.subr.bf16.mxu0 %v2490
        %3934 = vmatpush1.bf16.msra.mxu0 %v2489
        %3935 = vmatprep.subr.bf16.mxu0 %v2498
        %3936 = vmatpush1.bf16.msra.mxu0 %v2497
        %3937 = vmatprep.subr.bf16.mxu0 %v2506
        %3938 = vmatpush1.bf16.msra.mxu0 %v2505
        %3939 = vmatprep.subr.bf16.mxu0 %v2514
        %3940 = vmatpush1.bf16.msra.mxu0 %v2513
        %3941 = vmatprep.subr.bf16.mxu0 %v2522
        %3942 = vmatpush1.bf16.msra.mxu0 %v2521
        %3943 = vmatprep.subr.bf16.mxu0 %v2530
        %3944 = vmatpush1.bf16.msra.mxu0 %v2529
        %3945 = vmatprep.subr.bf16.mxu0 %v2538
        %3946 = vmatpush1.bf16.msra.mxu0 %v2537
        %3947 = vmatprep.subr.bf16.mxu0 %v2546
        %3948 = vmatpush1.bf16.msra.mxu0 %v2545
        %3949 = vmatprep.subr.bf16.mxu0 %v2554
        %3950 = vmatpush1.bf16.msra.mxu0 %v2553
        %3951 = vmatprep.subr.bf16.mxu0 %v2562
        %3952 = vmatpush1.bf16.msra.mxu0 %v2561
        %3953 = vmatprep.subr.bf16.mxu0 %v2570
        %3954 = vmatpush1.bf16.msra.mxu0 %v2569
        %3955 = vmatprep.subr.bf16.mxu0 %v2578
        %3956 = vmatpush1.bf16.msra.mxu0 %v2577
        %3957 = vmatprep.subr.bf16.mxu0 %v2586
        %3958 = vmatpush1.bf16.msra.mxu0 %v2585
        %3959 = vmatprep.subr.bf16.mxu0 %v2594
        %3960 = vmatpush1.bf16.msra.mxu0 %v2593
        %3961 = vmatprep.subr.bf16.mxu0 %v2602
        %3962 = vmatpush1.bf16.msra.mxu0 %v2601
        %3963 = vmatprep.mubr.bf16.mxu0 %v506
        %3964 = vmatmul.mubr.bf16.gmra.mrb[0].mxu0 %v505
        %v3965 = vpop.f32.mrb[0].mxu0
        %v3966 = vadd.f32 %v1022, %v3965
        %v3967 = vpop.f32.mrb[0].mxu0
        %v3968 = vadd.f32 %v1026, %v3967
        %v3969 = vpop.f32.mrb[0].mxu0
        %v3970 = vpop.f32.mrb[0].mxu0
        %3971 = vdwg.mxu0
        %3972 = vmatprep.subr.bf16.mxu0 %v2610
        %3973 = vmatpush1.bf16.msra.mxu0 %v2609
        %3974 = vmatprep.subr.bf16.mxu0 %v2618
        %3975 = vmatpush1.bf16.msra.mxu0 %v2617
        %3976 = vmatprep.subr.bf16.mxu0 %v2626
        %3977 = vmatpush1.bf16.msra.mxu0 %v2625
        %3978 = vmatprep.subr.bf16.mxu0 %v2634
        %3979 = vmatpush1.bf16.msra.mxu0 %v2633
        %3980 = vmatprep.subr.bf16.mxu0 %v2642
        %3981 = vmatpush1.bf16.msra.mxu0 %v2641
        %3982 = vmatprep.subr.bf16.mxu0 %v2650
        %3983 = vmatpush1.bf16.msra.mxu0 %v2649
        %3984 = vmatprep.subr.bf16.mxu0 %v2658
        %3985 = vmatpush1.bf16.msra.mxu0 %v2657
        %3986 = vmatprep.subr.bf16.mxu0 %v2666
        %3987 = vmatpush1.bf16.msra.mxu0 %v2665
        %3988 = vmatprep.subr.bf16.mxu0 %v2674
        %3989 = vmatpush1.bf16.msra.mxu0 %v2673
        %3990 = vmatprep.subr.bf16.mxu0 %v2682
        %3991 = vmatpush1.bf16.msra.mxu0 %v2681
        %3992 = vmatprep.subr.bf16.mxu0 %v2690
        %3993 = vmatpush1.bf16.msra.mxu0 %v2689
        %3994 = vmatprep.subr.bf16.mxu0 %v2698
        %3995 = vmatpush1.bf16.msra.mxu0 %v2697
        %3996 = vmatprep.subr.bf16.mxu0 %v2706
        %3997 = vmatpush1.bf16.msra.mxu0 %v2705
        %3998 = vmatprep.subr.bf16.mxu0 %v2714
        %3999 = vmatpush1.bf16.msra.mxu0 %v2713
        %4000 = vmatprep.subr.bf16.mxu0 %v2722
        %4001 = vmatpush1.bf16.msra.mxu0 %v2721
        %4002 = vmatprep.subr.bf16.mxu0 %v2730
        %4003 = vmatpush1.bf16.msra.mxu0 %v2729
        %4004 = vmatprep.mubr.bf16.mxu0 %v508
        %4005 = vmatmul.mubr.bf16.gmra.mrb[0].mxu0 %v507
        %v4006 = vpop.f32.mrb[0].mxu0
        %v4007 = vadd.f32 %v3966, %v4006
        %v4008 = vpop.f32.mrb[0].mxu0
        %v4009 = vadd.f32 %v3968, %v4008
        %v4010 = vpop.f32.mrb[0].mxu0
        %v4011 = vpop.f32.mrb[0].mxu0
        %4012 = vdwg.mxu0
        %4013 = vmatprep.subr.bf16.mxu0 %v2738
        %4014 = vmatpush1.bf16.msra.mxu0 %v2737
        %4015 = vmatprep.subr.bf16.mxu0 %v2746
        %4016 = vmatpush1.bf16.msra.mxu0 %v2745
        %4017 = vmatprep.subr.bf16.mxu0 %v2754
        %4018 = vmatpush1.bf16.msra.mxu0 %v2753
        %4019 = vmatprep.subr.bf16.mxu0 %v2762
        %4020 = vmatpush1.bf16.msra.mxu0 %v2761
        %4021 = vmatprep.subr.bf16.mxu0 %v2770
        %4022 = vmatpush1.bf16.msra.mxu0 %v2769
        %4023 = vmatprep.subr.bf16.mxu0 %v2778
        %4024 = vmatpush1.bf16.msra.mxu0 %v2777
        %4025 = vmatprep.subr.bf16.mxu0 %v2786
        %4026 = vmatpush1.bf16.msra.mxu0 %v2785
        %4027 = vmatprep.subr.bf16.mxu0 %v2794
        %4028 = vmatpush1.bf16.msra.mxu0 %v2793
        %4029 = vmatprep.subr.bf16.mxu0 %v2802
        %4030 = vmatpush1.bf16.msra.mxu0 %v2801
        %4031 = vmatprep.subr.bf16.mxu0 %v2810
        %4032 = vmatpush1.bf16.msra.mxu0 %v2809
        %4033 = vmatprep.subr.bf16.mxu0 %v2818
        %4034 = vmatpush1.bf16.msra.mxu0 %v2817
        %4035 = vmatprep.subr.bf16.mxu0 %v2826
        %4036 = vmatpush1.bf16.msra.mxu0 %v2825
        %4037 = vmatprep.subr.bf16.mxu0 %v2834
        %4038 = vmatpush1.bf16.msra.mxu0 %v2833
        %4039 = vmatprep.subr.bf16.mxu0 %v2842
        %4040 = vmatpush1.bf16.msra.mxu0 %v2841
        %4041 = vmatprep.subr.bf16.mxu0 %v2850
        %4042 = vmatpush1.bf16.msra.mxu0 %v2849
        %4043 = vmatprep.subr.bf16.mxu0 %v2858
        %4044 = vmatpush1.bf16.msra.mxu0 %v2857
        %4045 = vmatprep.mubr.bf16.mxu0 %v510
        %4046 = vmatmul.mubr.bf16.gmra.mrb[0].mxu0 %v509
        %v4047 = vpop.f32.mrb[0].mxu0
        %v4048 = vadd.f32 %v4007, %v4047
        %v4049 = vpop.f32.mrb[0].mxu0
        %v4050 = vadd.f32 %v4009, %v4049
        %v4051 = vpop.f32.mrb[0].mxu0
        %v4052 = vpop.f32.mrb[0].mxu0
        %4053 = vdwg.mxu0
        %4054 = vmatprep.subr.bf16.mxu0 %v2866
        %4055 = vmatpush1.bf16.msra.mxu0 %v2865
        %4056 = vmatprep.subr.bf16.mxu0 %v2874
        %4057 = vmatpush1.bf16.msra.mxu0 %v2873
        %4058 = vmatprep.subr.bf16.mxu0 %v2882
        %4059 = vmatpush1.bf16.msra.mxu0 %v2881
        %4060 = vmatprep.subr.bf16.mxu0 %v2890
        %4061 = vmatpush1.bf16.msra.mxu0 %v2889
        %4062 = vmatprep.subr.bf16.mxu0 %v2898
        %4063 = vmatpush1.bf16.msra.mxu0 %v2897
        %4064 = vmatprep.subr.bf16.mxu0 %v2906
        %4065 = vmatpush1.bf16.msra.mxu0 %v2905
        %4066 = vmatprep.subr.bf16.mxu0 %v2914
        %4067 = vmatpush1.bf16.msra.mxu0 %v2913
        %4068 = vmatprep.subr.bf16.mxu0 %v2922
        %4069 = vmatpush1.bf16.msra.mxu0 %v2921
        %4070 = vmatprep.subr.bf16.mxu0 %v2930
        %4071 = vmatpush1.bf16.msra.mxu0 %v2929
        %4072 = vmatprep.subr.bf16.mxu0 %v2938
        %4073 = vmatpush1.bf16.msra.mxu0 %v2937
        %4074 = vmatprep.subr.bf16.mxu0 %v2946
        %4075 = vmatpush1.bf16.msra.mxu0 %v2945
        %4076 = vmatprep.subr.bf16.mxu0 %v2954
        %4077 = vmatpush1.bf16.msra.mxu0 %v2953
        %4078 = vmatprep.subr.bf16.mxu0 0
        %4079 = vmatpush1.bf16.msra.mxu0 0
        %4080 = vmatprep.subr.bf16.mxu0 0
        %4081 = vmatpush1.bf16.msra.mxu0 0
        %4082 = vmatprep.subr.bf16.mxu0 0
        %4083 = vmatpush1.bf16.msra.mxu0 0
        %4084 = vmatprep.subr.bf16.mxu0 0
        %4085 = vmatpush1.bf16.msra.mxu0 0
        %4086 = vmatprep.mubr.bf16.mxu0 %v3437
        %4087 = vmatmul.mubr.bf16.gmra.mrb[0].mxu0 %v511
        %v4088 = vpop.f32.mrb[0].mxu0
        %v4089 = vadd.f32 %v4048, %v4088
        %v4090 = vpop.f32.mrb[0].mxu0
        %v4091 = vadd.f32 %v4050, %v4090
        %v4092 = vpop.f32.mrb[0].mxu0
        %v4093 = vpop.f32.mrb[0].mxu0
        %4094 = vdwg.mxu0
        %v4095 = vmax.f32 %v3597, 0.0
        %v4096 = vmax.f32 %v3599, 0.0
        %v4097 = vmax.f32 %v3761, 0.0
        %v4098 = vmax.f32 %v3763, 0.0
        %v4099 = vmax.f32 %v3925, 0.0
        %v4100 = vmax.f32 %v3927, 0.0
        %v4101 = vmax.f32 %v4089, 0.0
        %v4102 = vmax.f32 %v4091, 0.0
        %v4103 = vld [vmem:[#allocation2] sm:$0xff]
        %v4104 = vld [vmem:[#allocation2 + $0x8] sm:$0xff]
        %v4105 = vld [vmem:[#allocation2 + $0x10] sm:$0xff]
        %v4106 = vld [vmem:[#allocation2 + $0x18] sm:$0xff]
        %v4107 = vld [vmem:[#allocation2 + $0x20] sm:$0xff]
        %v4108 = vld [vmem:[#allocation2 + $0x28] sm:$0xff]
        %v4109 = vld [vmem:[#allocation2 + $0x30] sm:$0xff]
        %v4110 = vld [vmem:[#allocation2 + $0x38] sm:$0xff]
        %v4111 = vpack.c.bf16 %v4095, %v4095
        %v4112 = vpack.c.bf16 %v4096, %v4096
        %v4113 = vpack.c.bf16 %v4097, %v4097
        %v4114 = vpack.c.bf16 %v4098, %v4098
        %v4115 = vpack.c.bf16 %v4099, %v4099
        %v4116 = vpack.c.bf16 %v4100, %v4100
        %v4117 = vpack.c.bf16 %v4101, %v4101
        %v4118 = vpack.c.bf16 %v4102, %v4102
        %v4119 = vld [vmem:[%s425] sm:$0xff]
        %v4120 = vld [vmem:[%s425 + $0x8] sm:$0xff]
        %v4121 = vld [vmem:[%s425 + $0x10] sm:$0xff]
        %v4122 = vld [vmem:[%s425 + $0x18] sm:$0xff]
        %v4123 = vld [vmem:[%s425 + $0x20] sm:$0xff]
        %v4124 = vld [vmem:[%s425 + $0x28] sm:$0xff]
        %v4125 = vld [vmem:[%s425 + $0x30] sm:$0xff]
        %v4126 = vld [vmem:[%s425 + $0x38] sm:$0xff]
        %v4127 = vld [vmem:[%s425 + $0x40] sm:$0xff]
        %v4128 = vld [vmem:[%s425 + $0x48] sm:$0xff]
        %v4129 = vld [vmem:[%s425 + $0x50] sm:$0xff]
        %v4130 = vld [vmem:[%s425 + $0x58] sm:$0xff]
        %v4131 = vld [vmem:[%s425 + $0x60] sm:$0xff]
        %v4132 = vld [vmem:[%s425 + $0x68] sm:$0xff]
        %v4133 = vld [vmem:[%s425 + $0x70] sm:$0xff]
        %v4134 = vld [vmem:[%s425 + $0x78] sm:$0xff]
        %v4135 = vld [vmem:[%s425 + $0x80] sm:$0xff]
        %v4136 = vld [vmem:[%s425 + $0x88] sm:$0xff]
        %v4137 = vld [vmem:[%s425 + $0x90] sm:$0xff]
        %v4138 = vld [vmem:[%s425 + $0x98] sm:$0xff]
        %v4139 = vld [vmem:[%s425 + $0xa0] sm:$0xff]
        %v4140 = vld [vmem:[%s425 + $0xa8] sm:$0xff]
        %v4141 = vld [vmem:[%s425 + $0xb0] sm:$0xff]
        %v4142 = vld [vmem:[%s425 + $0xb8] sm:$0xff]
        %v4143 = vld [vmem:[%s425 + $0xc0] sm:$0xff]
        %v4144 = vld [vmem:[%s425 + $0xc8] sm:$0xff]
        %v4145 = vld [vmem:[%s425 + $0xd0] sm:$0xff]
        %v4146 = vld [vmem:[%s425 + $0xd8] sm:$0xff]
        %v4147 = vld [vmem:[%s425 + $0xe0] sm:$0xff]
        %v4148 = vld [vmem:[%s425 + $0xe8] sm:$0xff]
        %v4149 = vld [vmem:[%s425 + $0xf0] sm:$0xff]
        %v4150 = vld [vmem:[%s425 + $0xf8] sm:$0xff]
        %v4151 = vld [vmem:[%s425 + $0x100] sm:$0xff]
        %v4152 = vld [vmem:[%s425 + $0x108] sm:$0xff]
        %v4153 = vld [vmem:[%s425 + $0x110] sm:$0xff]
        %v4154 = vld [vmem:[%s425 + $0x118] sm:$0xff]
        %v4155 = vld [vmem:[%s425 + $0x120] sm:$0xff]
        %v4156 = vld [vmem:[%s425 + $0x128] sm:$0xff]
        %v4157 = vld [vmem:[%s425 + $0x130] sm:$0xff]
        %v4158 = vld [vmem:[%s425 + $0x138] sm:$0xff]
        %v4159 = vld [vmem:[%s425 + $0x140] sm:$0xff]
        %v4160 = vld [vmem:[%s425 + $0x148] sm:$0xff]
        %v4161 = vld [vmem:[%s425 + $0x150] sm:$0xff]
        %v4162 = vld [vmem:[%s425 + $0x158] sm:$0xff]
        %v4163 = vld [vmem:[%s425 + $0x160] sm:$0xff]
        %v4164 = vld [vmem:[%s425 + $0x168] sm:$0xff]
        %v4165 = vld [vmem:[%s425 + $0x170] sm:$0xff]
        %v4166 = vld [vmem:[%s425 + $0x178] sm:$0xff]
        %v4167 = vld [vmem:[%s425 + $0x180] sm:$0xff]
        %v4168 = vld [vmem:[%s425 + $0x188] sm:$0xff]
        %v4169 = vld [vmem:[%s425 + $0x190] sm:$0xff]
        %v4170 = vld [vmem:[%s425 + $0x198] sm:$0xff]
        %v4171 = vld [vmem:[%s425 + $0x1a0] sm:$0xff]
        %v4172 = vld [vmem:[%s425 + $0x1a8] sm:$0xff]
        %v4173 = vld [vmem:[%s425 + $0x1b0] sm:$0xff]
        %v4174 = vld [vmem:[%s425 + $0x1b8] sm:$0xff]
        %v4175 = vld [vmem:[%s425 + $0x1c0] sm:$0xff]
        %v4176 = vld [vmem:[%s425 + $0x1c8] sm:$0xff]
        %v4177 = vld [vmem:[%s425 + $0x1d0] sm:$0xff]
        %v4178 = vld [vmem:[%s425 + $0x1d8] sm:$0xff]
        %v4179 = vld [vmem:[%s425 + $0x1e0] sm:$0xff]
        %v4180 = vld [vmem:[%s425 + $0x1e8] sm:$0xff]
        %v4181 = vld [vmem:[%s425 + $0x1f0] sm:$0xff]
        %v4182 = vld [vmem:[%s425 + $0x1f8] sm:$0xff]
        %v4183 = vld [vmem:[%s425 + $0x200] sm:$0xff]
        %v4184 = vld [vmem:[%s425 + $0x208] sm:$0xff]
        %v4185 = vld [vmem:[%s425 + $0x210] sm:$0xff]
        %v4186 = vld [vmem:[%s425 + $0x218] sm:$0xff]
        %v4187 = vld [vmem:[%s425 + $0x220] sm:$0xff]
        %v4188 = vld [vmem:[%s425 + $0x228] sm:$0xff]
        %v4189 = vld [vmem:[%s425 + $0x230] sm:$0xff]
        %v4190 = vld [vmem:[%s425 + $0x238] sm:$0xff]
        %v4191 = vld [vmem:[%s425 + $0x240] sm:$0xff]
        %v4192 = vld [vmem:[%s425 + $0x248] sm:$0xff]
        %v4193 = vld [vmem:[%s425 + $0x250] sm:$0xff]
        %v4194 = vld [vmem:[%s425 + $0x258] sm:$0xff]
        %v4195 = vld [vmem:[%s425 + $0x260] sm:$0xff]
        %v4196 = vld [vmem:[%s425 + $0x268] sm:$0xff]
        %v4197 = vld [vmem:[%s425 + $0x270] sm:$0xff]
        %v4198 = vld [vmem:[%s425 + $0x278] sm:$0xff]
        %v4199 = vld [vmem:[%s425 + $0x280] sm:$0xff]
        %v4200 = vld [vmem:[%s425 + $0x288] sm:$0xff]
        %v4201 = vld [vmem:[%s425 + $0x290] sm:$0xff]
        %v4202 = vld [vmem:[%s425 + $0x298] sm:$0xff]
        %v4203 = vld [vmem:[%s425 + $0x2a0] sm:$0xff]
        %v4204 = vld [vmem:[%s425 + $0x2a8] sm:$0xff]
        %v4205 = vld [vmem:[%s425 + $0x2b0] sm:$0xff]
        %v4206 = vld [vmem:[%s425 + $0x2b8] sm:$0xff]
        %v4207 = vld [vmem:[%s425 + $0x2c0] sm:$0xff]
        %v4208 = vld [vmem:[%s425 + $0x2c8] sm:$0xff]
        %v4209 = vld [vmem:[%s425 + $0x2d0] sm:$0xff]
        %v4210 = vld [vmem:[%s425 + $0x2d8] sm:$0xff]
        %v4211 = vld [vmem:[%s425 + $0x2e0] sm:$0xff]
        %v4212 = vld [vmem:[%s425 + $0x2e8] sm:$0xff]
        %v4213 = vld [vmem:[%s425 + $0x2f0] sm:$0xff]
        %v4214 = vld [vmem:[%s425 + $0x2f8] sm:$0xff]
        %v4215 = vld [vmem:[%s425 + $0x300] sm:$0xff]
        %v4216 = vld [vmem:[%s425 + $0x308] sm:$0xff]
        %v4217 = vld [vmem:[%s425 + $0x310] sm:$0xff]
        %v4218 = vld [vmem:[%s425 + $0x318] sm:$0xff]
        %v4219 = vld [vmem:[%s425 + $0x320] sm:$0xff]
        %v4220 = vld [vmem:[%s425 + $0x328] sm:$0xff]
        %v4221 = vld [vmem:[%s425 + $0x330] sm:$0xff]
        %v4222 = vld [vmem:[%s425 + $0x338] sm:$0xff]
        %v4223 = vld [vmem:[%s425 + $0x340] sm:$0xff]
        %v4224 = vld [vmem:[%s425 + $0x348] sm:$0xff]
        %v4225 = vld [vmem:[%s425 + $0x350] sm:$0xff]
        %v4226 = vld [vmem:[%s425 + $0x358] sm:$0xff]
        %v4227 = vld [vmem:[%s425 + $0x360] sm:$0xff]
        %v4228 = vld [vmem:[%s425 + $0x368] sm:$0xff]
        %v4229 = vld [vmem:[%s425 + $0x370] sm:$0xff]
        %v4230 = vld [vmem:[%s425 + $0x378] sm:$0xff]
        %v4231 = vld [vmem:[%s425 + $0x380] sm:$0xff]
        %v4232 = vld [vmem:[%s425 + $0x388] sm:$0xff]
        %v4233 = vld [vmem:[%s425 + $0x390] sm:$0xff]
        %v4234 = vld [vmem:[%s425 + $0x398] sm:$0xff]
        %v4235 = vld [vmem:[%s425 + $0x3a0] sm:$0xff]
        %v4236 = vld [vmem:[%s425 + $0x3a8] sm:$0xff]
        %v4237 = vld [vmem:[%s425 + $0x3b0] sm:$0xff]
        %v4238 = vld [vmem:[%s425 + $0x3b8] sm:$0xff]
        %v4239 = vld [vmem:[%s425 + $0x3c0] sm:$0xff]
        %v4240 = vld [vmem:[%s425 + $0x3c8] sm:$0xff]
        %v4241 = vld [vmem:[%s425 + $0x3d0] sm:$0xff]
        %v4242 = vld [vmem:[%s425 + $0x3d8] sm:$0xff]
        %v4243 = vld [vmem:[%s425 + $0x3e0] sm:$0xff]
        %v4244 = vld [vmem:[%s425 + $0x3e8] sm:$0xff]
        %v4245 = vld [vmem:[%s425 + $0x3f0] sm:$0xff]
        %v4246 = vld [vmem:[%s425 + $0x3f8] sm:$0xff]
        %v4247 = vld [vmem:[%s425 + $0x400] sm:$0xff]
        %v4248 = vld [vmem:[%s425 + $0x408] sm:$0xff]
        %v4249 = vld [vmem:[%s425 + $0x410] sm:$0xff]
        %v4250 = vld [vmem:[%s425 + $0x418] sm:$0xff]
        %v4251 = vld [vmem:[%s425 + $0x420] sm:$0xff]
        %v4252 = vld [vmem:[%s425 + $0x428] sm:$0xff]
        %v4253 = vld [vmem:[%s425 + $0x430] sm:$0xff]
        %v4254 = vld [vmem:[%s425 + $0x438] sm:$0xff]
        %v4255 = vld [vmem:[%s425 + $0x440] sm:$0xff]
        %v4256 = vld [vmem:[%s425 + $0x448] sm:$0xff]
        %v4257 = vld [vmem:[%s425 + $0x450] sm:$0xff]
        %v4258 = vld [vmem:[%s425 + $0x458] sm:$0xff]
        %v4259 = vld [vmem:[%s425 + $0x460] sm:$0xff]
        %v4260 = vld [vmem:[%s425 + $0x468] sm:$0xff]
        %v4261 = vld [vmem:[%s425 + $0x470] sm:$0xff]
        %v4262 = vld [vmem:[%s425 + $0x478] sm:$0xff]
        %v4263 = vld [vmem:[%s425 + $0x480] sm:$0xff]
        %v4264 = vld [vmem:[%s425 + $0x488] sm:$0xff]
        %v4265 = vld [vmem:[%s425 + $0x490] sm:$0xff]
        %v4266 = vld [vmem:[%s425 + $0x498] sm:$0xff]
        %v4267 = vld [vmem:[%s425 + $0x4a0] sm:$0xff]
        %v4268 = vld [vmem:[%s425 + $0x4a8] sm:$0xff]
        %v4269 = vld [vmem:[%s425 + $0x4b0] sm:$0xff]
        %v4270 = vld [vmem:[%s425 + $0x4b8] sm:$0xff]
        %v4271 = vld [vmem:[%s425 + $0x4c0] sm:$0xff]
        %v4272 = vld [vmem:[%s425 + $0x4c8] sm:$0xff]
        %v4273 = vld [vmem:[%s425 + $0x4d0] sm:$0xff]
        %v4274 = vld [vmem:[%s425 + $0x4d8] sm:$0xff]
        %v4275 = vld [vmem:[%s425 + $0x4e0] sm:$0xff]
        %v4276 = vld [vmem:[%s425 + $0x4e8] sm:$0xff]
        %v4277 = vld [vmem:[%s425 + $0x4f0] sm:$0xff]
        %v4278 = vld [vmem:[%s425 + $0x4f8] sm:$0xff]
        %v4279 = vld [vmem:[%s425 + $0x500] sm:$0xff]
        %v4280 = vld [vmem:[%s425 + $0x508] sm:$0xff]
        %v4281 = vld [vmem:[%s425 + $0x510] sm:$0xff]
        %v4282 = vld [vmem:[%s425 + $0x518] sm:$0xff]
        %v4283 = vld [vmem:[%s425 + $0x520] sm:$0xff]
        %v4284 = vld [vmem:[%s425 + $0x528] sm:$0xff]
        %v4285 = vld [vmem:[%s425 + $0x530] sm:$0xff]
        %v4286 = vld [vmem:[%s425 + $0x538] sm:$0xff]
        %v4287 = vld [vmem:[%s425 + $0x540] sm:$0xff]
        %v4288 = vld [vmem:[%s425 + $0x548] sm:$0xff]
        %v4289 = vld [vmem:[%s425 + $0x550] sm:$0xff]
        %v4290 = vld [vmem:[%s425 + $0x558] sm:$0xff]
        %v4291 = vld [vmem:[%s425 + $0x560] sm:$0xff]
        %v4292 = vld [vmem:[%s425 + $0x568] sm:$0xff]
        %v4293 = vld [vmem:[%s425 + $0x570] sm:$0xff]
        %v4294 = vld [vmem:[%s425 + $0x578] sm:$0xff]
        %v4295 = vld [vmem:[%s425 + $0x580] sm:$0xff]
        %v4296 = vld [vmem:[%s425 + $0x588] sm:$0xff]
        %v4297 = vld [vmem:[%s425 + $0x590] sm:$0xff]
        %v4298 = vld [vmem:[%s425 + $0x598] sm:$0xff]
        %v4299 = vld [vmem:[%s425 + $0x5a0] sm:$0xff]
        %v4300 = vld [vmem:[%s425 + $0x5a8] sm:$0xff]
        %v4301 = vld [vmem:[%s425 + $0x5b0] sm:$0xff]
        %v4302 = vld [vmem:[%s425 + $0x5b8] sm:$0xff]
        %v4303 = vld [vmem:[%s425 + $0x5c0] sm:$0xff]
        %v4304 = vld [vmem:[%s425 + $0x5c8] sm:$0xff]
        %v4305 = vld [vmem:[%s425 + $0x5d0] sm:$0xff]
        %v4306 = vld [vmem:[%s425 + $0x5d8] sm:$0xff]
        %v4307 = vld [vmem:[%s425 + $0x5e0] sm:$0xff]
        %v4308 = vld [vmem:[%s425 + $0x5e8] sm:$0xff]
        %v4309 = vld [vmem:[%s425 + $0x5f0] sm:$0xff]
        %v4310 = vld [vmem:[%s425 + $0x5f8] sm:$0xff]
        %v4311 = vld [vmem:[%s425 + $0x600] sm:$0xff]
        %v4312 = vld [vmem:[%s425 + $0x608] sm:$0xff]
        %v4313 = vld [vmem:[%s425 + $0x610] sm:$0xff]
        %v4314 = vld [vmem:[%s425 + $0x618] sm:$0xff]
        %v4315 = vld [vmem:[%s425 + $0x620] sm:$0xff]
        %v4316 = vld [vmem:[%s425 + $0x628] sm:$0xff]
        %v4317 = vld [vmem:[%s425 + $0x630] sm:$0xff]
        %v4318 = vld [vmem:[%s425 + $0x638] sm:$0xff]
        %v4319 = vld [vmem:[%s425 + $0x640] sm:$0xff]
        %v4320 = vld [vmem:[%s425 + $0x648] sm:$0xff]
        %v4321 = vld [vmem:[%s425 + $0x650] sm:$0xff]
        %v4322 = vld [vmem:[%s425 + $0x658] sm:$0xff]
        %v4323 = vld [vmem:[%s425 + $0x660] sm:$0xff]
        %v4324 = vld [vmem:[%s425 + $0x668] sm:$0xff]
        %v4325 = vld [vmem:[%s425 + $0x670] sm:$0xff]
        %v4326 = vld [vmem:[%s425 + $0x678] sm:$0xff]
        %v4327 = vld [vmem:[%s425 + $0x680] sm:$0xff]
        %v4328 = vld [vmem:[%s425 + $0x688] sm:$0xff]
        %v4329 = vld [vmem:[%s425 + $0x690] sm:$0xff]
        %v4330 = vld [vmem:[%s425 + $0x698] sm:$0xff]
        %v4331 = vld [vmem:[%s425 + $0x6a0] sm:$0xff]
        %v4332 = vld [vmem:[%s425 + $0x6a8] sm:$0xff]
        %v4333 = vld [vmem:[%s425 + $0x6b0] sm:$0xff]
        %v4334 = vld [vmem:[%s425 + $0x6b8] sm:$0xff]
        %v4335 = vld [vmem:[%s425 + $0x6c0] sm:$0xff]
        %v4336 = vld [vmem:[%s425 + $0x6c8] sm:$0xff]
        %v4337 = vld [vmem:[%s425 + $0x6d0] sm:$0xff]
        %v4338 = vld [vmem:[%s425 + $0x6d8] sm:$0xff]
        %v4339 = vld [vmem:[%s425 + $0x6e0] sm:$0xff]
        %v4340 = vld [vmem:[%s425 + $0x6e8] sm:$0xff]
        %v4341 = vld [vmem:[%s425 + $0x6f0] sm:$0xff]
        %v4342 = vld [vmem:[%s425 + $0x6f8] sm:$0xff]
        %v4343 = vld [vmem:[%s425 + $0x700] sm:$0xff]
        %v4344 = vld [vmem:[%s425 + $0x708] sm:$0xff]
        %v4345 = vld [vmem:[%s425 + $0x710] sm:$0xff]
        %v4346 = vld [vmem:[%s425 + $0x718] sm:$0xff]
        %v4347 = vld [vmem:[%s425 + $0x720] sm:$0xff]
        %v4348 = vld [vmem:[%s425 + $0x728] sm:$0xff]
        %v4349 = vld [vmem:[%s425 + $0x730] sm:$0xff]
        %v4350 = vld [vmem:[%s425 + $0x738] sm:$0xff]
        %v4351 = vld [vmem:[%s425 + $0x740] sm:$0xff]
        %v4352 = vld [vmem:[%s425 + $0x748] sm:$0xff]
        %v4353 = vld [vmem:[%s425 + $0x750] sm:$0xff]
        %v4354 = vld [vmem:[%s425 + $0x758] sm:$0xff]
        %v4355 = vld [vmem:[%s425 + $0x760] sm:$0xff]
        %v4356 = vld [vmem:[%s425 + $0x768] sm:$0xff]
        %v4357 = vld [vmem:[%s425 + $0x770] sm:$0xff]
        %v4358 = vld [vmem:[%s425 + $0x778] sm:$0xff]
        %v4359 = vld [vmem:[%s425 + $0x780] sm:$0xff]
        %v4360 = vld [vmem:[%s425 + $0x788] sm:$0xff]
        %v4361 = vld [vmem:[%s425 + $0x790] sm:$0xff]
        %v4362 = vld [vmem:[%s425 + $0x798] sm:$0xff]
        %v4363 = vld [vmem:[%s425 + $0x7a0] sm:$0xff]
        %v4364 = vld [vmem:[%s425 + $0x7a8] sm:$0xff]
        %v4365 = vld [vmem:[%s425 + $0x7b0] sm:$0xff]
        %v4366 = vld [vmem:[%s425 + $0x7b8] sm:$0xff]
        %v4367 = vld [vmem:[%s425 + $0x7c0] sm:$0xff]
        %v4368 = vld [vmem:[%s425 + $0x7c8] sm:$0xff]
        %v4369 = vld [vmem:[%s425 + $0x7d0] sm:$0xff]
        %v4370 = vld [vmem:[%s425 + $0x7d8] sm:$0xff]
        %v4371 = vld [vmem:[%s425 + $0x7e0] sm:$0xff]
        %v4372 = vld [vmem:[%s425 + $0x7e8] sm:$0xff]
        %v4373 = vld [vmem:[%s425 + $0x7f0] sm:$0xff]
        %v4374 = vld [vmem:[%s425 + $0x7f8] sm:$0xff]
        %v4375 = vld [vmem:[%s425 + $0x800] sm:$0xff]
        %v4376 = vld [vmem:[%s425 + $0x808] sm:$0xff]
        %v4377 = vld [vmem:[%s425 + $0x810] sm:$0xff]
        %v4378 = vld [vmem:[%s425 + $0x818] sm:$0xff]
        %v4379 = vld [vmem:[%s425 + $0x820] sm:$0xff]
        %v4380 = vld [vmem:[%s425 + $0x828] sm:$0xff]
        %v4381 = vld [vmem:[%s425 + $0x830] sm:$0xff]
        %v4382 = vld [vmem:[%s425 + $0x838] sm:$0xff]
        %v4383 = vld [vmem:[%s425 + $0x840] sm:$0xff]
        %v4384 = vld [vmem:[%s425 + $0x848] sm:$0xff]
        %v4385 = vld [vmem:[%s425 + $0x850] sm:$0xff]
        %v4386 = vld [vmem:[%s425 + $0x858] sm:$0xff]
        %v4387 = vld [vmem:[%s425 + $0x860] sm:$0xff]
        %v4388 = vld [vmem:[%s425 + $0x868] sm:$0xff]
        %v4389 = vld [vmem:[%s425 + $0x870] sm:$0xff]
        %v4390 = vld [vmem:[%s425 + $0x878] sm:$0xff]
        %v4391 = vld [vmem:[%s425 + $0x880] sm:$0xff]
        %v4392 = vld [vmem:[%s425 + $0x888] sm:$0xff]
        %v4393 = vld [vmem:[%s425 + $0x890] sm:$0xff]
        %v4394 = vld [vmem:[%s425 + $0x898] sm:$0xff]
        %v4395 = vld [vmem:[%s425 + $0x8a0] sm:$0xff]
        %v4396 = vld [vmem:[%s425 + $0x8a8] sm:$0xff]
        %v4397 = vld [vmem:[%s425 + $0x8b0] sm:$0xff]
        %v4398 = vld [vmem:[%s425 + $0x8b8] sm:$0xff]
        %v4399 = vld [vmem:[%s425 + $0x8c0] sm:$0xff]
        %v4400 = vld [vmem:[%s425 + $0x8c8] sm:$0xff]
        %v4401 = vld [vmem:[%s425 + $0x8d0] sm:$0xff]
        %v4402 = vld [vmem:[%s425 + $0x8d8] sm:$0xff]
        %v4403 = vld [vmem:[%s425 + $0x8e0] sm:$0xff]
        %v4404 = vld [vmem:[%s425 + $0x8e8] sm:$0xff]
        %v4405 = vld [vmem:[%s425 + $0x8f0] sm:$0xff]
        %v4406 = vld [vmem:[%s425 + $0x8f8] sm:$0xff]
        %v4407 = vld [vmem:[%s425 + $0x900] sm:$0xff]
        %v4408 = vld [vmem:[%s425 + $0x908] sm:$0xff]
        %v4409 = vld [vmem:[%s425 + $0x910] sm:$0xff]
        %v4410 = vld [vmem:[%s425 + $0x918] sm:$0xff]
        %v4411 = vld [vmem:[%s425 + $0x920] sm:$0xff]
        %v4412 = vld [vmem:[%s425 + $0x928] sm:$0xff]
        %v4413 = vld [vmem:[%s425 + $0x930] sm:$0xff]
        %v4414 = vld [vmem:[%s425 + $0x938] sm:$0xff]
        %v4415 = vld [vmem:[%s425 + $0x940] sm:$0xff]
        %v4416 = vld [vmem:[%s425 + $0x948] sm:$0xff]
        %v4417 = vld [vmem:[%s425 + $0x950] sm:$0xff]
        %v4418 = vld [vmem:[%s425 + $0x958] sm:$0xff]
        %v4419 = vld [vmem:[%s425 + $0x960] sm:$0xff]
        %v4420 = vld [vmem:[%s425 + $0x968] sm:$0xff]
        %v4421 = vld [vmem:[%s425 + $0x970] sm:$0xff]
        %v4422 = vld [vmem:[%s425 + $0x978] sm:$0xff]
        %v4423 = vld [vmem:[%s425 + $0x980] sm:$0xff]
        %v4424 = vld [vmem:[%s425 + $0x988] sm:$0xff]
        %v4425 = vld [vmem:[%s425 + $0x990] sm:$0xff]
        %v4426 = vld [vmem:[%s425 + $0x998] sm:$0xff]
        %v4427 = vld [vmem:[%s425 + $0x9a0] sm:$0xff]
        %v4428 = vld [vmem:[%s425 + $0x9a8] sm:$0xff]
        %v4429 = vld [vmem:[%s425 + $0x9b0] sm:$0xff]
        %v4430 = vld [vmem:[%s425 + $0x9b8] sm:$0xff]
        %v4431 = vld [vmem:[%s425 + $0x9c0] sm:$0xff]
        %v4432 = vld [vmem:[%s425 + $0x9c8] sm:$0xff]
        %v4433 = vld [vmem:[%s425 + $0x9d0] sm:$0xff]
        %v4434 = vld [vmem:[%s425 + $0x9d8] sm:$0xff]
        %v4435 = vld [vmem:[%s425 + $0x9e0] sm:$0xff]
        %v4436 = vld [vmem:[%s425 + $0x9e8] sm:$0xff]
        %v4437 = vld [vmem:[%s425 + $0x9f0] sm:$0xff]
        %v4438 = vld [vmem:[%s425 + $0x9f8] sm:$0xff]
        %v4439 = vld [vmem:[%s425 + $0xa00] sm:$0xff]
        %v4440 = vld [vmem:[%s425 + $0xa08] sm:$0xff]
        %v4441 = vld [vmem:[%s425 + $0xa10] sm:$0xff]
        %v4442 = vld [vmem:[%s425 + $0xa18] sm:$0xff]
        %v4443 = vld [vmem:[%s425 + $0xa20] sm:$0xff]
        %v4444 = vld [vmem:[%s425 + $0xa28] sm:$0xff]
        %v4445 = vld [vmem:[%s425 + $0xa30] sm:$0xff]
        %v4446 = vld [vmem:[%s425 + $0xa38] sm:$0xff]
        %v4447 = vld [vmem:[%s425 + $0xa40] sm:$0xff]
        %v4448 = vld [vmem:[%s425 + $0xa48] sm:$0xff]
        %v4449 = vld [vmem:[%s425 + $0xa50] sm:$0xff]
        %v4450 = vld [vmem:[%s425 + $0xa58] sm:$0xff]
        %v4451 = vld [vmem:[%s425 + $0xa60] sm:$0xff]
        %v4452 = vld [vmem:[%s425 + $0xa68] sm:$0xff]
        %v4453 = vld [vmem:[%s425 + $0xa70] sm:$0xff]
        %v4454 = vld [vmem:[%s425 + $0xa78] sm:$0xff]
        %v4455 = vld [vmem:[%s425 + $0xa80] sm:$0xff]
        %v4456 = vld [vmem:[%s425 + $0xa88] sm:$0xff]
        %v4457 = vld [vmem:[%s425 + $0xa90] sm:$0xff]
        %v4458 = vld [vmem:[%s425 + $0xa98] sm:$0xff]
        %v4459 = vld [vmem:[%s425 + $0xaa0] sm:$0xff]
        %v4460 = vld [vmem:[%s425 + $0xaa8] sm:$0xff]
        %v4461 = vld [vmem:[%s425 + $0xab0] sm:$0xff]
        %v4462 = vld [vmem:[%s425 + $0xab8] sm:$0xff]
        %v4463 = vld [vmem:[%s425 + $0xac0] sm:$0xff]
        %v4464 = vld [vmem:[%s425 + $0xac8] sm:$0xff]
        %v4465 = vld [vmem:[%s425 + $0xad0] sm:$0xff]
        %v4466 = vld [vmem:[%s425 + $0xad8] sm:$0xff]
        %v4467 = vld [vmem:[%s425 + $0xae0] sm:$0xff]
        %v4468 = vld [vmem:[%s425 + $0xae8] sm:$0xff]
        %v4469 = vld [vmem:[%s425 + $0xaf0] sm:$0xff]
        %v4470 = vld [vmem:[%s425 + $0xaf8] sm:$0xff]
        %v4471 = vld [vmem:[%s425 + $0xb00] sm:$0xff]
        %v4472 = vld [vmem:[%s425 + $0xb08] sm:$0xff]
        %v4473 = vld [vmem:[%s425 + $0xb10] sm:$0xff]
        %v4474 = vld [vmem:[%s425 + $0xb18] sm:$0xff]
        %v4475 = vld [vmem:[%s425 + $0xb20] sm:$0xff]
        %v4476 = vld [vmem:[%s425 + $0xb28] sm:$0xff]
        %v4477 = vld [vmem:[%s425 + $0xb30] sm:$0xff]
        %v4478 = vld [vmem:[%s425 + $0xb38] sm:$0xff]
        %v4479 = vld [vmem:[%s425 + $0xb40] sm:$0xff]
        %v4480 = vld [vmem:[%s425 + $0xb48] sm:$0xff]
        %v4481 = vld [vmem:[%s425 + $0xb50] sm:$0xff]
        %v4482 = vld [vmem:[%s425 + $0xb58] sm:$0xff]
        %v4483 = vld [vmem:[%s425 + $0xb60] sm:$0xff]
        %v4484 = vld [vmem:[%s425 + $0xb68] sm:$0xff]
        %v4485 = vld [vmem:[%s425 + $0xb70] sm:$0xff]
        %v4486 = vld [vmem:[%s425 + $0xb78] sm:$0xff]
        %v4487 = vld [vmem:[%s425 + $0xb80] sm:$0xff]
        %v4488 = vld [vmem:[%s425 + $0xb88] sm:$0xff]
        %v4489 = vld [vmem:[%s425 + $0xb90] sm:$0xff]
        %v4490 = vld [vmem:[%s425 + $0xb98] sm:$0xff]
        %v4491 = vld [vmem:[%s425 + $0xba0] sm:$0xff]
        %v4492 = vld [vmem:[%s425 + $0xba8] sm:$0xff]
        %v4493 = vld [vmem:[%s425 + $0xbb0] sm:$0xff]
        %v4494 = vld [vmem:[%s425 + $0xbb8] sm:$0xff]
        %v4495 = vld [vmem:[%s425 + $0xbc0] sm:$0xff]
        %v4496 = vld [vmem:[%s425 + $0xbc8] sm:$0xff]
        %v4497 = vld [vmem:[%s425 + $0xbd0] sm:$0xff]
        %v4498 = vld [vmem:[%s425 + $0xbd8] sm:$0xff]
        %v4499 = vld [vmem:[%s425 + $0xbe0] sm:$0xff]
        %v4500 = vld [vmem:[%s425 + $0xbe8] sm:$0xff]
        %v4501 = vld [vmem:[%s425 + $0xbf0] sm:$0xff]
        %v4502 = vld [vmem:[%s425 + $0xbf8] sm:$0xff]
        %v4503 = vld [vmem:[%s425 + $0xc00] sm:$0xff]
        %v4504 = vld [vmem:[%s425 + $0xc08] sm:$0xff]
        %v4505 = vld [vmem:[%s425 + $0xc10] sm:$0xff]
        %v4506 = vld [vmem:[%s425 + $0xc18] sm:$0xff]
        %v4507 = vld [vmem:[%s425 + $0xc20] sm:$0xff]
        %v4508 = vld [vmem:[%s425 + $0xc28] sm:$0xff]
        %v4509 = vld [vmem:[%s425 + $0xc30] sm:$0xff]
        %v4510 = vld [vmem:[%s425 + $0xc38] sm:$0xff]
        %v4511 = vld [vmem:[%s425 + $0xc40] sm:$0xff]
        %v4512 = vld [vmem:[%s425 + $0xc48] sm:$0xff]
        %v4513 = vld [vmem:[%s425 + $0xc50] sm:$0xff]
        %v4514 = vld [vmem:[%s425 + $0xc58] sm:$0xff]
        %v4515 = vld [vmem:[%s425 + $0xc60] sm:$0xff]
        %v4516 = vld [vmem:[%s425 + $0xc68] sm:$0xff]
        %v4517 = vld [vmem:[%s425 + $0xc70] sm:$0xff]
        %v4518 = vld [vmem:[%s425 + $0xc78] sm:$0xff]
        %v4519 = vld [vmem:[%s425 + $0xc80] sm:$0xff]
        %v4520 = vld [vmem:[%s425 + $0xc88] sm:$0xff]
        %v4521 = vld [vmem:[%s425 + $0xc90] sm:$0xff]
        %v4522 = vld [vmem:[%s425 + $0xc98] sm:$0xff]
        %v4523 = vld [vmem:[%s425 + $0xca0] sm:$0xff]
        %v4524 = vld [vmem:[%s425 + $0xca8] sm:$0xff]
        %v4525 = vld [vmem:[%s425 + $0xcb0] sm:$0xff]
        %v4526 = vld [vmem:[%s425 + $0xcb8] sm:$0xff]
        %v4527 = vld [vmem:[%s425 + $0xcc0] sm:$0xff]
        %v4528 = vld [vmem:[%s425 + $0xcc8] sm:$0xff]
        %v4529 = vld [vmem:[%s425 + $0xcd0] sm:$0xff]
        %v4530 = vld [vmem:[%s425 + $0xcd8] sm:$0xff]
        %v4531 = vld [vmem:[%s425 + $0xce0] sm:$0xff]
        %v4532 = vld [vmem:[%s425 + $0xce8] sm:$0xff]
        %v4533 = vld [vmem:[%s425 + $0xcf0] sm:$0xff]
        %v4534 = vld [vmem:[%s425 + $0xcf8] sm:$0xff]
        %v4535 = vld [vmem:[%s425 + $0xd00] sm:$0xff]
        %v4536 = vld [vmem:[%s425 + $0xd08] sm:$0xff]
        %v4537 = vld [vmem:[%s425 + $0xd10] sm:$0xff]
        %v4538 = vld [vmem:[%s425 + $0xd18] sm:$0xff]
        %v4539 = vld [vmem:[%s425 + $0xd20] sm:$0xff]
        %v4540 = vld [vmem:[%s425 + $0xd28] sm:$0xff]
        %v4541 = vld [vmem:[%s425 + $0xd30] sm:$0xff]
        %v4542 = vld [vmem:[%s425 + $0xd38] sm:$0xff]
        %v4543 = vld [vmem:[%s425 + $0xd40] sm:$0xff]
        %v4544 = vld [vmem:[%s425 + $0xd48] sm:$0xff]
        %v4545 = vld [vmem:[%s425 + $0xd50] sm:$0xff]
        %v4546 = vld [vmem:[%s425 + $0xd58] sm:$0xff]
        %v4547 = vld [vmem:[%s425 + $0xd60] sm:$0xff]
        %v4548 = vld [vmem:[%s425 + $0xd68] sm:$0xff]
        %v4549 = vld [vmem:[%s425 + $0xd70] sm:$0xff]
        %v4550 = vld [vmem:[%s425 + $0xd78] sm:$0xff]
        %v4551 = vld [vmem:[%s425 + $0xd80] sm:$0xff]
        %v4552 = vld [vmem:[%s425 + $0xd88] sm:$0xff]
        %v4553 = vld [vmem:[%s425 + $0xd90] sm:$0xff]
        %v4554 = vld [vmem:[%s425 + $0xd98] sm:$0xff]
        %v4555 = vld [vmem:[%s425 + $0xda0] sm:$0xff]
        %v4556 = vld [vmem:[%s425 + $0xda8] sm:$0xff]
        %v4557 = vld [vmem:[%s425 + $0xdb0] sm:$0xff]
        %v4558 = vld [vmem:[%s425 + $0xdb8] sm:$0xff]
        %v4559 = vld [vmem:[%s425 + $0xdc0] sm:$0xff]
        %v4560 = vld [vmem:[%s425 + $0xdc8] sm:$0xff]
        %v4561 = vld [vmem:[%s425 + $0xdd0] sm:$0xff]
        %v4562 = vld [vmem:[%s425 + $0xdd8] sm:$0xff]
        %v4563 = vld [vmem:[%s425 + $0xde0] sm:$0xff]
        %v4564 = vld [vmem:[%s425 + $0xde8] sm:$0xff]
        %v4565 = vld [vmem:[%s425 + $0xdf0] sm:$0xff]
        %v4566 = vld [vmem:[%s425 + $0xdf8] sm:$0xff]
        %v4567 = vld [vmem:[%s425 + $0xe00] sm:$0xff]
        %v4568 = vld [vmem:[%s425 + $0xe08] sm:$0xff]
        %v4569 = vld [vmem:[%s425 + $0xe10] sm:$0xff]
        %v4570 = vld [vmem:[%s425 + $0xe18] sm:$0xff]
        %v4571 = vld [vmem:[%s425 + $0xe20] sm:$0xff]
        %v4572 = vld [vmem:[%s425 + $0xe28] sm:$0xff]
        %v4573 = vld [vmem:[%s425 + $0xe30] sm:$0xff]
        %v4574 = vld [vmem:[%s425 + $0xe38] sm:$0xff]
        %v4575 = vld [vmem:[%s425 + $0xe40] sm:$0xff]
        %v4576 = vld [vmem:[%s425 + $0xe48] sm:$0xff]
        %v4577 = vld [vmem:[%s425 + $0xe50] sm:$0xff]
        %v4578 = vld [vmem:[%s425 + $0xe58] sm:$0xff]
        %v4579 = vld [vmem:[%s425 + $0xe60] sm:$0xff]
        %v4580 = vld [vmem:[%s425 + $0xe68] sm:$0xff]
        %v4581 = vld [vmem:[%s425 + $0xe70] sm:$0xff]
        %v4582 = vld [vmem:[%s425 + $0xe78] sm:$0xff]
        %v4583 = vld [vmem:[%s425 + $0xe80] sm:$0xff]
        %v4584 = vld [vmem:[%s425 + $0xe88] sm:$0xff]
        %v4585 = vld [vmem:[%s425 + $0xe90] sm:$0xff]
        %v4586 = vld [vmem:[%s425 + $0xe98] sm:$0xff]
        %v4587 = vld [vmem:[%s425 + $0xea0] sm:$0xff]
        %v4588 = vld [vmem:[%s425 + $0xea8] sm:$0xff]
        %v4589 = vld [vmem:[%s425 + $0xeb0] sm:$0xff]
        %v4590 = vld [vmem:[%s425 + $0xeb8] sm:$0xff]
        %v4591 = vld [vmem:[%s425 + $0xec0] sm:$0xff]
        %v4592 = vld [vmem:[%s425 + $0xec8] sm:$0xff]
        %v4593 = vld [vmem:[%s425 + $0xed0] sm:$0xff]
        %v4594 = vld [vmem:[%s425 + $0xed8] sm:$0xff]
        %v4595 = vld [vmem:[%s425 + $0xee0] sm:$0xff]
        %v4596 = vld [vmem:[%s425 + $0xee8] sm:$0xff]
        %v4597 = vld [vmem:[%s425 + $0xef0] sm:$0xff]
        %v4598 = vld [vmem:[%s425 + $0xef8] sm:$0xff]
        %v4599 = vld [vmem:[%s425 + $0xf00] sm:$0xff]
        %v4600 = vld [vmem:[%s425 + $0xf08] sm:$0xff]
        %v4601 = vld [vmem:[%s425 + $0xf10] sm:$0xff]
        %v4602 = vld [vmem:[%s425 + $0xf18] sm:$0xff]
        %v4603 = vld [vmem:[%s425 + $0xf20] sm:$0xff]
        %v4604 = vld [vmem:[%s425 + $0xf28] sm:$0xff]
        %v4605 = vld [vmem:[%s425 + $0xf30] sm:$0xff]
        %v4606 = vld [vmem:[%s425 + $0xf38] sm:$0xff]
        %v4607 = vld [vmem:[%s425 + $0xf40] sm:$0xff]
        %v4608 = vld [vmem:[%s425 + $0xf48] sm:$0xff]
        %v4609 = vld [vmem:[%s425 + $0xf50] sm:$0xff]
        %v4610 = vld [vmem:[%s425 + $0xf58] sm:$0xff]
        %v4611 = vld [vmem:[%s425 + $0xf60] sm:$0xff]
        %v4612 = vld [vmem:[%s425 + $0xf68] sm:$0xff]
        %v4613 = vld [vmem:[%s425 + $0xf70] sm:$0xff]
        %v4614 = vld [vmem:[%s425 + $0xf78] sm:$0xff]
        %v4615 = vld [vmem:[%s425 + $0xf80] sm:$0xff]
        %v4616 = vld [vmem:[%s425 + $0xf88] sm:$0xff]
        %v4617 = vld [vmem:[%s425 + $0xf90] sm:$0xff]
        %v4618 = vld [vmem:[%s425 + $0xf98] sm:$0xff]
        %v4619 = vld [vmem:[%s425 + $0xfa0] sm:$0xff]
        %v4620 = vld [vmem:[%s425 + $0xfa8] sm:$0xff]
        %v4621 = vld [vmem:[%s425 + $0xfb0] sm:$0xff]
        %v4622 = vld [vmem:[%s425 + $0xfb8] sm:$0xff]
        %v4623 = vld [vmem:[%s425 + $0xfc0] sm:$0xff]
        %v4624 = vld [vmem:[%s425 + $0xfc8] sm:$0xff]
        %v4625 = vld [vmem:[%s425 + $0xfd0] sm:$0xff]
        %v4626 = vld [vmem:[%s425 + $0xfd8] sm:$0xff]
        %v4627 = vld [vmem:[%s425 + $0xfe0] sm:$0xff]
        %v4628 = vld [vmem:[%s425 + $0xfe8] sm:$0xff]
        %v4629 = vld [vmem:[%s425 + $0xff0] sm:$0xff]
        %v4630 = vld [vmem:[%s425 + $0xff8] sm:$0xff]
        %v5143 = vunpack.c.l.b16 %v4119
        %v5144 = vunpack.c.h.b16 %v4119
        %v5145 = vunpack.c.l.b16 %v4120
        %v5146 = vunpack.c.h.b16 %v4120
        %v5147 = vunpack.c.l.b16 %v4121
        %v5148 = vunpack.c.h.b16 %v4121
        %v5149 = vunpack.c.l.b16 %v4122
        %v5150 = vunpack.c.h.b16 %v4122
        %v5151 = vunpack.c.l.b16 %v4123
        %v5152 = vunpack.c.h.b16 %v4123
        %v5153 = vunpack.c.l.b16 %v4124
        %v5154 = vunpack.c.h.b16 %v4124
        %v5155 = vunpack.c.l.b16 %v4125
        %v5156 = vunpack.c.h.b16 %v4125
        %v5157 = vunpack.c.l.b16 %v4126
        %v5158 = vunpack.c.h.b16 %v4126
        %v5159 = vunpack.c.l.b16 %v4127
        %v5160 = vunpack.c.h.b16 %v4127
        %v5161 = vunpack.c.l.b16 %v4128
        %v5162 = vunpack.c.h.b16 %v4128
        %v5163 = vunpack.c.l.b16 %v4129
        %v5164 = vunpack.c.h.b16 %v4129
        %v5165 = vunpack.c.l.b16 %v4130
        %v5166 = vunpack.c.h.b16 %v4130
        %v5167 = vunpack.c.l.b16 %v4131
        %v5168 = vunpack.c.h.b16 %v4131
        %v5169 = vunpack.c.l.b16 %v4132
        %v5170 = vunpack.c.h.b16 %v4132
        %v5171 = vunpack.c.l.b16 %v4133
        %v5172 = vunpack.c.h.b16 %v4133
        %v5173 = vunpack.c.l.b16 %v4134
        %v5174 = vunpack.c.h.b16 %v4134
        %v5175 = vunpack.c.l.b16 %v4135
        %v5176 = vunpack.c.h.b16 %v4135
        %v5177 = vunpack.c.l.b16 %v4136
        %v5178 = vunpack.c.h.b16 %v4136
        %v5179 = vunpack.c.l.b16 %v4137
        %v5180 = vunpack.c.h.b16 %v4137
        %v5181 = vunpack.c.l.b16 %v4138
        %v5182 = vunpack.c.h.b16 %v4138
        %v5183 = vunpack.c.l.b16 %v4139
        %v5184 = vunpack.c.h.b16 %v4139
        %v5185 = vunpack.c.l.b16 %v4140
        %v5186 = vunpack.c.h.b16 %v4140
        %v5187 = vunpack.c.l.b16 %v4141
        %v5188 = vunpack.c.h.b16 %v4141
        %v5189 = vunpack.c.l.b16 %v4142
        %v5190 = vunpack.c.h.b16 %v4142
        %v5191 = vunpack.c.l.b16 %v4143
        %v5192 = vunpack.c.h.b16 %v4143
        %v5193 = vunpack.c.l.b16 %v4144
        %v5194 = vunpack.c.h.b16 %v4144
        %v5195 = vunpack.c.l.b16 %v4145
        %v5196 = vunpack.c.h.b16 %v4145
        %v5197 = vunpack.c.l.b16 %v4146
        %v5198 = vunpack.c.h.b16 %v4146
        %v5199 = vunpack.c.l.b16 %v4147
        %v5200 = vunpack.c.h.b16 %v4147
        %v5201 = vunpack.c.l.b16 %v4148
        %v5202 = vunpack.c.h.b16 %v4148
        %v5203 = vunpack.c.l.b16 %v4149
        %v5204 = vunpack.c.h.b16 %v4149
        %v5205 = vunpack.c.l.b16 %v4150
        %v5206 = vunpack.c.h.b16 %v4150
        %v5207 = vunpack.c.l.b16 %v4151
        %v5208 = vunpack.c.h.b16 %v4151
        %v5209 = vunpack.c.l.b16 %v4152
        %v5210 = vunpack.c.h.b16 %v4152
        %v5211 = vunpack.c.l.b16 %v4153
        %v5212 = vunpack.c.h.b16 %v4153
        %v5213 = vunpack.c.l.b16 %v4154
        %v5214 = vunpack.c.h.b16 %v4154
        %v5215 = vunpack.c.l.b16 %v4155
        %v5216 = vunpack.c.h.b16 %v4155
        %v5217 = vunpack.c.l.b16 %v4156
        %v5218 = vunpack.c.h.b16 %v4156
        %v5219 = vunpack.c.l.b16 %v4157
        %v5220 = vunpack.c.h.b16 %v4157
        %v5221 = vunpack.c.l.b16 %v4158
        %v5222 = vunpack.c.h.b16 %v4158
        %v5223 = vunpack.c.l.b16 %v4159
        %v5224 = vunpack.c.h.b16 %v4159
        %v5225 = vunpack.c.l.b16 %v4160
        %v5226 = vunpack.c.h.b16 %v4160
        %v5227 = vunpack.c.l.b16 %v4161
        %v5228 = vunpack.c.h.b16 %v4161
        %v5229 = vunpack.c.l.b16 %v4162
        %v5230 = vunpack.c.h.b16 %v4162
        %v5231 = vunpack.c.l.b16 %v4163
        %v5232 = vunpack.c.h.b16 %v4163
        %v5233 = vunpack.c.l.b16 %v4164
        %v5234 = vunpack.c.h.b16 %v4164
        %v5235 = vunpack.c.l.b16 %v4165
        %v5236 = vunpack.c.h.b16 %v4165
        %v5237 = vunpack.c.l.b16 %v4166
        %v5238 = vunpack.c.h.b16 %v4166
        %v5239 = vunpack.c.l.b16 %v4167
        %v5240 = vunpack.c.h.b16 %v4167
        %v5241 = vunpack.c.l.b16 %v4168
        %v5242 = vunpack.c.h.b16 %v4168
        %v5243 = vunpack.c.l.b16 %v4169
        %v5244 = vunpack.c.h.b16 %v4169
        %v5245 = vunpack.c.l.b16 %v4170
        %v5246 = vunpack.c.h.b16 %v4170
        %v5247 = vunpack.c.l.b16 %v4171
        %v5248 = vunpack.c.h.b16 %v4171
        %v5249 = vunpack.c.l.b16 %v4172
        %v5250 = vunpack.c.h.b16 %v4172
        %v5251 = vunpack.c.l.b16 %v4173
        %v5252 = vunpack.c.h.b16 %v4173
        %v5253 = vunpack.c.l.b16 %v4174
        %v5254 = vunpack.c.h.b16 %v4174
        %v5255 = vunpack.c.l.b16 %v4175
        %v5256 = vunpack.c.h.b16 %v4175
        %v5257 = vunpack.c.l.b16 %v4176
        %v5258 = vunpack.c.h.b16 %v4176
        %v5259 = vunpack.c.l.b16 %v4177
        %v5260 = vunpack.c.h.b16 %v4177
        %v5261 = vunpack.c.l.b16 %v4178
        %v5262 = vunpack.c.h.b16 %v4178
        %v5263 = vunpack.c.l.b16 %v4179
        %v5264 = vunpack.c.h.b16 %v4179
        %v5265 = vunpack.c.l.b16 %v4180
        %v5266 = vunpack.c.h.b16 %v4180
        %v5267 = vunpack.c.l.b16 %v4181
        %v5268 = vunpack.c.h.b16 %v4181
        %v5269 = vunpack.c.l.b16 %v4182
        %v5270 = vunpack.c.h.b16 %v4182
        %v5271 = vunpack.c.l.b16 %v4183
        %v5272 = vunpack.c.h.b16 %v4183
        %v5273 = vunpack.c.l.b16 %v4184
        %v5274 = vunpack.c.h.b16 %v4184
        %v5275 = vunpack.c.l.b16 %v4185
        %v5276 = vunpack.c.h.b16 %v4185
        %v5277 = vunpack.c.l.b16 %v4186
        %v5278 = vunpack.c.h.b16 %v4186
        %v5279 = vunpack.c.l.b16 %v4187
        %v5280 = vunpack.c.h.b16 %v4187
        %v5281 = vunpack.c.l.b16 %v4188
        %v5282 = vunpack.c.h.b16 %v4188
        %v5283 = vunpack.c.l.b16 %v4189
        %v5284 = vunpack.c.h.b16 %v4189
        %v5285 = vunpack.c.l.b16 %v4190
        %v5286 = vunpack.c.h.b16 %v4190
        %v5287 = vunpack.c.l.b16 %v4191
        %v5288 = vunpack.c.h.b16 %v4191
        %v5289 = vunpack.c.l.b16 %v4192
        %v5290 = vunpack.c.h.b16 %v4192
        %v5291 = vunpack.c.l.b16 %v4193
        %v5292 = vunpack.c.h.b16 %v4193
        %v5293 = vunpack.c.l.b16 %v4194
        %v5294 = vunpack.c.h.b16 %v4194
        %v5295 = vunpack.c.l.b16 %v4195
        %v5296 = vunpack.c.h.b16 %v4195
        %v5297 = vunpack.c.l.b16 %v4196
        %v5298 = vunpack.c.h.b16 %v4196
        %v5299 = vunpack.c.l.b16 %v4197
        %v5300 = vunpack.c.h.b16 %v4197
        %v5301 = vunpack.c.l.b16 %v4198
        %v5302 = vunpack.c.h.b16 %v4198
        %v5303 = vunpack.c.l.b16 %v4199
        %v5304 = vunpack.c.h.b16 %v4199
        %v5305 = vunpack.c.l.b16 %v4200
        %v5306 = vunpack.c.h.b16 %v4200
        %v5307 = vunpack.c.l.b16 %v4201
        %v5308 = vunpack.c.h.b16 %v4201
        %v5309 = vunpack.c.l.b16 %v4202
        %v5310 = vunpack.c.h.b16 %v4202
        %v5311 = vunpack.c.l.b16 %v4203
        %v5312 = vunpack.c.h.b16 %v4203
        %v5313 = vunpack.c.l.b16 %v4204
        %v5314 = vunpack.c.h.b16 %v4204
        %v5315 = vunpack.c.l.b16 %v4205
        %v5316 = vunpack.c.h.b16 %v4205
        %v5317 = vunpack.c.l.b16 %v4206
        %v5318 = vunpack.c.h.b16 %v4206
        %v5319 = vunpack.c.l.b16 %v4207
        %v5320 = vunpack.c.h.b16 %v4207
        %v5321 = vunpack.c.l.b16 %v4208
        %v5322 = vunpack.c.h.b16 %v4208
        %v5323 = vunpack.c.l.b16 %v4209
        %v5324 = vunpack.c.h.b16 %v4209
        %v5325 = vunpack.c.l.b16 %v4210
        %v5326 = vunpack.c.h.b16 %v4210
        %v5327 = vunpack.c.l.b16 %v4211
        %v5328 = vunpack.c.h.b16 %v4211
        %v5329 = vunpack.c.l.b16 %v4212
        %v5330 = vunpack.c.h.b16 %v4212
        %v5331 = vunpack.c.l.b16 %v4213
        %v5332 = vunpack.c.h.b16 %v4213
        %v5333 = vunpack.c.l.b16 %v4214
        %v5334 = vunpack.c.h.b16 %v4214
        %v5335 = vunpack.c.l.b16 %v4215
        %v5336 = vunpack.c.h.b16 %v4215
        %v5337 = vunpack.c.l.b16 %v4216
        %v5338 = vunpack.c.h.b16 %v4216
        %v5339 = vunpack.c.l.b16 %v4217
        %v5340 = vunpack.c.h.b16 %v4217
        %v5341 = vunpack.c.l.b16 %v4218
        %v5342 = vunpack.c.h.b16 %v4218
        %v5343 = vunpack.c.l.b16 %v4219
        %v5344 = vunpack.c.h.b16 %v4219
        %v5345 = vunpack.c.l.b16 %v4220
        %v5346 = vunpack.c.h.b16 %v4220
        %v5347 = vunpack.c.l.b16 %v4221
        %v5348 = vunpack.c.h.b16 %v4221
        %v5349 = vunpack.c.l.b16 %v4222
        %v5350 = vunpack.c.h.b16 %v4222
        %v5351 = vunpack.c.l.b16 %v4223
        %v5352 = vunpack.c.h.b16 %v4223
        %v5353 = vunpack.c.l.b16 %v4224
        %v5354 = vunpack.c.h.b16 %v4224
        %v5355 = vunpack.c.l.b16 %v4225
        %v5356 = vunpack.c.h.b16 %v4225
        %v5357 = vunpack.c.l.b16 %v4226
        %v5358 = vunpack.c.h.b16 %v4226
        %v5359 = vunpack.c.l.b16 %v4227
        %v5360 = vunpack.c.h.b16 %v4227
        %v5361 = vunpack.c.l.b16 %v4228
        %v5362 = vunpack.c.h.b16 %v4228
        %v5363 = vunpack.c.l.b16 %v4229
        %v5364 = vunpack.c.h.b16 %v4229
        %v5365 = vunpack.c.l.b16 %v4230
        %v5366 = vunpack.c.h.b16 %v4230
        %v5367 = vunpack.c.l.b16 %v4231
        %v5368 = vunpack.c.h.b16 %v4231
        %v5369 = vunpack.c.l.b16 %v4232
        %v5370 = vunpack.c.h.b16 %v4232
        %v5371 = vunpack.c.l.b16 %v4233
        %v5372 = vunpack.c.h.b16 %v4233
        %v5373 = vunpack.c.l.b16 %v4234
        %v5374 = vunpack.c.h.b16 %v4234
        %v5375 = vunpack.c.l.b16 %v4235
        %v5376 = vunpack.c.h.b16 %v4235
        %v5377 = vunpack.c.l.b16 %v4236
        %v5378 = vunpack.c.h.b16 %v4236
        %v5379 = vunpack.c.l.b16 %v4237
        %v5380 = vunpack.c.h.b16 %v4237
        %v5381 = vunpack.c.l.b16 %v4238
        %v5382 = vunpack.c.h.b16 %v4238
        %v5383 = vunpack.c.l.b16 %v4239
        %v5384 = vunpack.c.h.b16 %v4239
        %v5385 = vunpack.c.l.b16 %v4240
        %v5386 = vunpack.c.h.b16 %v4240
        %v5387 = vunpack.c.l.b16 %v4241
        %v5388 = vunpack.c.h.b16 %v4241
        %v5389 = vunpack.c.l.b16 %v4242
        %v5390 = vunpack.c.h.b16 %v4242
        %v5391 = vunpack.c.l.b16 %v4243
        %v5392 = vunpack.c.h.b16 %v4243
        %v5393 = vunpack.c.l.b16 %v4244
        %v5394 = vunpack.c.h.b16 %v4244
        %v5395 = vunpack.c.l.b16 %v4245
        %v5396 = vunpack.c.h.b16 %v4245
        %v5397 = vunpack.c.l.b16 %v4246
        %v5398 = vunpack.c.h.b16 %v4246
        %v5399 = vunpack.c.l.b16 %v4247
        %v5400 = vunpack.c.h.b16 %v4247
        %v5401 = vunpack.c.l.b16 %v4248
        %v5402 = vunpack.c.h.b16 %v4248
        %v5403 = vunpack.c.l.b16 %v4249
        %v5404 = vunpack.c.h.b16 %v4249
        %v5405 = vunpack.c.l.b16 %v4250
        %v5406 = vunpack.c.h.b16 %v4250
        %v5407 = vunpack.c.l.b16 %v4251
        %v5408 = vunpack.c.h.b16 %v4251
        %v5409 = vunpack.c.l.b16 %v4252
        %v5410 = vunpack.c.h.b16 %v4252
        %v5411 = vunpack.c.l.b16 %v4253
        %v5412 = vunpack.c.h.b16 %v4253
        %v5413 = vunpack.c.l.b16 %v4254
        %v5414 = vunpack.c.h.b16 %v4254
        %v5415 = vunpack.c.l.b16 %v4255
        %v5416 = vunpack.c.h.b16 %v4255
        %v5417 = vunpack.c.l.b16 %v4256
        %v5418 = vunpack.c.h.b16 %v4256
        %v5419 = vunpack.c.l.b16 %v4257
        %v5420 = vunpack.c.h.b16 %v4257
        %v5421 = vunpack.c.l.b16 %v4258
        %v5422 = vunpack.c.h.b16 %v4258
        %v5423 = vunpack.c.l.b16 %v4259
        %v5424 = vunpack.c.h.b16 %v4259
        %v5425 = vunpack.c.l.b16 %v4260
        %v5426 = vunpack.c.h.b16 %v4260
        %v5427 = vunpack.c.l.b16 %v4261
        %v5428 = vunpack.c.h.b16 %v4261
        %v5429 = vunpack.c.l.b16 %v4262
        %v5430 = vunpack.c.h.b16 %v4262
        %v5431 = vunpack.c.l.b16 %v4263
        %v5432 = vunpack.c.h.b16 %v4263
        %v5433 = vunpack.c.l.b16 %v4264
        %v5434 = vunpack.c.h.b16 %v4264
        %v5435 = vunpack.c.l.b16 %v4265
        %v5436 = vunpack.c.h.b16 %v4265
        %v5437 = vunpack.c.l.b16 %v4266
        %v5438 = vunpack.c.h.b16 %v4266
        %v5439 = vunpack.c.l.b16 %v4267
        %v5440 = vunpack.c.h.b16 %v4267
        %v5441 = vunpack.c.l.b16 %v4268
        %v5442 = vunpack.c.h.b16 %v4268
        %v5443 = vunpack.c.l.b16 %v4269
        %v5444 = vunpack.c.h.b16 %v4269
        %v5445 = vunpack.c.l.b16 %v4270
        %v5446 = vunpack.c.h.b16 %v4270
        %v5447 = vunpack.c.l.b16 %v4271
        %v5448 = vunpack.c.h.b16 %v4271
        %v5449 = vunpack.c.l.b16 %v4272
        %v5450 = vunpack.c.h.b16 %v4272
        %v5451 = vunpack.c.l.b16 %v4273
        %v5452 = vunpack.c.h.b16 %v4273
        %v5453 = vunpack.c.l.b16 %v4274
        %v5454 = vunpack.c.h.b16 %v4274
        %v5455 = vunpack.c.l.b16 %v4275
        %v5456 = vunpack.c.h.b16 %v4275
        %v5457 = vunpack.c.l.b16 %v4276
        %v5458 = vunpack.c.h.b16 %v4276
        %v5459 = vunpack.c.l.b16 %v4277
        %v5460 = vunpack.c.h.b16 %v4277
        %v5461 = vunpack.c.l.b16 %v4278
        %v5462 = vunpack.c.h.b16 %v4278
        %v5463 = vunpack.c.l.b16 %v4279
        %v5464 = vunpack.c.h.b16 %v4279
        %v5465 = vunpack.c.l.b16 %v4280
        %v5466 = vunpack.c.h.b16 %v4280
        %v5467 = vunpack.c.l.b16 %v4281
        %v5468 = vunpack.c.h.b16 %v4281
        %v5469 = vunpack.c.l.b16 %v4282
        %v5470 = vunpack.c.h.b16 %v4282
        %v5471 = vunpack.c.l.b16 %v4283
        %v5472 = vunpack.c.h.b16 %v4283
        %v5473 = vunpack.c.l.b16 %v4284
        %v5474 = vunpack.c.h.b16 %v4284
        %v5475 = vunpack.c.l.b16 %v4285
        %v5476 = vunpack.c.h.b16 %v4285
        %v5477 = vunpack.c.l.b16 %v4286
        %v5478 = vunpack.c.h.b16 %v4286
        %v5479 = vunpack.c.l.b16 %v4287
        %v5480 = vunpack.c.h.b16 %v4287
        %v5481 = vunpack.c.l.b16 %v4288
        %v5482 = vunpack.c.h.b16 %v4288
        %v5483 = vunpack.c.l.b16 %v4289
        %v5484 = vunpack.c.h.b16 %v4289
        %v5485 = vunpack.c.l.b16 %v4290
        %v5486 = vunpack.c.h.b16 %v4290
        %v5487 = vunpack.c.l.b16 %v4291
        %v5488 = vunpack.c.h.b16 %v4291
        %v5489 = vunpack.c.l.b16 %v4292
        %v5490 = vunpack.c.h.b16 %v4292
        %v5491 = vunpack.c.l.b16 %v4293
        %v5492 = vunpack.c.h.b16 %v4293
        %v5493 = vunpack.c.l.b16 %v4294
        %v5494 = vunpack.c.h.b16 %v4294
        %v5495 = vunpack.c.l.b16 %v4295
        %v5496 = vunpack.c.h.b16 %v4295
        %v5497 = vunpack.c.l.b16 %v4296
        %v5498 = vunpack.c.h.b16 %v4296
        %v5499 = vunpack.c.l.b16 %v4297
        %v5500 = vunpack.c.h.b16 %v4297
        %v5501 = vunpack.c.l.b16 %v4298
        %v5502 = vunpack.c.h.b16 %v4298
        %v5503 = vunpack.c.l.b16 %v4299
        %v5504 = vunpack.c.h.b16 %v4299
        %v5505 = vunpack.c.l.b16 %v4300
        %v5506 = vunpack.c.h.b16 %v4300
        %v5507 = vunpack.c.l.b16 %v4301
        %v5508 = vunpack.c.h.b16 %v4301
        %v5509 = vunpack.c.l.b16 %v4302
        %v5510 = vunpack.c.h.b16 %v4302
        %v5511 = vunpack.c.l.b16 %v4303
        %v5512 = vunpack.c.h.b16 %v4303
        %v5513 = vunpack.c.l.b16 %v4304
        %v5514 = vunpack.c.h.b16 %v4304
        %v5515 = vunpack.c.l.b16 %v4305
        %v5516 = vunpack.c.h.b16 %v4305
        %v5517 = vunpack.c.l.b16 %v4306
        %v5518 = vunpack.c.h.b16 %v4306
        %v5519 = vunpack.c.l.b16 %v4307
        %v5520 = vunpack.c.h.b16 %v4307
        %v5521 = vunpack.c.l.b16 %v4308
        %v5522 = vunpack.c.h.b16 %v4308
        %v5523 = vunpack.c.l.b16 %v4309
        %v5524 = vunpack.c.h.b16 %v4309
        %v5525 = vunpack.c.l.b16 %v4310
        %v5526 = vunpack.c.h.b16 %v4310
        %v5527 = vunpack.c.l.b16 %v4311
        %v5528 = vunpack.c.h.b16 %v4311
        %v5529 = vunpack.c.l.b16 %v4312
        %v5530 = vunpack.c.h.b16 %v4312
        %v5531 = vunpack.c.l.b16 %v4313
        %v5532 = vunpack.c.h.b16 %v4313
        %v5533 = vunpack.c.l.b16 %v4314
        %v5534 = vunpack.c.h.b16 %v4314
        %v5535 = vunpack.c.l.b16 %v4315
        %v5536 = vunpack.c.h.b16 %v4315
        %v5537 = vunpack.c.l.b16 %v4316
        %v5538 = vunpack.c.h.b16 %v4316
        %v5539 = vunpack.c.l.b16 %v4317
        %v5540 = vunpack.c.h.b16 %v4317
        %v5541 = vunpack.c.l.b16 %v4318
        %v5542 = vunpack.c.h.b16 %v4318
        %v5543 = vunpack.c.l.b16 %v4319
        %v5544 = vunpack.c.h.b16 %v4319
        %v5545 = vunpack.c.l.b16 %v4320
        %v5546 = vunpack.c.h.b16 %v4320
        %v5547 = vunpack.c.l.b16 %v4321
        %v5548 = vunpack.c.h.b16 %v4321
        %v5549 = vunpack.c.l.b16 %v4322
        %v5550 = vunpack.c.h.b16 %v4322
        %v5551 = vunpack.c.l.b16 %v4323
        %v5552 = vunpack.c.h.b16 %v4323
        %v5553 = vunpack.c.l.b16 %v4324
        %v5554 = vunpack.c.h.b16 %v4324
        %v5555 = vunpack.c.l.b16 %v4325
        %v5556 = vunpack.c.h.b16 %v4325
        %v5557 = vunpack.c.l.b16 %v4326
        %v5558 = vunpack.c.h.b16 %v4326
        %v5559 = vunpack.c.l.b16 %v4327
        %v5560 = vunpack.c.h.b16 %v4327
        %v5561 = vunpack.c.l.b16 %v4328
        %v5562 = vunpack.c.h.b16 %v4328
        %v5563 = vunpack.c.l.b16 %v4329
        %v5564 = vunpack.c.h.b16 %v4329
        %v5565 = vunpack.c.l.b16 %v4330
        %v5566 = vunpack.c.h.b16 %v4330
        %v5567 = vunpack.c.l.b16 %v4331
        %v5568 = vunpack.c.h.b16 %v4331
        %v5569 = vunpack.c.l.b16 %v4332
        %v5570 = vunpack.c.h.b16 %v4332
        %v5571 = vunpack.c.l.b16 %v4333
        %v5572 = vunpack.c.h.b16 %v4333
        %v5573 = vunpack.c.l.b16 %v4334
        %v5574 = vunpack.c.h.b16 %v4334
        %v5575 = vunpack.c.l.b16 %v4335
        %v5576 = vunpack.c.h.b16 %v4335
        %v5577 = vunpack.c.l.b16 %v4336
        %v5578 = vunpack.c.h.b16 %v4336
        %v5579 = vunpack.c.l.b16 %v4337
        %v5580 = vunpack.c.h.b16 %v4337
        %v5581 = vunpack.c.l.b16 %v4338
        %v5582 = vunpack.c.h.b16 %v4338
        %v5583 = vunpack.c.l.b16 %v4339
        %v5584 = vunpack.c.h.b16 %v4339
        %v5585 = vunpack.c.l.b16 %v4340
        %v5586 = vunpack.c.h.b16 %v4340
        %v5587 = vunpack.c.l.b16 %v4341
        %v5588 = vunpack.c.h.b16 %v4341
        %v5589 = vunpack.c.l.b16 %v4342
        %v5590 = vunpack.c.h.b16 %v4342
        %v5591 = vunpack.c.l.b16 %v4343
        %v5592 = vunpack.c.h.b16 %v4343
        %v5593 = vunpack.c.l.b16 %v4344
        %v5594 = vunpack.c.h.b16 %v4344
        %v5595 = vunpack.c.l.b16 %v4345
        %v5596 = vunpack.c.h.b16 %v4345
        %v5597 = vunpack.c.l.b16 %v4346
        %v5598 = vunpack.c.h.b16 %v4346
        %v5599 = vunpack.c.l.b16 %v4347
        %v5600 = vunpack.c.h.b16 %v4347
        %v5601 = vunpack.c.l.b16 %v4348
        %v5602 = vunpack.c.h.b16 %v4348
        %v5603 = vunpack.c.l.b16 %v4349
        %v5604 = vunpack.c.h.b16 %v4349
        %v5605 = vunpack.c.l.b16 %v4350
        %v5606 = vunpack.c.h.b16 %v4350
        %v5607 = vunpack.c.l.b16 %v4351
        %v5608 = vunpack.c.h.b16 %v4351
        %v5609 = vunpack.c.l.b16 %v4352
        %v5610 = vunpack.c.h.b16 %v4352
        %v5611 = vunpack.c.l.b16 %v4353
        %v5612 = vunpack.c.h.b16 %v4353
        %v5613 = vunpack.c.l.b16 %v4354
        %v5614 = vunpack.c.h.b16 %v4354
        %v5615 = vunpack.c.l.b16 %v4355
        %v5616 = vunpack.c.h.b16 %v4355
        %v5617 = vunpack.c.l.b16 %v4356
        %v5618 = vunpack.c.h.b16 %v4356
        %v5619 = vunpack.c.l.b16 %v4357
        %v5620 = vunpack.c.h.b16 %v4357
        %v5621 = vunpack.c.l.b16 %v4358
        %v5622 = vunpack.c.h.b16 %v4358
        %v5623 = vunpack.c.l.b16 %v4359
        %v5624 = vunpack.c.h.b16 %v4359
        %v5625 = vunpack.c.l.b16 %v4360
        %v5626 = vunpack.c.h.b16 %v4360
        %v5627 = vunpack.c.l.b16 %v4361
        %v5628 = vunpack.c.h.b16 %v4361
        %v5629 = vunpack.c.l.b16 %v4362
        %v5630 = vunpack.c.h.b16 %v4362
        %v5631 = vunpack.c.l.b16 %v4363
        %v5632 = vunpack.c.h.b16 %v4363
        %v5633 = vunpack.c.l.b16 %v4364
        %v5634 = vunpack.c.h.b16 %v4364
        %v5635 = vunpack.c.l.b16 %v4365
        %v5636 = vunpack.c.h.b16 %v4365
        %v5637 = vunpack.c.l.b16 %v4366
        %v5638 = vunpack.c.h.b16 %v4366
        %v5639 = vunpack.c.l.b16 %v4367
        %v5640 = vunpack.c.h.b16 %v4367
        %v5641 = vunpack.c.l.b16 %v4368
        %v5642 = vunpack.c.h.b16 %v4368
        %v5643 = vunpack.c.l.b16 %v4369
        %v5644 = vunpack.c.h.b16 %v4369
        %v5645 = vunpack.c.l.b16 %v4370
        %v5646 = vunpack.c.h.b16 %v4370
        %v5647 = vunpack.c.l.b16 %v4371
        %v5648 = vunpack.c.h.b16 %v4371
        %v5649 = vunpack.c.l.b16 %v4372
        %v5650 = vunpack.c.h.b16 %v4372
        %v5651 = vunpack.c.l.b16 %v4373
        %v5652 = vunpack.c.h.b16 %v4373
        %v5653 = vunpack.c.l.b16 %v4374
        %v5654 = vunpack.c.h.b16 %v4374
        %v5655 = vunpack.c.l.b16 %v4375
        %v5656 = vunpack.c.h.b16 %v4375
        %v5657 = vunpack.c.l.b16 %v4376
        %v5658 = vunpack.c.h.b16 %v4376
        %v5659 = vunpack.c.l.b16 %v4377
        %v5660 = vunpack.c.h.b16 %v4377
        %v5661 = vunpack.c.l.b16 %v4378
        %v5662 = vunpack.c.h.b16 %v4378
        %v5663 = vunpack.c.l.b16 %v4379
        %v5664 = vunpack.c.h.b16 %v4379
        %v5665 = vunpack.c.l.b16 %v4380
        %v5666 = vunpack.c.h.b16 %v4380
        %v5667 = vunpack.c.l.b16 %v4381
        %v5668 = vunpack.c.h.b16 %v4381
        %v5669 = vunpack.c.l.b16 %v4382
        %v5670 = vunpack.c.h.b16 %v4382
        %v5671 = vunpack.c.l.b16 %v4383
        %v5672 = vunpack.c.h.b16 %v4383
        %v5673 = vunpack.c.l.b16 %v4384
        %v5674 = vunpack.c.h.b16 %v4384
        %v5675 = vunpack.c.l.b16 %v4385
        %v5676 = vunpack.c.h.b16 %v4385
        %v5677 = vunpack.c.l.b16 %v4386
        %v5678 = vunpack.c.h.b16 %v4386
        %v5679 = vunpack.c.l.b16 %v4387
        %v5680 = vunpack.c.h.b16 %v4387
        %v5681 = vunpack.c.l.b16 %v4388
        %v5682 = vunpack.c.h.b16 %v4388
        %v5683 = vunpack.c.l.b16 %v4389
        %v5684 = vunpack.c.h.b16 %v4389
        %v5685 = vunpack.c.l.b16 %v4390
        %v5686 = vunpack.c.h.b16 %v4390
        %v5687 = vunpack.c.l.b16 %v4391
        %v5688 = vunpack.c.h.b16 %v4391
        %v5689 = vunpack.c.l.b16 %v4392
        %v5690 = vunpack.c.h.b16 %v4392
        %v5691 = vunpack.c.l.b16 %v4393
        %v5692 = vunpack.c.h.b16 %v4393
        %v5693 = vunpack.c.l.b16 %v4394
        %v5694 = vunpack.c.h.b16 %v4394
        %v5695 = vunpack.c.l.b16 %v4395
        %v5696 = vunpack.c.h.b16 %v4395
        %v5697 = vunpack.c.l.b16 %v4396
        %v5698 = vunpack.c.h.b16 %v4396
        %v5699 = vunpack.c.l.b16 %v4397
        %v5700 = vunpack.c.h.b16 %v4397
        %v5701 = vunpack.c.l.b16 %v4398
        %v5702 = vunpack.c.h.b16 %v4398
        %v5703 = vunpack.c.l.b16 %v4399
        %v5704 = vunpack.c.h.b16 %v4399
        %v5705 = vunpack.c.l.b16 %v4400
        %v5706 = vunpack.c.h.b16 %v4400
        %v5707 = vunpack.c.l.b16 %v4401
        %v5708 = vunpack.c.h.b16 %v4401
        %v5709 = vunpack.c.l.b16 %v4402
        %v5710 = vunpack.c.h.b16 %v4402
        %v5711 = vunpack.c.l.b16 %v4403
        %v5712 = vunpack.c.h.b16 %v4403
        %v5713 = vunpack.c.l.b16 %v4404
        %v5714 = vunpack.c.h.b16 %v4404
        %v5715 = vunpack.c.l.b16 %v4405
        %v5716 = vunpack.c.h.b16 %v4405
        %v5717 = vunpack.c.l.b16 %v4406
        %v5718 = vunpack.c.h.b16 %v4406
        %v5719 = vunpack.c.l.b16 %v4407
        %v5720 = vunpack.c.h.b16 %v4407
        %v5721 = vunpack.c.l.b16 %v4408
        %v5722 = vunpack.c.h.b16 %v4408
        %v5723 = vunpack.c.l.b16 %v4409
        %v5724 = vunpack.c.h.b16 %v4409
        %v5725 = vunpack.c.l.b16 %v4410
        %v5726 = vunpack.c.h.b16 %v4410
        %v5727 = vunpack.c.l.b16 %v4411
        %v5728 = vunpack.c.h.b16 %v4411
        %v5729 = vunpack.c.l.b16 %v4412
        %v5730 = vunpack.c.h.b16 %v4412
        %v5731 = vunpack.c.l.b16 %v4413
        %v5732 = vunpack.c.h.b16 %v4413
        %v5733 = vunpack.c.l.b16 %v4414
        %v5734 = vunpack.c.h.b16 %v4414
        %v5735 = vunpack.c.l.b16 %v4415
        %v5736 = vunpack.c.h.b16 %v4415
        %v5737 = vunpack.c.l.b16 %v4416
        %v5738 = vunpack.c.h.b16 %v4416
        %v5739 = vunpack.c.l.b16 %v4417
        %v5740 = vunpack.c.h.b16 %v4417
        %v5741 = vunpack.c.l.b16 %v4418
        %v5742 = vunpack.c.h.b16 %v4418
        %v5743 = vunpack.c.l.b16 %v4419
        %v5744 = vunpack.c.h.b16 %v4419
        %v5745 = vunpack.c.l.b16 %v4420
        %v5746 = vunpack.c.h.b16 %v4420
        %v5747 = vunpack.c.l.b16 %v4421
        %v5748 = vunpack.c.h.b16 %v4421
        %v5749 = vunpack.c.l.b16 %v4422
        %v5750 = vunpack.c.h.b16 %v4422
        %v5751 = vunpack.c.l.b16 %v4423
        %v5752 = vunpack.c.h.b16 %v4423
        %v5753 = vunpack.c.l.b16 %v4424
        %v5754 = vunpack.c.h.b16 %v4424
        %v5755 = vunpack.c.l.b16 %v4425
        %v5756 = vunpack.c.h.b16 %v4425
        %v5757 = vunpack.c.l.b16 %v4426
        %v5758 = vunpack.c.h.b16 %v4426
        %v5759 = vunpack.c.l.b16 %v4427
        %v5760 = vunpack.c.h.b16 %v4427
        %v5761 = vunpack.c.l.b16 %v4428
        %v5762 = vunpack.c.h.b16 %v4428
        %v5763 = vunpack.c.l.b16 %v4429
        %v5764 = vunpack.c.h.b16 %v4429
        %v5765 = vunpack.c.l.b16 %v4430
        %v5766 = vunpack.c.h.b16 %v4430
        %v5767 = vunpack.c.l.b16 %v4431
        %v5768 = vunpack.c.h.b16 %v4431
        %v5769 = vunpack.c.l.b16 %v4432
        %v5770 = vunpack.c.h.b16 %v4432
        %v5771 = vunpack.c.l.b16 %v4433
        %v5772 = vunpack.c.h.b16 %v4433
        %v5773 = vunpack.c.l.b16 %v4434
        %v5774 = vunpack.c.h.b16 %v4434
        %v5775 = vunpack.c.l.b16 %v4435
        %v5776 = vunpack.c.h.b16 %v4435
        %v5777 = vunpack.c.l.b16 %v4436
        %v5778 = vunpack.c.h.b16 %v4436
        %v5779 = vunpack.c.l.b16 %v4437
        %v5780 = vunpack.c.h.b16 %v4437
        %v5781 = vunpack.c.l.b16 %v4438
        %v5782 = vunpack.c.h.b16 %v4438
        %v5783 = vunpack.c.l.b16 %v4439
        %v5784 = vunpack.c.h.b16 %v4439
        %v5785 = vunpack.c.l.b16 %v4440
        %v5786 = vunpack.c.h.b16 %v4440
        %v5787 = vunpack.c.l.b16 %v4441
        %v5788 = vunpack.c.h.b16 %v4441
        %v5789 = vunpack.c.l.b16 %v4442
        %v5790 = vunpack.c.h.b16 %v4442
        %v5791 = vunpack.c.l.b16 %v4443
        %v5792 = vunpack.c.h.b16 %v4443
        %v5793 = vunpack.c.l.b16 %v4444
        %v5794 = vunpack.c.h.b16 %v4444
        %v5795 = vunpack.c.l.b16 %v4445
        %v5796 = vunpack.c.h.b16 %v4445
        %v5797 = vunpack.c.l.b16 %v4446
        %v5798 = vunpack.c.h.b16 %v4446
        %v5799 = vunpack.c.l.b16 %v4447
        %v5800 = vunpack.c.h.b16 %v4447
        %v5801 = vunpack.c.l.b16 %v4448
        %v5802 = vunpack.c.h.b16 %v4448
        %v5803 = vunpack.c.l.b16 %v4449
        %v5804 = vunpack.c.h.b16 %v4449
        %v5805 = vunpack.c.l.b16 %v4450
        %v5806 = vunpack.c.h.b16 %v4450
        %v5807 = vunpack.c.l.b16 %v4451
        %v5808 = vunpack.c.h.b16 %v4451
        %v5809 = vunpack.c.l.b16 %v4452
        %v5810 = vunpack.c.h.b16 %v4452
        %v5811 = vunpack.c.l.b16 %v4453
        %v5812 = vunpack.c.h.b16 %v4453
        %v5813 = vunpack.c.l.b16 %v4454
        %v5814 = vunpack.c.h.b16 %v4454
        %v5815 = vunpack.c.l.b16 %v4455
        %v5816 = vunpack.c.h.b16 %v4455
        %v5817 = vunpack.c.l.b16 %v4456
        %v5818 = vunpack.c.h.b16 %v4456
        %v5819 = vunpack.c.l.b16 %v4457
        %v5820 = vunpack.c.h.b16 %v4457
        %v5821 = vunpack.c.l.b16 %v4458
        %v5822 = vunpack.c.h.b16 %v4458
        %v5823 = vunpack.c.l.b16 %v4459
        %v5824 = vunpack.c.h.b16 %v4459
        %v5825 = vunpack.c.l.b16 %v4460
        %v5826 = vunpack.c.h.b16 %v4460
        %v5827 = vunpack.c.l.b16 %v4461
        %v5828 = vunpack.c.h.b16 %v4461
        %v5829 = vunpack.c.l.b16 %v4462
        %v5830 = vunpack.c.h.b16 %v4462
        %v5831 = vunpack.c.l.b16 %v4463
        %v5832 = vunpack.c.h.b16 %v4463
        %v5833 = vunpack.c.l.b16 %v4464
        %v5834 = vunpack.c.h.b16 %v4464
        %v5835 = vunpack.c.l.b16 %v4465
        %v5836 = vunpack.c.h.b16 %v4465
        %v5837 = vunpack.c.l.b16 %v4466
        %v5838 = vunpack.c.h.b16 %v4466
        %v5839 = vunpack.c.l.b16 %v4467
        %v5840 = vunpack.c.h.b16 %v4467
        %v5841 = vunpack.c.l.b16 %v4468
        %v5842 = vunpack.c.h.b16 %v4468
        %v5843 = vunpack.c.l.b16 %v4469
        %v5844 = vunpack.c.h.b16 %v4469
        %v5845 = vunpack.c.l.b16 %v4470
        %v5846 = vunpack.c.h.b16 %v4470
        %v5847 = vunpack.c.l.b16 %v4471
        %v5848 = vunpack.c.h.b16 %v4471
        %v5849 = vunpack.c.l.b16 %v4472
        %v5850 = vunpack.c.h.b16 %v4472
        %v5851 = vunpack.c.l.b16 %v4473
        %v5852 = vunpack.c.h.b16 %v4473
        %v5853 = vunpack.c.l.b16 %v4474
        %v5854 = vunpack.c.h.b16 %v4474
        %v5855 = vunpack.c.l.b16 %v4475
        %v5856 = vunpack.c.h.b16 %v4475
        %v5857 = vunpack.c.l.b16 %v4476
        %v5858 = vunpack.c.h.b16 %v4476
        %v5859 = vunpack.c.l.b16 %v4477
        %v5860 = vunpack.c.h.b16 %v4477
        %v5861 = vunpack.c.l.b16 %v4478
        %v5862 = vunpack.c.h.b16 %v4478
        %v5863 = vunpack.c.l.b16 %v4479
        %v5864 = vunpack.c.h.b16 %v4479
        %v5865 = vunpack.c.l.b16 %v4480
        %v5866 = vunpack.c.h.b16 %v4480
        %v5867 = vunpack.c.l.b16 %v4481
        %v5868 = vunpack.c.h.b16 %v4481
        %v5869 = vunpack.c.l.b16 %v4482
        %v5870 = vunpack.c.h.b16 %v4482
        %v5871 = vunpack.c.l.b16 %v4483
        %v5872 = vunpack.c.h.b16 %v4483
        %v5873 = vunpack.c.l.b16 %v4484
        %v5874 = vunpack.c.h.b16 %v4484
        %v5875 = vunpack.c.l.b16 %v4485
        %v5876 = vunpack.c.h.b16 %v4485
        %v5877 = vunpack.c.l.b16 %v4486
        %v5878 = vunpack.c.h.b16 %v4486
        %v5879 = vunpack.c.l.b16 %v4487
        %v5880 = vunpack.c.h.b16 %v4487
        %v5881 = vunpack.c.l.b16 %v4488
        %v5882 = vunpack.c.h.b16 %v4488
        %v5883 = vunpack.c.l.b16 %v4489
        %v5884 = vunpack.c.h.b16 %v4489
        %v5885 = vunpack.c.l.b16 %v4490
        %v5886 = vunpack.c.h.b16 %v4490
        %v5887 = vunpack.c.l.b16 %v4491
        %v5888 = vunpack.c.h.b16 %v4491
        %v5889 = vunpack.c.l.b16 %v4492
        %v5890 = vunpack.c.h.b16 %v4492
        %v5891 = vunpack.c.l.b16 %v4493
        %v5892 = vunpack.c.h.b16 %v4493
        %v5893 = vunpack.c.l.b16 %v4494
        %v5894 = vunpack.c.h.b16 %v4494
        %v5895 = vunpack.c.l.b16 %v4495
        %v5896 = vunpack.c.h.b16 %v4495
        %v5897 = vunpack.c.l.b16 %v4496
        %v5898 = vunpack.c.h.b16 %v4496
        %v5899 = vunpack.c.l.b16 %v4497
        %v5900 = vunpack.c.h.b16 %v4497
        %v5901 = vunpack.c.l.b16 %v4498
        %v5902 = vunpack.c.h.b16 %v4498
        %v5903 = vunpack.c.l.b16 %v4499
        %v5904 = vunpack.c.h.b16 %v4499
        %v5905 = vunpack.c.l.b16 %v4500
        %v5906 = vunpack.c.h.b16 %v4500
        %v5907 = vunpack.c.l.b16 %v4501
        %v5908 = vunpack.c.h.b16 %v4501
        %v5909 = vunpack.c.l.b16 %v4502
        %v5910 = vunpack.c.h.b16 %v4502
        %v5911 = vunpack.c.l.b16 %v4503
        %v5912 = vunpack.c.h.b16 %v4503
        %v5913 = vunpack.c.l.b16 %v4504
        %v5914 = vunpack.c.h.b16 %v4504
        %v5915 = vunpack.c.l.b16 %v4505
        %v5916 = vunpack.c.h.b16 %v4505
        %v5917 = vunpack.c.l.b16 %v4506
        %v5918 = vunpack.c.h.b16 %v4506
        %v5919 = vunpack.c.l.b16 %v4507
        %v5920 = vunpack.c.h.b16 %v4507
        %v5921 = vunpack.c.l.b16 %v4508
        %v5922 = vunpack.c.h.b16 %v4508
        %v5923 = vunpack.c.l.b16 %v4509
        %v5924 = vunpack.c.h.b16 %v4509
        %v5925 = vunpack.c.l.b16 %v4510
        %v5926 = vunpack.c.h.b16 %v4510
        %v5927 = vunpack.c.l.b16 %v4511
        %v5928 = vunpack.c.h.b16 %v4511
        %v5929 = vunpack.c.l.b16 %v4512
        %v5930 = vunpack.c.h.b16 %v4512
        %v5931 = vunpack.c.l.b16 %v4513
        %v5932 = vunpack.c.h.b16 %v4513
        %v5933 = vunpack.c.l.b16 %v4514
        %v5934 = vunpack.c.h.b16 %v4514
        %v5935 = vunpack.c.l.b16 %v4515
        %v5936 = vunpack.c.h.b16 %v4515
        %v5937 = vunpack.c.l.b16 %v4516
        %v5938 = vunpack.c.h.b16 %v4516
        %v5939 = vunpack.c.l.b16 %v4517
        %v5940 = vunpack.c.h.b16 %v4517
        %v5941 = vunpack.c.l.b16 %v4518
        %v5942 = vunpack.c.h.b16 %v4518
        %v5943 = vunpack.c.l.b16 %v4519
        %v5944 = vunpack.c.h.b16 %v4519
        %v5945 = vunpack.c.l.b16 %v4520
        %v5946 = vunpack.c.h.b16 %v4520
        %v5947 = vunpack.c.l.b16 %v4521
        %v5948 = vunpack.c.h.b16 %v4521
        %v5949 = vunpack.c.l.b16 %v4522
        %v5950 = vunpack.c.h.b16 %v4522
        %v5951 = vunpack.c.l.b16 %v4523
        %v5952 = vunpack.c.h.b16 %v4523
        %v5953 = vunpack.c.l.b16 %v4524
        %v5954 = vunpack.c.h.b16 %v4524
        %v5955 = vunpack.c.l.b16 %v4525
        %v5956 = vunpack.c.h.b16 %v4525
        %v5957 = vunpack.c.l.b16 %v4526
        %v5958 = vunpack.c.h.b16 %v4526
        %v5959 = vunpack.c.l.b16 %v4527
        %v5960 = vunpack.c.h.b16 %v4527
        %v5961 = vunpack.c.l.b16 %v4528
        %v5962 = vunpack.c.h.b16 %v4528
        %v5963 = vunpack.c.l.b16 %v4529
        %v5964 = vunpack.c.h.b16 %v4529
        %v5965 = vunpack.c.l.b16 %v4530
        %v5966 = vunpack.c.h.b16 %v4530
        %v5967 = vunpack.c.l.b16 %v4531
        %v5968 = vunpack.c.h.b16 %v4531
        %v5969 = vunpack.c.l.b16 %v4532
        %v5970 = vunpack.c.h.b16 %v4532
        %v5971 = vunpack.c.l.b16 %v4533
        %v5972 = vunpack.c.h.b16 %v4533
        %v5973 = vunpack.c.l.b16 %v4534
        %v5974 = vunpack.c.h.b16 %v4534
        %v5975 = vunpack.c.l.b16 %v4535
        %v5976 = vunpack.c.h.b16 %v4535
        %v5977 = vunpack.c.l.b16 %v4536
        %v5978 = vunpack.c.h.b16 %v4536
        %v5979 = vunpack.c.l.b16 %v4537
        %v5980 = vunpack.c.h.b16 %v4537
        %v5981 = vunpack.c.l.b16 %v4538
        %v5982 = vunpack.c.h.b16 %v4538
        %v5983 = vunpack.c.l.b16 %v4539
        %v5984 = vunpack.c.h.b16 %v4539
        %v5985 = vunpack.c.l.b16 %v4540
        %v5986 = vunpack.c.h.b16 %v4540
        %v5987 = vunpack.c.l.b16 %v4541
        %v5988 = vunpack.c.h.b16 %v4541
        %v5989 = vunpack.c.l.b16 %v4542
        %v5990 = vunpack.c.h.b16 %v4542
        %v5991 = vunpack.c.l.b16 %v4543
        %v5992 = vunpack.c.h.b16 %v4543
        %v5993 = vunpack.c.l.b16 %v4544
        %v5994 = vunpack.c.h.b16 %v4544
        %v5995 = vunpack.c.l.b16 %v4545
        %v5996 = vunpack.c.h.b16 %v4545
        %v5997 = vunpack.c.l.b16 %v4546
        %v5998 = vunpack.c.h.b16 %v4546
        %v5999 = vunpack.c.l.b16 %v4547
        %v6000 = vunpack.c.h.b16 %v4547
        %v6001 = vunpack.c.l.b16 %v4548
        %v6002 = vunpack.c.h.b16 %v4548
        %v6003 = vunpack.c.l.b16 %v4549
        %v6004 = vunpack.c.h.b16 %v4549
        %v6005 = vunpack.c.l.b16 %v4550
        %v6006 = vunpack.c.h.b16 %v4550
        %v6007 = vunpack.c.l.b16 %v4551
        %v6008 = vunpack.c.h.b16 %v4551
        %v6009 = vunpack.c.l.b16 %v4552
        %v6010 = vunpack.c.h.b16 %v4552
        %v6011 = vunpack.c.l.b16 %v4553
        %v6012 = vunpack.c.h.b16 %v4553
        %v6013 = vunpack.c.l.b16 %v4554
        %v6014 = vunpack.c.h.b16 %v4554
        %v6015 = vunpack.c.l.b16 %v4555
        %v6016 = vunpack.c.h.b16 %v4555
        %v6017 = vunpack.c.l.b16 %v4556
        %v6018 = vunpack.c.h.b16 %v4556
        %v6019 = vunpack.c.l.b16 %v4557
        %v6020 = vunpack.c.h.b16 %v4557
        %v6021 = vunpack.c.l.b16 %v4558
        %v6022 = vunpack.c.h.b16 %v4558
        %v6023 = vunpack.c.l.b16 %v4559
        %v6024 = vunpack.c.h.b16 %v4559
        %v6025 = vunpack.c.l.b16 %v4560
        %v6026 = vunpack.c.h.b16 %v4560
        %v6027 = vunpack.c.l.b16 %v4561
        %v6028 = vunpack.c.h.b16 %v4561
        %v6029 = vunpack.c.l.b16 %v4562
        %v6030 = vunpack.c.h.b16 %v4562
        %v6031 = vunpack.c.l.b16 %v4563
        %v6032 = vunpack.c.h.b16 %v4563
        %v6033 = vunpack.c.l.b16 %v4564
        %v6034 = vunpack.c.h.b16 %v4564
        %v6035 = vunpack.c.l.b16 %v4565
        %v6036 = vunpack.c.h.b16 %v4565
        %v6037 = vunpack.c.l.b16 %v4566
        %v6038 = vunpack.c.h.b16 %v4566
        %v6039 = vunpack.c.l.b16 %v4567
        %v6040 = vunpack.c.h.b16 %v4567
        %v6041 = vunpack.c.l.b16 %v4568
        %v6042 = vunpack.c.h.b16 %v4568
        %v6043 = vunpack.c.l.b16 %v4569
        %v6044 = vunpack.c.h.b16 %v4569
        %v6045 = vunpack.c.l.b16 %v4570
        %v6046 = vunpack.c.h.b16 %v4570
        %v6047 = vunpack.c.l.b16 %v4571
        %v6048 = vunpack.c.h.b16 %v4571
        %v6049 = vunpack.c.l.b16 %v4572
        %v6050 = vunpack.c.h.b16 %v4572
        %v6051 = vunpack.c.l.b16 %v4573
        %v6052 = vunpack.c.h.b16 %v4573
        %v6053 = vunpack.c.l.b16 %v4574
        %v6054 = vunpack.c.h.b16 %v4574
        %v6055 = vunpack.c.l.b16 %v4575
        %v6056 = vunpack.c.h.b16 %v4575
        %v6057 = vunpack.c.l.b16 %v4576
        %v6058 = vunpack.c.h.b16 %v4576
        %v6059 = vunpack.c.l.b16 %v4577
        %v6060 = vunpack.c.h.b16 %v4577
        %v6061 = vunpack.c.l.b16 %v4578
        %v6062 = vunpack.c.h.b16 %v4578
        %v6063 = vunpack.c.l.b16 %v4579
        %v6064 = vunpack.c.h.b16 %v4579
        %v6065 = vunpack.c.l.b16 %v4580
        %v6066 = vunpack.c.h.b16 %v4580
        %v6067 = vunpack.c.l.b16 %v4581
        %v6068 = vunpack.c.h.b16 %v4581
        %v6069 = vunpack.c.l.b16 %v4582
        %v6070 = vunpack.c.h.b16 %v4582
        %v6071 = vunpack.c.l.b16 %v4583
        %v6072 = vunpack.c.h.b16 %v4583
        %v6073 = vunpack.c.l.b16 %v4584
        %v6074 = vunpack.c.h.b16 %v4584
        %v6075 = vunpack.c.l.b16 %v4585
        %v6076 = vunpack.c.h.b16 %v4585
        %v6077 = vunpack.c.l.b16 %v4586
        %v6078 = vunpack.c.h.b16 %v4586
        %v6079 = vunpack.c.l.b16 %v4587
        %v6080 = vunpack.c.h.b16 %v4587
        %v6081 = vunpack.c.l.b16 %v4588
        %v6082 = vunpack.c.h.b16 %v4588
        %v6083 = vunpack.c.l.b16 %v4589
        %v6084 = vunpack.c.h.b16 %v4589
        %v6085 = vunpack.c.l.b16 %v4590
        %v6086 = vunpack.c.h.b16 %v4590
        %v6087 = vunpack.c.l.b16 %v4591
        %v6088 = vunpack.c.h.b16 %v4591
        %v6089 = vunpack.c.l.b16 %v4592
        %v6090 = vunpack.c.h.b16 %v4592
        %v6091 = vunpack.c.l.b16 %v4593
        %v6092 = vunpack.c.h.b16 %v4593
        %v6093 = vunpack.c.l.b16 %v4594
        %v6094 = vunpack.c.h.b16 %v4594
        %v6095 = vunpack.c.l.b16 %v4595
        %v6096 = vunpack.c.h.b16 %v4595
        %v6097 = vunpack.c.l.b16 %v4596
        %v6098 = vunpack.c.h.b16 %v4596
        %v6099 = vunpack.c.l.b16 %v4597
        %v6100 = vunpack.c.h.b16 %v4597
        %v6101 = vunpack.c.l.b16 %v4598
        %v6102 = vunpack.c.h.b16 %v4598
        %v6103 = vunpack.c.l.b16 %v4599
        %v6104 = vunpack.c.h.b16 %v4599
        %v6105 = vunpack.c.l.b16 %v4600
        %v6106 = vunpack.c.h.b16 %v4600
        %v6107 = vunpack.c.l.b16 %v4601
        %v6108 = vunpack.c.h.b16 %v4601
        %v6109 = vunpack.c.l.b16 %v4602
        %v6110 = vunpack.c.h.b16 %v4602
        %v6111 = vunpack.c.l.b16 %v4603
        %v6112 = vunpack.c.h.b16 %v4603
        %v6113 = vunpack.c.l.b16 %v4604
        %v6114 = vunpack.c.h.b16 %v4604
        %v6115 = vunpack.c.l.b16 %v4605
        %v6116 = vunpack.c.h.b16 %v4605
        %v6117 = vunpack.c.l.b16 %v4606
        %v6118 = vunpack.c.h.b16 %v4606
        %v6119 = vunpack.c.l.b16 %v4607
        %v6120 = vunpack.c.h.b16 %v4607
        %v6121 = vunpack.c.l.b16 %v4608
        %v6122 = vunpack.c.h.b16 %v4608
        %v6123 = vunpack.c.l.b16 %v4609
        %v6124 = vunpack.c.h.b16 %v4609
        %v6125 = vunpack.c.l.b16 %v4610
        %v6126 = vunpack.c.h.b16 %v4610
        %v6127 = vunpack.c.l.b16 %v4611
        %v6128 = vunpack.c.h.b16 %v4611
        %v6129 = vunpack.c.l.b16 %v4612
        %v6130 = vunpack.c.h.b16 %v4612
        %v6131 = vunpack.c.l.b16 %v4613
        %v6132 = vunpack.c.h.b16 %v4613
        %v6133 = vunpack.c.l.b16 %v4614
        %v6134 = vunpack.c.h.b16 %v4614
        %v6135 = vunpack.c.l.b16 %v4615
        %v6136 = vunpack.c.h.b16 %v4615
        %v6137 = vunpack.c.l.b16 %v4616
        %v6138 = vunpack.c.h.b16 %v4616
        %v6139 = vunpack.c.l.b16 %v4617
        %v6140 = vunpack.c.h.b16 %v4617
        %v6141 = vunpack.c.l.b16 %v4618
        %v6142 = vunpack.c.h.b16 %v4618
        %v6143 = vunpack.c.l.b16 %v4619
        %v6144 = vunpack.c.h.b16 %v4619
        %v6145 = vunpack.c.l.b16 %v4620
        %v6146 = vunpack.c.h.b16 %v4620
        %v6147 = vunpack.c.l.b16 %v4621
        %v6148 = vunpack.c.h.b16 %v4621
        %v6149 = vunpack.c.l.b16 %v4622
        %v6150 = vunpack.c.h.b16 %v4622
        %v6151 = vunpack.c.l.b16 %v4623
        %v6152 = vunpack.c.h.b16 %v4623
        %v6153 = vunpack.c.l.b16 %v4624
        %v6154 = vunpack.c.h.b16 %v4624
        %v6155 = vunpack.c.l.b16 %v4625
        %v6156 = vunpack.c.h.b16 %v4625
        %v6157 = vunpack.c.l.b16 %v4626
        %v6158 = vunpack.c.h.b16 %v4626
        %v6159 = vunpack.c.l.b16 %v4627
        %v6160 = vunpack.c.h.b16 %v4627
        %v6161 = vunpack.c.l.b16 %v4628
        %v6162 = vunpack.c.h.b16 %v4628
        %v6163 = vunpack.c.l.b16 %v4629
        %v6164 = vunpack.c.h.b16 %v4629
        %v6165 = vunpack.c.l.b16 %v4630
        %v6166 = vunpack.c.h.b16 %v4630
        %v6167 = vpack.c.b16 %v5151, %v5143
        %v6168 = vpack.c.b16 %v5152, %v5144
        %v6169 = vpack.c.b16 %v5153, %v5145
        %v6170 = vpack.c.b16 %v5154, %v5146
        %v6171 = vpack.c.b16 %v5155, %v5147
        %v6172 = vpack.c.b16 %v5156, %v5148
        %v6173 = vpack.c.b16 %v5157, %v5149
        %v6174 = vpack.c.b16 %v5158, %v5150
        %v6175 = vpack.c.b16 %v5167, %v5159
        %v6176 = vpack.c.b16 %v5168, %v5160
        %v6177 = vpack.c.b16 %v5169, %v5161
        %v6178 = vpack.c.b16 %v5170, %v5162
        %v6179 = vpack.c.b16 %v5171, %v5163
        %v6180 = vpack.c.b16 %v5172, %v5164
        %v6181 = vpack.c.b16 %v5173, %v5165
        %v6182 = vpack.c.b16 %v5174, %v5166
        %v6183 = vpack.c.b16 %v5183, %v5175
        %v6184 = vpack.c.b16 %v5184, %v5176
        %v6185 = vpack.c.b16 %v5185, %v5177
        %v6186 = vpack.c.b16 %v5186, %v5178
        %v6187 = vpack.c.b16 %v5187, %v5179
        %v6188 = vpack.c.b16 %v5188, %v5180
        %v6189 = vpack.c.b16 %v5189, %v5181
        %v6190 = vpack.c.b16 %v5190, %v5182
        %v6191 = vpack.c.b16 %v5199, %v5191
        %v6192 = vpack.c.b16 %v5200, %v5192
        %v6193 = vpack.c.b16 %v5201, %v5193
        %v6194 = vpack.c.b16 %v5202, %v5194
        %v6195 = vpack.c.b16 %v5203, %v5195
        %v6196 = vpack.c.b16 %v5204, %v5196
        %v6197 = vpack.c.b16 %v5205, %v5197
        %v6198 = vpack.c.b16 %v5206, %v5198
        %v6199 = vpack.c.b16 %v5215, %v5207
        %v6200 = vpack.c.b16 %v5216, %v5208
        %v6201 = vpack.c.b16 %v5217, %v5209
        %v6202 = vpack.c.b16 %v5218, %v5210
        %v6203 = vpack.c.b16 %v5219, %v5211
        %v6204 = vpack.c.b16 %v5220, %v5212
        %v6205 = vpack.c.b16 %v5221, %v5213
        %v6206 = vpack.c.b16 %v5222, %v5214
        %v6207 = vpack.c.b16 %v5231, %v5223
        %v6208 = vpack.c.b16 %v5232, %v5224
        %v6209 = vpack.c.b16 %v5233, %v5225
        %v6210 = vpack.c.b16 %v5234, %v5226
        %v6211 = vpack.c.b16 %v5235, %v5227
        %v6212 = vpack.c.b16 %v5236, %v5228
        %v6213 = vpack.c.b16 %v5237, %v5229
        %v6214 = vpack.c.b16 %v5238, %v5230
        %v6215 = vpack.c.b16 %v5247, %v5239
        %v6216 = vpack.c.b16 %v5248, %v5240
        %v6217 = vpack.c.b16 %v5249, %v5241
        %v6218 = vpack.c.b16 %v5250, %v5242
        %v6219 = vpack.c.b16 %v5251, %v5243
        %v6220 = vpack.c.b16 %v5252, %v5244
        %v6221 = vpack.c.b16 %v5253, %v5245
        %v6222 = vpack.c.b16 %v5254, %v5246
        %v6223 = vpack.c.b16 %v5263, %v5255
        %v6224 = vpack.c.b16 %v5264, %v5256
        %v6225 = vpack.c.b16 %v5265, %v5257
        %v6226 = vpack.c.b16 %v5266, %v5258
        %v6227 = vpack.c.b16 %v5267, %v5259
        %v6228 = vpack.c.b16 %v5268, %v5260
        %v6229 = vpack.c.b16 %v5269, %v5261
        %v6230 = vpack.c.b16 %v5270, %v5262
        %v6231 = vpack.c.b16 %v5279, %v5271
        %v6232 = vpack.c.b16 %v5280, %v5272
        %v6233 = vpack.c.b16 %v5281, %v5273
        %v6234 = vpack.c.b16 %v5282, %v5274
        %v6235 = vpack.c.b16 %v5283, %v5275
        %v6236 = vpack.c.b16 %v5284, %v5276
        %v6237 = vpack.c.b16 %v5285, %v5277
        %v6238 = vpack.c.b16 %v5286, %v5278
        %v6239 = vpack.c.b16 %v5295, %v5287
        %v6240 = vpack.c.b16 %v5296, %v5288
        %v6241 = vpack.c.b16 %v5297, %v5289
        %v6242 = vpack.c.b16 %v5298, %v5290
        %v6243 = vpack.c.b16 %v5299, %v5291
        %v6244 = vpack.c.b16 %v5300, %v5292
        %v6245 = vpack.c.b16 %v5301, %v5293
        %v6246 = vpack.c.b16 %v5302, %v5294
        %v6247 = vpack.c.b16 %v5311, %v5303
        %v6248 = vpack.c.b16 %v5312, %v5304
        %v6249 = vpack.c.b16 %v5313, %v5305
        %v6250 = vpack.c.b16 %v5314, %v5306
        %v6251 = vpack.c.b16 %v5315, %v5307
        %v6252 = vpack.c.b16 %v5316, %v5308
        %v6253 = vpack.c.b16 %v5317, %v5309
        %v6254 = vpack.c.b16 %v5318, %v5310
        %v6255 = vpack.c.b16 %v5327, %v5319
        %v6256 = vpack.c.b16 %v5328, %v5320
        %v6257 = vpack.c.b16 %v5329, %v5321
        %v6258 = vpack.c.b16 %v5330, %v5322
        %v6259 = vpack.c.b16 %v5331, %v5323
        %v6260 = vpack.c.b16 %v5332, %v5324
        %v6261 = vpack.c.b16 %v5333, %v5325
        %v6262 = vpack.c.b16 %v5334, %v5326
        %v6263 = vpack.c.b16 %v5343, %v5335
        %v6264 = vpack.c.b16 %v5344, %v5336
        %v6265 = vpack.c.b16 %v5345, %v5337
        %v6266 = vpack.c.b16 %v5346, %v5338
        %v6267 = vpack.c.b16 %v5347, %v5339
        %v6268 = vpack.c.b16 %v5348, %v5340
        %v6269 = vpack.c.b16 %v5349, %v5341
        %v6270 = vpack.c.b16 %v5350, %v5342
        %v6271 = vpack.c.b16 %v5359, %v5351
        %v6272 = vpack.c.b16 %v5360, %v5352
        %v6273 = vpack.c.b16 %v5361, %v5353
        %v6274 = vpack.c.b16 %v5362, %v5354
        %v6275 = vpack.c.b16 %v5363, %v5355
        %v6276 = vpack.c.b16 %v5364, %v5356
        %v6277 = vpack.c.b16 %v5365, %v5357
        %v6278 = vpack.c.b16 %v5366, %v5358
        %v6279 = vpack.c.b16 %v5375, %v5367
        %v6280 = vpack.c.b16 %v5376, %v5368
        %v6281 = vpack.c.b16 %v5377, %v5369
        %v6282 = vpack.c.b16 %v5378, %v5370
        %v6283 = vpack.c.b16 %v5379, %v5371
        %v6284 = vpack.c.b16 %v5380, %v5372
        %v6285 = vpack.c.b16 %v5381, %v5373
        %v6286 = vpack.c.b16 %v5382, %v5374
        %v6287 = vpack.c.b16 %v5391, %v5383
        %v6288 = vpack.c.b16 %v5392, %v5384
        %v6289 = vpack.c.b16 %v5393, %v5385
        %v6290 = vpack.c.b16 %v5394, %v5386
        %v6291 = vpack.c.b16 %v5395, %v5387
        %v6292 = vpack.c.b16 %v5396, %v5388
        %v6293 = vpack.c.b16 %v5397, %v5389
        %v6294 = vpack.c.b16 %v5398, %v5390
        %v6295 = vpack.c.b16 %v5407, %v5399
        %v6296 = vpack.c.b16 %v5408, %v5400
        %v6297 = vpack.c.b16 %v5409, %v5401
        %v6298 = vpack.c.b16 %v5410, %v5402
        %v6299 = vpack.c.b16 %v5411, %v5403
        %v6300 = vpack.c.b16 %v5412, %v5404
        %v6301 = vpack.c.b16 %v5413, %v5405
        %v6302 = vpack.c.b16 %v5414, %v5406
        %v6303 = vpack.c.b16 %v5423, %v5415
        %v6304 = vpack.c.b16 %v5424, %v5416
        %v6305 = vpack.c.b16 %v5425, %v5417
        %v6306 = vpack.c.b16 %v5426, %v5418
        %v6307 = vpack.c.b16 %v5427, %v5419
        %v6308 = vpack.c.b16 %v5428, %v5420
        %v6309 = vpack.c.b16 %v5429, %v5421
        %v6310 = vpack.c.b16 %v5430, %v5422
        %v6311 = vpack.c.b16 %v5439, %v5431
        %v6312 = vpack.c.b16 %v5440, %v5432
        %v6313 = vpack.c.b16 %v5441, %v5433
        %v6314 = vpack.c.b16 %v5442, %v5434
        %v6315 = vpack.c.b16 %v5443, %v5435
        %v6316 = vpack.c.b16 %v5444, %v5436
        %v6317 = vpack.c.b16 %v5445, %v5437
        %v6318 = vpack.c.b16 %v5446, %v5438
        %v6319 = vpack.c.b16 %v5455, %v5447
        %v6320 = vpack.c.b16 %v5456, %v5448
        %v6321 = vpack.c.b16 %v5457, %v5449
        %v6322 = vpack.c.b16 %v5458, %v5450
        %v6323 = vpack.c.b16 %v5459, %v5451
        %v6324 = vpack.c.b16 %v5460, %v5452
        %v6325 = vpack.c.b16 %v5461, %v5453
        %v6326 = vpack.c.b16 %v5462, %v5454
        %v6327 = vpack.c.b16 %v5471, %v5463
        %v6328 = vpack.c.b16 %v5472, %v5464
        %v6329 = vpack.c.b16 %v5473, %v5465
        %v6330 = vpack.c.b16 %v5474, %v5466
        %v6331 = vpack.c.b16 %v5475, %v5467
        %v6332 = vpack.c.b16 %v5476, %v5468
        %v6333 = vpack.c.b16 %v5477, %v5469
        %v6334 = vpack.c.b16 %v5478, %v5470
        %v6335 = vpack.c.b16 %v5487, %v5479
        %v6336 = vpack.c.b16 %v5488, %v5480
        %v6337 = vpack.c.b16 %v5489, %v5481
        %v6338 = vpack.c.b16 %v5490, %v5482
        %v6339 = vpack.c.b16 %v5491, %v5483
        %v6340 = vpack.c.b16 %v5492, %v5484
        %v6341 = vpack.c.b16 %v5493, %v5485
        %v6342 = vpack.c.b16 %v5494, %v5486
        %v6343 = vpack.c.b16 %v5503, %v5495
        %v6344 = vpack.c.b16 %v5504, %v5496
        %v6345 = vpack.c.b16 %v5505, %v5497
        %v6346 = vpack.c.b16 %v5506, %v5498
        %v6347 = vpack.c.b16 %v5507, %v5499
        %v6348 = vpack.c.b16 %v5508, %v5500
        %v6349 = vpack.c.b16 %v5509, %v5501
        %v6350 = vpack.c.b16 %v5510, %v5502
        %v6351 = vpack.c.b16 %v5519, %v5511
        %v6352 = vpack.c.b16 %v5520, %v5512
        %v6353 = vpack.c.b16 %v5521, %v5513
        %v6354 = vpack.c.b16 %v5522, %v5514
        %v6355 = vpack.c.b16 %v5523, %v5515
        %v6356 = vpack.c.b16 %v5524, %v5516
        %v6357 = vpack.c.b16 %v5525, %v5517
        %v6358 = vpack.c.b16 %v5526, %v5518
        %v6359 = vpack.c.b16 %v5535, %v5527
        %v6360 = vpack.c.b16 %v5536, %v5528
        %v6361 = vpack.c.b16 %v5537, %v5529
        %v6362 = vpack.c.b16 %v5538, %v5530
        %v6363 = vpack.c.b16 %v5539, %v5531
        %v6364 = vpack.c.b16 %v5540, %v5532
        %v6365 = vpack.c.b16 %v5541, %v5533
        %v6366 = vpack.c.b16 %v5542, %v5534
        %v6367 = vpack.c.b16 %v5551, %v5543
        %v6368 = vpack.c.b16 %v5552, %v5544
        %v6369 = vpack.c.b16 %v5553, %v5545
        %v6370 = vpack.c.b16 %v5554, %v5546
        %v6371 = vpack.c.b16 %v5555, %v5547
        %v6372 = vpack.c.b16 %v5556, %v5548
        %v6373 = vpack.c.b16 %v5557, %v5549
        %v6374 = vpack.c.b16 %v5558, %v5550
        %v6375 = vpack.c.b16 %v5567, %v5559
        %v6376 = vpack.c.b16 %v5568, %v5560
        %v6377 = vpack.c.b16 %v5569, %v5561
        %v6378 = vpack.c.b16 %v5570, %v5562
        %v6379 = vpack.c.b16 %v5571, %v5563
        %v6380 = vpack.c.b16 %v5572, %v5564
        %v6381 = vpack.c.b16 %v5573, %v5565
        %v6382 = vpack.c.b16 %v5574, %v5566
        %v6383 = vpack.c.b16 %v5583, %v5575
        %v6384 = vpack.c.b16 %v5584, %v5576
        %v6385 = vpack.c.b16 %v5585, %v5577
        %v6386 = vpack.c.b16 %v5586, %v5578
        %v6387 = vpack.c.b16 %v5587, %v5579
        %v6388 = vpack.c.b16 %v5588, %v5580
        %v6389 = vpack.c.b16 %v5589, %v5581
        %v6390 = vpack.c.b16 %v5590, %v5582
        %v6391 = vpack.c.b16 %v5599, %v5591
        %v6392 = vpack.c.b16 %v5600, %v5592
        %v6393 = vpack.c.b16 %v5601, %v5593
        %v6394 = vpack.c.b16 %v5602, %v5594
        %v6395 = vpack.c.b16 %v5603, %v5595
        %v6396 = vpack.c.b16 %v5604, %v5596
        %v6397 = vpack.c.b16 %v5605, %v5597
        %v6398 = vpack.c.b16 %v5606, %v5598
        %v6399 = vpack.c.b16 %v5615, %v5607
        %v6400 = vpack.c.b16 %v5616, %v5608
        %v6401 = vpack.c.b16 %v5617, %v5609
        %v6402 = vpack.c.b16 %v5618, %v5610
        %v6403 = vpack.c.b16 %v5619, %v5611
        %v6404 = vpack.c.b16 %v5620, %v5612
        %v6405 = vpack.c.b16 %v5621, %v5613
        %v6406 = vpack.c.b16 %v5622, %v5614
        %v6407 = vpack.c.b16 %v5631, %v5623
        %v6408 = vpack.c.b16 %v5632, %v5624
        %v6409 = vpack.c.b16 %v5633, %v5625
        %v6410 = vpack.c.b16 %v5634, %v5626
        %v6411 = vpack.c.b16 %v5635, %v5627
        %v6412 = vpack.c.b16 %v5636, %v5628
        %v6413 = vpack.c.b16 %v5637, %v5629
        %v6414 = vpack.c.b16 %v5638, %v5630
        %v6415 = vpack.c.b16 %v5647, %v5639
        %v6416 = vpack.c.b16 %v5648, %v5640
        %v6417 = vpack.c.b16 %v5649, %v5641
        %v6418 = vpack.c.b16 %v5650, %v5642
        %v6419 = vpack.c.b16 %v5651, %v5643
        %v6420 = vpack.c.b16 %v5652, %v5644
        %v6421 = vpack.c.b16 %v5653, %v5645
        %v6422 = vpack.c.b16 %v5654, %v5646
        %v6423 = vpack.c.b16 %v5663, %v5655
        %v6424 = vpack.c.b16 %v5664, %v5656
        %v6425 = vpack.c.b16 %v5665, %v5657
        %v6426 = vpack.c.b16 %v5666, %v5658
        %v6427 = vpack.c.b16 %v5667, %v5659
        %v6428 = vpack.c.b16 %v5668, %v5660
        %v6429 = vpack.c.b16 %v5669, %v5661
        %v6430 = vpack.c.b16 %v5670, %v5662
        %v6431 = vpack.c.b16 %v5679, %v5671
        %v6432 = vpack.c.b16 %v5680, %v5672
        %v6433 = vpack.c.b16 %v5681, %v5673
        %v6434 = vpack.c.b16 %v5682, %v5674
        %v6435 = vpack.c.b16 %v5683, %v5675
        %v6436 = vpack.c.b16 %v5684, %v5676
        %v6437 = vpack.c.b16 %v5685, %v5677
        %v6438 = vpack.c.b16 %v5686, %v5678
        %v6439 = vpack.c.b16 %v5695, %v5687
        %v6440 = vpack.c.b16 %v5696, %v5688
        %v6441 = vpack.c.b16 %v5697, %v5689
        %v6442 = vpack.c.b16 %v5698, %v5690
        %v6443 = vpack.c.b16 %v5699, %v5691
        %v6444 = vpack.c.b16 %v5700, %v5692
        %v6445 = vpack.c.b16 %v5701, %v5693
        %v6446 = vpack.c.b16 %v5702, %v5694
        %v6447 = vpack.c.b16 %v5711, %v5703
        %v6448 = vpack.c.b16 %v5712, %v5704
        %v6449 = vpack.c.b16 %v5713, %v5705
        %v6450 = vpack.c.b16 %v5714, %v5706
        %v6451 = vpack.c.b16 %v5715, %v5707
        %v6452 = vpack.c.b16 %v5716, %v5708
        %v6453 = vpack.c.b16 %v5717, %v5709
        %v6454 = vpack.c.b16 %v5718, %v5710
        %v6455 = vpack.c.b16 %v5727, %v5719
        %v6456 = vpack.c.b16 %v5728, %v5720
        %v6457 = vpack.c.b16 %v5729, %v5721
        %v6458 = vpack.c.b16 %v5730, %v5722
        %v6459 = vpack.c.b16 %v5731, %v5723
        %v6460 = vpack.c.b16 %v5732, %v5724
        %v6461 = vpack.c.b16 %v5733, %v5725
        %v6462 = vpack.c.b16 %v5734, %v5726
        %v6463 = vpack.c.b16 %v5743, %v5735
        %v6464 = vpack.c.b16 %v5744, %v5736
        %v6465 = vpack.c.b16 %v5745, %v5737
        %v6466 = vpack.c.b16 %v5746, %v5738
        %v6467 = vpack.c.b16 %v5747, %v5739
        %v6468 = vpack.c.b16 %v5748, %v5740
        %v6469 = vpack.c.b16 %v5749, %v5741
        %v6470 = vpack.c.b16 %v5750, %v5742
        %v6471 = vpack.c.b16 %v5759, %v5751
        %v6472 = vpack.c.b16 %v5760, %v5752
        %v6473 = vpack.c.b16 %v5761, %v5753
        %v6474 = vpack.c.b16 %v5762, %v5754
        %v6475 = vpack.c.b16 %v5763, %v5755
        %v6476 = vpack.c.b16 %v5764, %v5756
        %v6477 = vpack.c.b16 %v5765, %v5757
        %v6478 = vpack.c.b16 %v5766, %v5758
        %v6479 = vpack.c.b16 %v5775, %v5767
        %v6480 = vpack.c.b16 %v5776, %v5768
        %v6481 = vpack.c.b16 %v5777, %v5769
        %v6482 = vpack.c.b16 %v5778, %v5770
        %v6483 = vpack.c.b16 %v5779, %v5771
        %v6484 = vpack.c.b16 %v5780, %v5772
        %v6485 = vpack.c.b16 %v5781, %v5773
        %v6486 = vpack.c.b16 %v5782, %v5774
        %v6487 = vpack.c.b16 %v5791, %v5783
        %v6488 = vpack.c.b16 %v5792, %v5784
        %v6489 = vpack.c.b16 %v5793, %v5785
        %v6490 = vpack.c.b16 %v5794, %v5786
        %v6491 = vpack.c.b16 %v5795, %v5787
        %v6492 = vpack.c.b16 %v5796, %v5788
        %v6493 = vpack.c.b16 %v5797, %v5789
        %v6494 = vpack.c.b16 %v5798, %v5790
        %v6495 = vpack.c.b16 %v5807, %v5799
        %v6496 = vpack.c.b16 %v5808, %v5800
        %v6497 = vpack.c.b16 %v5809, %v5801
        %v6498 = vpack.c.b16 %v5810, %v5802
        %v6499 = vpack.c.b16 %v5811, %v5803
        %v6500 = vpack.c.b16 %v5812, %v5804
        %v6501 = vpack.c.b16 %v5813, %v5805
        %v6502 = vpack.c.b16 %v5814, %v5806
        %v6503 = vpack.c.b16 %v5823, %v5815
        %v6504 = vpack.c.b16 %v5824, %v5816
        %v6505 = vpack.c.b16 %v5825, %v5817
        %v6506 = vpack.c.b16 %v5826, %v5818
        %v6507 = vpack.c.b16 %v5827, %v5819
        %v6508 = vpack.c.b16 %v5828, %v5820
        %v6509 = vpack.c.b16 %v5829, %v5821
        %v6510 = vpack.c.b16 %v5830, %v5822
        %v6511 = vpack.c.b16 %v5839, %v5831
        %v6512 = vpack.c.b16 %v5840, %v5832
        %v6513 = vpack.c.b16 %v5841, %v5833
        %v6514 = vpack.c.b16 %v5842, %v5834
        %v6515 = vpack.c.b16 %v5843, %v5835
        %v6516 = vpack.c.b16 %v5844, %v5836
        %v6517 = vpack.c.b16 %v5845, %v5837
        %v6518 = vpack.c.b16 %v5846, %v5838
        %v6519 = vpack.c.b16 %v5855, %v5847
        %v6520 = vpack.c.b16 %v5856, %v5848
        %v6521 = vpack.c.b16 %v5857, %v5849
        %v6522 = vpack.c.b16 %v5858, %v5850
        %v6523 = vpack.c.b16 %v5859, %v5851
        %v6524 = vpack.c.b16 %v5860, %v5852
        %v6525 = vpack.c.b16 %v5861, %v5853
        %v6526 = vpack.c.b16 %v5862, %v5854
        %v6527 = vpack.c.b16 %v5871, %v5863
        %v6528 = vpack.c.b16 %v5872, %v5864
        %v6529 = vpack.c.b16 %v5873, %v5865
        %v6530 = vpack.c.b16 %v5874, %v5866
        %v6531 = vpack.c.b16 %v5875, %v5867
        %v6532 = vpack.c.b16 %v5876, %v5868
        %v6533 = vpack.c.b16 %v5877, %v5869
        %v6534 = vpack.c.b16 %v5878, %v5870
        %v6535 = vpack.c.b16 %v5887, %v5879
        %v6536 = vpack.c.b16 %v5888, %v5880
        %v6537 = vpack.c.b16 %v5889, %v5881
        %v6538 = vpack.c.b16 %v5890, %v5882
        %v6539 = vpack.c.b16 %v5891, %v5883
        %v6540 = vpack.c.b16 %v5892, %v5884
        %v6541 = vpack.c.b16 %v5893, %v5885
        %v6542 = vpack.c.b16 %v5894, %v5886
        %v6543 = vpack.c.b16 %v5903, %v5895
        %v6544 = vpack.c.b16 %v5904, %v5896
        %v6545 = vpack.c.b16 %v5905, %v5897
        %v6546 = vpack.c.b16 %v5906, %v5898
        %v6547 = vpack.c.b16 %v5907, %v5899
        %v6548 = vpack.c.b16 %v5908, %v5900
        %v6549 = vpack.c.b16 %v5909, %v5901
        %v6550 = vpack.c.b16 %v5910, %v5902
        %v6551 = vpack.c.b16 %v5919, %v5911
        %v6552 = vpack.c.b16 %v5920, %v5912
        %v6553 = vpack.c.b16 %v5921, %v5913
        %v6554 = vpack.c.b16 %v5922, %v5914
        %v6555 = vpack.c.b16 %v5923, %v5915
        %v6556 = vpack.c.b16 %v5924, %v5916
        %v6557 = vpack.c.b16 %v5925, %v5917
        %v6558 = vpack.c.b16 %v5926, %v5918
        %v6559 = vpack.c.b16 %v5935, %v5927
        %v6560 = vpack.c.b16 %v5936, %v5928
        %v6561 = vpack.c.b16 %v5937, %v5929
        %v6562 = vpack.c.b16 %v5938, %v5930
        %v6563 = vpack.c.b16 %v5939, %v5931
        %v6564 = vpack.c.b16 %v5940, %v5932
        %v6565 = vpack.c.b16 %v5941, %v5933
        %v6566 = vpack.c.b16 %v5942, %v5934
        %v6567 = vpack.c.b16 %v5951, %v5943
        %v6568 = vpack.c.b16 %v5952, %v5944
        %v6569 = vpack.c.b16 %v5953, %v5945
        %v6570 = vpack.c.b16 %v5954, %v5946
        %v6571 = vpack.c.b16 %v5955, %v5947
        %v6572 = vpack.c.b16 %v5956, %v5948
        %v6573 = vpack.c.b16 %v5957, %v5949
        %v6574 = vpack.c.b16 %v5958, %v5950
        %v6575 = vpack.c.b16 %v5967, %v5959
        %v6576 = vpack.c.b16 %v5968, %v5960
        %v6577 = vpack.c.b16 %v5969, %v5961
        %v6578 = vpack.c.b16 %v5970, %v5962
        %v6579 = vpack.c.b16 %v5971, %v5963
        %v6580 = vpack.c.b16 %v5972, %v5964
        %v6581 = vpack.c.b16 %v5973, %v5965
        %v6582 = vpack.c.b16 %v5974, %v5966
        %v6583 = vpack.c.b16 %v5983, %v5975
        %v6584 = vpack.c.b16 %v5984, %v5976
        %v6585 = vpack.c.b16 %v5985, %v5977
        %v6586 = vpack.c.b16 %v5986, %v5978
        %v6587 = vpack.c.b16 %v5987, %v5979
        %v6588 = vpack.c.b16 %v5988, %v5980
        %v6589 = vpack.c.b16 %v5989, %v5981
        %v6590 = vpack.c.b16 %v5990, %v5982
        %v6591 = vpack.c.b16 %v5999, %v5991
        %v6592 = vpack.c.b16 %v6000, %v5992
        %v6593 = vpack.c.b16 %v6001, %v5993
        %v6594 = vpack.c.b16 %v6002, %v5994
        %v6595 = vpack.c.b16 %v6003, %v5995
        %v6596 = vpack.c.b16 %v6004, %v5996
        %v6597 = vpack.c.b16 %v6005, %v5997
        %v6598 = vpack.c.b16 %v6006, %v5998
        %v6599 = vpack.c.b16 %v6015, %v6007
        %v6600 = vpack.c.b16 %v6016, %v6008
        %v6601 = vpack.c.b16 %v6017, %v6009
        %v6602 = vpack.c.b16 %v6018, %v6010
        %v6603 = vpack.c.b16 %v6019, %v6011
        %v6604 = vpack.c.b16 %v6020, %v6012
        %v6605 = vpack.c.b16 %v6021, %v6013
        %v6606 = vpack.c.b16 %v6022, %v6014
        %v6607 = vpack.c.b16 %v6031, %v6023
        %v6608 = vpack.c.b16 %v6032, %v6024
        %v6609 = vpack.c.b16 %v6033, %v6025
        %v6610 = vpack.c.b16 %v6034, %v6026
        %v6611 = vpack.c.b16 %v6035, %v6027
        %v6612 = vpack.c.b16 %v6036, %v6028
        %v6613 = vpack.c.b16 %v6037, %v6029
        %v6614 = vpack.c.b16 %v6038, %v6030
        %v6615 = vpack.c.b16 %v6047, %v6039
        %v6616 = vpack.c.b16 %v6048, %v6040
        %v6617 = vpack.c.b16 %v6049, %v6041
        %v6618 = vpack.c.b16 %v6050, %v6042
        %v6619 = vpack.c.b16 %v6051, %v6043
        %v6620 = vpack.c.b16 %v6052, %v6044
        %v6621 = vpack.c.b16 %v6053, %v6045
        %v6622 = vpack.c.b16 %v6054, %v6046
        %v6623 = vpack.c.b16 %v6063, %v6055
        %v6624 = vpack.c.b16 %v6064, %v6056
        %v6625 = vpack.c.b16 %v6065, %v6057
        %v6626 = vpack.c.b16 %v6066, %v6058
        %v6627 = vpack.c.b16 %v6067, %v6059
        %v6628 = vpack.c.b16 %v6068, %v6060
        %v6629 = vpack.c.b16 %v6069, %v6061
        %v6630 = vpack.c.b16 %v6070, %v6062
        %v6631 = vpack.c.b16 %v6079, %v6071
        %v6632 = vpack.c.b16 %v6080, %v6072
        %v6633 = vpack.c.b16 %v6081, %v6073
        %v6634 = vpack.c.b16 %v6082, %v6074
        %v6635 = vpack.c.b16 %v6083, %v6075
        %v6636 = vpack.c.b16 %v6084, %v6076
        %v6637 = vpack.c.b16 %v6085, %v6077
        %v6638 = vpack.c.b16 %v6086, %v6078
        %v6639 = vpack.c.b16 %v6095, %v6087
        %v6640 = vpack.c.b16 %v6096, %v6088
        %v6641 = vpack.c.b16 %v6097, %v6089
        %v6642 = vpack.c.b16 %v6098, %v6090
        %v6643 = vpack.c.b16 %v6099, %v6091
        %v6644 = vpack.c.b16 %v6100, %v6092
        %v6645 = vpack.c.b16 %v6101, %v6093
        %v6646 = vpack.c.b16 %v6102, %v6094
        %v6647 = vpack.c.b16 %v6111, %v6103
        %v6648 = vpack.c.b16 %v6112, %v6104
        %v6649 = vpack.c.b16 %v6113, %v6105
        %v6650 = vpack.c.b16 %v6114, %v6106
        %v6651 = vpack.c.b16 %v6115, %v6107
        %v6652 = vpack.c.b16 %v6116, %v6108
        %v6653 = vpack.c.b16 %v6117, %v6109
        %v6654 = vpack.c.b16 %v6118, %v6110
        %v6655 = vpack.c.b16 %v6127, %v6119
        %v6656 = vpack.c.b16 %v6128, %v6120
        %v6657 = vpack.c.b16 %v6129, %v6121
        %v6658 = vpack.c.b16 %v6130, %v6122
        %v6659 = vpack.c.b16 %v6131, %v6123
        %v6660 = vpack.c.b16 %v6132, %v6124
        %v6661 = vpack.c.b16 %v6133, %v6125
        %v6662 = vpack.c.b16 %v6134, %v6126
        %v6663 = vpack.c.b16 %v6143, %v6135
        %v6664 = vpack.c.b16 %v6144, %v6136
        %v6665 = vpack.c.b16 %v6145, %v6137
        %v6666 = vpack.c.b16 %v6146, %v6138
        %v6667 = vpack.c.b16 %v6147, %v6139
        %v6668 = vpack.c.b16 %v6148, %v6140
        %v6669 = vpack.c.b16 %v6149, %v6141
        %v6670 = vpack.c.b16 %v6150, %v6142
        %v6671 = vpack.c.b16 %v6159, %v6151
        %v6672 = vpack.c.b16 %v6160, %v6152
        %v6673 = vpack.c.b16 %v6161, %v6153
        %v6674 = vpack.c.b16 %v6162, %v6154
        %v6675 = vpack.c.b16 %v6163, %v6155
        %v6676 = vpack.c.b16 %v6164, %v6156
        %v6677 = vpack.c.b16 %v6165, %v6157
        %v6678 = vpack.c.b16 %v6166, %v6158
        %7191 = vmatprep.subr.bf16.mxu0 %v6168
        %7192 = vmatpush1.bf16.msra.mxu0 %v6167
        %7193 = vmatprep.subr.bf16.mxu0 %v6176
        %7194 = vmatpush1.bf16.msra.mxu0 %v6175
        %7195 = vmatprep.subr.bf16.mxu0 %v6184
        %7196 = vmatpush1.bf16.msra.mxu0 %v6183
        %7197 = vmatprep.subr.bf16.mxu0 %v6192
        %7198 = vmatpush1.bf16.msra.mxu0 %v6191
        %7199 = vmatprep.subr.bf16.mxu0 %v6200
        %7200 = vmatpush1.bf16.msra.mxu0 %v6199
        %7201 = vmatprep.subr.bf16.mxu0 %v6208
        %7202 = vmatpush1.bf16.msra.mxu0 %v6207
        %7203 = vmatprep.subr.bf16.mxu0 %v6216
        %7204 = vmatpush1.bf16.msra.mxu0 %v6215
        %7205 = vmatprep.subr.bf16.mxu0 %v6224
        %7206 = vmatpush1.bf16.msra.mxu0 %v6223
        %7207 = vmatprep.subr.bf16.mxu0 %v6232
        %7208 = vmatpush1.bf16.msra.mxu0 %v6231
        %7209 = vmatprep.subr.bf16.mxu0 %v6240
        %7210 = vmatpush1.bf16.msra.mxu0 %v6239
        %7211 = vmatprep.subr.bf16.mxu0 %v6248
        %7212 = vmatpush1.bf16.msra.mxu0 %v6247
        %7213 = vmatprep.subr.bf16.mxu0 %v6256
        %7214 = vmatpush1.bf16.msra.mxu0 %v6255
        %7215 = vmatprep.subr.bf16.mxu0 %v6264
        %7216 = vmatpush1.bf16.msra.mxu0 %v6263
        %7217 = vmatprep.subr.bf16.mxu0 %v6272
        %7218 = vmatpush1.bf16.msra.mxu0 %v6271
        %7219 = vmatprep.subr.bf16.mxu0 %v6280
        %7220 = vmatpush1.bf16.msra.mxu0 %v6279
        %7221 = vmatprep.subr.bf16.mxu0 %v6288
        %7222 = vmatpush1.bf16.msra.mxu0 %v6287
        %7223 = vmatprep.mubr.bf16.mxu0 %v4112
        %7224 = vmatmul.mubr.bf16.gmra.mrb[0].mxu0 %v4111
        %v7225 = vpop.f32.mrb[0].mxu0
        %v7226 = vadd.f32 0.0, %v7225
        %v7227 = vpop.f32.mrb[0].mxu0
        %v7228 = vadd.f32 0.0, %v7227
        %v7229 = vpop.f32.mrb[0].mxu0
        %v7230 = vpop.f32.mrb[0].mxu0
        %7231 = vdwg.mxu0
        %7232 = vmatprep.subr.bf16.mxu0 %v6296
        %7233 = vmatpush1.bf16.msra.mxu0 %v6295
        %7234 = vmatprep.subr.bf16.mxu0 %v6304
        %7235 = vmatpush1.bf16.msra.mxu0 %v6303
        %7236 = vmatprep.subr.bf16.mxu0 %v6312
        %7237 = vmatpush1.bf16.msra.mxu0 %v6311
        %7238 = vmatprep.subr.bf16.mxu0 %v6320
        %7239 = vmatpush1.bf16.msra.mxu0 %v6319
        %7240 = vmatprep.subr.bf16.mxu0 %v6328
        %7241 = vmatpush1.bf16.msra.mxu0 %v6327
        %7242 = vmatprep.subr.bf16.mxu0 %v6336
        %7243 = vmatpush1.bf16.msra.mxu0 %v6335
        %7244 = vmatprep.subr.bf16.mxu0 %v6344
        %7245 = vmatpush1.bf16.msra.mxu0 %v6343
        %7246 = vmatprep.subr.bf16.mxu0 %v6352
        %7247 = vmatpush1.bf16.msra.mxu0 %v6351
        %7248 = vmatprep.subr.bf16.mxu0 %v6360
        %7249 = vmatpush1.bf16.msra.mxu0 %v6359
        %7250 = vmatprep.subr.bf16.mxu0 %v6368
        %7251 = vmatpush1.bf16.msra.mxu0 %v6367
        %7252 = vmatprep.subr.bf16.mxu0 %v6376
        %7253 = vmatpush1.bf16.msra.mxu0 %v6375
        %7254 = vmatprep.subr.bf16.mxu0 %v6384
        %7255 = vmatpush1.bf16.msra.mxu0 %v6383
        %7256 = vmatprep.subr.bf16.mxu0 %v6392
        %7257 = vmatpush1.bf16.msra.mxu0 %v6391
        %7258 = vmatprep.subr.bf16.mxu0 %v6400
        %7259 = vmatpush1.bf16.msra.mxu0 %v6399
        %7260 = vmatprep.subr.bf16.mxu0 %v6408
        %7261 = vmatpush1.bf16.msra.mxu0 %v6407
        %7262 = vmatprep.subr.bf16.mxu0 %v6416
        %7263 = vmatpush1.bf16.msra.mxu0 %v6415
        %7264 = vmatprep.mubr.bf16.mxu0 %v4114
        %7265 = vmatmul.mubr.bf16.gmra.mrb[0].mxu0 %v4113
        %v7266 = vpop.f32.mrb[0].mxu0
        %v7267 = vadd.f32 %v7226, %v7266
        %v7268 = vpop.f32.mrb[0].mxu0
        %v7269 = vadd.f32 %v7228, %v7268
        %v7270 = vpop.f32.mrb[0].mxu0
        %v7271 = vpop.f32.mrb[0].mxu0
        %7272 = vdwg.mxu0
        %7273 = vmatprep.subr.bf16.mxu0 %v6424
        %7274 = vmatpush1.bf16.msra.mxu0 %v6423
        %7275 = vmatprep.subr.bf16.mxu0 %v6432
        %7276 = vmatpush1.bf16.msra.mxu0 %v6431
        %7277 = vmatprep.subr.bf16.mxu0 %v6440
        %7278 = vmatpush1.bf16.msra.mxu0 %v6439
        %7279 = vmatprep.subr.bf16.mxu0 %v6448
        %7280 = vmatpush1.bf16.msra.mxu0 %v6447
        %7281 = vmatprep.subr.bf16.mxu0 %v6456
        %7282 = vmatpush1.bf16.msra.mxu0 %v6455
        %7283 = vmatprep.subr.bf16.mxu0 %v6464
        %7284 = vmatpush1.bf16.msra.mxu0 %v6463
        %7285 = vmatprep.subr.bf16.mxu0 %v6472
        %7286 = vmatpush1.bf16.msra.mxu0 %v6471
        %7287 = vmatprep.subr.bf16.mxu0 %v6480
        %7288 = vmatpush1.bf16.msra.mxu0 %v6479
        %7289 = vmatprep.subr.bf16.mxu0 %v6488
        %7290 = vmatpush1.bf16.msra.mxu0 %v6487
        %7291 = vmatprep.subr.bf16.mxu0 %v6496
        %7292 = vmatpush1.bf16.msra.mxu0 %v6495
        %7293 = vmatprep.subr.bf16.mxu0 %v6504
        %7294 = vmatpush1.bf16.msra.mxu0 %v6503
        %7295 = vmatprep.subr.bf16.mxu0 %v6512
        %7296 = vmatpush1.bf16.msra.mxu0 %v6511
        %7297 = vmatprep.subr.bf16.mxu0 %v6520
        %7298 = vmatpush1.bf16.msra.mxu0 %v6519
        %7299 = vmatprep.subr.bf16.mxu0 %v6528
        %7300 = vmatpush1.bf16.msra.mxu0 %v6527
        %7301 = vmatprep.subr.bf16.mxu0 %v6536
        %7302 = vmatpush1.bf16.msra.mxu0 %v6535
        %7303 = vmatprep.subr.bf16.mxu0 %v6544
        %7304 = vmatpush1.bf16.msra.mxu0 %v6543
        %7305 = vmatprep.mubr.bf16.mxu0 %v4116
        %7306 = vmatmul.mubr.bf16.gmra.mrb[0].mxu0 %v4115
        %v7307 = vpop.f32.mrb[0].mxu0
        %v7308 = vadd.f32 %v7267, %v7307
        %v7309 = vpop.f32.mrb[0].mxu0
        %v7310 = vadd.f32 %v7269, %v7309
        %v7311 = vpop.f32.mrb[0].mxu0
        %v7312 = vpop.f32.mrb[0].mxu0
        %7313 = vdwg.mxu0
        %7314 = vmatprep.subr.bf16.mxu0 %v6552
        %7315 = vmatpush1.bf16.msra.mxu0 %v6551
        %7316 = vmatprep.subr.bf16.mxu0 %v6560
        %7317 = vmatpush1.bf16.msra.mxu0 %v6559
        %7318 = vmatprep.subr.bf16.mxu0 %v6568
        %7319 = vmatpush1.bf16.msra.mxu0 %v6567
        %7320 = vmatprep.subr.bf16.mxu0 %v6576
        %7321 = vmatpush1.bf16.msra.mxu0 %v6575
        %7322 = vmatprep.subr.bf16.mxu0 %v6584
        %7323 = vmatpush1.bf16.msra.mxu0 %v6583
        %7324 = vmatprep.subr.bf16.mxu0 %v6592
        %7325 = vmatpush1.bf16.msra.mxu0 %v6591
        %7326 = vmatprep.subr.bf16.mxu0 %v6600
        %7327 = vmatpush1.bf16.msra.mxu0 %v6599
        %7328 = vmatprep.subr.bf16.mxu0 %v6608
        %7329 = vmatpush1.bf16.msra.mxu0 %v6607
        %7330 = vmatprep.subr.bf16.mxu0 %v6616
        %7331 = vmatpush1.bf16.msra.mxu0 %v6615
        %7332 = vmatprep.subr.bf16.mxu0 %v6624
        %7333 = vmatpush1.bf16.msra.mxu0 %v6623
        %7334 = vmatprep.subr.bf16.mxu0 %v6632
        %7335 = vmatpush1.bf16.msra.mxu0 %v6631
        %7336 = vmatprep.subr.bf16.mxu0 %v6640
        %7337 = vmatpush1.bf16.msra.mxu0 %v6639
        %7338 = vmatprep.subr.bf16.mxu0 %v6648
        %7339 = vmatpush1.bf16.msra.mxu0 %v6647
        %7340 = vmatprep.subr.bf16.mxu0 %v6656
        %7341 = vmatpush1.bf16.msra.mxu0 %v6655
        %7342 = vmatprep.subr.bf16.mxu0 %v6664
        %7343 = vmatpush1.bf16.msra.mxu0 %v6663
        %7344 = vmatprep.subr.bf16.mxu0 %v6672
        %7345 = vmatpush1.bf16.msra.mxu0 %v6671
        %7346 = vmatprep.mubr.bf16.mxu0 %v4118
        %7347 = vmatmul.mubr.bf16.gmra.mrb[0].mxu0 %v4117
        %v7348 = vpop.f32.mrb[0].mxu0
        %v7349 = vadd.f32 %v7308, %v7348
        %v7350 = vpop.f32.mrb[0].mxu0
        %v7351 = vadd.f32 %v7310, %v7350
        %v7352 = vpop.f32.mrb[0].mxu0
        %v7353 = vpop.f32.mrb[0].mxu0
        %7354 = vdwg.mxu0
        %7355 = vmatprep.subr.bf16.mxu0 %v6170
        %7356 = vmatpush1.bf16.msra.mxu0 %v6169
        %7357 = vmatprep.subr.bf16.mxu0 %v6178
        %7358 = vmatpush1.bf16.msra.mxu0 %v6177
        %7359 = vmatprep.subr.bf16.mxu0 %v6186
        %7360 = vmatpush1.bf16.msra.mxu0 %v6185
        %7361 = vmatprep.subr.bf16.mxu0 %v6194
        %7362 = vmatpush1.bf16.msra.mxu0 %v6193
        %7363 = vmatprep.subr.bf16.mxu0 %v6202
        %7364 = vmatpush1.bf16.msra.mxu0 %v6201
        %7365 = vmatprep.subr.bf16.mxu0 %v6210
        %7366 = vmatpush1.bf16.msra.mxu0 %v6209
        %7367 = vmatprep.subr.bf16.mxu0 %v6218
        %7368 = vmatpush1.bf16.msra.mxu0 %v6217
        %7369 = vmatprep.subr.bf16.mxu0 %v6226
        %7370 = vmatpush1.bf16.msra.mxu0 %v6225
        %7371 = vmatprep.subr.bf16.mxu0 %v6234
        %7372 = vmatpush1.bf16.msra.mxu0 %v6233
        %7373 = vmatprep.subr.bf16.mxu0 %v6242
        %7374 = vmatpush1.bf16.msra.mxu0 %v6241
        %7375 = vmatprep.subr.bf16.mxu0 %v6250
        %7376 = vmatpush1.bf16.msra.mxu0 %v6249
        %7377 = vmatprep.subr.bf16.mxu0 %v6258
        %7378 = vmatpush1.bf16.msra.mxu0 %v6257
        %7379 = vmatprep.subr.bf16.mxu0 %v6266
        %7380 = vmatpush1.bf16.msra.mxu0 %v6265
        %7381 = vmatprep.subr.bf16.mxu0 %v6274
        %7382 = vmatpush1.bf16.msra.mxu0 %v6273
        %7383 = vmatprep.subr.bf16.mxu0 %v6282
        %7384 = vmatpush1.bf16.msra.mxu0 %v6281
        %7385 = vmatprep.subr.bf16.mxu0 %v6290
        %7386 = vmatpush1.bf16.msra.mxu0 %v6289
        %7387 = vmatprep.mubr.bf16.mxu0 %v4112
        %7388 = vmatmul.mubr.bf16.gmra.mrb[0].mxu0 %v4111
        %v7389 = vpop.f32.mrb[0].mxu0
        %v7390 = vadd.f32 0.0, %v7389
        %v7391 = vpop.f32.mrb[0].mxu0
        %v7392 = vadd.f32 0.0, %v7391
        %v7393 = vpop.f32.mrb[0].mxu0
        %v7394 = vpop.f32.mrb[0].mxu0
        %7395 = vdwg.mxu0
        %7396 = vmatprep.subr.bf16.mxu0 %v6298
        %7397 = vmatpush1.bf16.msra.mxu0 %v6297
        %7398 = vmatprep.subr.bf16.mxu0 %v6306
        %7399 = vmatpush1.bf16.msra.mxu0 %v6305
        %7400 = vmatprep.subr.bf16.mxu0 %v6314
        %7401 = vmatpush1.bf16.msra.mxu0 %v6313
        %7402 = vmatprep.subr.bf16.mxu0 %v6322
        %7403 = vmatpush1.bf16.msra.mxu0 %v6321
        %7404 = vmatprep.subr.bf16.mxu0 %v6330
        %7405 = vmatpush1.bf16.msra.mxu0 %v6329
        %7406 = vmatprep.subr.bf16.mxu0 %v6338
        %7407 = vmatpush1.bf16.msra.mxu0 %v6337
        %7408 = vmatprep.subr.bf16.mxu0 %v6346
        %7409 = vmatpush1.bf16.msra.mxu0 %v6345
        %7410 = vmatprep.subr.bf16.mxu0 %v6354
        %7411 = vmatpush1.bf16.msra.mxu0 %v6353
        %7412 = vmatprep.subr.bf16.mxu0 %v6362
        %7413 = vmatpush1.bf16.msra.mxu0 %v6361
        %7414 = vmatprep.subr.bf16.mxu0 %v6370
        %7415 = vmatpush1.bf16.msra.mxu0 %v6369
        %7416 = vmatprep.subr.bf16.mxu0 %v6378
        %7417 = vmatpush1.bf16.msra.mxu0 %v6377
        %7418 = vmatprep.subr.bf16.mxu0 %v6386
        %7419 = vmatpush1.bf16.msra.mxu0 %v6385
        %7420 = vmatprep.subr.bf16.mxu0 %v6394
        %7421 = vmatpush1.bf16.msra.mxu0 %v6393
        %7422 = vmatprep.subr.bf16.mxu0 %v6402
        %7423 = vmatpush1.bf16.msra.mxu0 %v6401
        %7424 = vmatprep.subr.bf16.mxu0 %v6410
        %7425 = vmatpush1.bf16.msra.mxu0 %v6409
        %7426 = vmatprep.subr.bf16.mxu0 %v6418
        %7427 = vmatpush1.bf16.msra.mxu0 %v6417
        %7428 = vmatprep.mubr.bf16.mxu0 %v4114
        %7429 = vmatmul.mubr.bf16.gmra.mrb[0].mxu0 %v4113
        %v7430 = vpop.f32.mrb[0].mxu0
        %v7431 = vadd.f32 %v7390, %v7430
        %v7432 = vpop.f32.mrb[0].mxu0
        %v7433 = vadd.f32 %v7392, %v7432
        %v7434 = vpop.f32.mrb[0].mxu0
        %v7435 = vpop.f32.mrb[0].mxu0
        %7436 = vdwg.mxu0
        %7437 = vmatprep.subr.bf16.mxu0 %v6426
        %7438 = vmatpush1.bf16.msra.mxu0 %v6425
        %7439 = vmatprep.subr.bf16.mxu0 %v6434
        %7440 = vmatpush1.bf16.msra.mxu0 %v6433
        %7441 = vmatprep.subr.bf16.mxu0 %v6442
        %7442 = vmatpush1.bf16.msra.mxu0 %v6441
        %7443 = vmatprep.subr.bf16.mxu0 %v6450
        %7444 = vmatpush1.bf16.msra.mxu0 %v6449
        %7445 = vmatprep.subr.bf16.mxu0 %v6458
        %7446 = vmatpush1.bf16.msra.mxu0 %v6457
        %7447 = vmatprep.subr.bf16.mxu0 %v6466
        %7448 = vmatpush1.bf16.msra.mxu0 %v6465
        %7449 = vmatprep.subr.bf16.mxu0 %v6474
        %7450 = vmatpush1.bf16.msra.mxu0 %v6473
        %7451 = vmatprep.subr.bf16.mxu0 %v6482
        %7452 = vmatpush1.bf16.msra.mxu0 %v6481
        %7453 = vmatprep.subr.bf16.mxu0 %v6490
        %7454 = vmatpush1.bf16.msra.mxu0 %v6489
        %7455 = vmatprep.subr.bf16.mxu0 %v6498
        %7456 = vmatpush1.bf16.msra.mxu0 %v6497
        %7457 = vmatprep.subr.bf16.mxu0 %v6506
        %7458 = vmatpush1.bf16.msra.mxu0 %v6505
        %7459 = vmatprep.subr.bf16.mxu0 %v6514
        %7460 = vmatpush1.bf16.msra.mxu0 %v6513
        %7461 = vmatprep.subr.bf16.mxu0 %v6522
        %7462 = vmatpush1.bf16.msra.mxu0 %v6521
        %7463 = vmatprep.subr.bf16.mxu0 %v6530
        %7464 = vmatpush1.bf16.msra.mxu0 %v6529
        %7465 = vmatprep.subr.bf16.mxu0 %v6538
        %7466 = vmatpush1.bf16.msra.mxu0 %v6537
        %7467 = vmatprep.subr.bf16.mxu0 %v6546
        %7468 = vmatpush1.bf16.msra.mxu0 %v6545
        %7469 = vmatprep.mubr.bf16.mxu0 %v4116
        %7470 = vmatmul.mubr.bf16.gmra.mrb[0].mxu0 %v4115
        %v7471 = vpop.f32.mrb[0].mxu0
        %v7472 = vadd.f32 %v7431, %v7471
        %v7473 = vpop.f32.mrb[0].mxu0
        %v7474 = vadd.f32 %v7433, %v7473
        %v7475 = vpop.f32.mrb[0].mxu0
        %v7476 = vpop.f32.mrb[0].mxu0
        %7477 = vdwg.mxu0
        %7478 = vmatprep.subr.bf16.mxu0 %v6554
        %7479 = vmatpush1.bf16.msra.mxu0 %v6553
        %7480 = vmatprep.subr.bf16.mxu0 %v6562
        %7481 = vmatpush1.bf16.msra.mxu0 %v6561
        %7482 = vmatprep.subr.bf16.mxu0 %v6570
        %7483 = vmatpush1.bf16.msra.mxu0 %v6569
        %7484 = vmatprep.subr.bf16.mxu0 %v6578
        %7485 = vmatpush1.bf16.msra.mxu0 %v6577
        %7486 = vmatprep.subr.bf16.mxu0 %v6586
        %7487 = vmatpush1.bf16.msra.mxu0 %v6585
        %7488 = vmatprep.subr.bf16.mxu0 %v6594
        %7489 = vmatpush1.bf16.msra.mxu0 %v6593
        %7490 = vmatprep.subr.bf16.mxu0 %v6602
        %7491 = vmatpush1.bf16.msra.mxu0 %v6601
        %7492 = vmatprep.subr.bf16.mxu0 %v6610
        %7493 = vmatpush1.bf16.msra.mxu0 %v6609
        %7494 = vmatprep.subr.bf16.mxu0 %v6618
        %7495 = vmatpush1.bf16.msra.mxu0 %v6617
        %7496 = vmatprep.subr.bf16.mxu0 %v6626
        %7497 = vmatpush1.bf16.msra.mxu0 %v6625
        %7498 = vmatprep.subr.bf16.mxu0 %v6634
        %7499 = vmatpush1.bf16.msra.mxu0 %v6633
        %7500 = vmatprep.subr.bf16.mxu0 %v6642
        %7501 = vmatpush1.bf16.msra.mxu0 %v6641
        %7502 = vmatprep.subr.bf16.mxu0 %v6650
        %7503 = vmatpush1.bf16.msra.mxu0 %v6649
        %7504 = vmatprep.subr.bf16.mxu0 %v6658
        %7505 = vmatpush1.bf16.msra.mxu0 %v6657
        %7506 = vmatprep.subr.bf16.mxu0 %v6666
        %7507 = vmatpush1.bf16.msra.mxu0 %v6665
        %7508 = vmatprep.subr.bf16.mxu0 %v6674
        %7509 = vmatpush1.bf16.msra.mxu0 %v6673
        %7510 = vmatprep.mubr.bf16.mxu0 %v4118
        %7511 = vmatmul.mubr.bf16.gmra.mrb[0].mxu0 %v4117
        %v7512 = vpop.f32.mrb[0].mxu0
        %v7513 = vadd.f32 %v7472, %v7512
        %v7514 = vpop.f32.mrb[0].mxu0
        %v7515 = vadd.f32 %v7474, %v7514
        %v7516 = vpop.f32.mrb[0].mxu0
        %v7517 = vpop.f32.mrb[0].mxu0
        %7518 = vdwg.mxu0
        %7519 = vmatprep.subr.bf16.mxu0 %v6172
        %7520 = vmatpush1.bf16.msra.mxu0 %v6171
        %7521 = vmatprep.subr.bf16.mxu0 %v6180
        %7522 = vmatpush1.bf16.msra.mxu0 %v6179
        %7523 = vmatprep.subr.bf16.mxu0 %v6188
        %7524 = vmatpush1.bf16.msra.mxu0 %v6187
        %7525 = vmatprep.subr.bf16.mxu0 %v6196
        %7526 = vmatpush1.bf16.msra.mxu0 %v6195
        %7527 = vmatprep.subr.bf16.mxu0 %v6204
        %7528 = vmatpush1.bf16.msra.mxu0 %v6203
        %7529 = vmatprep.subr.bf16.mxu0 %v6212
        %7530 = vmatpush1.bf16.msra.mxu0 %v6211
        %7531 = vmatprep.subr.bf16.mxu0 %v6220
        %7532 = vmatpush1.bf16.msra.mxu0 %v6219
        %7533 = vmatprep.subr.bf16.mxu0 %v6228
        %7534 = vmatpush1.bf16.msra.mxu0 %v6227
        %7535 = vmatprep.subr.bf16.mxu0 %v6236
        %7536 = vmatpush1.bf16.msra.mxu0 %v6235
        %7537 = vmatprep.subr.bf16.mxu0 %v6244
        %7538 = vmatpush1.bf16.msra.mxu0 %v6243
        %7539 = vmatprep.subr.bf16.mxu0 %v6252
        %7540 = vmatpush1.bf16.msra.mxu0 %v6251
        %7541 = vmatprep.subr.bf16.mxu0 %v6260
        %7542 = vmatpush1.bf16.msra.mxu0 %v6259
        %7543 = vmatprep.subr.bf16.mxu0 %v6268
        %7544 = vmatpush1.bf16.msra.mxu0 %v6267
        %7545 = vmatprep.subr.bf16.mxu0 %v6276
        %7546 = vmatpush1.bf16.msra.mxu0 %v6275
        %7547 = vmatprep.subr.bf16.mxu0 %v6284
        %7548 = vmatpush1.bf16.msra.mxu0 %v6283
        %7549 = vmatprep.subr.bf16.mxu0 %v6292
        %7550 = vmatpush1.bf16.msra.mxu0 %v6291
        %7551 = vmatprep.mubr.bf16.mxu0 %v4112
        %7552 = vmatmul.mubr.bf16.gmra.mrb[0].mxu0 %v4111
        %v7553 = vpop.f32.mrb[0].mxu0
        %v7554 = vadd.f32 0.0, %v7553
        %v7555 = vpop.f32.mrb[0].mxu0
        %v7556 = vadd.f32 0.0, %v7555
        %v7557 = vpop.f32.mrb[0].mxu0
        %v7558 = vpop.f32.mrb[0].mxu0
        %7559 = vdwg.mxu0
        %7560 = vmatprep.subr.bf16.mxu0 %v6300
        %7561 = vmatpush1.bf16.msra.mxu0 %v6299
        %7562 = vmatprep.subr.bf16.mxu0 %v6308
        %7563 = vmatpush1.bf16.msra.mxu0 %v6307
        %7564 = vmatprep.subr.bf16.mxu0 %v6316
        %7565 = vmatpush1.bf16.msra.mxu0 %v6315
        %7566 = vmatprep.subr.bf16.mxu0 %v6324
        %7567 = vmatpush1.bf16.msra.mxu0 %v6323
        %7568 = vmatprep.subr.bf16.mxu0 %v6332
        %7569 = vmatpush1.bf16.msra.mxu0 %v6331
        %7570 = vmatprep.subr.bf16.mxu0 %v6340
        %7571 = vmatpush1.bf16.msra.mxu0 %v6339
        %7572 = vmatprep.subr.bf16.mxu0 %v6348
        %7573 = vmatpush1.bf16.msra.mxu0 %v6347
        %7574 = vmatprep.subr.bf16.mxu0 %v6356
        %7575 = vmatpush1.bf16.msra.mxu0 %v6355
        %7576 = vmatprep.subr.bf16.mxu0 %v6364
        %7577 = vmatpush1.bf16.msra.mxu0 %v6363
        %7578 = vmatprep.subr.bf16.mxu0 %v6372
        %7579 = vmatpush1.bf16.msra.mxu0 %v6371
        %7580 = vmatprep.subr.bf16.mxu0 %v6380
        %7581 = vmatpush1.bf16.msra.mxu0 %v6379
        %7582 = vmatprep.subr.bf16.mxu0 %v6388
        %7583 = vmatpush1.bf16.msra.mxu0 %v6387
        %7584 = vmatprep.subr.bf16.mxu0 %v6396
        %7585 = vmatpush1.bf16.msra.mxu0 %v6395
        %7586 = vmatprep.subr.bf16.mxu0 %v6404
        %7587 = vmatpush1.bf16.msra.mxu0 %v6403
        %7588 = vmatprep.subr.bf16.mxu0 %v6412
        %7589 = vmatpush1.bf16.msra.mxu0 %v6411
        %7590 = vmatprep.subr.bf16.mxu0 %v6420
        %7591 = vmatpush1.bf16.msra.mxu0 %v6419
        %7592 = vmatprep.mubr.bf16.mxu0 %v4114
        %7593 = vmatmul.mubr.bf16.gmra.mrb[0].mxu0 %v4113
        %v7594 = vpop.f32.mrb[0].mxu0
        %v7595 = vadd.f32 %v7554, %v7594
        %v7596 = vpop.f32.mrb[0].mxu0
        %v7597 = vadd.f32 %v7556, %v7596
        %v7598 = vpop.f32.mrb[0].mxu0
        %v7599 = vpop.f32.mrb[0].mxu0
        %7600 = vdwg.mxu0
        %7601 = vmatprep.subr.bf16.mxu0 %v6428
        %7602 = vmatpush1.bf16.msra.mxu0 %v6427
        %7603 = vmatprep.subr.bf16.mxu0 %v6436
        %7604 = vmatpush1.bf16.msra.mxu0 %v6435
        %7605 = vmatprep.subr.bf16.mxu0 %v6444
        %7606 = vmatpush1.bf16.msra.mxu0 %v6443
        %7607 = vmatprep.subr.bf16.mxu0 %v6452
        %7608 = vmatpush1.bf16.msra.mxu0 %v6451
        %7609 = vmatprep.subr.bf16.mxu0 %v6460
        %7610 = vmatpush1.bf16.msra.mxu0 %v6459
        %7611 = vmatprep.subr.bf16.mxu0 %v6468
        %7612 = vmatpush1.bf16.msra.mxu0 %v6467
        %7613 = vmatprep.subr.bf16.mxu0 %v6476
        %7614 = vmatpush1.bf16.msra.mxu0 %v6475
        %7615 = vmatprep.subr.bf16.mxu0 %v6484
        %7616 = vmatpush1.bf16.msra.mxu0 %v6483
        %7617 = vmatprep.subr.bf16.mxu0 %v6492
        %7618 = vmatpush1.bf16.msra.mxu0 %v6491
        %7619 = vmatprep.subr.bf16.mxu0 %v6500
        %7620 = vmatpush1.bf16.msra.mxu0 %v6499
        %7621 = vmatprep.subr.bf16.mxu0 %v6508
        %7622 = vmatpush1.bf16.msra.mxu0 %v6507
        %7623 = vmatprep.subr.bf16.mxu0 %v6516
        %7624 = vmatpush1.bf16.msra.mxu0 %v6515
        %7625 = vmatprep.subr.bf16.mxu0 %v6524
        %7626 = vmatpush1.bf16.msra.mxu0 %v6523
        %7627 = vmatprep.subr.bf16.mxu0 %v6532
        %7628 = vmatpush1.bf16.msra.mxu0 %v6531
        %7629 = vmatprep.subr.bf16.mxu0 %v6540
        %7630 = vmatpush1.bf16.msra.mxu0 %v6539
        %7631 = vmatprep.subr.bf16.mxu0 %v6548
        %7632 = vmatpush1.bf16.msra.mxu0 %v6547
        %7633 = vmatprep.mubr.bf16.mxu0 %v4116
        %7634 = vmatmul.mubr.bf16.gmra.mrb[0].mxu0 %v4115
        %v7635 = vpop.f32.mrb[0].mxu0
        %v7636 = vadd.f32 %v7595, %v7635
        %v7637 = vpop.f32.mrb[0].mxu0
        %v7638 = vadd.f32 %v7597, %v7637
        %v7639 = vpop.f32.mrb[0].mxu0
        %v7640 = vpop.f32.mrb[0].mxu0
        %7641 = vdwg.mxu0
        %7642 = vmatprep.subr.bf16.mxu0 %v6556
        %7643 = vmatpush1.bf16.msra.mxu0 %v6555
        %7644 = vmatprep.subr.bf16.mxu0 %v6564
        %7645 = vmatpush1.bf16.msra.mxu0 %v6563
        %7646 = vmatprep.subr.bf16.mxu0 %v6572
        %7647 = vmatpush1.bf16.msra.mxu0 %v6571
        %7648 = vmatprep.subr.bf16.mxu0 %v6580
        %7649 = vmatpush1.bf16.msra.mxu0 %v6579
        %7650 = vmatprep.subr.bf16.mxu0 %v6588
        %7651 = vmatpush1.bf16.msra.mxu0 %v6587
        %7652 = vmatprep.subr.bf16.mxu0 %v6596
        %7653 = vmatpush1.bf16.msra.mxu0 %v6595
        %7654 = vmatprep.subr.bf16.mxu0 %v6604
        %7655 = vmatpush1.bf16.msra.mxu0 %v6603
        %7656 = vmatprep.subr.bf16.mxu0 %v6612
        %7657 = vmatpush1.bf16.msra.mxu0 %v6611
        %7658 = vmatprep.subr.bf16.mxu0 %v6620
        %7659 = vmatpush1.bf16.msra.mxu0 %v6619
        %7660 = vmatprep.subr.bf16.mxu0 %v6628
        %7661 = vmatpush1.bf16.msra.mxu0 %v6627
        %7662 = vmatprep.subr.bf16.mxu0 %v6636
        %7663 = vmatpush1.bf16.msra.mxu0 %v6635
        %7664 = vmatprep.subr.bf16.mxu0 %v6644
        %7665 = vmatpush1.bf16.msra.mxu0 %v6643
        %7666 = vmatprep.subr.bf16.mxu0 %v6652
        %7667 = vmatpush1.bf16.msra.mxu0 %v6651
        %7668 = vmatprep.subr.bf16.mxu0 %v6660
        %7669 = vmatpush1.bf16.msra.mxu0 %v6659
        %7670 = vmatprep.subr.bf16.mxu0 %v6668
        %7671 = vmatpush1.bf16.msra.mxu0 %v6667
        %7672 = vmatprep.subr.bf16.mxu0 %v6676
        %7673 = vmatpush1.bf16.msra.mxu0 %v6675
        %7674 = vmatprep.mubr.bf16.mxu0 %v4118
        %7675 = vmatmul.mubr.bf16.gmra.mrb[0].mxu0 %v4117
        %v7676 = vpop.f32.mrb[0].mxu0
        %v7677 = vadd.f32 %v7636, %v7676
        %v7678 = vpop.f32.mrb[0].mxu0
        %v7679 = vadd.f32 %v7638, %v7678
        %v7680 = vpop.f32.mrb[0].mxu0
        %v7681 = vpop.f32.mrb[0].mxu0
        %7682 = vdwg.mxu0
        %7683 = vmatprep.subr.bf16.mxu0 %v6174
        %7684 = vmatpush1.bf16.msra.mxu0 %v6173
        %7685 = vmatprep.subr.bf16.mxu0 %v6182
        %7686 = vmatpush1.bf16.msra.mxu0 %v6181
        %7687 = vmatprep.subr.bf16.mxu0 %v6190
        %7688 = vmatpush1.bf16.msra.mxu0 %v6189
        %7689 = vmatprep.subr.bf16.mxu0 %v6198
        %7690 = vmatpush1.bf16.msra.mxu0 %v6197
        %7691 = vmatprep.subr.bf16.mxu0 %v6206
        %7692 = vmatpush1.bf16.msra.mxu0 %v6205
        %7693 = vmatprep.subr.bf16.mxu0 %v6214
        %7694 = vmatpush1.bf16.msra.mxu0 %v6213
        %7695 = vmatprep.subr.bf16.mxu0 %v6222
        %7696 = vmatpush1.bf16.msra.mxu0 %v6221
        %7697 = vmatprep.subr.bf16.mxu0 %v6230
        %7698 = vmatpush1.bf16.msra.mxu0 %v6229
        %7699 = vmatprep.subr.bf16.mxu0 %v6238
        %7700 = vmatpush1.bf16.msra.mxu0 %v6237
        %7701 = vmatprep.subr.bf16.mxu0 %v6246
        %7702 = vmatpush1.bf16.msra.mxu0 %v6245
        %7703 = vmatprep.subr.bf16.mxu0 %v6254
        %7704 = vmatpush1.bf16.msra.mxu0 %v6253
        %7705 = vmatprep.subr.bf16.mxu0 %v6262
        %7706 = vmatpush1.bf16.msra.mxu0 %v6261
        %7707 = vmatprep.subr.bf16.mxu0 %v6270
        %7708 = vmatpush1.bf16.msra.mxu0 %v6269
        %7709 = vmatprep.subr.bf16.mxu0 %v6278
        %7710 = vmatpush1.bf16.msra.mxu0 %v6277
        %7711 = vmatprep.subr.bf16.mxu0 %v6286
        %7712 = vmatpush1.bf16.msra.mxu0 %v6285
        %7713 = vmatprep.subr.bf16.mxu0 %v6294
        %7714 = vmatpush1.bf16.msra.mxu0 %v6293
        %7715 = vmatprep.mubr.bf16.mxu0 %v4112
        %7716 = vmatmul.mubr.bf16.gmra.mrb[0].mxu0 %v4111
        %v7717 = vpop.f32.mrb[0].mxu0
        %v7718 = vadd.f32 0.0, %v7717
        %v7719 = vpop.f32.mrb[0].mxu0
        %v7720 = vadd.f32 0.0, %v7719
        %v7721 = vpop.f32.mrb[0].mxu0
        %v7722 = vpop.f32.mrb[0].mxu0
        %7723 = vdwg.mxu0
        %7724 = vmatprep.subr.bf16.mxu0 %v6302
        %7725 = vmatpush1.bf16.msra.mxu0 %v6301
        %7726 = vmatprep.subr.bf16.mxu0 %v6310
        %7727 = vmatpush1.bf16.msra.mxu0 %v6309
        %7728 = vmatprep.subr.bf16.mxu0 %v6318
        %7729 = vmatpush1.bf16.msra.mxu0 %v6317
        %7730 = vmatprep.subr.bf16.mxu0 %v6326
        %7731 = vmatpush1.bf16.msra.mxu0 %v6325
        %7732 = vmatprep.subr.bf16.mxu0 %v6334
        %7733 = vmatpush1.bf16.msra.mxu0 %v6333
        %7734 = vmatprep.subr.bf16.mxu0 %v6342
        %7735 = vmatpush1.bf16.msra.mxu0 %v6341
        %7736 = vmatprep.subr.bf16.mxu0 %v6350
        %7737 = vmatpush1.bf16.msra.mxu0 %v6349
        %7738 = vmatprep.subr.bf16.mxu0 %v6358
        %7739 = vmatpush1.bf16.msra.mxu0 %v6357
        %7740 = vmatprep.subr.bf16.mxu0 %v6366
        %7741 = vmatpush1.bf16.msra.mxu0 %v6365
        %7742 = vmatprep.subr.bf16.mxu0 %v6374
        %7743 = vmatpush1.bf16.msra.mxu0 %v6373
        %7744 = vmatprep.subr.bf16.mxu0 %v6382
        %7745 = vmatpush1.bf16.msra.mxu0 %v6381
        %7746 = vmatprep.subr.bf16.mxu0 %v6390
        %7747 = vmatpush1.bf16.msra.mxu0 %v6389
        %7748 = vmatprep.subr.bf16.mxu0 %v6398
        %7749 = vmatpush1.bf16.msra.mxu0 %v6397
        %7750 = vmatprep.subr.bf16.mxu0 %v6406
        %7751 = vmatpush1.bf16.msra.mxu0 %v6405
        %7752 = vmatprep.subr.bf16.mxu0 %v6414
        %7753 = vmatpush1.bf16.msra.mxu0 %v6413
        %7754 = vmatprep.subr.bf16.mxu0 %v6422
        %7755 = vmatpush1.bf16.msra.mxu0 %v6421
        %7756 = vmatprep.mubr.bf16.mxu0 %v4114
        %7757 = vmatmul.mubr.bf16.gmra.mrb[0].mxu0 %v4113
        %v7758 = vpop.f32.mrb[0].mxu0
        %v7759 = vadd.f32 %v7718, %v7758
        %v7760 = vpop.f32.mrb[0].mxu0
        %v7761 = vadd.f32 %v7720, %v7760
        %v7762 = vpop.f32.mrb[0].mxu0
        %v7763 = vpop.f32.mrb[0].mxu0
        %7764 = vdwg.mxu0
        %7765 = vmatprep.subr.bf16.mxu0 %v6430
        %7766 = vmatpush1.bf16.msra.mxu0 %v6429
        %7767 = vmatprep.subr.bf16.mxu0 %v6438
        %7768 = vmatpush1.bf16.msra.mxu0 %v6437
        %7769 = vmatprep.subr.bf16.mxu0 %v6446
        %7770 = vmatpush1.bf16.msra.mxu0 %v6445
        %7771 = vmatprep.subr.bf16.mxu0 %v6454
        %7772 = vmatpush1.bf16.msra.mxu0 %v6453
        %7773 = vmatprep.subr.bf16.mxu0 %v6462
        %7774 = vmatpush1.bf16.msra.mxu0 %v6461
        %7775 = vmatprep.subr.bf16.mxu0 %v6470
        %7776 = vmatpush1.bf16.msra.mxu0 %v6469
        %7777 = vmatprep.subr.bf16.mxu0 %v6478
        %7778 = vmatpush1.bf16.msra.mxu0 %v6477
        %7779 = vmatprep.subr.bf16.mxu0 %v6486
        %7780 = vmatpush1.bf16.msra.mxu0 %v6485
        %7781 = vmatprep.subr.bf16.mxu0 %v6494
        %7782 = vmatpush1.bf16.msra.mxu0 %v6493
        %7783 = vmatprep.subr.bf16.mxu0 %v6502
        %7784 = vmatpush1.bf16.msra.mxu0 %v6501
        %7785 = vmatprep.subr.bf16.mxu0 %v6510
        %7786 = vmatpush1.bf16.msra.mxu0 %v6509
        %7787 = vmatprep.subr.bf16.mxu0 %v6518
        %7788 = vmatpush1.bf16.msra.mxu0 %v6517
        %7789 = vmatprep.subr.bf16.mxu0 %v6526
        %7790 = vmatpush1.bf16.msra.mxu0 %v6525
        %7791 = vmatprep.subr.bf16.mxu0 %v6534
        %7792 = vmatpush1.bf16.msra.mxu0 %v6533
        %7793 = vmatprep.subr.bf16.mxu0 %v6542
        %7794 = vmatpush1.bf16.msra.mxu0 %v6541
        %7795 = vmatprep.subr.bf16.mxu0 %v6550
        %7796 = vmatpush1.bf16.msra.mxu0 %v6549
        %7797 = vmatprep.mubr.bf16.mxu0 %v4116
        %7798 = vmatmul.mubr.bf16.gmra.mrb[0].mxu0 %v4115
        %v7799 = vpop.f32.mrb[0].mxu0
        %v7800 = vadd.f32 %v7759, %v7799
        %v7801 = vpop.f32.mrb[0].mxu0
        %v7802 = vadd.f32 %v7761, %v7801
        %v7803 = vpop.f32.mrb[0].mxu0
        %v7804 = vpop.f32.mrb[0].mxu0
        %7805 = vdwg.mxu0
        %7806 = vmatprep.subr.bf16.mxu0 %v6558
        %7807 = vmatpush1.bf16.msra.mxu0 %v6557
        %7808 = vmatprep.subr.bf16.mxu0 %v6566
        %7809 = vmatpush1.bf16.msra.mxu0 %v6565
        %7810 = vmatprep.subr.bf16.mxu0 %v6574
        %7811 = vmatpush1.bf16.msra.mxu0 %v6573
        %7812 = vmatprep.subr.bf16.mxu0 %v6582
        %7813 = vmatpush1.bf16.msra.mxu0 %v6581
        %7814 = vmatprep.subr.bf16.mxu0 %v6590
        %7815 = vmatpush1.bf16.msra.mxu0 %v6589
        %7816 = vmatprep.subr.bf16.mxu0 %v6598
        %7817 = vmatpush1.bf16.msra.mxu0 %v6597
        %7818 = vmatprep.subr.bf16.mxu0 %v6606
        %7819 = vmatpush1.bf16.msra.mxu0 %v6605
        %7820 = vmatprep.subr.bf16.mxu0 %v6614
        %7821 = vmatpush1.bf16.msra.mxu0 %v6613
        %7822 = vmatprep.subr.bf16.mxu0 %v6622
        %7823 = vmatpush1.bf16.msra.mxu0 %v6621
        %7824 = vmatprep.subr.bf16.mxu0 %v6630
        %7825 = vmatpush1.bf16.msra.mxu0 %v6629
        %7826 = vmatprep.subr.bf16.mxu0 %v6638
        %7827 = vmatpush1.bf16.msra.mxu0 %v6637
        %7828 = vmatprep.subr.bf16.mxu0 %v6646
        %7829 = vmatpush1.bf16.msra.mxu0 %v6645
        %7830 = vmatprep.subr.bf16.mxu0 %v6654
        %7831 = vmatpush1.bf16.msra.mxu0 %v6653
        %7832 = vmatprep.subr.bf16.mxu0 %v6662
        %7833 = vmatpush1.bf16.msra.mxu0 %v6661
        %7834 = vmatprep.subr.bf16.mxu0 %v6670
        %7835 = vmatpush1.bf16.msra.mxu0 %v6669
        %7836 = vmatprep.subr.bf16.mxu0 %v6678
        %7837 = vmatpush1.bf16.msra.mxu0 %v6677
        %7838 = vmatprep.mubr.bf16.mxu0 %v4118
        %7839 = vmatmul.mubr.bf16.gmra.mrb[0].mxu0 %v4117
        %v7840 = vpop.f32.mrb[0].mxu0
        %v7841 = vadd.f32 %v7800, %v7840
        %v7842 = vpop.f32.mrb[0].mxu0
        %v7843 = vadd.f32 %v7802, %v7842
        %v7844 = vpop.f32.mrb[0].mxu0
        %v7845 = vpop.f32.mrb[0].mxu0
        %7846 = vdwg.mxu0
        %v7847 = vadd.f32 %v4103, %v7349
        %v7848 = vadd.f32 %v4104, %v7351
        %v7849 = vadd.f32 %v4105, %v7513
        %v7850 = vadd.f32 %v4106, %v7515
        %v7851 = vadd.f32 %v4107, %v7677
        %v7852 = vadd.f32 %v4108, %v7679
        %v7853 = vadd.f32 %v4109, %v7841
        %v7854 = vadd.f32 %v4110, %v7843
        %7855 = vst [vmem:[#allocation2] sm:$0xff] %v7847
        %7856 = vst [vmem:[#allocation2 + $0x8] sm:$0xff] %v7848
        %7857 = vst [vmem:[#allocation2 + $0x10] sm:$0xff] %v7849
        %7858 = vst [vmem:[#allocation2 + $0x18] sm:$0xff] %v7850
        %7859 = vst [vmem:[#allocation2 + $0x20] sm:$0xff] %v7851
        %7860 = vst [vmem:[#allocation2 + $0x28] sm:$0xff] %v7852
        %7861 = vst [vmem:[#allocation2 + $0x30] sm:$0xff] %v7853
        %7862 = vst [vmem:[#allocation2 + $0x38] sm:$0xff] %v7854
        %p7863 = scmp.eq.s32.totalorder %s31, 1
        // Predicated region
        $region93: #{age_net_forward.1} parent=55 // pred_check
          %p7864 = pneg %p7863
        $region94: #{age_net_forward.1} parent=55 // pred_check_branch
          %7866 = sbr.rel (%p7864) target = $region96
        $region95: #{age_net_forward.1} parent=55 // pred_region
          %v7867 = vld [vmem:[#allocation2] sm:$0xff]
          %v7868 = vld [vmem:[#allocation2 + $0x8] sm:$0xff]
          %v7869 = vld [vmem:[#allocation2 + $0x10] sm:$0xff]
          %v7870 = vld [vmem:[#allocation2 + $0x18] sm:$0xff]
          %v7871 = vld [vmem:[#allocation2 + $0x20] sm:$0xff]
          %v7872 = vld [vmem:[#allocation2 + $0x28] sm:$0xff]
          %v7873 = vld [vmem:[#allocation2 + $0x30] sm:$0xff]
          %v7874 = vld [vmem:[#allocation2 + $0x38] sm:$0xff]
          %v7875 = vld [vmem:[#allocation11] sm:$0xff]
          %v7877 = vlaneseq
          %v7878 = vshrl.u32 %v7877, 7
          %v7879 = vsub.s32 0, %v7878
          %v7880 = vrot.slane %v7875, %v7879
          %v7881 = vlaneseq
          %v7882 = vshrl.u32 %v7881, 7
          %v7883 = vsub.s32 1, %v7882
          %v7884 = vrot.slane %v7875, %v7883
          %v7885 = vlaneseq
          %v7886 = vshrl.u32 %v7885, 7
          %v7887 = vsub.s32 2, %v7886
          %v7888 = vrot.slane %v7875, %v7887
          %v7889 = vlaneseq
          %v7890 = vshrl.u32 %v7889, 7
          %v7891 = vsub.s32 3, %v7890
          %v7892 = vrot.slane %v7875, %v7891
          %v7893 = vlaneseq
          %v7894 = vshrl.u32 %v7893, 7
          %v7895 = vsub.s32 4, %v7894
          %v7896 = vrot.slane %v7875, %v7895
          %v7897 = vlaneseq
          %v7898 = vshrl.u32 %v7897, 7
          %v7899 = vsub.s32 5, %v7898
          %v7900 = vrot.slane %v7875, %v7899
          %v7901 = vlaneseq
          %v7902 = vshrl.u32 %v7901, 7
          %v7903 = vsub.s32 6, %v7902
          %v7904 = vrot.slane %v7875, %v7903
          %v7905 = vlaneseq
          %v7906 = vshrl.u32 %v7905, 7
          %v7907 = vsub.s32 7, %v7906
          %v7908 = vrot.slane %v7875, %v7907
          %v7917 = vadd.f32 %v7867, %v7880
          %v7918 = vadd.f32 %v7868, %v7884
          %v7919 = vadd.f32 %v7869, %v7888
          %v7920 = vadd.f32 %v7870, %v7892
          %v7921 = vadd.f32 %v7871, %v7896
          %v7922 = vadd.f32 %v7872, %v7900
          %v7923 = vadd.f32 %v7873, %v7904
          %v7924 = vadd.f32 %v7874, %v7908
          %v7925 = vmax.f32 %v7917, 0.0
          %v7926 = vmax.f32 %v7918, 0.0
          %v7927 = vmax.f32 %v7919, 0.0
          %v7928 = vmax.f32 %v7920, 0.0
          %v7929 = vmax.f32 %v7921, 0.0
          %v7930 = vmax.f32 %v7922, 0.0
          %v7931 = vmax.f32 %v7923, 0.0
          %v7932 = vmax.f32 %v7924, 0.0
          %v7933 = vpack.c.bf16 %v7925, %v7925
          %v7934 = vpack.c.bf16 %v7926, %v7926
          %v7935 = vpack.c.bf16 %v7927, %v7927
          %v7936 = vpack.c.bf16 %v7928, %v7928
          %v7937 = vpack.c.bf16 %v7929, %v7929
          %v7938 = vpack.c.bf16 %v7930, %v7930
          %v7939 = vpack.c.bf16 %v7931, %v7931
          %v7940 = vpack.c.bf16 %v7932, %v7932
          %v7941 = vld [vmem:[#allocation12] sm:$0xff]
          %v7942 = vld [vmem:[#allocation12 + $0x8] sm:$0xff]
          %v7943 = vld [vmem:[#allocation12 + $0x10] sm:$0xff]
          %v7944 = vld [vmem:[#allocation12 + $0x18] sm:$0xff]
          %v7945 = vld [vmem:[#allocation12 + $0x20] sm:$0xff]
          %v7946 = vld [vmem:[#allocation12 + $0x28] sm:$0xff]
          %v7947 = vld [vmem:[#allocation12 + $0x30] sm:$0xff]
          %v7948 = vld [vmem:[#allocation12 + $0x38] sm:$0xff]
          %v7949 = vld [vmem:[#allocation12 + $0x40] sm:$0xff]
          %v7950 = vld [vmem:[#allocation12 + $0x48] sm:$0xff]
          %v7951 = vld [vmem:[#allocation12 + $0x50] sm:$0xff]
          %v7952 = vld [vmem:[#allocation12 + $0x58] sm:$0xff]
          %v7953 = vld [vmem:[#allocation12 + $0x60] sm:$0xff]
          %v7954 = vld [vmem:[#allocation12 + $0x68] sm:$0xff]
          %v7955 = vld [vmem:[#allocation12 + $0x70] sm:$0xff]
          %v7956 = vld [vmem:[#allocation12 + $0x78] sm:$0xff]
          %v7957 = vld [vmem:[#allocation12 + $0x80] sm:$0xff]
          %v7958 = vld [vmem:[#allocation12 + $0x88] sm:$0xff]
          %v7959 = vld [vmem:[#allocation12 + $0x90] sm:$0xff]
          %v7960 = vld [vmem:[#allocation12 + $0x98] sm:$0xff]
          %v7961 = vld [vmem:[#allocation12 + $0xa0] sm:$0xff]
          %v7962 = vld [vmem:[#allocation12 + $0xa8] sm:$0xff]
          %v7963 = vld [vmem:[#allocation12 + $0xb0] sm:$0xff]
          %v7964 = vld [vmem:[#allocation12 + $0xb8] sm:$0xff]
          %v7965 = vld [vmem:[#allocation12 + $0xc0] sm:$0xff]
          %v7966 = vld [vmem:[#allocation12 + $0xc8] sm:$0xff]
          %v7967 = vld [vmem:[#allocation12 + $0xd0] sm:$0xff]
          %v7968 = vld [vmem:[#allocation12 + $0xd8] sm:$0xff]
          %v7969 = vld [vmem:[#allocation12 + $0xe0] sm:$0xff]
          %v7970 = vld [vmem:[#allocation12 + $0xe8] sm:$0xff]
          %v7971 = vld [vmem:[#allocation12 + $0xf0] sm:$0xff]
          %v7972 = vld [vmem:[#allocation12 + $0xf8] sm:$0xff]
          %v7973 = vld [vmem:[#allocation12 + $0x100] sm:$0xff]
          %v7974 = vld [vmem:[#allocation12 + $0x108] sm:$0xff]
          %v7975 = vld [vmem:[#allocation12 + $0x110] sm:$0xff]
          %v7976 = vld [vmem:[#allocation12 + $0x118] sm:$0xff]
          %v7977 = vld [vmem:[#allocation12 + $0x120] sm:$0xff]
          %v7978 = vld [vmem:[#allocation12 + $0x128] sm:$0xff]
          %v7979 = vld [vmem:[#allocation12 + $0x130] sm:$0xff]
          %v7980 = vld [vmem:[#allocation12 + $0x138] sm:$0xff]
          %v7981 = vld [vmem:[#allocation12 + $0x140] sm:$0xff]
          %v7982 = vld [vmem:[#allocation12 + $0x148] sm:$0xff]
          %v7983 = vld [vmem:[#allocation12 + $0x150] sm:$0xff]
          %v7984 = vld [vmem:[#allocation12 + $0x158] sm:$0xff]
          %v7985 = vld [vmem:[#allocation12 + $0x160] sm:$0xff]
          %v7986 = vld [vmem:[#allocation12 + $0x168] sm:$0xff]
          %v7987 = vld [vmem:[#allocation12 + $0x170] sm:$0xff]
          %v7988 = vld [vmem:[#allocation12 + $0x178] sm:$0xff]
          %v7989 = vld [vmem:[#allocation12 + $0x180] sm:$0xff]
          %v7990 = vld [vmem:[#allocation12 + $0x188] sm:$0xff]
          %v7991 = vld [vmem:[#allocation12 + $0x190] sm:$0xff]
          %v7992 = vld [vmem:[#allocation12 + $0x198] sm:$0xff]
          %v7993 = vld [vmem:[#allocation12 + $0x1a0] sm:$0xff]
          %v7994 = vld [vmem:[#allocation12 + $0x1a8] sm:$0xff]
          %v7995 = vld [vmem:[#allocation12 + $0x1b0] sm:$0xff]
          %v7996 = vld [vmem:[#allocation12 + $0x1b8] sm:$0xff]
          %v7997 = vld [vmem:[#allocation12 + $0x1c0] sm:$0xff]
          %v7998 = vld [vmem:[#allocation12 + $0x1c8] sm:$0xff]
          %v7999 = vld [vmem:[#allocation12 + $0x1d0] sm:$0xff]
          %v8000 = vld [vmem:[#allocation12 + $0x1d8] sm:$0xff]
          %v8001 = vld [vmem:[#allocation12 + $0x1e0] sm:$0xff]
          %v8002 = vld [vmem:[#allocation12 + $0x1e8] sm:$0xff]
          %v8003 = vld [vmem:[#allocation12 + $0x1f0] sm:$0xff]
          %v8004 = vld [vmem:[#allocation12 + $0x1f8] sm:$0xff]
          %v8005 = vld [vmem:[#allocation12 + $0x200] sm:$0xff]
          %v8006 = vld [vmem:[#allocation12 + $0x208] sm:$0xff]
          %v8007 = vld [vmem:[#allocation12 + $0x210] sm:$0xff]
          %v8008 = vld [vmem:[#allocation12 + $0x218] sm:$0xff]
          %v8009 = vld [vmem:[#allocation12 + $0x220] sm:$0xff]
          %v8010 = vld [vmem:[#allocation12 + $0x228] sm:$0xff]
          %v8011 = vld [vmem:[#allocation12 + $0x230] sm:$0xff]
          %v8012 = vld [vmem:[#allocation12 + $0x238] sm:$0xff]
          %v8013 = vld [vmem:[#allocation12 + $0x240] sm:$0xff]
          %v8014 = vld [vmem:[#allocation12 + $0x248] sm:$0xff]
          %v8015 = vld [vmem:[#allocation12 + $0x250] sm:$0xff]
          %v8016 = vld [vmem:[#allocation12 + $0x258] sm:$0xff]
          %v8017 = vld [vmem:[#allocation12 + $0x260] sm:$0xff]
          %v8018 = vld [vmem:[#allocation12 + $0x268] sm:$0xff]
          %v8019 = vld [vmem:[#allocation12 + $0x270] sm:$0xff]
          %v8020 = vld [vmem:[#allocation12 + $0x278] sm:$0xff]
          %v8021 = vld [vmem:[#allocation12 + $0x280] sm:$0xff]
          %v8022 = vld [vmem:[#allocation12 + $0x288] sm:$0xff]
          %v8023 = vld [vmem:[#allocation12 + $0x290] sm:$0xff]
          %v8024 = vld [vmem:[#allocation12 + $0x298] sm:$0xff]
          %v8025 = vld [vmem:[#allocation12 + $0x2a0] sm:$0xff]
          %v8026 = vld [vmem:[#allocation12 + $0x2a8] sm:$0xff]
          %v8027 = vld [vmem:[#allocation12 + $0x2b0] sm:$0xff]
          %v8028 = vld [vmem:[#allocation12 + $0x2b8] sm:$0xff]
          %v8029 = vld [vmem:[#allocation12 + $0x2c0] sm:$0xff]
          %v8030 = vld [vmem:[#allocation12 + $0x2c8] sm:$0xff]
          %v8031 = vld [vmem:[#allocation12 + $0x2d0] sm:$0xff]
          %v8032 = vld [vmem:[#allocation12 + $0x2d8] sm:$0xff]
          %v8033 = vld [vmem:[#allocation12 + $0x2e0] sm:$0xff]
          %v8034 = vld [vmem:[#allocation12 + $0x2e8] sm:$0xff]
          %v8035 = vld [vmem:[#allocation12 + $0x2f0] sm:$0xff]
          %v8036 = vld [vmem:[#allocation12 + $0x2f8] sm:$0xff]
          %v8037 = vld [vmem:[#allocation12 + $0x300] sm:$0xff]
          %v8038 = vld [vmem:[#allocation12 + $0x308] sm:$0xff]
          %v8039 = vld [vmem:[#allocation12 + $0x310] sm:$0xff]
          %v8040 = vld [vmem:[#allocation12 + $0x318] sm:$0xff]
          %v8041 = vld [vmem:[#allocation12 + $0x320] sm:$0xff]
          %v8042 = vld [vmem:[#allocation12 + $0x328] sm:$0xff]
          %v8043 = vld [vmem:[#allocation12 + $0x330] sm:$0xff]
          %v8044 = vld [vmem:[#allocation12 + $0x338] sm:$0xff]
          %v8045 = vld [vmem:[#allocation12 + $0x340] sm:$0xff]
          %v8046 = vld [vmem:[#allocation12 + $0x348] sm:$0xff]
          %v8047 = vld [vmem:[#allocation12 + $0x350] sm:$0xff]
          %v8048 = vld [vmem:[#allocation12 + $0x358] sm:$0xff]
          %v8049 = vld [vmem:[#allocation12 + $0x360] sm:$0xff]
          %v8050 = vld [vmem:[#allocation12 + $0x368] sm:$0xff]
          %v8051 = vld [vmem:[#allocation12 + $0x370] sm:$0xff]
          %v8052 = vld [vmem:[#allocation12 + $0x378] sm:$0xff]
          %v8053 = vld [vmem:[#allocation12 + $0x380] sm:$0xff]
          %v8054 = vld [vmem:[#allocation12 + $0x388] sm:$0xff]
          %v8055 = vld [vmem:[#allocation12 + $0x390] sm:$0xff]
          %v8056 = vld [vmem:[#allocation12 + $0x398] sm:$0xff]
          %v8057 = vld [vmem:[#allocation12 + $0x3a0] sm:$0xff]
          %v8058 = vld [vmem:[#allocation12 + $0x3a8] sm:$0xff]
          %v8059 = vld [vmem:[#allocation12 + $0x3b0] sm:$0xff]
          %v8060 = vld [vmem:[#allocation12 + $0x3b8] sm:$0xff]
          %v8061 = vld [vmem:[#allocation12 + $0x3c0] sm:$0xff]
          %v8062 = vld [vmem:[#allocation12 + $0x3c8] sm:$0xff]
          %v8063 = vld [vmem:[#allocation12 + $0x3d0] sm:$0xff]
          %v8064 = vld [vmem:[#allocation12 + $0x3d8] sm:$0xff]
          %v8065 = vld [vmem:[#allocation12 + $0x3e0] sm:$0xff]
          %v8066 = vld [vmem:[#allocation12 + $0x3e8] sm:$0xff]
          %v8067 = vld [vmem:[#allocation12 + $0x3f0] sm:$0xff]
          %v8068 = vld [vmem:[#allocation12 + $0x3f8] sm:$0xff]
          %v8069 = vld [vmem:[#allocation12 + $0x400] sm:$0xff]
          %v8070 = vld [vmem:[#allocation12 + $0x408] sm:$0xff]
          %v8071 = vld [vmem:[#allocation12 + $0x410] sm:$0xff]
          %v8072 = vld [vmem:[#allocation12 + $0x418] sm:$0xff]
          %v8073 = vld [vmem:[#allocation12 + $0x420] sm:$0xff]
          %v8074 = vld [vmem:[#allocation12 + $0x428] sm:$0xff]
          %v8075 = vld [vmem:[#allocation12 + $0x430] sm:$0xff]
          %v8076 = vld [vmem:[#allocation12 + $0x438] sm:$0xff]
          %v8077 = vld [vmem:[#allocation12 + $0x440] sm:$0xff]
          %v8078 = vld [vmem:[#allocation12 + $0x448] sm:$0xff]
          %v8079 = vld [vmem:[#allocation12 + $0x450] sm:$0xff]
          %v8080 = vld [vmem:[#allocation12 + $0x458] sm:$0xff]
          %v8081 = vld [vmem:[#allocation12 + $0x460] sm:$0xff]
          %v8082 = vld [vmem:[#allocation12 + $0x468] sm:$0xff]
          %v8083 = vld [vmem:[#allocation12 + $0x470] sm:$0xff]
          %v8084 = vld [vmem:[#allocation12 + $0x478] sm:$0xff]
          %v8085 = vld [vmem:[#allocation12 + $0x480] sm:$0xff]
          %v8086 = vld [vmem:[#allocation12 + $0x488] sm:$0xff]
          %v8087 = vld [vmem:[#allocation12 + $0x490] sm:$0xff]
          %v8088 = vld [vmem:[#allocation12 + $0x498] sm:$0xff]
          %v8089 = vld [vmem:[#allocation12 + $0x4a0] sm:$0xff]
          %v8090 = vld [vmem:[#allocation12 + $0x4a8] sm:$0xff]
          %v8091 = vld [vmem:[#allocation12 + $0x4b0] sm:$0xff]
          %v8092 = vld [vmem:[#allocation12 + $0x4b8] sm:$0xff]
          %v8093 = vld [vmem:[#allocation12 + $0x4c0] sm:$0xff]
          %v8094 = vld [vmem:[#allocation12 + $0x4c8] sm:$0xff]
          %v8095 = vld [vmem:[#allocation12 + $0x4d0] sm:$0xff]
          %v8096 = vld [vmem:[#allocation12 + $0x4d8] sm:$0xff]
          %v8097 = vld [vmem:[#allocation12 + $0x4e0] sm:$0xff]
          %v8098 = vld [vmem:[#allocation12 + $0x4e8] sm:$0xff]
          %v8099 = vld [vmem:[#allocation12 + $0x4f0] sm:$0xff]
          %v8100 = vld [vmem:[#allocation12 + $0x4f8] sm:$0xff]
          %v8101 = vld [vmem:[#allocation12 + $0x500] sm:$0xff]
          %v8102 = vld [vmem:[#allocation12 + $0x508] sm:$0xff]
          %v8103 = vld [vmem:[#allocation12 + $0x510] sm:$0xff]
          %v8104 = vld [vmem:[#allocation12 + $0x518] sm:$0xff]
          %v8105 = vld [vmem:[#allocation12 + $0x520] sm:$0xff]
          %v8106 = vld [vmem:[#allocation12 + $0x528] sm:$0xff]
          %v8107 = vld [vmem:[#allocation12 + $0x530] sm:$0xff]
          %v8108 = vld [vmem:[#allocation12 + $0x538] sm:$0xff]
          %v8109 = vld [vmem:[#allocation12 + $0x540] sm:$0xff]
          %v8110 = vld [vmem:[#allocation12 + $0x548] sm:$0xff]
          %v8111 = vld [vmem:[#allocation12 + $0x550] sm:$0xff]
          %v8112 = vld [vmem:[#allocation12 + $0x558] sm:$0xff]
          %v8113 = vld [vmem:[#allocation12 + $0x560] sm:$0xff]
          %v8114 = vld [vmem:[#allocation12 + $0x568] sm:$0xff]
          %v8115 = vld [vmem:[#allocation12 + $0x570] sm:$0xff]
          %v8116 = vld [vmem:[#allocation12 + $0x578] sm:$0xff]
          %v8117 = vld [vmem:[#allocation12 + $0x580] sm:$0xff]
          %v8118 = vld [vmem:[#allocation12 + $0x588] sm:$0xff]
          %v8119 = vld [vmem:[#allocation12 + $0x590] sm:$0xff]
          %v8120 = vld [vmem:[#allocation12 + $0x598] sm:$0xff]
          %v8121 = vld [vmem:[#allocation12 + $0x5a0] sm:$0xff]
          %v8122 = vld [vmem:[#allocation12 + $0x5a8] sm:$0xff]
          %v8123 = vld [vmem:[#allocation12 + $0x5b0] sm:$0xff]
          %v8124 = vld [vmem:[#allocation12 + $0x5b8] sm:$0xff]
          %v8125 = vld [vmem:[#allocation12 + $0x5c0] sm:$0xff]
          %v8126 = vld [vmem:[#allocation12 + $0x5c8] sm:$0xff]
          %v8127 = vld [vmem:[#allocation12 + $0x5d0] sm:$0xff]
          %v8128 = vld [vmem:[#allocation12 + $0x5d8] sm:$0xff]
          %v8129 = vld [vmem:[#allocation12 + $0x5e0] sm:$0xff]
          %v8130 = vld [vmem:[#allocation12 + $0x5e8] sm:$0xff]
          %v8131 = vld [vmem:[#allocation12 + $0x5f0] sm:$0xff]
          %v8132 = vld [vmem:[#allocation12 + $0x5f8] sm:$0xff]
          %v8133 = vld [vmem:[#allocation12 + $0x600] sm:$0xff]
          %v8134 = vld [vmem:[#allocation12 + $0x608] sm:$0xff]
          %v8135 = vld [vmem:[#allocation12 + $0x610] sm:$0xff]
          %v8136 = vld [vmem:[#allocation12 + $0x618] sm:$0xff]
          %v8137 = vld [vmem:[#allocation12 + $0x620] sm:$0xff]
          %v8138 = vld [vmem:[#allocation12 + $0x628] sm:$0xff]
          %v8139 = vld [vmem:[#allocation12 + $0x630] sm:$0xff]
          %v8140 = vld [vmem:[#allocation12 + $0x638] sm:$0xff]
          %v8141 = vld [vmem:[#allocation12 + $0x640] sm:$0xff]
          %v8142 = vld [vmem:[#allocation12 + $0x648] sm:$0xff]
          %v8143 = vld [vmem:[#allocation12 + $0x650] sm:$0xff]
          %v8144 = vld [vmem:[#allocation12 + $0x658] sm:$0xff]
          %v8145 = vld [vmem:[#allocation12 + $0x660] sm:$0xff]
          %v8146 = vld [vmem:[#allocation12 + $0x668] sm:$0xff]
          %v8147 = vld [vmem:[#allocation12 + $0x670] sm:$0xff]
          %v8148 = vld [vmem:[#allocation12 + $0x678] sm:$0xff]
          %v8149 = vld [vmem:[#allocation12 + $0x680] sm:$0xff]
          %v8150 = vld [vmem:[#allocation12 + $0x688] sm:$0xff]
          %v8151 = vld [vmem:[#allocation12 + $0x690] sm:$0xff]
          %v8152 = vld [vmem:[#allocation12 + $0x698] sm:$0xff]
          %v8153 = vld [vmem:[#allocation12 + $0x6a0] sm:$0xff]
          %v8154 = vld [vmem:[#allocation12 + $0x6a8] sm:$0xff]
          %v8155 = vld [vmem:[#allocation12 + $0x6b0] sm:$0xff]
          %v8156 = vld [vmem:[#allocation12 + $0x6b8] sm:$0xff]
          %v8157 = vld [vmem:[#allocation12 + $0x6c0] sm:$0xff]
          %v8158 = vld [vmem:[#allocation12 + $0x6c8] sm:$0xff]
          %v8159 = vld [vmem:[#allocation12 + $0x6d0] sm:$0xff]
          %v8160 = vld [vmem:[#allocation12 + $0x6d8] sm:$0xff]
          %v8161 = vld [vmem:[#allocation12 + $0x6e0] sm:$0xff]
          %v8162 = vld [vmem:[#allocation12 + $0x6e8] sm:$0xff]
          %v8163 = vld [vmem:[#allocation12 + $0x6f0] sm:$0xff]
          %v8164 = vld [vmem:[#allocation12 + $0x6f8] sm:$0xff]
          %v8165 = vld [vmem:[#allocation12 + $0x700] sm:$0xff]
          %v8166 = vld [vmem:[#allocation12 + $0x708] sm:$0xff]
          %v8167 = vld [vmem:[#allocation12 + $0x710] sm:$0xff]
          %v8168 = vld [vmem:[#allocation12 + $0x718] sm:$0xff]
          %v8169 = vld [vmem:[#allocation12 + $0x720] sm:$0xff]
          %v8170 = vld [vmem:[#allocation12 + $0x728] sm:$0xff]
          %v8171 = vld [vmem:[#allocation12 + $0x730] sm:$0xff]
          %v8172 = vld [vmem:[#allocation12 + $0x738] sm:$0xff]
          %v8173 = vld [vmem:[#allocation12 + $0x740] sm:$0xff]
          %v8174 = vld [vmem:[#allocation12 + $0x748] sm:$0xff]
          %v8175 = vld [vmem:[#allocation12 + $0x750] sm:$0xff]
          %v8176 = vld [vmem:[#allocation12 + $0x758] sm:$0xff]
          %v8177 = vld [vmem:[#allocation12 + $0x760] sm:$0xff]
          %v8178 = vld [vmem:[#allocation12 + $0x768] sm:$0xff]
          %v8179 = vld [vmem:[#allocation12 + $0x770] sm:$0xff]
          %v8180 = vld [vmem:[#allocation12 + $0x778] sm:$0xff]
          %v8181 = vld [vmem:[#allocation12 + $0x780] sm:$0xff]
          %v8182 = vld [vmem:[#allocation12 + $0x788] sm:$0xff]
          %v8183 = vld [vmem:[#allocation12 + $0x790] sm:$0xff]
          %v8184 = vld [vmem:[#allocation12 + $0x798] sm:$0xff]
          %v8185 = vld [vmem:[#allocation12 + $0x7a0] sm:$0xff]
          %v8186 = vld [vmem:[#allocation12 + $0x7a8] sm:$0xff]
          %v8187 = vld [vmem:[#allocation12 + $0x7b0] sm:$0xff]
          %v8188 = vld [vmem:[#allocation12 + $0x7b8] sm:$0xff]
          %v8189 = vld [vmem:[#allocation12 + $0x7c0] sm:$0xff]
          %v8190 = vld [vmem:[#allocation12 + $0x7c8] sm:$0xff]
          %v8191 = vld [vmem:[#allocation12 + $0x7d0] sm:$0xff]
          %v8192 = vld [vmem:[#allocation12 + $0x7d8] sm:$0xff]
          %v8193 = vld [vmem:[#allocation12 + $0x7e0] sm:$0xff]
          %v8194 = vld [vmem:[#allocation12 + $0x7e8] sm:$0xff]
          %v8195 = vld [vmem:[#allocation12 + $0x7f0] sm:$0xff]
          %v8196 = vld [vmem:[#allocation12 + $0x7f8] sm:$0xff]
          %v8197 = vld [vmem:[#allocation14] sm:$0xf]
          %v8199 = vlaneseq
          %v8200 = vshrl.u32 %v8199, 7
          %v8201 = vsub.s32 0, %v8200
          %v8202 = vrot.slane %v8197, %v8201
          %v8203 = vlaneseq
          %v8204 = vshrl.u32 %v8203, 7
          %v8205 = vsub.s32 1, %v8204
          %v8206 = vrot.slane %v8197, %v8205
          %v8207 = vlaneseq
          %v8208 = vshrl.u32 %v8207, 7
          %v8209 = vsub.s32 2, %v8208
          %v8210 = vrot.slane %v8197, %v8209
          %v8211 = vlaneseq
          %v8212 = vshrl.u32 %v8211, 7
          %v8213 = vsub.s32 3, %v8212
          %v8214 = vrot.slane %v8197, %v8213
          %v8475 = vunpack.c.l.b16 %v7941
          %v8476 = vunpack.c.h.b16 %v7941
          %v8477 = vunpack.c.l.b16 %v7942
          %v8478 = vunpack.c.h.b16 %v7942
          %v8479 = vunpack.c.l.b16 %v7943
          %v8480 = vunpack.c.h.b16 %v7943
          %v8481 = vunpack.c.l.b16 %v7944
          %v8482 = vunpack.c.h.b16 %v7944
          %v8483 = vunpack.c.l.b16 %v7945
          %v8484 = vunpack.c.h.b16 %v7945
          %v8485 = vunpack.c.l.b16 %v7946
          %v8486 = vunpack.c.h.b16 %v7946
          %v8487 = vunpack.c.l.b16 %v7947
          %v8488 = vunpack.c.h.b16 %v7947
          %v8489 = vunpack.c.l.b16 %v7948
          %v8490 = vunpack.c.h.b16 %v7948
          %v8491 = vunpack.c.l.b16 %v7949
          %v8492 = vunpack.c.h.b16 %v7949
          %v8493 = vunpack.c.l.b16 %v7950
          %v8494 = vunpack.c.h.b16 %v7950
          %v8495 = vunpack.c.l.b16 %v7951
          %v8496 = vunpack.c.h.b16 %v7951
          %v8497 = vunpack.c.l.b16 %v7952
          %v8498 = vunpack.c.h.b16 %v7952
          %v8499 = vunpack.c.l.b16 %v7953
          %v8500 = vunpack.c.h.b16 %v7953
          %v8501 = vunpack.c.l.b16 %v7954
          %v8502 = vunpack.c.h.b16 %v7954
          %v8503 = vunpack.c.l.b16 %v7955
          %v8504 = vunpack.c.h.b16 %v7955
          %v8505 = vunpack.c.l.b16 %v7956
          %v8506 = vunpack.c.h.b16 %v7956
          %v8507 = vunpack.c.l.b16 %v7957
          %v8508 = vunpack.c.h.b16 %v7957
          %v8509 = vunpack.c.l.b16 %v7958
          %v8510 = vunpack.c.h.b16 %v7958
          %v8511 = vunpack.c.l.b16 %v7959
          %v8512 = vunpack.c.h.b16 %v7959
          %v8513 = vunpack.c.l.b16 %v7960
          %v8514 = vunpack.c.h.b16 %v7960
          %v8515 = vunpack.c.l.b16 %v7961
          %v8516 = vunpack.c.h.b16 %v7961
          %v8517 = vunpack.c.l.b16 %v7962
          %v8518 = vunpack.c.h.b16 %v7962
          %v8519 = vunpack.c.l.b16 %v7963
          %v8520 = vunpack.c.h.b16 %v7963
          %v8521 = vunpack.c.l.b16 %v7964
          %v8522 = vunpack.c.h.b16 %v7964
          %v8523 = vunpack.c.l.b16 %v7965
          %v8524 = vunpack.c.h.b16 %v7965
          %v8525 = vunpack.c.l.b16 %v7966
          %v8526 = vunpack.c.h.b16 %v7966
          %v8527 = vunpack.c.l.b16 %v7967
          %v8528 = vunpack.c.h.b16 %v7967
          %v8529 = vunpack.c.l.b16 %v7968
          %v8530 = vunpack.c.h.b16 %v7968
          %v8531 = vunpack.c.l.b16 %v7969
          %v8532 = vunpack.c.h.b16 %v7969
          %v8533 = vunpack.c.l.b16 %v7970
          %v8534 = vunpack.c.h.b16 %v7970
          %v8535 = vunpack.c.l.b16 %v7971
          %v8536 = vunpack.c.h.b16 %v7971
          %v8537 = vunpack.c.l.b16 %v7972
          %v8538 = vunpack.c.h.b16 %v7972
          %v8539 = vunpack.c.l.b16 %v7973
          %v8540 = vunpack.c.h.b16 %v7973
          %v8541 = vunpack.c.l.b16 %v7974
          %v8542 = vunpack.c.h.b16 %v7974
          %v8543 = vunpack.c.l.b16 %v7975
          %v8544 = vunpack.c.h.b16 %v7975
          %v8545 = vunpack.c.l.b16 %v7976
          %v8546 = vunpack.c.h.b16 %v7976
          %v8547 = vunpack.c.l.b16 %v7977
          %v8548 = vunpack.c.h.b16 %v7977
          %v8549 = vunpack.c.l.b16 %v7978
          %v8550 = vunpack.c.h.b16 %v7978
          %v8551 = vunpack.c.l.b16 %v7979
          %v8552 = vunpack.c.h.b16 %v7979
          %v8553 = vunpack.c.l.b16 %v7980
          %v8554 = vunpack.c.h.b16 %v7980
          %v8555 = vunpack.c.l.b16 %v7981
          %v8556 = vunpack.c.h.b16 %v7981
          %v8557 = vunpack.c.l.b16 %v7982
          %v8558 = vunpack.c.h.b16 %v7982
          %v8559 = vunpack.c.l.b16 %v7983
          %v8560 = vunpack.c.h.b16 %v7983
          %v8561 = vunpack.c.l.b16 %v7984
          %v8562 = vunpack.c.h.b16 %v7984
          %v8563 = vunpack.c.l.b16 %v7985
          %v8564 = vunpack.c.h.b16 %v7985
          %v8565 = vunpack.c.l.b16 %v7986
          %v8566 = vunpack.c.h.b16 %v7986
          %v8567 = vunpack.c.l.b16 %v7987
          %v8568 = vunpack.c.h.b16 %v7987
          %v8569 = vunpack.c.l.b16 %v7988
          %v8570 = vunpack.c.h.b16 %v7988
          %v8571 = vunpack.c.l.b16 %v7989
          %v8572 = vunpack.c.h.b16 %v7989
          %v8573 = vunpack.c.l.b16 %v7990
          %v8574 = vunpack.c.h.b16 %v7990
          %v8575 = vunpack.c.l.b16 %v7991
          %v8576 = vunpack.c.h.b16 %v7991
          %v8577 = vunpack.c.l.b16 %v7992
          %v8578 = vunpack.c.h.b16 %v7992
          %v8579 = vunpack.c.l.b16 %v7993
          %v8580 = vunpack.c.h.b16 %v7993
          %v8581 = vunpack.c.l.b16 %v7994
          %v8582 = vunpack.c.h.b16 %v7994
          %v8583 = vunpack.c.l.b16 %v7995
          %v8584 = vunpack.c.h.b16 %v7995
          %v8585 = vunpack.c.l.b16 %v7996
          %v8586 = vunpack.c.h.b16 %v7996
          %v8587 = vunpack.c.l.b16 %v7997
          %v8588 = vunpack.c.h.b16 %v7997
          %v8589 = vunpack.c.l.b16 %v7998
          %v8590 = vunpack.c.h.b16 %v7998
          %v8591 = vunpack.c.l.b16 %v7999
          %v8592 = vunpack.c.h.b16 %v7999
          %v8593 = vunpack.c.l.b16 %v8000
          %v8594 = vunpack.c.h.b16 %v8000
          %v8595 = vunpack.c.l.b16 %v8001
          %v8596 = vunpack.c.h.b16 %v8001
          %v8597 = vunpack.c.l.b16 %v8002
          %v8598 = vunpack.c.h.b16 %v8002
          %v8599 = vunpack.c.l.b16 %v8003
          %v8600 = vunpack.c.h.b16 %v8003
          %v8601 = vunpack.c.l.b16 %v8004
          %v8602 = vunpack.c.h.b16 %v8004
          %v8603 = vunpack.c.l.b16 %v8005
          %v8604 = vunpack.c.h.b16 %v8005
          %v8605 = vunpack.c.l.b16 %v8006
          %v8606 = vunpack.c.h.b16 %v8006
          %v8607 = vunpack.c.l.b16 %v8007
          %v8608 = vunpack.c.h.b16 %v8007
          %v8609 = vunpack.c.l.b16 %v8008
          %v8610 = vunpack.c.h.b16 %v8008
          %v8611 = vunpack.c.l.b16 %v8009
          %v8612 = vunpack.c.h.b16 %v8009
          %v8613 = vunpack.c.l.b16 %v8010
          %v8614 = vunpack.c.h.b16 %v8010
          %v8615 = vunpack.c.l.b16 %v8011
          %v8616 = vunpack.c.h.b16 %v8011
          %v8617 = vunpack.c.l.b16 %v8012
          %v8618 = vunpack.c.h.b16 %v8012
          %v8619 = vunpack.c.l.b16 %v8013
          %v8620 = vunpack.c.h.b16 %v8013
          %v8621 = vunpack.c.l.b16 %v8014
          %v8622 = vunpack.c.h.b16 %v8014
          %v8623 = vunpack.c.l.b16 %v8015
          %v8624 = vunpack.c.h.b16 %v8015
          %v8625 = vunpack.c.l.b16 %v8016
          %v8626 = vunpack.c.h.b16 %v8016
          %v8627 = vunpack.c.l.b16 %v8017
          %v8628 = vunpack.c.h.b16 %v8017
          %v8629 = vunpack.c.l.b16 %v8018
          %v8630 = vunpack.c.h.b16 %v8018
          %v8631 = vunpack.c.l.b16 %v8019
          %v8632 = vunpack.c.h.b16 %v8019
          %v8633 = vunpack.c.l.b16 %v8020
          %v8634 = vunpack.c.h.b16 %v8020
          %v8635 = vunpack.c.l.b16 %v8021
          %v8636 = vunpack.c.h.b16 %v8021
          %v8637 = vunpack.c.l.b16 %v8022
          %v8638 = vunpack.c.h.b16 %v8022
          %v8639 = vunpack.c.l.b16 %v8023
          %v8640 = vunpack.c.h.b16 %v8023
          %v8641 = vunpack.c.l.b16 %v8024
          %v8642 = vunpack.c.h.b16 %v8024
          %v8643 = vunpack.c.l.b16 %v8025
          %v8644 = vunpack.c.h.b16 %v8025
          %v8645 = vunpack.c.l.b16 %v8026
          %v8646 = vunpack.c.h.b16 %v8026
          %v8647 = vunpack.c.l.b16 %v8027
          %v8648 = vunpack.c.h.b16 %v8027
          %v8649 = vunpack.c.l.b16 %v8028
          %v8650 = vunpack.c.h.b16 %v8028
          %v8651 = vunpack.c.l.b16 %v8029
          %v8652 = vunpack.c.h.b16 %v8029
          %v8653 = vunpack.c.l.b16 %v8030
          %v8654 = vunpack.c.h.b16 %v8030
          %v8655 = vunpack.c.l.b16 %v8031
          %v8656 = vunpack.c.h.b16 %v8031
          %v8657 = vunpack.c.l.b16 %v8032
          %v8658 = vunpack.c.h.b16 %v8032
          %v8659 = vunpack.c.l.b16 %v8033
          %v8660 = vunpack.c.h.b16 %v8033
          %v8661 = vunpack.c.l.b16 %v8034
          %v8662 = vunpack.c.h.b16 %v8034
          %v8663 = vunpack.c.l.b16 %v8035
          %v8664 = vunpack.c.h.b16 %v8035
          %v8665 = vunpack.c.l.b16 %v8036
          %v8666 = vunpack.c.h.b16 %v8036
          %v8667 = vunpack.c.l.b16 %v8037
          %v8668 = vunpack.c.h.b16 %v8037
          %v8669 = vunpack.c.l.b16 %v8038
          %v8670 = vunpack.c.h.b16 %v8038
          %v8671 = vunpack.c.l.b16 %v8039
          %v8672 = vunpack.c.h.b16 %v8039
          %v8673 = vunpack.c.l.b16 %v8040
          %v8674 = vunpack.c.h.b16 %v8040
          %v8675 = vunpack.c.l.b16 %v8041
          %v8676 = vunpack.c.h.b16 %v8041
          %v8677 = vunpack.c.l.b16 %v8042
          %v8678 = vunpack.c.h.b16 %v8042
          %v8679 = vunpack.c.l.b16 %v8043
          %v8680 = vunpack.c.h.b16 %v8043
          %v8681 = vunpack.c.l.b16 %v8044
          %v8682 = vunpack.c.h.b16 %v8044
          %v8683 = vunpack.c.l.b16 %v8045
          %v8684 = vunpack.c.h.b16 %v8045
          %v8685 = vunpack.c.l.b16 %v8046
          %v8686 = vunpack.c.h.b16 %v8046
          %v8687 = vunpack.c.l.b16 %v8047
          %v8688 = vunpack.c.h.b16 %v8047
          %v8689 = vunpack.c.l.b16 %v8048
          %v8690 = vunpack.c.h.b16 %v8048
          %v8691 = vunpack.c.l.b16 %v8049
          %v8692 = vunpack.c.h.b16 %v8049
          %v8693 = vunpack.c.l.b16 %v8050
          %v8694 = vunpack.c.h.b16 %v8050
          %v8695 = vunpack.c.l.b16 %v8051
          %v8696 = vunpack.c.h.b16 %v8051
          %v8697 = vunpack.c.l.b16 %v8052
          %v8698 = vunpack.c.h.b16 %v8052
          %v8699 = vunpack.c.l.b16 %v8053
          %v8700 = vunpack.c.h.b16 %v8053
          %v8701 = vunpack.c.l.b16 %v8054
          %v8702 = vunpack.c.h.b16 %v8054
          %v8703 = vunpack.c.l.b16 %v8055
          %v8704 = vunpack.c.h.b16 %v8055
          %v8705 = vunpack.c.l.b16 %v8056
          %v8706 = vunpack.c.h.b16 %v8056
          %v8707 = vunpack.c.l.b16 %v8057
          %v8708 = vunpack.c.h.b16 %v8057
          %v8709 = vunpack.c.l.b16 %v8058
          %v8710 = vunpack.c.h.b16 %v8058
          %v8711 = vunpack.c.l.b16 %v8059
          %v8712 = vunpack.c.h.b16 %v8059
          %v8713 = vunpack.c.l.b16 %v8060
          %v8714 = vunpack.c.h.b16 %v8060
          %v8715 = vunpack.c.l.b16 %v8061
          %v8716 = vunpack.c.h.b16 %v8061
          %v8717 = vunpack.c.l.b16 %v8062
          %v8718 = vunpack.c.h.b16 %v8062
          %v8719 = vunpack.c.l.b16 %v8063
          %v8720 = vunpack.c.h.b16 %v8063
          %v8721 = vunpack.c.l.b16 %v8064
          %v8722 = vunpack.c.h.b16 %v8064
          %v8723 = vunpack.c.l.b16 %v8065
          %v8724 = vunpack.c.h.b16 %v8065
          %v8725 = vunpack.c.l.b16 %v8066
          %v8726 = vunpack.c.h.b16 %v8066
          %v8727 = vunpack.c.l.b16 %v8067
          %v8728 = vunpack.c.h.b16 %v8067
          %v8729 = vunpack.c.l.b16 %v8068
          %v8730 = vunpack.c.h.b16 %v8068
          %v8731 = vunpack.c.l.b16 %v8069
          %v8732 = vunpack.c.h.b16 %v8069
          %v8733 = vunpack.c.l.b16 %v8070
          %v8734 = vunpack.c.h.b16 %v8070
          %v8735 = vunpack.c.l.b16 %v8071
          %v8736 = vunpack.c.h.b16 %v8071
          %v8737 = vunpack.c.l.b16 %v8072
          %v8738 = vunpack.c.h.b16 %v8072
          %v8739 = vunpack.c.l.b16 %v8073
          %v8740 = vunpack.c.h.b16 %v8073
          %v8741 = vunpack.c.l.b16 %v8074
          %v8742 = vunpack.c.h.b16 %v8074
          %v8743 = vunpack.c.l.b16 %v8075
          %v8744 = vunpack.c.h.b16 %v8075
          %v8745 = vunpack.c.l.b16 %v8076
          %v8746 = vunpack.c.h.b16 %v8076
          %v8747 = vunpack.c.l.b16 %v8077
          %v8748 = vunpack.c.h.b16 %v8077
          %v8749 = vunpack.c.l.b16 %v8078
          %v8750 = vunpack.c.h.b16 %v8078
          %v8751 = vunpack.c.l.b16 %v8079
          %v8752 = vunpack.c.h.b16 %v8079
          %v8753 = vunpack.c.l.b16 %v8080
          %v8754 = vunpack.c.h.b16 %v8080
          %v8755 = vunpack.c.l.b16 %v8081
          %v8756 = vunpack.c.h.b16 %v8081
          %v8757 = vunpack.c.l.b16 %v8082
          %v8758 = vunpack.c.h.b16 %v8082
          %v8759 = vunpack.c.l.b16 %v8083
          %v8760 = vunpack.c.h.b16 %v8083
          %v8761 = vunpack.c.l.b16 %v8084
          %v8762 = vunpack.c.h.b16 %v8084
          %v8763 = vunpack.c.l.b16 %v8085
          %v8764 = vunpack.c.h.b16 %v8085
          %v8765 = vunpack.c.l.b16 %v8086
          %v8766 = vunpack.c.h.b16 %v8086
          %v8767 = vunpack.c.l.b16 %v8087
          %v8768 = vunpack.c.h.b16 %v8087
          %v8769 = vunpack.c.l.b16 %v8088
          %v8770 = vunpack.c.h.b16 %v8088
          %v8771 = vunpack.c.l.b16 %v8089
          %v8772 = vunpack.c.h.b16 %v8089
          %v8773 = vunpack.c.l.b16 %v8090
          %v8774 = vunpack.c.h.b16 %v8090
          %v8775 = vunpack.c.l.b16 %v8091
          %v8776 = vunpack.c.h.b16 %v8091
          %v8777 = vunpack.c.l.b16 %v8092
          %v8778 = vunpack.c.h.b16 %v8092
          %v8779 = vunpack.c.l.b16 %v8093
          %v8780 = vunpack.c.h.b16 %v8093
          %v8781 = vunpack.c.l.b16 %v8094
          %v8782 = vunpack.c.h.b16 %v8094
          %v8783 = vunpack.c.l.b16 %v8095
          %v8784 = vunpack.c.h.b16 %v8095
          %v8785 = vunpack.c.l.b16 %v8096
          %v8786 = vunpack.c.h.b16 %v8096
          %v8787 = vunpack.c.l.b16 %v8097
          %v8788 = vunpack.c.h.b16 %v8097
          %v8789 = vunpack.c.l.b16 %v8098
          %v8790 = vunpack.c.h.b16 %v8098
          %v8791 = vunpack.c.l.b16 %v8099
          %v8792 = vunpack.c.h.b16 %v8099
          %v8793 = vunpack.c.l.b16 %v8100
          %v8794 = vunpack.c.h.b16 %v8100
          %v8795 = vunpack.c.l.b16 %v8101
          %v8796 = vunpack.c.h.b16 %v8101
          %v8797 = vunpack.c.l.b16 %v8102
          %v8798 = vunpack.c.h.b16 %v8102
          %v8799 = vunpack.c.l.b16 %v8103
          %v8800 = vunpack.c.h.b16 %v8103
          %v8801 = vunpack.c.l.b16 %v8104
          %v8802 = vunpack.c.h.b16 %v8104
          %v8803 = vunpack.c.l.b16 %v8105
          %v8804 = vunpack.c.h.b16 %v8105
          %v8805 = vunpack.c.l.b16 %v8106
          %v8806 = vunpack.c.h.b16 %v8106
          %v8807 = vunpack.c.l.b16 %v8107
          %v8808 = vunpack.c.h.b16 %v8107
          %v8809 = vunpack.c.l.b16 %v8108
          %v8810 = vunpack.c.h.b16 %v8108
          %v8811 = vunpack.c.l.b16 %v8109
          %v8812 = vunpack.c.h.b16 %v8109
          %v8813 = vunpack.c.l.b16 %v8110
          %v8814 = vunpack.c.h.b16 %v8110
          %v8815 = vunpack.c.l.b16 %v8111
          %v8816 = vunpack.c.h.b16 %v8111
          %v8817 = vunpack.c.l.b16 %v8112
          %v8818 = vunpack.c.h.b16 %v8112
          %v8819 = vunpack.c.l.b16 %v8113
          %v8820 = vunpack.c.h.b16 %v8113
          %v8821 = vunpack.c.l.b16 %v8114
          %v8822 = vunpack.c.h.b16 %v8114
          %v8823 = vunpack.c.l.b16 %v8115
          %v8824 = vunpack.c.h.b16 %v8115
          %v8825 = vunpack.c.l.b16 %v8116
          %v8826 = vunpack.c.h.b16 %v8116
          %v8827 = vunpack.c.l.b16 %v8117
          %v8828 = vunpack.c.h.b16 %v8117
          %v8829 = vunpack.c.l.b16 %v8118
          %v8830 = vunpack.c.h.b16 %v8118
          %v8831 = vunpack.c.l.b16 %v8119
          %v8832 = vunpack.c.h.b16 %v8119
          %v8833 = vunpack.c.l.b16 %v8120
          %v8834 = vunpack.c.h.b16 %v8120
          %v8835 = vunpack.c.l.b16 %v8121
          %v8836 = vunpack.c.h.b16 %v8121
          %v8837 = vunpack.c.l.b16 %v8122
          %v8838 = vunpack.c.h.b16 %v8122
          %v8839 = vunpack.c.l.b16 %v8123
          %v8840 = vunpack.c.h.b16 %v8123
          %v8841 = vunpack.c.l.b16 %v8124
          %v8842 = vunpack.c.h.b16 %v8124
          %v8843 = vunpack.c.l.b16 %v8125
          %v8844 = vunpack.c.h.b16 %v8125
          %v8845 = vunpack.c.l.b16 %v8126
          %v8846 = vunpack.c.h.b16 %v8126
          %v8847 = vunpack.c.l.b16 %v8127
          %v8848 = vunpack.c.h.b16 %v8127
          %v8849 = vunpack.c.l.b16 %v8128
          %v8850 = vunpack.c.h.b16 %v8128
          %v8851 = vunpack.c.l.b16 %v8129
          %v8852 = vunpack.c.h.b16 %v8129
          %v8853 = vunpack.c.l.b16 %v8130
          %v8854 = vunpack.c.h.b16 %v8130
          %v8855 = vunpack.c.l.b16 %v8131
          %v8856 = vunpack.c.h.b16 %v8131
          %v8857 = vunpack.c.l.b16 %v8132
          %v8858 = vunpack.c.h.b16 %v8132
          %v8859 = vunpack.c.l.b16 %v8133
          %v8860 = vunpack.c.h.b16 %v8133
          %v8861 = vunpack.c.l.b16 %v8134
          %v8862 = vunpack.c.h.b16 %v8134
          %v8863 = vunpack.c.l.b16 %v8135
          %v8864 = vunpack.c.h.b16 %v8135
          %v8865 = vunpack.c.l.b16 %v8136
          %v8866 = vunpack.c.h.b16 %v8136
          %v8867 = vunpack.c.l.b16 %v8137
          %v8868 = vunpack.c.h.b16 %v8137
          %v8869 = vunpack.c.l.b16 %v8138
          %v8870 = vunpack.c.h.b16 %v8138
          %v8871 = vunpack.c.l.b16 %v8139
          %v8872 = vunpack.c.h.b16 %v8139
          %v8873 = vunpack.c.l.b16 %v8140
          %v8874 = vunpack.c.h.b16 %v8140
          %v8875 = vunpack.c.l.b16 %v8141
          %v8876 = vunpack.c.h.b16 %v8141
          %v8877 = vunpack.c.l.b16 %v8142
          %v8878 = vunpack.c.h.b16 %v8142
          %v8879 = vunpack.c.l.b16 %v8143
          %v8880 = vunpack.c.h.b16 %v8143
          %v8881 = vunpack.c.l.b16 %v8144
          %v8882 = vunpack.c.h.b16 %v8144
          %v8883 = vunpack.c.l.b16 %v8145
          %v8884 = vunpack.c.h.b16 %v8145
          %v8885 = vunpack.c.l.b16 %v8146
          %v8886 = vunpack.c.h.b16 %v8146
          %v8887 = vunpack.c.l.b16 %v8147
          %v8888 = vunpack.c.h.b16 %v8147
          %v8889 = vunpack.c.l.b16 %v8148
          %v8890 = vunpack.c.h.b16 %v8148
          %v8891 = vunpack.c.l.b16 %v8149
          %v8892 = vunpack.c.h.b16 %v8149
          %v8893 = vunpack.c.l.b16 %v8150
          %v8894 = vunpack.c.h.b16 %v8150
          %v8895 = vunpack.c.l.b16 %v8151
          %v8896 = vunpack.c.h.b16 %v8151
          %v8897 = vunpack.c.l.b16 %v8152
          %v8898 = vunpack.c.h.b16 %v8152
          %v8899 = vunpack.c.l.b16 %v8153
          %v8900 = vunpack.c.h.b16 %v8153
          %v8901 = vunpack.c.l.b16 %v8154
          %v8902 = vunpack.c.h.b16 %v8154
          %v8903 = vunpack.c.l.b16 %v8155
          %v8904 = vunpack.c.h.b16 %v8155
          %v8905 = vunpack.c.l.b16 %v8156
          %v8906 = vunpack.c.h.b16 %v8156
          %v8907 = vunpack.c.l.b16 %v8157
          %v8908 = vunpack.c.h.b16 %v8157
          %v8909 = vunpack.c.l.b16 %v8158
          %v8910 = vunpack.c.h.b16 %v8158
          %v8911 = vunpack.c.l.b16 %v8159
          %v8912 = vunpack.c.h.b16 %v8159
          %v8913 = vunpack.c.l.b16 %v8160
          %v8914 = vunpack.c.h.b16 %v8160
          %v8915 = vunpack.c.l.b16 %v8161
          %v8916 = vunpack.c.h.b16 %v8161
          %v8917 = vunpack.c.l.b16 %v8162
          %v8918 = vunpack.c.h.b16 %v8162
          %v8919 = vunpack.c.l.b16 %v8163
          %v8920 = vunpack.c.h.b16 %v8163
          %v8921 = vunpack.c.l.b16 %v8164
          %v8922 = vunpack.c.h.b16 %v8164
          %v8923 = vunpack.c.l.b16 %v8165
          %v8924 = vunpack.c.h.b16 %v8165
          %v8925 = vunpack.c.l.b16 %v8166
          %v8926 = vunpack.c.h.b16 %v8166
          %v8927 = vunpack.c.l.b16 %v8167
          %v8928 = vunpack.c.h.b16 %v8167
          %v8929 = vunpack.c.l.b16 %v8168
          %v8930 = vunpack.c.h.b16 %v8168
          %v8931 = vunpack.c.l.b16 %v8169
          %v8932 = vunpack.c.h.b16 %v8169
          %v8933 = vunpack.c.l.b16 %v8170
          %v8934 = vunpack.c.h.b16 %v8170
          %v8935 = vunpack.c.l.b16 %v8171
          %v8936 = vunpack.c.h.b16 %v8171
          %v8937 = vunpack.c.l.b16 %v8172
          %v8938 = vunpack.c.h.b16 %v8172
          %v8939 = vunpack.c.l.b16 %v8173
          %v8940 = vunpack.c.h.b16 %v8173
          %v8941 = vunpack.c.l.b16 %v8174
          %v8942 = vunpack.c.h.b16 %v8174
          %v8943 = vunpack.c.l.b16 %v8175
          %v8944 = vunpack.c.h.b16 %v8175
          %v8945 = vunpack.c.l.b16 %v8176
          %v8946 = vunpack.c.h.b16 %v8176
          %v8947 = vunpack.c.l.b16 %v8177
          %v8948 = vunpack.c.h.b16 %v8177
          %v8949 = vunpack.c.l.b16 %v8178
          %v8950 = vunpack.c.h.b16 %v8178
          %v8951 = vunpack.c.l.b16 %v8179
          %v8952 = vunpack.c.h.b16 %v8179
          %v8953 = vunpack.c.l.b16 %v8180
          %v8954 = vunpack.c.h.b16 %v8180
          %v8955 = vunpack.c.l.b16 %v8181
          %v8956 = vunpack.c.h.b16 %v8181
          %v8957 = vunpack.c.l.b16 %v8182
          %v8958 = vunpack.c.h.b16 %v8182
          %v8959 = vunpack.c.l.b16 %v8183
          %v8960 = vunpack.c.h.b16 %v8183
          %v8961 = vunpack.c.l.b16 %v8184
          %v8962 = vunpack.c.h.b16 %v8184
          %v8963 = vunpack.c.l.b16 %v8185
          %v8964 = vunpack.c.h.b16 %v8185
          %v8965 = vunpack.c.l.b16 %v8186
          %v8966 = vunpack.c.h.b16 %v8186
          %v8967 = vunpack.c.l.b16 %v8187
          %v8968 = vunpack.c.h.b16 %v8187
          %v8969 = vunpack.c.l.b16 %v8188
          %v8970 = vunpack.c.h.b16 %v8188
          %v8971 = vunpack.c.l.b16 %v8189
          %v8972 = vunpack.c.h.b16 %v8189
          %v8973 = vunpack.c.l.b16 %v8190
          %v8974 = vunpack.c.h.b16 %v8190
          %v8975 = vunpack.c.l.b16 %v8191
          %v8976 = vunpack.c.h.b16 %v8191
          %v8977 = vunpack.c.l.b16 %v8192
          %v8978 = vunpack.c.h.b16 %v8192
          %v8979 = vunpack.c.l.b16 %v8193
          %v8980 = vunpack.c.h.b16 %v8193
          %v8981 = vunpack.c.l.b16 %v8194
          %v8982 = vunpack.c.h.b16 %v8194
          %v8983 = vunpack.c.l.b16 %v8195
          %v8984 = vunpack.c.h.b16 %v8195
          %v8985 = vunpack.c.l.b16 %v8196
          %v8986 = vunpack.c.h.b16 %v8196
          %v8987 = vpack.c.b16 %v8479, %v8475
          %v8988 = vpack.c.b16 %v8480, %v8476
          %v8989 = vpack.c.b16 %v8481, %v8477
          %v8990 = vpack.c.b16 %v8482, %v8478
          %v8991 = vpack.c.b16 %v8487, %v8483
          %v8992 = vpack.c.b16 %v8488, %v8484
          %v8993 = vpack.c.b16 %v8489, %v8485
          %v8994 = vpack.c.b16 %v8490, %v8486
          %v8995 = vpack.c.b16 %v8495, %v8491
          %v8996 = vpack.c.b16 %v8496, %v8492
          %v8997 = vpack.c.b16 %v8497, %v8493
          %v8998 = vpack.c.b16 %v8498, %v8494
          %v8999 = vpack.c.b16 %v8503, %v8499
          %v9000 = vpack.c.b16 %v8504, %v8500
          %v9001 = vpack.c.b16 %v8505, %v8501
          %v9002 = vpack.c.b16 %v8506, %v8502
          %v9003 = vpack.c.b16 %v8511, %v8507
          %v9004 = vpack.c.b16 %v8512, %v8508
          %v9005 = vpack.c.b16 %v8513, %v8509
          %v9006 = vpack.c.b16 %v8514, %v8510
          %v9007 = vpack.c.b16 %v8519, %v8515
          %v9008 = vpack.c.b16 %v8520, %v8516
          %v9009 = vpack.c.b16 %v8521, %v8517
          %v9010 = vpack.c.b16 %v8522, %v8518
          %v9011 = vpack.c.b16 %v8527, %v8523
          %v9012 = vpack.c.b16 %v8528, %v8524
          %v9013 = vpack.c.b16 %v8529, %v8525
          %v9014 = vpack.c.b16 %v8530, %v8526
          %v9015 = vpack.c.b16 %v8535, %v8531
          %v9016 = vpack.c.b16 %v8536, %v8532
          %v9017 = vpack.c.b16 %v8537, %v8533
          %v9018 = vpack.c.b16 %v8538, %v8534
          %v9019 = vpack.c.b16 %v8543, %v8539
          %v9020 = vpack.c.b16 %v8544, %v8540
          %v9021 = vpack.c.b16 %v8545, %v8541
          %v9022 = vpack.c.b16 %v8546, %v8542
          %v9023 = vpack.c.b16 %v8551, %v8547
          %v9024 = vpack.c.b16 %v8552, %v8548
          %v9025 = vpack.c.b16 %v8553, %v8549
          %v9026 = vpack.c.b16 %v8554, %v8550
          %v9027 = vpack.c.b16 %v8559, %v8555
          %v9028 = vpack.c.b16 %v8560, %v8556
          %v9029 = vpack.c.b16 %v8561, %v8557
          %v9030 = vpack.c.b16 %v8562, %v8558
          %v9031 = vpack.c.b16 %v8567, %v8563
          %v9032 = vpack.c.b16 %v8568, %v8564
          %v9033 = vpack.c.b16 %v8569, %v8565
          %v9034 = vpack.c.b16 %v8570, %v8566
          %v9035 = vpack.c.b16 %v8575, %v8571
          %v9036 = vpack.c.b16 %v8576, %v8572
          %v9037 = vpack.c.b16 %v8577, %v8573
          %v9038 = vpack.c.b16 %v8578, %v8574
          %v9039 = vpack.c.b16 %v8583, %v8579
          %v9040 = vpack.c.b16 %v8584, %v8580
          %v9041 = vpack.c.b16 %v8585, %v8581
          %v9042 = vpack.c.b16 %v8586, %v8582
          %v9043 = vpack.c.b16 %v8591, %v8587
          %v9044 = vpack.c.b16 %v8592, %v8588
          %v9045 = vpack.c.b16 %v8593, %v8589
          %v9046 = vpack.c.b16 %v8594, %v8590
          %v9047 = vpack.c.b16 %v8599, %v8595
          %v9048 = vpack.c.b16 %v8600, %v8596
          %v9049 = vpack.c.b16 %v8601, %v8597
          %v9050 = vpack.c.b16 %v8602, %v8598
          %v9051 = vpack.c.b16 %v8607, %v8603
          %v9052 = vpack.c.b16 %v8608, %v8604
          %v9053 = vpack.c.b16 %v8609, %v8605
          %v9054 = vpack.c.b16 %v8610, %v8606
          %v9055 = vpack.c.b16 %v8615, %v8611
          %v9056 = vpack.c.b16 %v8616, %v8612
          %v9057 = vpack.c.b16 %v8617, %v8613
          %v9058 = vpack.c.b16 %v8618, %v8614
          %v9059 = vpack.c.b16 %v8623, %v8619
          %v9060 = vpack.c.b16 %v8624, %v8620
          %v9061 = vpack.c.b16 %v8625, %v8621
          %v9062 = vpack.c.b16 %v8626, %v8622
          %v9063 = vpack.c.b16 %v8631, %v8627
          %v9064 = vpack.c.b16 %v8632, %v8628
          %v9065 = vpack.c.b16 %v8633, %v8629
          %v9066 = vpack.c.b16 %v8634, %v8630
          %v9067 = vpack.c.b16 %v8639, %v8635
          %v9068 = vpack.c.b16 %v8640, %v8636
          %v9069 = vpack.c.b16 %v8641, %v8637
          %v9070 = vpack.c.b16 %v8642, %v8638
          %v9071 = vpack.c.b16 %v8647, %v8643
          %v9072 = vpack.c.b16 %v8648, %v8644
          %v9073 = vpack.c.b16 %v8649, %v8645
          %v9074 = vpack.c.b16 %v8650, %v8646
          %v9075 = vpack.c.b16 %v8655, %v8651
          %v9076 = vpack.c.b16 %v8656, %v8652
          %v9077 = vpack.c.b16 %v8657, %v8653
          %v9078 = vpack.c.b16 %v8658, %v8654
          %v9079 = vpack.c.b16 %v8663, %v8659
          %v9080 = vpack.c.b16 %v8664, %v8660
          %v9081 = vpack.c.b16 %v8665, %v8661
          %v9082 = vpack.c.b16 %v8666, %v8662
          %v9083 = vpack.c.b16 %v8671, %v8667
          %v9084 = vpack.c.b16 %v8672, %v8668
          %v9085 = vpack.c.b16 %v8673, %v8669
          %v9086 = vpack.c.b16 %v8674, %v8670
          %v9087 = vpack.c.b16 %v8679, %v8675
          %v9088 = vpack.c.b16 %v8680, %v8676
          %v9089 = vpack.c.b16 %v8681, %v8677
          %v9090 = vpack.c.b16 %v8682, %v8678
          %v9091 = vpack.c.b16 %v8687, %v8683
          %v9092 = vpack.c.b16 %v8688, %v8684
          %v9093 = vpack.c.b16 %v8689, %v8685
          %v9094 = vpack.c.b16 %v8690, %v8686
          %v9095 = vpack.c.b16 %v8695, %v8691
          %v9096 = vpack.c.b16 %v8696, %v8692
          %v9097 = vpack.c.b16 %v8697, %v8693
          %v9098 = vpack.c.b16 %v8698, %v8694
          %v9099 = vpack.c.b16 %v8703, %v8699
          %v9100 = vpack.c.b16 %v8704, %v8700
          %v9101 = vpack.c.b16 %v8705, %v8701
          %v9102 = vpack.c.b16 %v8706, %v8702
          %v9103 = vpack.c.b16 %v8711, %v8707
          %v9104 = vpack.c.b16 %v8712, %v8708
          %v9105 = vpack.c.b16 %v8713, %v8709
          %v9106 = vpack.c.b16 %v8714, %v8710
          %v9107 = vpack.c.b16 %v8719, %v8715
          %v9108 = vpack.c.b16 %v8720, %v8716
          %v9109 = vpack.c.b16 %v8721, %v8717
          %v9110 = vpack.c.b16 %v8722, %v8718
          %v9111 = vpack.c.b16 %v8727, %v8723
          %v9112 = vpack.c.b16 %v8728, %v8724
          %v9113 = vpack.c.b16 %v8729, %v8725
          %v9114 = vpack.c.b16 %v8730, %v8726
          %v9115 = vpack.c.b16 %v8735, %v8731
          %v9116 = vpack.c.b16 %v8736, %v8732
          %v9117 = vpack.c.b16 %v8737, %v8733
          %v9118 = vpack.c.b16 %v8738, %v8734
          %v9119 = vpack.c.b16 %v8743, %v8739
          %v9120 = vpack.c.b16 %v8744, %v8740
          %v9121 = vpack.c.b16 %v8745, %v8741
          %v9122 = vpack.c.b16 %v8746, %v8742
          %v9123 = vpack.c.b16 %v8751, %v8747
          %v9124 = vpack.c.b16 %v8752, %v8748
          %v9125 = vpack.c.b16 %v8753, %v8749
          %v9126 = vpack.c.b16 %v8754, %v8750
          %v9127 = vpack.c.b16 %v8759, %v8755
          %v9128 = vpack.c.b16 %v8760, %v8756
          %v9129 = vpack.c.b16 %v8761, %v8757
          %v9130 = vpack.c.b16 %v8762, %v8758
          %v9131 = vpack.c.b16 %v8767, %v8763
          %v9132 = vpack.c.b16 %v8768, %v8764
          %v9133 = vpack.c.b16 %v8769, %v8765
          %v9134 = vpack.c.b16 %v8770, %v8766
          %v9135 = vpack.c.b16 %v8775, %v8771
          %v9136 = vpack.c.b16 %v8776, %v8772
          %v9137 = vpack.c.b16 %v8777, %v8773
          %v9138 = vpack.c.b16 %v8778, %v8774
          %v9139 = vpack.c.b16 %v8783, %v8779
          %v9140 = vpack.c.b16 %v8784, %v8780
          %v9141 = vpack.c.b16 %v8785, %v8781
          %v9142 = vpack.c.b16 %v8786, %v8782
          %v9143 = vpack.c.b16 %v8791, %v8787
          %v9144 = vpack.c.b16 %v8792, %v8788
          %v9145 = vpack.c.b16 %v8793, %v8789
          %v9146 = vpack.c.b16 %v8794, %v8790
          %v9147 = vpack.c.b16 %v8799, %v8795
          %v9148 = vpack.c.b16 %v8800, %v8796
          %v9149 = vpack.c.b16 %v8801, %v8797
          %v9150 = vpack.c.b16 %v8802, %v8798
          %v9151 = vpack.c.b16 %v8807, %v8803
          %v9152 = vpack.c.b16 %v8808, %v8804
          %v9153 = vpack.c.b16 %v8809, %v8805
          %v9154 = vpack.c.b16 %v8810, %v8806
          %v9155 = vpack.c.b16 %v8815, %v8811
          %v9156 = vpack.c.b16 %v8816, %v8812
          %v9157 = vpack.c.b16 %v8817, %v8813
          %v9158 = vpack.c.b16 %v8818, %v8814
          %v9159 = vpack.c.b16 %v8823, %v8819
          %v9160 = vpack.c.b16 %v8824, %v8820
          %v9161 = vpack.c.b16 %v8825, %v8821
          %v9162 = vpack.c.b16 %v8826, %v8822
          %v9163 = vpack.c.b16 %v8831, %v8827
          %v9164 = vpack.c.b16 %v8832, %v8828
          %v9165 = vpack.c.b16 %v8833, %v8829
          %v9166 = vpack.c.b16 %v8834, %v8830
          %v9167 = vpack.c.b16 %v8839, %v8835
          %v9168 = vpack.c.b16 %v8840, %v8836
          %v9169 = vpack.c.b16 %v8841, %v8837
          %v9170 = vpack.c.b16 %v8842, %v8838
          %v9171 = vpack.c.b16 %v8847, %v8843
          %v9172 = vpack.c.b16 %v8848, %v8844
          %v9173 = vpack.c.b16 %v8849, %v8845
          %v9174 = vpack.c.b16 %v8850, %v8846
          %v9175 = vpack.c.b16 %v8855, %v8851
          %v9176 = vpack.c.b16 %v8856, %v8852
          %v9177 = vpack.c.b16 %v8857, %v8853
          %v9178 = vpack.c.b16 %v8858, %v8854
          %v9179 = vpack.c.b16 %v8863, %v8859
          %v9180 = vpack.c.b16 %v8864, %v8860
          %v9181 = vpack.c.b16 %v8865, %v8861
          %v9182 = vpack.c.b16 %v8866, %v8862
          %v9183 = vpack.c.b16 %v8871, %v8867
          %v9184 = vpack.c.b16 %v8872, %v8868
          %v9185 = vpack.c.b16 %v8873, %v8869
          %v9186 = vpack.c.b16 %v8874, %v8870
          %v9187 = vpack.c.b16 %v8879, %v8875
          %v9188 = vpack.c.b16 %v8880, %v8876
          %v9189 = vpack.c.b16 %v8881, %v8877
          %v9190 = vpack.c.b16 %v8882, %v8878
          %v9191 = vpack.c.b16 %v8887, %v8883
          %v9192 = vpack.c.b16 %v8888, %v8884
          %v9193 = vpack.c.b16 %v8889, %v8885
          %v9194 = vpack.c.b16 %v8890, %v8886
          %v9195 = vpack.c.b16 %v8895, %v8891
          %v9196 = vpack.c.b16 %v8896, %v8892
          %v9197 = vpack.c.b16 %v8897, %v8893
          %v9198 = vpack.c.b16 %v8898, %v8894
          %v9199 = vpack.c.b16 %v8903, %v8899
          %v9200 = vpack.c.b16 %v8904, %v8900
          %v9201 = vpack.c.b16 %v8905, %v8901
          %v9202 = vpack.c.b16 %v8906, %v8902
          %v9203 = vpack.c.b16 %v8911, %v8907
          %v9204 = vpack.c.b16 %v8912, %v8908
          %v9205 = vpack.c.b16 %v8913, %v8909
          %v9206 = vpack.c.b16 %v8914, %v8910
          %v9207 = vpack.c.b16 %v8919, %v8915
          %v9208 = vpack.c.b16 %v8920, %v8916
          %v9209 = vpack.c.b16 %v8921, %v8917
          %v9210 = vpack.c.b16 %v8922, %v8918
          %v9211 = vpack.c.b16 %v8927, %v8923
          %v9212 = vpack.c.b16 %v8928, %v8924
          %v9213 = vpack.c.b16 %v8929, %v8925
          %v9214 = vpack.c.b16 %v8930, %v8926
          %v9215 = vpack.c.b16 %v8935, %v8931
          %v9216 = vpack.c.b16 %v8936, %v8932
          %v9217 = vpack.c.b16 %v8937, %v8933
          %v9218 = vpack.c.b16 %v8938, %v8934
          %v9219 = vpack.c.b16 %v8943, %v8939
          %v9220 = vpack.c.b16 %v8944, %v8940
          %v9221 = vpack.c.b16 %v8945, %v8941
          %v9222 = vpack.c.b16 %v8946, %v8942
          %v9223 = vpack.c.b16 %v8951, %v8947
          %v9224 = vpack.c.b16 %v8952, %v8948
          %v9225 = vpack.c.b16 %v8953, %v8949
          %v9226 = vpack.c.b16 %v8954, %v8950
          %v9227 = vpack.c.b16 %v8959, %v8955
          %v9228 = vpack.c.b16 %v8960, %v8956
          %v9229 = vpack.c.b16 %v8961, %v8957
          %v9230 = vpack.c.b16 %v8962, %v8958
          %v9231 = vpack.c.b16 %v8967, %v8963
          %v9232 = vpack.c.b16 %v8968, %v8964
          %v9233 = vpack.c.b16 %v8969, %v8965
          %v9234 = vpack.c.b16 %v8970, %v8966
          %v9235 = vpack.c.b16 %v8975, %v8971
          %v9236 = vpack.c.b16 %v8976, %v8972
          %v9237 = vpack.c.b16 %v8977, %v8973
          %v9238 = vpack.c.b16 %v8978, %v8974
          %v9239 = vpack.c.b16 %v8983, %v8979
          %v9240 = vpack.c.b16 %v8984, %v8980
          %v9241 = vpack.c.b16 %v8985, %v8981
          %v9242 = vpack.c.b16 %v8986, %v8982
          %9499 = vmatprep.subr.bf16.mxu0 %v8988
          %9500 = vmatpush1.bf16.msra.mxu0 %v8987
          %9501 = vmatprep.subr.bf16.mxu0 %v8992
          %9502 = vmatpush1.bf16.msra.mxu0 %v8991
          %9503 = vmatprep.subr.bf16.mxu0 %v8996
          %9504 = vmatpush1.bf16.msra.mxu0 %v8995
          %9505 = vmatprep.subr.bf16.mxu0 %v9000
          %9506 = vmatpush1.bf16.msra.mxu0 %v8999
          %9507 = vmatprep.subr.bf16.mxu0 %v9004
          %9508 = vmatpush1.bf16.msra.mxu0 %v9003
          %9509 = vmatprep.subr.bf16.mxu0 %v9008
          %9510 = vmatpush1.bf16.msra.mxu0 %v9007
          %9511 = vmatprep.subr.bf16.mxu0 %v9012
          %9512 = vmatpush1.bf16.msra.mxu0 %v9011
          %9513 = vmatprep.subr.bf16.mxu0 %v9016
          %9514 = vmatpush1.bf16.msra.mxu0 %v9015
          %9515 = vmatprep.subr.bf16.mxu0 %v9020
          %9516 = vmatpush1.bf16.msra.mxu0 %v9019
          %9517 = vmatprep.subr.bf16.mxu0 %v9024
          %9518 = vmatpush1.bf16.msra.mxu0 %v9023
          %9519 = vmatprep.subr.bf16.mxu0 %v9028
          %9520 = vmatpush1.bf16.msra.mxu0 %v9027
          %9521 = vmatprep.subr.bf16.mxu0 %v9032
          %9522 = vmatpush1.bf16.msra.mxu0 %v9031
          %9523 = vmatprep.subr.bf16.mxu0 %v9036
          %9524 = vmatpush1.bf16.msra.mxu0 %v9035
          %9525 = vmatprep.subr.bf16.mxu0 %v9040
          %9526 = vmatpush1.bf16.msra.mxu0 %v9039
          %9527 = vmatprep.subr.bf16.mxu0 %v9044
          %9528 = vmatpush1.bf16.msra.mxu0 %v9043
          %9529 = vmatprep.subr.bf16.mxu0 %v9048
          %9530 = vmatpush1.bf16.msra.mxu0 %v9047
          %9531 = vmatprep.mubr.bf16.mxu0 %v7934
          %9532 = vmatmul.mubr.bf16.gmra.mrb[0].mxu0 %v7933
          %v9533 = vpop.f32.mrb[0].mxu0
          %v9534 = vadd.f32 %v8202, %v9533
          %v9535 = vpop.f32.mrb[0].mxu0
          %v9536 = vadd.f32 %v8206, %v9535
          %v9537 = vpop.f32.mrb[0].mxu0
          %v9538 = vpop.f32.mrb[0].mxu0
          %9539 = vdwg.mxu0
          %9540 = vmatprep.subr.bf16.mxu0 %v9052
          %9541 = vmatpush1.bf16.msra.mxu0 %v9051
          %9542 = vmatprep.subr.bf16.mxu0 %v9056
          %9543 = vmatpush1.bf16.msra.mxu0 %v9055
          %9544 = vmatprep.subr.bf16.mxu0 %v9060
          %9545 = vmatpush1.bf16.msra.mxu0 %v9059
          %9546 = vmatprep.subr.bf16.mxu0 %v9064
          %9547 = vmatpush1.bf16.msra.mxu0 %v9063
          %9548 = vmatprep.subr.bf16.mxu0 %v9068
          %9549 = vmatpush1.bf16.msra.mxu0 %v9067
          %9550 = vmatprep.subr.bf16.mxu0 %v9072
          %9551 = vmatpush1.bf16.msra.mxu0 %v9071
          %9552 = vmatprep.subr.bf16.mxu0 %v9076
          %9553 = vmatpush1.bf16.msra.mxu0 %v9075
          %9554 = vmatprep.subr.bf16.mxu0 %v9080
          %9555 = vmatpush1.bf16.msra.mxu0 %v9079
          %9556 = vmatprep.subr.bf16.mxu0 %v9084
          %9557 = vmatpush1.bf16.msra.mxu0 %v9083
          %9558 = vmatprep.subr.bf16.mxu0 %v9088
          %9559 = vmatpush1.bf16.msra.mxu0 %v9087
          %9560 = vmatprep.subr.bf16.mxu0 %v9092
          %9561 = vmatpush1.bf16.msra.mxu0 %v9091
          %9562 = vmatprep.subr.bf16.mxu0 %v9096
          %9563 = vmatpush1.bf16.msra.mxu0 %v9095
          %9564 = vmatprep.subr.bf16.mxu0 %v9100
          %9565 = vmatpush1.bf16.msra.mxu0 %v9099
          %9566 = vmatprep.subr.bf16.mxu0 %v9104
          %9567 = vmatpush1.bf16.msra.mxu0 %v9103
          %9568 = vmatprep.subr.bf16.mxu0 %v9108
          %9569 = vmatpush1.bf16.msra.mxu0 %v9107
          %9570 = vmatprep.subr.bf16.mxu0 %v9112
          %9571 = vmatpush1.bf16.msra.mxu0 %v9111
          %9572 = vmatprep.mubr.bf16.mxu0 %v7936
          %9573 = vmatmul.mubr.bf16.gmra.mrb[0].mxu0 %v7935
          %v9574 = vpop.f32.mrb[0].mxu0
          %v9575 = vadd.f32 %v9534, %v9574
          %v9576 = vpop.f32.mrb[0].mxu0
          %v9577 = vadd.f32 %v9536, %v9576
          %v9578 = vpop.f32.mrb[0].mxu0
          %v9579 = vpop.f32.mrb[0].mxu0
          %9580 = vdwg.mxu0
          %9581 = vmatprep.subr.bf16.mxu0 %v9116
          %9582 = vmatpush1.bf16.msra.mxu0 %v9115
          %9583 = vmatprep.subr.bf16.mxu0 %v9120
          %9584 = vmatpush1.bf16.msra.mxu0 %v9119
          %9585 = vmatprep.subr.bf16.mxu0 %v9124
          %9586 = vmatpush1.bf16.msra.mxu0 %v9123
          %9587 = vmatprep.subr.bf16.mxu0 %v9128
          %9588 = vmatpush1.bf16.msra.mxu0 %v9127
          %9589 = vmatprep.subr.bf16.mxu0 %v9132
          %9590 = vmatpush1.bf16.msra.mxu0 %v9131
          %9591 = vmatprep.subr.bf16.mxu0 %v9136
          %9592 = vmatpush1.bf16.msra.mxu0 %v9135
          %9593 = vmatprep.subr.bf16.mxu0 %v9140
          %9594 = vmatpush1.bf16.msra.mxu0 %v9139
          %9595 = vmatprep.subr.bf16.mxu0 %v9144
          %9596 = vmatpush1.bf16.msra.mxu0 %v9143
          %9597 = vmatprep.subr.bf16.mxu0 %v9148
          %9598 = vmatpush1.bf16.msra.mxu0 %v9147
          %9599 = vmatprep.subr.bf16.mxu0 %v9152
          %9600 = vmatpush1.bf16.msra.mxu0 %v9151
          %9601 = vmatprep.subr.bf16.mxu0 %v9156
          %9602 = vmatpush1.bf16.msra.mxu0 %v9155
          %9603 = vmatprep.subr.bf16.mxu0 %v9160
          %9604 = vmatpush1.bf16.msra.mxu0 %v9159
          %9605 = vmatprep.subr.bf16.mxu0 %v9164
          %9606 = vmatpush1.bf16.msra.mxu0 %v9163
          %9607 = vmatprep.subr.bf16.mxu0 %v9168
          %9608 = vmatpush1.bf16.msra.mxu0 %v9167
          %9609 = vmatprep.subr.bf16.mxu0 %v9172
          %9610 = vmatpush1.bf16.msra.mxu0 %v9171
          %9611 = vmatprep.subr.bf16.mxu0 %v9176
          %9612 = vmatpush1.bf16.msra.mxu0 %v9175
          %9613 = vmatprep.mubr.bf16.mxu0 %v7938
          %9614 = vmatmul.mubr.bf16.gmra.mrb[0].mxu0 %v7937
          %v9615 = vpop.f32.mrb[0].mxu0
          %v9616 = vadd.f32 %v9575, %v9615
          %v9617 = vpop.f32.mrb[0].mxu0
          %v9618 = vadd.f32 %v9577, %v9617
          %v9619 = vpop.f32.mrb[0].mxu0
          %v9620 = vpop.f32.mrb[0].mxu0
          %9621 = vdwg.mxu0
          %9622 = vmatprep.subr.bf16.mxu0 %v9180
          %9623 = vmatpush1.bf16.msra.mxu0 %v9179
          %9624 = vmatprep.subr.bf16.mxu0 %v9184
          %9625 = vmatpush1.bf16.msra.mxu0 %v9183
          %9626 = vmatprep.subr.bf16.mxu0 %v9188
          %9627 = vmatpush1.bf16.msra.mxu0 %v9187
          %9628 = vmatprep.subr.bf16.mxu0 %v9192
          %9629 = vmatpush1.bf16.msra.mxu0 %v9191
          %9630 = vmatprep.subr.bf16.mxu0 %v9196
          %9631 = vmatpush1.bf16.msra.mxu0 %v9195
          %9632 = vmatprep.subr.bf16.mxu0 %v9200
          %9633 = vmatpush1.bf16.msra.mxu0 %v9199
          %9634 = vmatprep.subr.bf16.mxu0 %v9204
          %9635 = vmatpush1.bf16.msra.mxu0 %v9203
          %9636 = vmatprep.subr.bf16.mxu0 %v9208
          %9637 = vmatpush1.bf16.msra.mxu0 %v9207
          %9638 = vmatprep.subr.bf16.mxu0 %v9212
          %9639 = vmatpush1.bf16.msra.mxu0 %v9211
          %9640 = vmatprep.subr.bf16.mxu0 %v9216
          %9641 = vmatpush1.bf16.msra.mxu0 %v9215
          %9642 = vmatprep.subr.bf16.mxu0 %v9220
          %9643 = vmatpush1.bf16.msra.mxu0 %v9219
          %9644 = vmatprep.subr.bf16.mxu0 %v9224
          %9645 = vmatpush1.bf16.msra.mxu0 %v9223
          %9646 = vmatprep.subr.bf16.mxu0 %v9228
          %9647 = vmatpush1.bf16.msra.mxu0 %v9227
          %9648 = vmatprep.subr.bf16.mxu0 %v9232
          %9649 = vmatpush1.bf16.msra.mxu0 %v9231
          %9650 = vmatprep.subr.bf16.mxu0 %v9236
          %9651 = vmatpush1.bf16.msra.mxu0 %v9235
          %9652 = vmatprep.subr.bf16.mxu0 %v9240
          %9653 = vmatpush1.bf16.msra.mxu0 %v9239
          %9654 = vmatprep.mubr.bf16.mxu0 %v7940
          %9655 = vmatmul.mubr.bf16.gmra.mrb[0].mxu0 %v7939
          %v9656 = vpop.f32.mrb[0].mxu0
          %v9657 = vadd.f32 %v9616, %v9656
          %v9658 = vpop.f32.mrb[0].mxu0
          %v9659 = vadd.f32 %v9618, %v9658
          %v9660 = vpop.f32.mrb[0].mxu0
          %v9661 = vpop.f32.mrb[0].mxu0
          %9662 = vdwg.mxu0
          %9663 = vmatprep.subr.bf16.mxu0 %v8990
          %9664 = vmatpush1.bf16.msra.mxu0 %v8989
          %9665 = vmatprep.subr.bf16.mxu0 %v8994
          %9666 = vmatpush1.bf16.msra.mxu0 %v8993
          %9667 = vmatprep.subr.bf16.mxu0 %v8998
          %9668 = vmatpush1.bf16.msra.mxu0 %v8997
          %9669 = vmatprep.subr.bf16.mxu0 %v9002
          %9670 = vmatpush1.bf16.msra.mxu0 %v9001
          %9671 = vmatprep.subr.bf16.mxu0 %v9006
          %9672 = vmatpush1.bf16.msra.mxu0 %v9005
          %9673 = vmatprep.subr.bf16.mxu0 %v9010
          %9674 = vmatpush1.bf16.msra.mxu0 %v9009
          %9675 = vmatprep.subr.bf16.mxu0 %v9014
          %9676 = vmatpush1.bf16.msra.mxu0 %v9013
          %9677 = vmatprep.subr.bf16.mxu0 %v9018
          %9678 = vmatpush1.bf16.msra.mxu0 %v9017
          %9679 = vmatprep.subr.bf16.mxu0 %v9022
          %9680 = vmatpush1.bf16.msra.mxu0 %v9021
          %9681 = vmatprep.subr.bf16.mxu0 %v9026
          %9682 = vmatpush1.bf16.msra.mxu0 %v9025
          %9683 = vmatprep.subr.bf16.mxu0 %v9030
          %9684 = vmatpush1.bf16.msra.mxu0 %v9029
          %9685 = vmatprep.subr.bf16.mxu0 %v9034
          %9686 = vmatpush1.bf16.msra.mxu0 %v9033
          %9687 = vmatprep.subr.bf16.mxu0 %v9038
          %9688 = vmatpush1.bf16.msra.mxu0 %v9037
          %9689 = vmatprep.subr.bf16.mxu0 %v9042
          %9690 = vmatpush1.bf16.msra.mxu0 %v9041
          %9691 = vmatprep.subr.bf16.mxu0 %v9046
          %9692 = vmatpush1.bf16.msra.mxu0 %v9045
          %9693 = vmatprep.subr.bf16.mxu0 %v9050
          %9694 = vmatpush1.bf16.msra.mxu0 %v9049
          %9695 = vmatprep.mubr.bf16.mxu0 %v7934
          %9696 = vmatmul.mubr.bf16.gmra.mrb[0].mxu0 %v7933
          %v9697 = vpop.f32.mrb[0].mxu0
          %v9698 = vadd.f32 %v8210, %v9697
          %v9699 = vpop.f32.mrb[0].mxu0
          %v9700 = vadd.f32 %v8214, %v9699
          %v9701 = vpop.f32.mrb[0].mxu0
          %v9702 = vpop.f32.mrb[0].mxu0
          %9703 = vdwg.mxu0
          %9704 = vmatprep.subr.bf16.mxu0 %v9054
          %9705 = vmatpush1.bf16.msra.mxu0 %v9053
          %9706 = vmatprep.subr.bf16.mxu0 %v9058
          %9707 = vmatpush1.bf16.msra.mxu0 %v9057
          %9708 = vmatprep.subr.bf16.mxu0 %v9062
          %9709 = vmatpush1.bf16.msra.mxu0 %v9061
          %9710 = vmatprep.subr.bf16.mxu0 %v9066
          %9711 = vmatpush1.bf16.msra.mxu0 %v9065
          %9712 = vmatprep.subr.bf16.mxu0 %v9070
          %9713 = vmatpush1.bf16.msra.mxu0 %v9069
          %9714 = vmatprep.subr.bf16.mxu0 %v9074
          %9715 = vmatpush1.bf16.msra.mxu0 %v9073
          %9716 = vmatprep.subr.bf16.mxu0 %v9078
          %9717 = vmatpush1.bf16.msra.mxu0 %v9077
          %9718 = vmatprep.subr.bf16.mxu0 %v9082
          %9719 = vmatpush1.bf16.msra.mxu0 %v9081
          %9720 = vmatprep.subr.bf16.mxu0 %v9086
          %9721 = vmatpush1.bf16.msra.mxu0 %v9085
          %9722 = vmatprep.subr.bf16.mxu0 %v9090
          %9723 = vmatpush1.bf16.msra.mxu0 %v9089
          %9724 = vmatprep.subr.bf16.mxu0 %v9094
          %9725 = vmatpush1.bf16.msra.mxu0 %v9093
          %9726 = vmatprep.subr.bf16.mxu0 %v9098
          %9727 = vmatpush1.bf16.msra.mxu0 %v9097
          %9728 = vmatprep.subr.bf16.mxu0 %v9102
          %9729 = vmatpush1.bf16.msra.mxu0 %v9101
          %9730 = vmatprep.subr.bf16.mxu0 %v9106
          %9731 = vmatpush1.bf16.msra.mxu0 %v9105
          %9732 = vmatprep.subr.bf16.mxu0 %v9110
          %9733 = vmatpush1.bf16.msra.mxu0 %v9109
          %9734 = vmatprep.subr.bf16.mxu0 %v9114
          %9735 = vmatpush1.bf16.msra.mxu0 %v9113
          %9736 = vmatprep.mubr.bf16.mxu0 %v7936
          %9737 = vmatmul.mubr.bf16.gmra.mrb[0].mxu0 %v7935
          %v9738 = vpop.f32.mrb[0].mxu0
          %v9739 = vadd.f32 %v9698, %v9738
          %v9740 = vpop.f32.mrb[0].mxu0
          %v9741 = vadd.f32 %v9700, %v9740
          %v9742 = vpop.f32.mrb[0].mxu0
          %v9743 = vpop.f32.mrb[0].mxu0
          %9744 = vdwg.mxu0
          %9745 = vmatprep.subr.bf16.mxu0 %v9118
          %9746 = vmatpush1.bf16.msra.mxu0 %v9117
          %9747 = vmatprep.subr.bf16.mxu0 %v9122
          %9748 = vmatpush1.bf16.msra.mxu0 %v9121
          %9749 = vmatprep.subr.bf16.mxu0 %v9126
          %9750 = vmatpush1.bf16.msra.mxu0 %v9125
          %9751 = vmatprep.subr.bf16.mxu0 %v9130
          %9752 = vmatpush1.bf16.msra.mxu0 %v9129
          %9753 = vmatprep.subr.bf16.mxu0 %v9134
          %9754 = vmatpush1.bf16.msra.mxu0 %v9133
          %9755 = vmatprep.subr.bf16.mxu0 %v9138
          %9756 = vmatpush1.bf16.msra.mxu0 %v9137
          %9757 = vmatprep.subr.bf16.mxu0 %v9142
          %9758 = vmatpush1.bf16.msra.mxu0 %v9141
          %9759 = vmatprep.subr.bf16.mxu0 %v9146
          %9760 = vmatpush1.bf16.msra.mxu0 %v9145
          %9761 = vmatprep.subr.bf16.mxu0 %v9150
          %9762 = vmatpush1.bf16.msra.mxu0 %v9149
          %9763 = vmatprep.subr.bf16.mxu0 %v9154
          %9764 = vmatpush1.bf16.msra.mxu0 %v9153
          %9765 = vmatprep.subr.bf16.mxu0 %v9158
          %9766 = vmatpush1.bf16.msra.mxu0 %v9157
          %9767 = vmatprep.subr.bf16.mxu0 %v9162
          %9768 = vmatpush1.bf16.msra.mxu0 %v9161
          %9769 = vmatprep.subr.bf16.mxu0 %v9166
          %9770 = vmatpush1.bf16.msra.mxu0 %v9165
          %9771 = vmatprep.subr.bf16.mxu0 %v9170
          %9772 = vmatpush1.bf16.msra.mxu0 %v9169
          %9773 = vmatprep.subr.bf16.mxu0 %v9174
          %9774 = vmatpush1.bf16.msra.mxu0 %v9173
          %9775 = vmatprep.subr.bf16.mxu0 %v9178
          %9776 = vmatpush1.bf16.msra.mxu0 %v9177
          %9777 = vmatprep.mubr.bf16.mxu0 %v7938
          %9778 = vmatmul.mubr.bf16.gmra.mrb[0].mxu0 %v7937
          %v9779 = vpop.f32.mrb[0].mxu0
          %v9780 = vadd.f32 %v9739, %v9779
          %v9781 = vpop.f32.mrb[0].mxu0
          %v9782 = vadd.f32 %v9741, %v9781
          %v9783 = vpop.f32.mrb[0].mxu0
          %v9784 = vpop.f32.mrb[0].mxu0
          %9785 = vdwg.mxu0
          %9786 = vmatprep.subr.bf16.mxu0 %v9182
          %9787 = vmatpush1.bf16.msra.mxu0 %v9181
          %9788 = vmatprep.subr.bf16.mxu0 %v9186
          %9789 = vmatpush1.bf16.msra.mxu0 %v9185
          %9790 = vmatprep.subr.bf16.mxu0 %v9190
          %9791 = vmatpush1.bf16.msra.mxu0 %v9189
          %9792 = vmatprep.subr.bf16.mxu0 %v9194
          %9793 = vmatpush1.bf16.msra.mxu0 %v9193
          %9794 = vmatprep.subr.bf16.mxu0 %v9198
          %9795 = vmatpush1.bf16.msra.mxu0 %v9197
          %9796 = vmatprep.subr.bf16.mxu0 %v9202
          %9797 = vmatpush1.bf16.msra.mxu0 %v9201
          %9798 = vmatprep.subr.bf16.mxu0 %v9206
          %9799 = vmatpush1.bf16.msra.mxu0 %v9205
          %9800 = vmatprep.subr.bf16.mxu0 %v9210
          %9801 = vmatpush1.bf16.msra.mxu0 %v9209
          %9802 = vmatprep.subr.bf16.mxu0 %v9214
          %9803 = vmatpush1.bf16.msra.mxu0 %v9213
          %9804 = vmatprep.subr.bf16.mxu0 %v9218
          %9805 = vmatpush1.bf16.msra.mxu0 %v9217
          %9806 = vmatprep.subr.bf16.mxu0 %v9222
          %9807 = vmatpush1.bf16.msra.mxu0 %v9221
          %9808 = vmatprep.subr.bf16.mxu0 %v9226
          %9809 = vmatpush1.bf16.msra.mxu0 %v9225
          %9810 = vmatprep.subr.bf16.mxu0 %v9230
          %9811 = vmatpush1.bf16.msra.mxu0 %v9229
          %9812 = vmatprep.subr.bf16.mxu0 %v9234
          %9813 = vmatpush1.bf16.msra.mxu0 %v9233
          %9814 = vmatprep.subr.bf16.mxu0 %v9238
          %9815 = vmatpush1.bf16.msra.mxu0 %v9237
          %9816 = vmatprep.subr.bf16.mxu0 %v9242
          %9817 = vmatpush1.bf16.msra.mxu0 %v9241
          %9818 = vmatprep.mubr.bf16.mxu0 %v7940
          %9819 = vmatmul.mubr.bf16.gmra.mrb[0].mxu0 %v7939
          %v9820 = vpop.f32.mrb[0].mxu0
          %v9821 = vadd.f32 %v9780, %v9820
          %v9822 = vpop.f32.mrb[0].mxu0
          %v9823 = vadd.f32 %v9782, %v9822
          %v9824 = vpop.f32.mrb[0].mxu0
          %v9825 = vpop.f32.mrb[0].mxu0
          %9826 = vdwg.mxu0
          %v9827 = vmax.f32 %v9657, 0.0
          %v9828 = vmax.f32 %v9659, 0.0
          %v9829 = vmax.f32 %v9821, 0.0
          %v9830 = vmax.f32 %v9823, 0.0
          %v9831 = vld [vmem:[#allocation15] sm:$0xf]
          %v9832 = vunpack.c.l.bf16 %v9831
          %v9834 = vlaneseq
          %v9835 = vshrl.u32 %v9834, 7
          %v9836 = vsub.s32 0, %v9835
          %v9837 = vrot.slane %v9832, %v9836
          %v9838 = vlaneseq
          %v9839 = vshrl.u32 %v9838, 7
          %v9840 = vsub.s32 2, %v9839
          %v9841 = vrot.slane %v9832, %v9840
          %v9842 = vlaneseq
          %v9843 = vshrl.u32 %v9842, 7
          %v9844 = vsub.s32 4, %v9843
          %v9845 = vrot.slane %v9832, %v9844
          %v9846 = vlaneseq
          %v9847 = vshrl.u32 %v9846, 7
          %v9848 = vsub.s32 6, %v9847
          %v9849 = vrot.slane %v9832, %v9848
          %v9854 = vlaneseq
          %v9855 = vshrl.u32 %v9854, 7
          %v9856 = vsub.s32 0, %v9855
          %v9857 = vrot.slane %v9837, %v9856
          %v9858 = vlaneseq
          %v9859 = vshrl.u32 %v9858, 7
          %v9860 = vsub.s32 0, %v9859
          %v9861 = vrot.slane %v9841, %v9860
          %v9862 = vlaneseq
          %v9863 = vshrl.u32 %v9862, 7
          %v9864 = vsub.s32 0, %v9863
          %v9865 = vrot.slane %v9845, %v9864
          %v9866 = vlaneseq
          %v9867 = vshrl.u32 %v9866, 7
          %v9868 = vsub.s32 0, %v9867
          %v9869 = vrot.slane %v9849, %v9868
          %v9870 = vmul.f32 %v9827, %v9857
          %v9871 = vmul.f32 %v9828, %v9861
          %v9872 = vmul.f32 %v9829, %v9865
          %v9873 = vmul.f32 %v9830, %v9869
          %v9874 = vadd.f32 %v9870, %v9871
          %v9875 = vadd.f32 %v9874, %v9872
          %v9876 = vadd.f32 %v9875, %v9873
          %9877 = vadd.xlane.f32.xlu0 %v9876
          %v9878 = vpop.xlane.xlu0 %9877
          %v9879 = vld [vmem:[#allocation3] sm:$0x1]
          %v9881 = vlaneseq
          %v9882 = vshrl.u32 %v9881, 7
          %v9883 = vsub.s32 0, %v9882
          %v9884 = vrot.slane %v9879, %v9883
          %v9886 = vadd.f32 %v9878, %v9884
          %vm9887 = vcmask 7168
          %9888 = vst.msk [vmem:[%s9] sm:$0xff] %vm9887, %v9886
        $region96: #{age_net_forward.1} parent=55 // pred_fallthru
          _
        // Predicated region
        $region97: #{age_net_forward.1} parent=55 // pred_check
          %p9889 = pneg %p248
        $region98: #{age_net_forward.1} parent=55 // pred_check_branch
          %9891 = sbr.rel (%p9889) target = $region100
        $region99: #{age_net_forward.1} parent=55 // pred_region
          _
        $region100: #{age_net_forward.1} parent=55 // pred_fallthru
          _
        // Predicated region
        $region101: #{age_net_forward.1} parent=55 // pred_check
          %p9892 = pneg %p248
        $region102: #{age_net_forward.1} parent=55 // pred_check_branch
          %9894 = sbr.rel (%p9892) target = $region104
        $region103: #{age_net_forward.1} parent=55 // pred_region
          _
        $region104: #{age_net_forward.1} parent=55 // pred_fallthru
          _
      $region56: #{age_net_forward.1} parent=5 // pred_fallthru
        _
      %p9895 = scmp.le.s32.totalorder 2, %s26
      // Predicated region
      $region105: #{age_net_forward.1} parent=5 // pred_check
        %p9896 = pneg %p9895
      $region106: #{age_net_forward.1} parent=5 // pred_check_branch
        %9898 = sbr.rel (%p9896) target = $region108
      $region107: #{age_net_forward.1} parent=5 // pred_region
        %s9899 = ssub.s32 %s26, 2
      $region108: #{age_net_forward.1} parent=5 // pred_fallthru
        _
    $region6: #{age_net_forward.1} parent=1 // loop_footer
      %s30 = sadd.s32 1, %s26
    $region7: #{age_net_forward.1} parent=1 // loop_footer_branch
      %25 = sbr.rel target = $region3
    $region8: #{age_net_forward.1} parent=1 // loop_exit
      _
    %9900 = vsyncpa [#allocation5], 1
    %s9901 = scalar_lea.sflag [#allocation5], 1
    %9902 = vsyncpa %s9901, 1
    %9903 = vsyncpa [#allocation7], 1
    %s9904 = scalar_lea.sflag [#allocation7], 1
    %9905 = vsyncpa %s9904, 1
    %9906 = vsyncpa [#allocation10], 1
    %s9907 = scalar_lea.sflag [#allocation10], 1
    %9908 = vsyncpa %s9907, 1
    %9909 = vsyncpa [#allocation13], 1
    %9910 = vsyncpa [#allocation16], 1

</llo_original>
